<compile_context>
chip_gen: v7x
topology: tpu7x:2x2x1
jax: 0.10.0
libtpu: 0.0.40
codegen_flags: <defaults>
</compile_context>

<pallas_src>
import jax
import jax.numpy as jnp
from jax import lax
from jax.experimental import pallas as pl
from jax.experimental.pallas import tpu as pltpu


LANE = 128   # channel padding target (TPU lane width)
PADL = 8     # left pad of the spatial halo scratch (keeps interior store sublane-aligned)


def _round_up(x, m):
    return (x + m - 1) // m * m


def _pad_axis(a, axis, target):
    pad = [(0, 0)] * a.ndim
    pad[axis] = (0, target - a.shape[axis])
    return jnp.pad(a, pad)


# ---------------------------------------------------------------------------
# Fused Bottleneck kernel (one image per grid step)
# ---------------------------------------------------------------------------
def _zero_halo_border(pad_ref, H, W):
    """Zero only the 1-deep ring actually read by the 3x3 taps.

    The interior [1:H+1, PADL:PADL+W) is fully overwritten each grid step, so
    only the surrounding ring needs (re)zeroing.  Must never be written by the
    interior store.
    """
    Wp = pad_ref.shape[1]
    Cm = pad_ref.shape[2]
    zrow = jnp.zeros((1, Wp, Cm), pad_ref.dtype)
    zcol = jnp.zeros((H, 1, Cm), pad_ref.dtype)
    pad_ref[0:1, :, :] = zrow                               # top halo row
    pad_ref[H + 1:H + 2, :, :] = zrow                       # bottom halo row
    pad_ref[1:H + 1, PADL - 1:PADL, :] = zcol               # left halo column
    pad_ref[1:H + 1, PADL + W:PADL + W + 1, :] = zcol       # right halo column


def _bottleneck_kernel(x_ref, w1_ref, b1_ref, w2_ref, b2_ref, w3_ref, b3_ref,
                       o_ref, y1_pad, y2_pad):
    H, W = o_ref.shape[1], o_ref.shape[2]
    Cin = x_ref.shape[3]
    Cm = w1_ref.shape[1]
    Cout = o_ref.shape[3]
    M = H * W

    x2d = x_ref[0].reshape(M, Cin)                       # bf16 activations

    # ---- stage 1: 1x1 conv (BN scale folded into w1) + bias + ReLU --------
    y1 = jnp.dot(x2d, w1_ref[...], preferred_element_type=jnp.float32)
    y1 = jnp.maximum(y1 + b1_ref[...], 0.0)

    # Place y1 at rows [1, H+1), cols [PADL, PADL+W); zero border provides
    # SAME padding.  Single f32->bf16 cast at the store (taps read bf16).
    _zero_halo_border(y1_pad, H, W)
    y1_pad[1:H + 1, PADL:PADL + W, :] = y1.astype(y1_pad.dtype).reshape(H, W, Cm)

    # ---- 3x3 conv = 9 accumulated matmuls; accumulate in a traced f32 value
    def conv3x3(src_pad, w_ref):
        acc = None
        for t in range(9):
            dh, dw = divmod(t, 3)
            patch = src_pad[dh:dh + H, PADL - 1 + dw:PADL - 1 + dw + W, :]
            contrib = jnp.dot(patch.reshape(M, Cm), w_ref[t],
                              preferred_element_type=jnp.float32)
            acc = contrib if acc is None else acc + contrib
        return acc

    # ---- stage 2: 3x3 conv + bias + ReLU -----------------------------------
    y2 = jnp.maximum(conv3x3(y1_pad, w2_ref) + b2_ref[...], 0.0)

    _zero_halo_border(y2_pad, H, W)
    y2_pad[1:H + 1, PADL:PADL + W, :] = y2.astype(y2_pad.dtype).reshape(H, W, Cm)

    # ---- stage 3: 3x3 conv + bias + identity residual + ReLU ---------------
    out = conv3x3(y2_pad, w3_ref) + b3_ref[...] + x2d.astype(jnp.float32)
    out = jnp.maximum(out, 0.0)
    o_ref[...] = out.reshape(1, H, W, Cout).astype(o_ref.dtype)


def bottleneck_forward(x_nhwc, params):
    """x_nhwc: (N, H, W, Cp_in) bf16, channels padded to a multiple of 128."""
    N, H, W, Cp_in = x_nhwc.shape
    w1, b1 = params["w1"], params["b1"]
    w2, b2 = params["w2"], params["b2"]
    w3, b3 = params["w3"], params["b3"]
    Cm = w1.shape[1]
    Cp_out = w3.shape[2]
    assert Cp_in == Cp_out, "identity residual requires in_channels == 4*inner"

    # Explicit VMEM budget: bf16 halos + double-buffered bf16 I/O blocks +
    # (possibly double-buffered) weights, with 2x headroom for compiler temps.
    halo_bytes = 2 * (H + 2) * (W + 2 * PADL) * Cm * 2
    io_bytes = 2 * 2 * H * W * (Cp_in + Cp_out)
    w_bytes = 2 * 2 * (Cp_in * Cm + 9 * Cm * Cm + 9 * Cm * Cp_out)
    vmem_limit = int(min(64 << 20, max(16 << 20, 2 * (halo_bytes + io_bytes + w_bytes))))

    return pl.pallas_call(
        _bottleneck_kernel,
        out_shape=jax.ShapeDtypeStruct((N, H, W, Cp_out), jnp.bfloat16),
        grid=(N,),
        in_specs=[
            pl.BlockSpec((1, H, W, Cp_in), lambda n: (n, 0, 0, 0)),
            pl.BlockSpec((Cp_in, Cm), lambda n: (0, 0)),
            pl.BlockSpec((1, Cm), lambda n: (0, 0)),
            pl.BlockSpec((9, Cm, Cm), lambda n: (0, 0, 0)),
            pl.BlockSpec((1, Cm), lambda n: (0, 0)),
            pl.BlockSpec((9, Cm, Cp_out), lambda n: (0, 0, 0)),
            pl.BlockSpec((1, Cp_out), lambda n: (0, 0)),
        ],
        out_specs=pl.BlockSpec((1, H, W, Cp_out), lambda n: (n, 0, 0, 0)),
        scratch_shapes=[
            pltpu.VMEM((H + 2, W + 2 * PADL, Cm), jnp.bfloat16),   # y1 halo
            pltpu.VMEM((H + 2, W + 2 * PADL, Cm), jnp.bfloat16),   # y2 halo
        ],
        compiler_params=pltpu.CompilerParams(
            dimension_semantics=("parallel",),
            vmem_limit_bytes=vmem_limit),
    )(x_nhwc, w1, b1, w2, b2, w3, b3)


# ---------------------------------------------------------------------------
# Parameter prep: fold eval-mode BN scale into weights, pad channels, cast bf16
# ---------------------------------------------------------------------------
def fold_bn(gamma, beta, mean, var, eps=1e-5):
    scale = gamma / jnp.sqrt(var + eps)
    bias = beta - mean * scale
    return scale, bias


def prepare_params(w1_oihw, w2_oihw, w3_oihw, bn1, bn2, bn3):
    inner, cin = w1_oihw.shape[0], w1_oihw.shape[1]
    cout = w3_oihw.shape[0]
    cp_in, cm, cp_out = _round_up(cin, LANE), _round_up(inner, LANE), _round_up(cout, LANE)

    s1, b1 = fold_bn(*bn1)
    s2, b2 = fold_bn(*bn2)
    s3, b3 = fold_bn(*bn3)

    # 1x1: OIHW -> (Cin, inner); 3x3: OIHW -> HWIO -> (9, Cin, Cout) (tap-major kh,kw)
    w1 = jnp.transpose(w1_oihw[:, :, 0, 0], (1, 0)) * s1[None, :]
    w2 = jnp.transpose(w2_oihw, (2, 3, 1, 0)).reshape(9, inner, inner) * s2[None, None, :]
    w3 = jnp.transpose(w3_oihw, (2, 3, 1, 0)).reshape(9, inner, cout) * s3[None, None, :]

    return dict(
        w1=_pad_axis(_pad_axis(w1, 0, cp_in), 1, cm).astype(jnp.bfloat16),
        w2=_pad_axis(_pad_axis(w2, 1, cm), 2, cm).astype(jnp.bfloat16),
        w3=_pad_axis(_pad_axis(w3, 1, cm), 2, cp_out).astype(jnp.bfloat16),
        b1=_pad_axis(b1[None, :], 1, cm).astype(jnp.float32),
        b2=_pad_axis(b2[None, :], 1, cm).astype(jnp.float32),
        b3=_pad_axis(b3[None, :], 1, cp_out).astype(jnp.float32),
    )


# ---------------------------------------------------------------------------
# Pure-JAX f32 reference (lax.conv) for verification
# ---------------------------------------------------------------------------
def reference_forward(x_nhwc, w1_hwio, w2_hwio, w3_hwio, bn1, bn2, bn3):
    dn = ("NHWC", "HWIO", "NHWC")
    s1, b1 = fold_bn(*bn1)
    s2, b2 = fold_bn(*bn2)
    s3, b3 = fold_bn(*bn3)
    y = lax.conv_general_dilated(x_nhwc, w1_hwio, (1, 1), "SAME", dimension_numbers=dn)
    y = jnp.maximum(y * s1 + b1, 0.0)
    y = lax.conv_general_dilated(y, w2_hwio, (1, 1), "SAME", dimension_numbers=dn)
    y = jnp.maximum(y * s2 + b2, 0.0)
    y = lax.conv_general_dilated(y, w3_hwio, (1, 1), "SAME", dimension_numbers=dn)
    y = y * s3 + b3
    return jnp.maximum(y + x_nhwc, 0.0)


if __name__ == "__main__":
    key = jax.random.PRNGKey(0)
    N, Cin, H, W = 2, 16, 16, 16
    inner = 4
    Cout = inner * 4                        # expansion=4; == Cin so identity residual is valid

    keys = jax.random.split(key, 16)

    # Input (NCHW like PyTorch) -> NHWC for the kernel.
    x_nchw = jax.random.normal(keys[0], (N, Cin, H, W), jnp.float32)
    x_nhwc = jnp.transpose(x_nchw, (0, 2, 3, 1))

    # Conv weights in PyTorch OIHW layout.
    w1_oihw = 0.2 * jax.random.normal(keys[1], (inner, Cin, 1, 1), jnp.float32)
    w2_oihw = 0.2 * jax.random.normal(keys[2], (inner, inner, 3, 3), jnp.float32)
    w3_oihw = 0.2 * jax.random.normal(keys[3], (Cout, inner, 3, 3), jnp.float32)

    # BatchNorm (eval mode) params: gamma, beta, running_mean, running_var.
    def bn_params(kg, kb, km, kv, c):
        gamma = 1.0 + 0.1 * jax.random.normal(kg, (c,), jnp.float32)
        beta = 0.1 * jax.random.normal(kb, (c,), jnp.float32)
        mean = 0.1 * jax.random.normal(km, (c,), jnp.float32)
        var = jax.random.uniform(kv, (c,), jnp.float32, 0.5, 1.5)
        return gamma, beta, mean, var

    bn1 = bn_params(keys[4], keys[5], keys[6], keys[7], inner)
    bn2 = bn_params(keys[8], keys[9], keys[10], keys[11], inner)
    bn3 = bn_params(keys[12], keys[13], keys[14], keys[15], Cout)

    params = prepare_params(w1_oihw, w2_oihw, w3_oihw, bn1, bn2, bn3)

    # Channel-pad + bf16-cast the input activations.
    Cp_in = params["w1"].shape[0]
    x_pad = _pad_axis(x_nhwc, 3, Cp_in).astype(jnp.bfloat16)

    out_pad = jax.block_until_ready(bottleneck_forward(x_pad, params))
    out_nhwc = out_pad[..., :Cout].astype(jnp.float32)
    out_nchw = jnp.transpose(out_nhwc, (0, 3, 1, 2))        # back to NCHW

    # f32 reference with unpadded weights.
    w1_hwio = jnp.transpose(w1_oihw, (2, 3, 1, 0))
    w2_hwio = jnp.transpose(w2_oihw, (2, 3, 1, 0))
    w3_hwio = jnp.transpose(w3_oihw, (2, 3, 1, 0))
    ref = reference_forward(x_nhwc, w1_hwio, w2_hwio, w3_hwio, bn1, bn2, bn3)

    abs_err = float(jnp.max(jnp.abs(out_nhwc - ref)))
    rel_err = abs_err / (float(jnp.max(jnp.abs(ref))) + 1e-6)
    assert out_nchw.shape == (N, Cout, H, W)
    assert rel_err < 3e-2, f"mismatch vs reference: abs={abs_err}, rel={rel_err}"

    print("KERNEL_OK")
</pallas_src>

<mosaic_0001>
module attributes {stable_mosaic.version = 11 : i64} {
  func.func @_bottleneck_kernel(%arg0: i32, %arg1: memref<1x16x16x128xbf16, #tpu.memory_space<vmem>>, %arg2: memref<128x128xbf16, #tpu.memory_space<vmem>>, %arg3: memref<1x128xf32, #tpu.memory_space<vmem>>, %arg4: memref<9x128x128xbf16, #tpu.memory_space<vmem>>, %arg5: memref<1x128xf32, #tpu.memory_space<vmem>>, %arg6: memref<9x128x128xbf16, #tpu.memory_space<vmem>>, %arg7: memref<1x128xf32, #tpu.memory_space<vmem>>, %arg8: memref<1x16x16x128xbf16, #tpu.memory_space<vmem>>, %arg9: memref<18x32x128xbf16, #tpu.memory_space<vmem>>, %arg10: memref<18x32x128xbf16, #tpu.memory_space<vmem>>) attributes {dimension_semantics = [#tpu.dimension_semantics<parallel>], iteration_bounds = array<i64: 2>, scalar_prefetch = 0 : i64, scratch_operands = 2 : i64, tpu.core_type = #tpu.core_type<tc>, window_params = [{transform_indices = @transform_0, window_bounds = array<i64: 1, 16, 16, 128>}, {pipeline_mode = #tpu.pipeline_mode<synchronous>, transform_indices = @transform_1, window_bounds = array<i64: 128, 128>}, {pipeline_mode = #tpu.pipeline_mode<synchronous>, transform_indices = @transform_2, window_bounds = array<i64: 1, 128>}, {pipeline_mode = #tpu.pipeline_mode<synchronous>, transform_indices = @transform_3, window_bounds = array<i64: 9, 128, 128>}, {pipeline_mode = #tpu.pipeline_mode<synchronous>, transform_indices = @transform_4, window_bounds = array<i64: 1, 128>}, {pipeline_mode = #tpu.pipeline_mode<synchronous>, transform_indices = @transform_5, window_bounds = array<i64: 9, 128, 128>}, {pipeline_mode = #tpu.pipeline_mode<synchronous>, transform_indices = @transform_6, window_bounds = array<i64: 1, 128>}, {transform_indices = @transform_7, window_bounds = array<i64: 1, 16, 16, 128>}]} {
    %c0 = arith.constant 0 : index
    %c0_0 = arith.constant 0 : index
    %c0_1 = arith.constant 0 : index
    %c0_2 = arith.constant 0 : index
    %0 = vector.load %arg1[%c0, %c0_0, %c0_1, %c0_2] : memref<1x16x16x128xbf16, #tpu.memory_space<vmem>>, vector<1x16x16x128xbf16>
    %1 = vector.shape_cast %0 : vector<1x16x16x128xbf16> to vector<16x16x128xbf16>
    %2 = vector.shape_cast %1 : vector<16x16x128xbf16> to vector<256x128xbf16>
    %c0_3 = arith.constant 0 : index
    %c0_4 = arith.constant 0 : index
    %3 = vector.load %arg2[%c0_3, %c0_4] : memref<128x128xbf16, #tpu.memory_space<vmem>>, vector<128x128xbf16>
    %cst = arith.constant dense<0.000000e+00> : vector<256x128xf32>
    %4 = tpu.matmul %2, %3, %cst {dimension_numbers = #tpu.dot_dimension_numbers<[1], [0], [0], [1], [0, 0, 1, 1], [], []>} : vector<256x128xbf16>, vector<128x128xbf16>, vector<256x128xf32> -> vector<256x128xf32>
    %c0_5 = arith.constant 0 : index
    %c0_6 = arith.constant 0 : index
    %5 = vector.load %arg3[%c0_5, %c0_6] : memref<1x128xf32, #tpu.memory_space<vmem>>, vector<1x128xf32>
    %6 = vector.broadcast %5 : vector<1x128xf32> to vector<256x128xf32>
    %7 = arith.addf %4, %6 : vector<256x128xf32>
    %cst_7 = arith.constant 0.000000e+00 : f32
    %8 = vector.broadcast %cst_7 : f32 to vector<256x128xf32>
    %9 = arith.maximumf %7, %8 : vector<256x128xf32>
    %cst_8 = arith.constant 0.000000e+00 : bf16
    %10 = vector.broadcast %cst_8 : bf16 to vector<1x32x128xbf16>
    %cst_9 = arith.constant 0.000000e+00 : bf16
    %11 = vector.broadcast %cst_9 : bf16 to vector<16x1x128xbf16>
    %c0_10 = arith.constant 0 : index
    %c0_11 = arith.constant 0 : index
    %c0_12 = arith.constant 0 : index
    %12 = vector.load %arg9[%c0_10, %c0_11, %c0_12] : memref<18x32x128xbf16, #tpu.memory_space<vmem>>, vector<1x32x128xbf16>
    tpu.vector_store %arg9[%c0_10, %c0_11, %c0_12], %10 {strides = array<i32>} : memref<18x32x128xbf16, #tpu.memory_space<vmem>>, vector<1x32x128xbf16>,
    %c17 = arith.constant 17 : index
    %c0_13 = arith.constant 0 : index
    %c0_14 = arith.constant 0 : index
    %13 = vector.load %arg9[%c17, %c0_13, %c0_14] : memref<18x32x128xbf16, #tpu.memory_space<vmem>>, vector<1x32x128xbf16>
    tpu.vector_store %arg9[%c17, %c0_13, %c0_14], %10 {strides = array<i32>} : memref<18x32x128xbf16, #tpu.memory_space<vmem>>, vector<1x32x128xbf16>,
    %c1 = arith.constant 1 : index
    %c7 = arith.constant 7 : index
    %c0_15 = arith.constant 0 : index
    %14 = vector.load %arg9[%c1, %c7, %c0_15] : memref<18x32x128xbf16, #tpu.memory_space<vmem>>, vector<16x1x128xbf16>
    tpu.vector_store %arg9[%c1, %c7, %c0_15], %11 {strides = array<i32>} : memref<18x32x128xbf16, #tpu.memory_space<vmem>>, vector<16x1x128xbf16>,
    %c1_16 = arith.constant 1 : index
    %c24 = arith.constant 24 : index
    %c0_17 = arith.constant 0 : index
    %15 = vector.load %arg9[%c1_16, %c24, %c0_17] : memref<18x32x128xbf16, #tpu.memory_space<vmem>>, vector<16x1x128xbf16>
    tpu.vector_store %arg9[%c1_16, %c24, %c0_17], %11 {strides = array<i32>} : memref<18x32x128xbf16, #tpu.memory_space<vmem>>, vector<16x1x128xbf16>,
    %16 = arith.truncf %9 : vector<256x128xf32> to vector<256x128xbf16>
    %17 = vector.shape_cast %16 : vector<256x128xbf16> to vector<16x16x128xbf16>
    %c1_18 = arith.constant 1 : index
    %c8 = arith.constant 8 : index
    %c0_19 = arith.constant 0 : index
    %18 = vector.load %arg9[%c1_18, %c8, %c0_19] : memref<18x32x128xbf16, #tpu.memory_space<vmem>>, vector<16x16x128xbf16>
    tpu.vector_store %arg9[%c1_18, %c8, %c0_19], %17 {strides = array<i32>} : memref<18x32x128xbf16, #tpu.memory_space<vmem>>, vector<16x16x128xbf16>,
    %c0_20 = arith.constant 0 : index
    %c7_21 = arith.constant 7 : index
    %c0_22 = arith.constant 0 : index
    %19 = vector.load %arg9[%c0_20, %c7_21, %c0_22] : memref<18x32x128xbf16, #tpu.memory_space<vmem>>, vector<16x16x128xbf16>
    %20 = vector.shape_cast %19 : vector<16x16x128xbf16> to vector<256x128xbf16>
    %c0_23 = arith.constant 0 : index
    %c0_24 = arith.constant 0 : index
    %c0_25 = arith.constant 0 : index
    %21 = vector.load %arg4[%c0_23, %c0_24, %c0_25] : memref<9x128x128xbf16, #tpu.memory_space<vmem>>, vector<1x128x128xbf16>
    %22 = vector.shape_cast %21 : vector<1x128x128xbf16> to vector<128x128xbf16>
    %cst_26 = arith.constant dense<0.000000e+00> : vector<256x128xf32>
    %23 = tpu.matmul %20, %22, %cst_26 {dimension_numbers = #tpu.dot_dimension_numbers<[1], [0], [0], [1], [0, 0, 1, 1], [], []>} : vector<256x128xbf16>, vector<128x128xbf16>, vector<256x128xf32> -> vector<256x128xf32>
    %c0_27 = arith.constant 0 : index
    %c8_28 = arith.constant 8 : index
    %c0_29 = arith.constant 0 : index
    %24 = vector.load %arg9[%c0_27, %c8_28, %c0_29] : memref<18x32x128xbf16, #tpu.memory_space<vmem>>, vector<16x16x128xbf16>
    %25 = vector.shape_cast %24 : vector<16x16x128xbf16> to vector<256x128xbf16>
    %c1_30 = arith.constant 1 : index
    %c0_31 = arith.constant 0 : index
    %c0_32 = arith.constant 0 : index
    %26 = vector.load %arg4[%c1_30, %c0_31, %c0_32] : memref<9x128x128xbf16, #tpu.memory_space<vmem>>, vector<1x128x128xbf16>
    %27 = vector.shape_cast %26 : vector<1x128x128xbf16> to vector<128x128xbf16>
    %cst_33 = arith.constant dense<0.000000e+00> : vector<256x128xf32>
    %28 = tpu.matmul %25, %27, %cst_33 {dimension_numbers = #tpu.dot_dimension_numbers<[1], [0], [0], [1], [0, 0, 1, 1], [], []>} : vector<256x128xbf16>, vector<128x128xbf16>, vector<256x128xf32> -> vector<256x128xf32>
    %29 = arith.addf %23, %28 : vector<256x128xf32>
    %c0_34 = arith.constant 0 : index
    %c9 = arith.constant 9 : index
    %c0_35 = arith.constant 0 : index
    %30 = vector.load %arg9[%c0_34, %c9, %c0_35] : memref<18x32x128xbf16, #tpu.memory_space<vmem>>, vector<16x16x128xbf16>
    %31 = vector.shape_cast %30 : vector<16x16x128xbf16> to vector<256x128xbf16>
    %c2 = arith.constant 2 : index
    %c0_36 = arith.constant 0 : index
    %c0_37 = arith.constant 0 : index
    %32 = vector.load %arg4[%c2, %c0_36, %c0_37] : memref<9x128x128xbf16, #tpu.memory_space<vmem>>, vector<1x128x128xbf16>
    %33 = vector.shape_cast %32 : vector<1x128x128xbf16> to vector<128x128xbf16>
    %cst_38 = arith.constant dense<0.000000e+00> : vector<256x128xf32>
    %34 = tpu.matmul %31, %33, %cst_38 {dimension_numbers = #tpu.dot_dimension_numbers<[1], [0], [0], [1], [0, 0, 1, 1], [], []>} : vector<256x128xbf16>, vector<128x128xbf16>, vector<256x128xf32> -> vector<256x128xf32>
    %35 = arith.addf %29, %34 : vector<256x128xf32>
    %c1_39 = arith.constant 1 : index
    %c7_40 = arith.constant 7 : index
    %c0_41 = arith.constant 0 : index
    %36 = vector.load %arg9[%c1_39, %c7_40, %c0_41] : memref<18x32x128xbf16, #tpu.memory_space<vmem>>, vector<16x16x128xbf16>
    %37 = vector.shape_cast %36 : vector<16x16x128xbf16> to vector<256x128xbf16>
    %c3 = arith.constant 3 : index
    %c0_42 = arith.constant 0 : index
    %c0_43 = arith.constant 0 : index
    %38 = vector.load %arg4[%c3, %c0_42, %c0_43] : memref<9x128x128xbf16, #tpu.memory_space<vmem>>, vector<1x128x128xbf16>
    %39 = vector.shape_cast %38 : vector<1x128x128xbf16> to vector<128x128xbf16>
    %cst_44 = arith.constant dense<0.000000e+00> : vector<256x128xf32>
    %40 = tpu.matmul %37, %39, %cst_44 {dimension_numbers = #tpu.dot_dimension_numbers<[1], [0], [0], [1], [0, 0, 1, 1], [], []>} : vector<256x128xbf16>, vector<128x128xbf16>, vector<256x128xf32> -> vector<256x128xf32>
    %41 = arith.addf %35, %40 : vector<256x128xf32>
    %c1_45 = arith.constant 1 : index
    %c8_46 = arith.constant 8 : index
    %c0_47 = arith.constant 0 : index
    %42 = vector.load %arg9[%c1_45, %c8_46, %c0_47] : memref<18x32x128xbf16, #tpu.memory_space<vmem>>, vector<16x16x128xbf16>
    %43 = vector.shape_cast %42 : vector<16x16x128xbf16> to vector<256x128xbf16>
    %c4 = arith.constant 4 : index
    %c0_48 = arith.constant 0 : index
    %c0_49 = arith.constant 0 : index
    %44 = vector.load %arg4[%c4, %c0_48, %c0_49] : memref<9x128x128xbf16, #tpu.memory_space<vmem>>, vector<1x128x128xbf16>
    %45 = vector.shape_cast %44 : vector<1x128x128xbf16> to vector<128x128xbf16>
    %cst_50 = arith.constant dense<0.000000e+00> : vector<256x128xf32>
    %46 = tpu.matmul %43, %45, %cst_50 {dimension_numbers = #tpu.dot_dimension_numbers<[1], [0], [0], [1], [0, 0, 1, 1], [], []>} : vector<256x128xbf16>, vector<128x128xbf16>, vector<256x128xf32> -> vector<256x128xf32>
    %47 = arith.addf %41, %46 : vector<256x128xf32>
    %c1_51 = arith.constant 1 : index
    %c9_52 = arith.constant 9 : index
    %c0_53 = arith.constant 0 : index
    %48 = vector.load %arg9[%c1_51, %c9_52, %c0_53] : memref<18x32x128xbf16, #tpu.memory_space<vmem>>, vector<16x16x128xbf16>
    %49 = vector.shape_cast %48 : vector<16x16x128xbf16> to vector<256x128xbf16>
    %c5 = arith.constant 5 : index
    %c0_54 = arith.constant 0 : index
    %c0_55 = arith.constant 0 : index
    %50 = vector.load %arg4[%c5, %c0_54, %c0_55] : memref<9x128x128xbf16, #tpu.memory_space<vmem>>, vector<1x128x128xbf16>
    %51 = vector.shape_cast %50 : vector<1x128x128xbf16> to vector<128x128xbf16>
    %cst_56 = arith.constant dense<0.000000e+00> : vector<256x128xf32>
    %52 = tpu.matmul %49, %51, %cst_56 {dimension_numbers = #tpu.dot_dimension_numbers<[1], [0], [0], [1], [0, 0, 1, 1], [], []>} : vector<256x128xbf16>, vector<128x128xbf16>, vector<256x128xf32> -> vector<256x128xf32>
    %53 = arith.addf %47, %52 : vector<256x128xf32>
    %c2_57 = arith.constant 2 : index
    %c7_58 = arith.constant 7 : index
    %c0_59 = arith.constant 0 : index
    %54 = vector.load %arg9[%c2_57, %c7_58, %c0_59] : memref<18x32x128xbf16, #tpu.memory_space<vmem>>, vector<16x16x128xbf16>
    %55 = vector.shape_cast %54 : vector<16x16x128xbf16> to vector<256x128xbf16>
    %c6 = arith.constant 6 : index
    %c0_60 = arith.constant 0 : index
    %c0_61 = arith.constant 0 : index
    %56 = vector.load %arg4[%c6, %c0_60, %c0_61] : memref<9x128x128xbf16, #tpu.memory_space<vmem>>, vector<1x128x128xbf16>
    %57 = vector.shape_cast %56 : vector<1x128x128xbf16> to vector<128x128xbf16>
    %cst_62 = arith.constant dense<0.000000e+00> : vector<256x128xf32>
    %58 = tpu.matmul %55, %57, %cst_62 {dimension_numbers = #tpu.dot_dimension_numbers<[1], [0], [0], [1], [0, 0, 1, 1], [], []>} : vector<256x128xbf16>, vector<128x128xbf16>, vector<256x128xf32> -> vector<256x128xf32>
    %59 = arith.addf %53, %58 : vector<256x128xf32>
    %c2_63 = arith.constant 2 : index
    %c8_64 = arith.constant 8 : index
    %c0_65 = arith.constant 0 : index
    %60 = vector.load %arg9[%c2_63, %c8_64, %c0_65] : memref<18x32x128xbf16, #tpu.memory_space<vmem>>, vector<16x16x128xbf16>
    %61 = vector.shape_cast %60 : vector<16x16x128xbf16> to vector<256x128xbf16>
    %c7_66 = arith.constant 7 : index
    %c0_67 = arith.constant 0 : index
    %c0_68 = arith.constant 0 : index
    %62 = vector.load %arg4[%c7_66, %c0_67, %c0_68] : memref<9x128x128xbf16, #tpu.memory_space<vmem>>, vector<1x128x128xbf16>
    %63 = vector.shape_cast %62 : vector<1x128x128xbf16> to vector<128x128xbf16>
    %cst_69 = arith.constant dense<0.000000e+00> : vector<256x128xf32>
    %64 = tpu.matmul %61, %63, %cst_69 {dimension_numbers = #tpu.dot_dimension_numbers<[1], [0], [0], [1], [0, 0, 1, 1], [], []>} : vector<256x128xbf16>, vector<128x128xbf16>, vector<256x128xf32> -> vector<256x128xf32>
    %65 = arith.addf %59, %64 : vector<256x128xf32>
    %c2_70 = arith.constant 2 : index
    %c9_71 = arith.constant 9 : index
    %c0_72 = arith.constant 0 : index
    %66 = vector.load %arg9[%c2_70, %c9_71, %c0_72] : memref<18x32x128xbf16, #tpu.memory_space<vmem>>, vector<16x16x128xbf16>
    %67 = vector.shape_cast %66 : vector<16x16x128xbf16> to vector<256x128xbf16>
    %c8_73 = arith.constant 8 : index
    %c0_74 = arith.constant 0 : index
    %c0_75 = arith.constant 0 : index
    %68 = vector.load %arg4[%c8_73, %c0_74, %c0_75] : memref<9x128x128xbf16, #tpu.memory_space<vmem>>, vector<1x128x128xbf16>
    %69 = vector.shape_cast %68 : vector<1x128x128xbf16> to vector<128x128xbf16>
    %cst_76 = arith.constant dense<0.000000e+00> : vector<256x128xf32>
    %70 = tpu.matmul %67, %69, %cst_76 {dimension_numbers = #tpu.dot_dimension_numbers<[1], [0], [0], [1], [0, 0, 1, 1], [], []>} : vector<256x128xbf16>, vector<128x128xbf16>, vector<256x128xf32> -> vector<256x128xf32>
    %71 = arith.addf %65, %70 : vector<256x128xf32>
    %c0_77 = arith.constant 0 : index
    %c0_78 = arith.constant 0 : index
    %72 = vector.load %arg5[%c0_77, %c0_78] : memref<1x128xf32, #tpu.memory_space<vmem>>, vector<1x128xf32>
    %73 = vector.broadcast %72 : vector<1x128xf32> to vector<256x128xf32>
    %74 = arith.addf %71, %73 : vector<256x128xf32>
    %cst_79 = arith.constant 0.000000e+00 : f32
    %75 = vector.broadcast %cst_79 : f32 to vector<256x128xf32>
    %76 = arith.maximumf %74, %75 : vector<256x128xf32>
    %cst_80 = arith.constant 0.000000e+00 : bf16
    %77 = vector.broadcast %cst_80 : bf16 to vector<1x32x128xbf16>
    %cst_81 = arith.constant 0.000000e+00 : bf16
    %78 = vector.broadcast %cst_81 : bf16 to vector<16x1x128xbf16>
    %c0_82 = arith.constant 0 : index
    %c0_83 = arith.constant 0 : index
    %c0_84 = arith.constant 0 : index
    %79 = vector.load %arg10[%c0_82, %c0_83, %c0_84] : memref<18x32x128xbf16, #tpu.memory_space<vmem>>, vector<1x32x128xbf16>
    tpu.vector_store %arg10[%c0_82, %c0_83, %c0_84], %77 {strides = array<i32>} : memref<18x32x128xbf16, #tpu.memory_space<vmem>>, vector<1x32x128xbf16>,
    %c17_85 = arith.constant 17 : index
    %c0_86 = arith.constant 0 : index
    %c0_87 = arith.constant 0 : index
    %80 = vector.load %arg10[%c17_85, %c0_86, %c0_87] : memref<18x32x128xbf16, #tpu.memory_space<vmem>>, vector<1x32x128xbf16>
    tpu.vector_store %arg10[%c17_85, %c0_86, %c0_87], %77 {strides = array<i32>} : memref<18x32x128xbf16, #tpu.memory_space<vmem>>, vector<1x32x128xbf16>,
    %c1_88 = arith.constant 1 : index
    %c7_89 = arith.constant 7 : index
    %c0_90 = arith.constant 0 : index
    %81 = vector.load %arg10[%c1_88, %c7_89, %c0_90] : memref<18x32x128xbf16, #tpu.memory_space<vmem>>, vector<16x1x128xbf16>
    tpu.vector_store %arg10[%c1_88, %c7_89, %c0_90], %78 {strides = array<i32>} : memref<18x32x128xbf16, #tpu.memory_space<vmem>>, vector<16x1x128xbf16>,
    %c1_91 = arith.constant 1 : index
    %c24_92 = arith.constant 24 : index
    %c0_93 = arith.constant 0 : index
    %82 = vector.load %arg10[%c1_91, %c24_92, %c0_93] : memref<18x32x128xbf16, #tpu.memory_space<vmem>>, vector<16x1x128xbf16>
    tpu.vector_store %arg10[%c1_91, %c24_92, %c0_93], %78 {strides = array<i32>} : memref<18x32x128xbf16, #tpu.memory_space<vmem>>, vector<16x1x128xbf16>,
    %83 = arith.truncf %76 : vector<256x128xf32> to vector<256x128xbf16>
    %84 = vector.shape_cast %83 : vector<256x128xbf16> to vector<16x16x128xbf16>
    %c1_94 = arith.constant 1 : index
    %c8_95 = arith.constant 8 : index
    %c0_96 = arith.constant 0 : index
    %85 = vector.load %arg10[%c1_94, %c8_95, %c0_96] : memref<18x32x128xbf16, #tpu.memory_space<vmem>>, vector<16x16x128xbf16>
    tpu.vector_store %arg10[%c1_94, %c8_95, %c0_96], %84 {strides = array<i32>} : memref<18x32x128xbf16, #tpu.memory_space<vmem>>, vector<16x16x128xbf16>,
    %c0_97 = arith.constant 0 : index
    %c7_98 = arith.constant 7 : index
    %c0_99 = arith.constant 0 : index
    %86 = vector.load %arg10[%c0_97, %c7_98, %c0_99] : memref<18x32x128xbf16, #tpu.memory_space<vmem>>, vector<16x16x128xbf16>
    %87 = vector.shape_cast %86 : vector<16x16x128xbf16> to vector<256x128xbf16>
    %c0_100 = arith.constant 0 : index
    %c0_101 = arith.constant 0 : index
    %c0_102 = arith.constant 0 : index
    %88 = vector.load %arg6[%c0_100, %c0_101, %c0_102] : memref<9x128x128xbf16, #tpu.memory_space<vmem>>, vector<1x128x128xbf16>
    %89 = vector.shape_cast %88 : vector<1x128x128xbf16> to vector<128x128xbf16>
    %cst_103 = arith.constant dense<0.000000e+00> : vector<256x128xf32>
    %90 = tpu.matmul %87, %89, %cst_103 {dimension_numbers = #tpu.dot_dimension_numbers<[1], [0], [0], [1], [0, 0, 1, 1], [], []>} : vector<256x128xbf16>, vector<128x128xbf16>, vector<256x128xf32> -> vector<256x128xf32>
    %c0_104 = arith.constant 0 : index
    %c8_105 = arith.constant 8 : index
    %c0_106 = arith.constant 0 : index
    %91 = vector.load %arg10[%c0_104, %c8_105, %c0_106] : memref<18x32x128xbf16, #tpu.memory_space<vmem>>, vector<16x16x128xbf16>
    %92 = vector.shape_cast %91 : vector<16x16x128xbf16> to vector<256x128xbf16>
    %c1_107 = arith.constant 1 : index
    %c0_108 = arith.constant 0 : index
    %c0_109 = arith.constant 0 : index
    %93 = vector.load %arg6[%c1_107, %c0_108, %c0_109] : memref<9x128x128xbf16, #tpu.memory_space<vmem>>, vector<1x128x128xbf16>
    %94 = vector.shape_cast %93 : vector<1x128x128xbf16> to vector<128x128xbf16>
    %cst_110 = arith.constant dense<0.000000e+00> : vector<256x128xf32>
    %95 = tpu.matmul %92, %94, %cst_110 {dimension_numbers = #tpu.dot_dimension_numbers<[1], [0], [0], [1], [0, 0, 1, 1], [], []>} : vector<256x128xbf16>, vector<128x128xbf16>, vector<256x128xf32> -> vector<256x128xf32>
    %96 = arith.addf %90, %95 : vector<256x128xf32>
    %c0_111 = arith.constant 0 : index
    %c9_112 = arith.constant 9 : index
    %c0_113 = arith.constant 0 : index
    %97 = vector.load %arg10[%c0_111, %c9_112, %c0_113] : memref<18x32x128xbf16, #tpu.memory_space<vmem>>, vector<16x16x128xbf16>
    %98 = vector.shape_cast %97 : vector<16x16x128xbf16> to vector<256x128xbf16>
    %c2_114 = arith.constant 2 : index
    %c0_115 = arith.constant 0 : index
    %c0_116 = arith.constant 0 : index
    %99 = vector.load %arg6[%c2_114, %c0_115, %c0_116] : memref<9x128x128xbf16, #tpu.memory_space<vmem>>, vector<1x128x128xbf16>
    %100 = vector.shape_cast %99 : vector<1x128x128xbf16> to vector<128x128xbf16>
    %cst_117 = arith.constant dense<0.000000e+00> : vector<256x128xf32>
    %101 = tpu.matmul %98, %100, %cst_117 {dimension_numbers = #tpu.dot_dimension_numbers<[1], [0], [0], [1], [0, 0, 1, 1], [], []>} : vector<256x128xbf16>, vector<128x128xbf16>, vector<256x128xf32> -> vector<256x128xf32>
    %102 = arith.addf %96, %101 : vector<256x128xf32>
    %c1_118 = arith.constant 1 : index
    %c7_119 = arith.constant 7 : index
    %c0_120 = arith.constant 0 : index
    %103 = vector.load %arg10[%c1_118, %c7_119, %c0_120] : memref<18x32x128xbf16, #tpu.memory_space<vmem>>, vector<16x16x128xbf16>
    %104 = vector.shape_cast %103 : vector<16x16x128xbf16> to vector<256x128xbf16>
    %c3_121 = arith.constant 3 : index
    %c0_122 = arith.constant 0 : index
    %c0_123 = arith.constant 0 : index
    %105 = vector.load %arg6[%c3_121, %c0_122, %c0_123] : memref<9x128x128xbf16, #tpu.memory_space<vmem>>, vector<1x128x128xbf16>
    %106 = vector.shape_cast %105 : vector<1x128x128xbf16> to vector<128x128xbf16>
    %cst_124 = arith.constant dense<0.000000e+00> : vector<256x128xf32>
    %107 = tpu.matmul %104, %106, %cst_124 {dimension_numbers = #tpu.dot_dimension_numbers<[1], [0], [0], [1], [0, 0, 1, 1], [], []>} : vector<256x128xbf16>, vector<128x128xbf16>, vector<256x128xf32> -> vector<256x128xf32>
    %108 = arith.addf %102, %107 : vector<256x128xf32>
    %c1_125 = arith.constant 1 : index
    %c8_126 = arith.constant 8 : index
    %c0_127 = arith.constant 0 : index
    %109 = vector.load %arg10[%c1_125, %c8_126, %c0_127] : memref<18x32x128xbf16, #tpu.memory_space<vmem>>, vector<16x16x128xbf16>
    %110 = vector.shape_cast %109 : vector<16x16x128xbf16> to vector<256x128xbf16>
    %c4_128 = arith.constant 4 : index
    %c0_129 = arith.constant 0 : index
    %c0_130 = arith.constant 0 : index
    %111 = vector.load %arg6[%c4_128, %c0_129, %c0_130] : memref<9x128x128xbf16, #tpu.memory_space<vmem>>, vector<1x128x128xbf16>
    %112 = vector.shape_cast %111 : vector<1x128x128xbf16> to vector<128x128xbf16>
    %cst_131 = arith.constant dense<0.000000e+00> : vector<256x128xf32>
    %113 = tpu.matmul %110, %112, %cst_131 {dimension_numbers = #tpu.dot_dimension_numbers<[1], [0], [0], [1], [0, 0, 1, 1], [], []>} : vector<256x128xbf16>, vector<128x128xbf16>, vector<256x128xf32> -> vector<256x128xf32>
    %114 = arith.addf %108, %113 : vector<256x128xf32>
    %c1_132 = arith.constant 1 : index
    %c9_133 = arith.constant 9 : index
    %c0_134 = arith.constant 0 : index
    %115 = vector.load %arg10[%c1_132, %c9_133, %c0_134] : memref<18x32x128xbf16, #tpu.memory_space<vmem>>, vector<16x16x128xbf16>
    %116 = vector.shape_cast %115 : vector<16x16x128xbf16> to vector<256x128xbf16>
    %c5_135 = arith.constant 5 : index
    %c0_136 = arith.constant 0 : index
    %c0_137 = arith.constant 0 : index
    %117 = vector.load %arg6[%c5_135, %c0_136, %c0_137] : memref<9x128x128xbf16, #tpu.memory_space<vmem>>, vector<1x128x128xbf16>
    %118 = vector.shape_cast %117 : vector<1x128x128xbf16> to vector<128x128xbf16>
    %cst_138 = arith.constant dense<0.000000e+00> : vector<256x128xf32>
    %119 = tpu.matmul %116, %118, %cst_138 {dimension_numbers = #tpu.dot_dimension_numbers<[1], [0], [0], [1], [0, 0, 1, 1], [], []>} : vector<256x128xbf16>, vector<128x128xbf16>, vector<256x128xf32> -> vector<256x128xf32>
    %120 = arith.addf %114, %119 : vector<256x128xf32>
    %c2_139 = arith.constant 2 : index
    %c7_140 = arith.constant 7 : index
    %c0_141 = arith.constant 0 : index
    %121 = vector.load %arg10[%c2_139, %c7_140, %c0_141] : memref<18x32x128xbf16, #tpu.memory_space<vmem>>, vector<16x16x128xbf16>
    %122 = vector.shape_cast %121 : vector<16x16x128xbf16> to vector<256x128xbf16>
    %c6_142 = arith.constant 6 : index
    %c0_143 = arith.constant 0 : index
    %c0_144 = arith.constant 0 : index
    %123 = vector.load %arg6[%c6_142, %c0_143, %c0_144] : memref<9x128x128xbf16, #tpu.memory_space<vmem>>, vector<1x128x128xbf16>
    %124 = vector.shape_cast %123 : vector<1x128x128xbf16> to vector<128x128xbf16>
    %cst_145 = arith.constant dense<0.000000e+00> : vector<256x128xf32>
    %125 = tpu.matmul %122, %124, %cst_145 {dimension_numbers = #tpu.dot_dimension_numbers<[1], [0], [0], [1], [0, 0, 1, 1], [], []>} : vector<256x128xbf16>, vector<128x128xbf16>, vector<256x128xf32> -> vector<256x128xf32>
    %126 = arith.addf %120, %125 : vector<256x128xf32>
    %c2_146 = arith.constant 2 : index
    %c8_147 = arith.constant 8 : index
    %c0_148 = arith.constant 0 : index
    %127 = vector.load %arg10[%c2_146, %c8_147, %c0_148] : memref<18x32x128xbf16, #tpu.memory_space<vmem>>, vector<16x16x128xbf16>
    %128 = vector.shape_cast %127 : vector<16x16x128xbf16> to vector<256x128xbf16>
    %c7_149 = arith.constant 7 : index
    %c0_150 = arith.constant 0 : index
    %c0_151 = arith.constant 0 : index
    %129 = vector.load %arg6[%c7_149, %c0_150, %c0_151] : memref<9x128x128xbf16, #tpu.memory_space<vmem>>, vector<1x128x128xbf16>
    %130 = vector.shape_cast %129 : vector<1x128x128xbf16> to vector<128x128xbf16>
    %cst_152 = arith.constant dense<0.000000e+00> : vector<256x128xf32>
    %131 = tpu.matmul %128, %130, %cst_152 {dimension_numbers = #tpu.dot_dimension_numbers<[1], [0], [0], [1], [0, 0, 1, 1], [], []>} : vector<256x128xbf16>, vector<128x128xbf16>, vector<256x128xf32> -> vector<256x128xf32>
    %132 = arith.addf %126, %131 : vector<256x128xf32>
    %c2_153 = arith.constant 2 : index
    %c9_154 = arith.constant 9 : index
    %c0_155 = arith.constant 0 : index
    %133 = vector.load %arg10[%c2_153, %c9_154, %c0_155] : memref<18x32x128xbf16, #tpu.memory_space<vmem>>, vector<16x16x128xbf16>
    %134 = vector.shape_cast %133 : vector<16x16x128xbf16> to vector<256x128xbf16>
    %c8_156 = arith.constant 8 : index
    %c0_157 = arith.constant 0 : index
    %c0_158 = arith.constant 0 : index
    %135 = vector.load %arg6[%c8_156, %c0_157, %c0_158] : memref<9x128x128xbf16, #tpu.memory_space<vmem>>, vector<1x128x128xbf16>
    %136 = vector.shape_cast %135 : vector<1x128x128xbf16> to vector<128x128xbf16>
    %cst_159 = arith.constant dense<0.000000e+00> : vector<256x128xf32>
    %137 = tpu.matmul %134, %136, %cst_159 {dimension_numbers = #tpu.dot_dimension_numbers<[1], [0], [0], [1], [0, 0, 1, 1], [], []>} : vector<256x128xbf16>, vector<128x128xbf16>, vector<256x128xf32> -> vector<256x128xf32>
    %138 = arith.addf %132, %137 : vector<256x128xf32>
    %c0_160 = arith.constant 0 : index
    %c0_161 = arith.constant 0 : index
    %139 = vector.load %arg7[%c0_160, %c0_161] : memref<1x128xf32, #tpu.memory_space<vmem>>, vector<1x128xf32>
    %140 = vector.broadcast %139 : vector<1x128xf32> to vector<256x128xf32>
    %141 = arith.addf %138, %140 : vector<256x128xf32>
    %142 = arith.extf %2 : vector<256x128xbf16> to vector<256x128xf32>
    %143 = arith.addf %141, %142 : vector<256x128xf32>
    %cst_162 = arith.constant 0.000000e+00 : f32
    %144 = vector.broadcast %cst_162 : f32 to vector<256x128xf32>
    %145 = arith.maximumf %143, %144 : vector<256x128xf32>
    %146 = vector.shape_cast %145 : vector<256x128xf32> to vector<1x16x16x128xf32>
    %147 = arith.truncf %146 : vector<1x16x16x128xf32> to vector<1x16x16x128xbf16>
    %c0_163 = arith.constant 0 : index
    %c0_164 = arith.constant 0 : index
    %c0_165 = arith.constant 0 : index
    %c0_166 = arith.constant 0 : index
    %148 = vector.load %arg8[%c0_163, %c0_164, %c0_165, %c0_166] : memref<1x16x16x128xbf16, #tpu.memory_space<vmem>>, vector<1x16x16x128xbf16>
    tpu.vector_store %arg8[%c0_163, %c0_164, %c0_165, %c0_166], %147 {strides = array<i32>} : memref<1x16x16x128xbf16, #tpu.memory_space<vmem>>, vector<1x16x16x128xbf16>,
    return
  }
  func.func @transform_0(%arg0: i32) -> (i32, i32, i32, i32) {
    %c0_i32 = arith.constant 0 : i32
    %c0_i32_0 = arith.constant 0 : i32
    %c0_i32_1 = arith.constant 0 : i32
    %c0_i32_2 = arith.constant 0 : i32
    return %arg0, %c0_i32, %c0_i32_0, %c0_i32_1 : i32, i32, i32, i32
  }
  func.func @transform_1(%arg0: i32) -> (i32, i32) {
    %c0_i32 = arith.constant 0 : i32
    %c0_i32_0 = arith.constant 0 : i32
    %c0_i32_1 = arith.constant 0 : i32
    return %c0_i32, %c0_i32_0 : i32, i32
  }
  func.func @transform_2(%arg0: i32) -> (i32, i32) {
    %c0_i32 = arith.constant 0 : i32
    %c0_i32_0 = arith.constant 0 : i32
    %c0_i32_1 = arith.constant 0 : i32
    return %c0_i32, %c0_i32_0 : i32, i32
  }
  func.func @transform_3(%arg0: i32) -> (i32, i32, i32) {
    %c0_i32 = arith.constant 0 : i32
    %c0_i32_0 = arith.constant 0 : i32
    %c0_i32_1 = arith.constant 0 : i32
    %c0_i32_2 = arith.constant 0 : i32
    return %c0_i32, %c0_i32_0, %c0_i32_1 : i32, i32, i32
  }
  func.func @transform_4(%arg0: i32) -> (i32, i32) {
    %c0_i32 = arith.constant 0 : i32
    %c0_i32_0 = arith.constant 0 : i32
    %c0_i32_1 = arith.constant 0 : i32
    return %c0_i32, %c0_i32_0 : i32, i32
  }
  func.func @transform_5(%arg0: i32) -> (i32, i32, i32) {
    %c0_i32 = arith.constant 0 : i32
    %c0_i32_0 = arith.constant 0 : i32
    %c0_i32_1 = arith.constant 0 : i32
    %c0_i32_2 = arith.constant 0 : i32
    return %c0_i32, %c0_i32_0, %c0_i32_1 : i32, i32, i32
  }
  func.func @transform_6(%arg0: i32) -> (i32, i32) {
    %c0_i32 = arith.constant 0 : i32
    %c0_i32_0 = arith.constant 0 : i32
    %c0_i32_1 = arith.constant 0 : i32
    return %c0_i32, %c0_i32_0 : i32, i32
  }
  func.func @transform_7(%arg0: i32) -> (i32, i32, i32, i32) {
    %c0_i32 = arith.constant 0 : i32
    %c0_i32_0 = arith.constant 0 : i32
    %c0_i32_1 = arith.constant 0 : i32
    %c0_i32_2 = arith.constant 0 : i32
    return %arg0, %c0_i32, %c0_i32_0, %c0_i32_1 : i32, i32, i32, i32
  }
}

</mosaic_0001>

<llo_original>
// kernel: tpu_custom_call.1
$region0: #{tpu_custom_call.1}
  #allocation0 [shape = 'u32[]', space=smem, size = 0x4, offset = 0x4, fixed_abs, tag = 'smem constant byte address 0x4 - core index']
  #allocation1 [shape = 'u32[144,128]{1,0:T(1,128)}', space=vmem, size = 0x12000, scoped, tag = 'internal scratch']
  #allocation2 [shape = 'bf16[18,32,128]{2,1,0:T(16,128)(2,1)}', space=vmem, size = 0x24000, scoped, tag = 'scratch operand']
  #allocation3 [shape = 'bf16[18,32,128]{2,1,0:T(16,128)(2,1)}', space=vmem, size = 0x24000, scoped, tag = 'scratch operand']
  %s0 = inlined_call_operand.hbm [shape: bf16[2,16,16,128], index: 0, kind: input, shape index: {}]
  %s1 = inlined_call_operand.hbm [shape: bf16[128,128], index: 1, kind: input, shape index: {}]
  %s2 = inlined_call_operand.vmem [shape: f32[1,128], index: 2, kind: input, shape index: {}]
  %s3 = inlined_call_operand.hbm [shape: bf16[9,128,128], index: 3, kind: input, shape index: {}]
  %s4 = inlined_call_operand.vmem [shape: f32[1,128], index: 4, kind: input, shape index: {}]
  %s5 = inlined_call_operand.hbm [shape: bf16[9,128,128], index: 5, kind: input, shape index: {}]
  %s6 = inlined_call_operand.vmem [shape: f32[1,128], index: 6, kind: input, shape index: {}]
  %s7 = inlined_call_operand.hbm [shape: bf16[2,16,16,128], index: 7, kind: output, shape index: {}]
  %s8 = sld [smem:[#allocation0]]
  $region77: #{tpu_custom_call.1} parent=0
    _
  %s10 = ssub.s32 1, %s8
  %s11 = scalar_select 0, %s10, %s8
  $region1: #{tpu_custom_call.1} parent=0
    #allocation4 [shape = 'u8[131072]{0}', space=vmem, size = 0x20000, scoped, tag = 'input window, operand 0']
    #allocation5 [shape = 's32[2]{0}', space=sflag, size = 0x8, scoped, tag = 'scoped memory for tpu_custom_call.1']
    #allocation6 [shape = 's32[2]{0}', space=sflag, size = 0x8, scoped, tag = 'scoped memory for tpu_custom_call.1']
    #allocation7 [shape = 'u8[32768]{0}', space=vmem, size = 0x8000, scoped, tag = 'input window, operand 1, single buffered']
    #allocation8 [shape = 's32[1]{0}', space=sflag, size = 0x4, scoped, tag = 'scoped memory for tpu_custom_call.1']
    #allocation9 [shape = 'u8[294912]{0}', space=vmem, size = 0x48000, scoped, tag = 'input window, operand 3, single buffered']
    #allocation10 [shape = 'u8[294912]{0}', space=vmem, size = 0x48000, scoped, tag = 'input window, operand 5, single buffered']
    #allocation11 [shape = 's32[1]{0}', space=sflag, size = 0x4, scoped, tag = 'scoped memory for tpu_custom_call.1']
    #allocation12 [shape = 'u8[131072]{0}', space=vmem, size = 0x20000, scoped, tag = 'output window, operand 0']
    %12 = vsyncpa [#allocation5], 0
    %s13 = scalar_lea.sflag [#allocation5], 1
    %14 = vsyncpa %s13, 0
    %15 = vsyncpa [#allocation8], 0
    %16 = vsyncpa [#allocation11], 0
    %17 = vsyncpa [#allocation6], 0
    %s18 = scalar_lea.sflag [#allocation6], 1
    %19 = vsyncpa %s18, 0
    loop: start=0, step=1, limit=4
    $region2: #{tpu_custom_call.1} parent=1 // loop_pre_header
      _
    $region3: #{tpu_custom_call.1} parent=1 // loop_header
      %s21 = sphi 0, %s25
      %p22 = scmp.ge.s32.totalorder %s21, 4
      %s31 = sphi 0, %s33
      %s34 = sphi 0, %s31
      %s35 = sphi 0, %s34
      %s51 = sphi 0, %s35
      %s55 = sphi 0, %s55
      %s57 = sphi 0, %s55
      %s58 = sphi 0, %s57
      %s72 = sphi 0, %s58
      %s76 = sphi 0, %s76
      %s78 = sphi 0, %s76
      %s79 = sphi 0, %s78
      %s93 = sphi 0, %s79
      %s97 = sphi 0, %s97
      %s99 = sphi 0, %s97
      %s100 = sphi 0, %s99
      %s114 = sphi 0, %s100
      %s118 = sphi 0, %s118
      %s120 = sphi 0, %s118
      %s121 = sphi 0, %s120
      %s135 = sphi 0, %s121
      %s139 = sphi 0, %s139
      %s141 = sphi 0, %s139
      %s142 = sphi 0, %s141
      %s156 = sphi 0, %s142
      %s160 = sphi 0, %s160
      %s162 = sphi 0, %s160
      %s163 = sphi 0, %s162
      %s177 = sphi 0, %s163
      %s183 = sphi 0, %s185
      %s186 = sphi 0, %s183
      %s187 = sphi 0, %s186
      %s203 = sphi 0, %s187
    $region4: #{tpu_custom_call.1} parent=1 // loop_header_branch
      %24 = sbr.rel (%p22) target = $region8
    $region5: #{tpu_custom_call.1} parent=1 // loop_body
      %s26 = ssub.s32 %s21, 1
      %s27 = ssub.s32 %s21, 2
      %s28 = sadd.s32 %s21, 1
      %s29 = ssub.s32 %s21, %s28
      %p30 = scmp.eq.s32.totalorder %s29, 0
      %s32 = sadd.s32 %s31, 1
      %s33 = scalar_select %p30, %s31, %s32
      %p36 = pneg %p30
      %p37 = scmp.eq.s32.totalorder %s21, 1
      %p38 = por %p36, %p37
      %p39 = scmp.ne.s32.totalorder %s31, %s34
      %p40 = scmp.eq.s32.totalorder %s21, 0
      %p41 = por %p39, %p40
      %p42 = scmp.ne.s32.totalorder %s31, %s34
      %p43 = scmp.eq.s32.totalorder %s26, 1
      %p44 = por %p42, %p43
      %p45 = scmp.ne.s32.totalorder %s34, %s35
      %p46 = scmp.eq.s32.totalorder %s26, 0
      %p47 = por %p45, %p46
      %p48 = scmp.ne.s32.totalorder %s34, %s35
      %p49 = scmp.eq.s32.totalorder %s27, 1
      %p50 = por %p48, %p49
      %p52 = scmp.ne.s32.totalorder %s35, %s51
      %p53 = scmp.eq.s32.totalorder %s27, 0
      %p54 = por %p52, %p53
      %s56 = sadd.s32 %s55, 1
      %p59 = scmp.eq.s32.totalorder %s21, 1
      %p60 = scmp.ne.s32.totalorder %s55, %s57
      %p61 = scmp.eq.s32.totalorder %s21, 0
      %p62 = por %p60, %p61
      %p63 = scmp.ne.s32.totalorder %s55, %s57
      %p64 = scmp.eq.s32.totalorder %s26, 1
      %p65 = por %p63, %p64
      %p66 = scmp.ne.s32.totalorder %s57, %s58
      %p67 = scmp.eq.s32.totalorder %s26, 0
      %p68 = por %p66, %p67
      %p69 = scmp.ne.s32.totalorder %s57, %s58
      %p70 = scmp.eq.s32.totalorder %s27, 1
      %p71 = por %p69, %p70
      %p73 = scmp.ne.s32.totalorder %s58, %s72
      %p74 = scmp.eq.s32.totalorder %s27, 0
      %p75 = por %p73, %p74
      %s77 = sadd.s32 %s76, 1
      %p80 = scmp.eq.s32.totalorder %s21, 1
      %p81 = scmp.ne.s32.totalorder %s76, %s78
      %p82 = scmp.eq.s32.totalorder %s21, 0
      %p83 = por %p81, %p82
      %p84 = scmp.ne.s32.totalorder %s76, %s78
      %p85 = scmp.eq.s32.totalorder %s26, 1
      %p86 = por %p84, %p85
      %p87 = scmp.ne.s32.totalorder %s78, %s79
      %p88 = scmp.eq.s32.totalorder %s26, 0
      %p89 = por %p87, %p88
      %p90 = scmp.ne.s32.totalorder %s78, %s79
      %p91 = scmp.eq.s32.totalorder %s27, 1
      %p92 = por %p90, %p91
      %p94 = scmp.ne.s32.totalorder %s79, %s93
      %p95 = scmp.eq.s32.totalorder %s27, 0
      %p96 = por %p94, %p95
      %s98 = sadd.s32 %s97, 1
      %p101 = scmp.eq.s32.totalorder %s21, 1
      %p102 = scmp.ne.s32.totalorder %s97, %s99
      %p103 = scmp.eq.s32.totalorder %s21, 0
      %p104 = por %p102, %p103
      %p105 = scmp.ne.s32.totalorder %s97, %s99
      %p106 = scmp.eq.s32.totalorder %s26, 1
      %p107 = por %p105, %p106
      %p108 = scmp.ne.s32.totalorder %s99, %s100
      %p109 = scmp.eq.s32.totalorder %s26, 0
      %p110 = por %p108, %p109
      %p111 = scmp.ne.s32.totalorder %s99, %s100
      %p112 = scmp.eq.s32.totalorder %s27, 1
      %p113 = por %p111, %p112
      %p115 = scmp.ne.s32.totalorder %s100, %s114
      %p116 = scmp.eq.s32.totalorder %s27, 0
      %p117 = por %p115, %p116
      %s119 = sadd.s32 %s118, 1
      %p122 = scmp.eq.s32.totalorder %s21, 1
      %p123 = scmp.ne.s32.totalorder %s118, %s120
      %p124 = scmp.eq.s32.totalorder %s21, 0
      %p125 = por %p123, %p124
      %p126 = scmp.ne.s32.totalorder %s118, %s120
      %p127 = scmp.eq.s32.totalorder %s26, 1
      %p128 = por %p126, %p127
      %p129 = scmp.ne.s32.totalorder %s120, %s121
      %p130 = scmp.eq.s32.totalorder %s26, 0
      %p131 = por %p129, %p130
      %p132 = scmp.ne.s32.totalorder %s120, %s121
      %p133 = scmp.eq.s32.totalorder %s27, 1
      %p134 = por %p132, %p133
      %p136 = scmp.ne.s32.totalorder %s121, %s135
      %p137 = scmp.eq.s32.totalorder %s27, 0
      %p138 = por %p136, %p137
      %s140 = sadd.s32 %s139, 1
      %p143 = scmp.eq.s32.totalorder %s21, 1
      %p144 = scmp.ne.s32.totalorder %s139, %s141
      %p145 = scmp.eq.s32.totalorder %s21, 0
      %p146 = por %p144, %p145
      %p147 = scmp.ne.s32.totalorder %s139, %s141
      %p148 = scmp.eq.s32.totalorder %s26, 1
      %p149 = por %p147, %p148
      %p150 = scmp.ne.s32.totalorder %s141, %s142
      %p151 = scmp.eq.s32.totalorder %s26, 0
      %p152 = por %p150, %p151
      %p153 = scmp.ne.s32.totalorder %s141, %s142
      %p154 = scmp.eq.s32.totalorder %s27, 1
      %p155 = por %p153, %p154
      %p157 = scmp.ne.s32.totalorder %s142, %s156
      %p158 = scmp.eq.s32.totalorder %s27, 0
      %p159 = por %p157, %p158
      %s161 = sadd.s32 %s160, 1
      %p164 = scmp.eq.s32.totalorder %s21, 1
      %p165 = scmp.ne.s32.totalorder %s160, %s162
      %p166 = scmp.eq.s32.totalorder %s21, 0
      %p167 = por %p165, %p166
      %p168 = scmp.ne.s32.totalorder %s160, %s162
      %p169 = scmp.eq.s32.totalorder %s26, 1
      %p170 = por %p168, %p169
      %p171 = scmp.ne.s32.totalorder %s162, %s163
      %p172 = scmp.eq.s32.totalorder %s26, 0
      %p173 = por %p171, %p172
      %p174 = scmp.ne.s32.totalorder %s162, %s163
      %p175 = scmp.eq.s32.totalorder %s27, 1
      %p176 = por %p174, %p175
      %p178 = scmp.ne.s32.totalorder %s163, %s177
      %p179 = scmp.eq.s32.totalorder %s27, 0
      %p180 = por %p178, %p179
      %s181 = ssub.s32 %s21, %s28
      %p182 = scmp.eq.s32.totalorder %s181, 0
      %s184 = sadd.s32 %s183, 1
      %s185 = scalar_select %p182, %s183, %s184
      %p188 = pneg %p182
      %p189 = scmp.eq.s32.totalorder %s21, 1
      %p190 = por %p188, %p189
      %p191 = scmp.ne.s32.totalorder %s183, %s186
      %p192 = scmp.eq.s32.totalorder %s21, 0
      %p193 = por %p191, %p192
      %p194 = scmp.ne.s32.totalorder %s183, %s186
      %p195 = scmp.eq.s32.totalorder %s26, 1
      %p196 = por %p194, %p195
      %p197 = scmp.ne.s32.totalorder %s186, %s187
      %p198 = scmp.eq.s32.totalorder %s26, 0
      %p199 = por %p197, %p198
      %p200 = scmp.ne.s32.totalorder %s186, %s187
      %p201 = scmp.eq.s32.totalorder %s27, 1
      %p202 = por %p200, %p201
      %p204 = scmp.ne.s32.totalorder %s187, %s203
      %p205 = scmp.eq.s32.totalorder %s27, 0
      %p206 = por %p204, %p205
      %p207 = scmp.le.s32.totalorder 1, %s21
      %p208 = scmp.lt.s32.totalorder %s21, 3
      %p209 = pnand %p207, %p208
      %p210 = pneg %p209
      // Predicated region
      $region9: #{tpu_custom_call.1} parent=5 // pred_check
        _
      $region10: #{tpu_custom_call.1} parent=5 // pred_check_branch
        %212 = sbr.rel (%p209) target = $region12
      $region11: #{tpu_custom_call.1} parent=5 // pred_region
        %s213 = ssub.s32 %s21, 1
        // Predicated region
        $region13: #{tpu_custom_call.1} parent=11 // pred_check
          %p214 = pneg %p68
        $region14: #{tpu_custom_call.1} parent=11 // pred_check_branch
          %216 = sbr.rel (%p214) target = $region16
        $region15: #{tpu_custom_call.1} parent=11 // pred_region
          %s218 = ssub.s32 1024, 1024
          %219 = vsyncadd [#allocation8], %s218
          %s220 = sshll.u32 [#allocation7], 4
          %s221 = int_to_ptr.vmem [resolvable:$true] %s220
          %226 = dma.hbm_to_vmem [thread:$0]  %s1, 1024, %s221, [#allocation8], 64, 64, 4
        $region16: #{tpu_custom_call.1} parent=11 // pred_fallthru
          _
        // Predicated region
        $region17: #{tpu_custom_call.1} parent=11 // pred_check
          %p227 = pneg %p89
        $region18: #{tpu_custom_call.1} parent=11 // pred_check_branch
          %229 = sbr.rel (%p227) target = $region20
        $region19: #{tpu_custom_call.1} parent=11 // pred_region
          _
        $region20: #{tpu_custom_call.1} parent=11 // pred_fallthru
          _
        // Predicated region
        $region21: #{tpu_custom_call.1} parent=11 // pred_check
          %p230 = pneg %p110
        $region22: #{tpu_custom_call.1} parent=11 // pred_check_branch
          %232 = sbr.rel (%p230) target = $region24
        $region23: #{tpu_custom_call.1} parent=11 // pred_region
          %s234 = ssub.s32 9216, 9216
          %235 = vsyncadd [#allocation8], %s234
          %s236 = sshll.u32 [#allocation9], 4
          %s237 = int_to_ptr.vmem [resolvable:$true] %s236
          %242 = dma.hbm_to_vmem [thread:$0]  %s3, 9216, %s237, [#allocation8], 64, 64, 4
        $region24: #{tpu_custom_call.1} parent=11 // pred_fallthru
          _
        // Predicated region
        $region25: #{tpu_custom_call.1} parent=11 // pred_check
          %p243 = pneg %p131
        $region26: #{tpu_custom_call.1} parent=11 // pred_check_branch
          %245 = sbr.rel (%p243) target = $region28
        $region27: #{tpu_custom_call.1} parent=11 // pred_region
          _
        $region28: #{tpu_custom_call.1} parent=11 // pred_fallthru
          _
        // Predicated region
        $region29: #{tpu_custom_call.1} parent=11 // pred_check
          %p246 = pneg %p152
        $region30: #{tpu_custom_call.1} parent=11 // pred_check_branch
          %248 = sbr.rel (%p246) target = $region32
        $region31: #{tpu_custom_call.1} parent=11 // pred_region
          %s250 = ssub.s32 9216, 9216
          %251 = vsyncadd [#allocation11], %s250
          %s252 = sshll.u32 [#allocation10], 4
          %s253 = int_to_ptr.vmem [resolvable:$true] %s252
          %258 = dma.hbm_to_vmem [thread:$0]  %s5, 9216, %s253, [#allocation11], 64, 64, 4
        $region32: #{tpu_custom_call.1} parent=11 // pred_fallthru
          _
        // Predicated region
        $region33: #{tpu_custom_call.1} parent=11 // pred_check
          %p259 = pneg %p173
        $region34: #{tpu_custom_call.1} parent=11 // pred_check_branch
          %261 = sbr.rel (%p259) target = $region36
        $region35: #{tpu_custom_call.1} parent=11 // pred_region
          _
        $region36: #{tpu_custom_call.1} parent=11 // pred_fallthru
          _
      $region12: #{tpu_custom_call.1} parent=5 // pred_fallthru
        _
      %p262 = scmp.lt.s32.totalorder %s21, 2
      // Predicated region
      $region37: #{tpu_custom_call.1} parent=5 // pred_check
        %p263 = pneg %p262
      $region38: #{tpu_custom_call.1} parent=5 // pred_check_branch
        %265 = sbr.rel (%p263) target = $region40
      $region39: #{tpu_custom_call.1} parent=5 // pred_region
        // Predicated region
        $region41: #{tpu_custom_call.1} parent=39 // pred_check
          %p266 = pneg %p41
        $region42: #{tpu_custom_call.1} parent=39 // pred_check_branch
          %268 = sbr.rel (%p266) target = $region44
        $region43: #{tpu_custom_call.1} parent=39 // pred_region
          %s269 = sand.u32 %s31, 1
          %s270 = scalar_lea.sflag [#allocation5], %s269
          %s271 = sand.u32 %s31, 1
          %s272 = smul.addr %s271, 128
          %s273 = scalar_lea.vmem [#allocation4], %s272
          %s275 = ssub.s32 2048, 2048
          %276 = vsyncadd %s270, %s275
          %s277 = smul.addr %s21, 32
          %s278 = smul.addr %s277, 64
          %s279 = scalar_lea.hbm %s0, %s278
          %s280 = sshll.u32 %s273, 4
          %s281 = int_to_ptr.vmem [resolvable:$true] %s280
          %286 = dma.hbm_to_vmem [thread:$0]  %s279, 2048, %s281, %s270, 64, 64, 4
        $region44: #{tpu_custom_call.1} parent=39 // pred_fallthru
          _
      $region40: #{tpu_custom_call.1} parent=5 // pred_fallthru
        _
      %p287 = scmp.le.s32.totalorder 1, %s21
      %p288 = scmp.lt.s32.totalorder %s21, 3
      %p289 = pnand %p287, %p288
      %p290 = pneg %p289
      // Predicated region
      $region45: #{tpu_custom_call.1} parent=5 // pred_check
        _
      $region46: #{tpu_custom_call.1} parent=5 // pred_check_branch
        %292 = sbr.rel (%p289) target = $region48
      $region47: #{tpu_custom_call.1} parent=5 // pred_region
        %s293 = ssub.s32 %s21, 1
        %s294 = sand.u32 %s34, 1
        %s295 = scalar_lea.sflag [#allocation5], %s294
        %s296 = sand.u32 %s34, 1
        %s297 = smul.addr %s296, 128
        %s298 = scalar_lea.vmem [#allocation4], %s297
        // Predicated region
        $region49: #{tpu_custom_call.1} parent=47 // pred_check
          %p299 = pneg %p47
        $region50: #{tpu_custom_call.1} parent=47 // pred_check_branch
          %301 = sbr.rel (%p299) target = $region52
        $region51: #{tpu_custom_call.1} parent=47 // pred_region
          %302 = dma.done %s295, 2048
        $region52: #{tpu_custom_call.1} parent=47 // pred_fallthru
          _
        // Predicated region
        $region53: #{tpu_custom_call.1} parent=47 // pred_check
          %p303 = pneg %p68
        $region54: #{tpu_custom_call.1} parent=47 // pred_check_branch
          %305 = sbr.rel (%p303) target = $region56
        $region55: #{tpu_custom_call.1} parent=47 // pred_region
          %306 = dma.done [#allocation8], 1024
        $region56: #{tpu_custom_call.1} parent=47 // pred_fallthru
          _
        // Predicated region
        $region57: #{tpu_custom_call.1} parent=47 // pred_check
          %p307 = pneg %p110
        $region58: #{tpu_custom_call.1} parent=47 // pred_check_branch
          %309 = sbr.rel (%p307) target = $region60
        $region59: #{tpu_custom_call.1} parent=47 // pred_region
          %310 = dma.done [#allocation8], 9216
        $region60: #{tpu_custom_call.1} parent=47 // pred_fallthru
          _
        // Predicated region
        $region61: #{tpu_custom_call.1} parent=47 // pred_check
          %p311 = pneg %p152
        $region62: #{tpu_custom_call.1} parent=47 // pred_check_branch
          %313 = sbr.rel (%p311) target = $region64
        $region63: #{tpu_custom_call.1} parent=47 // pred_region
          %314 = dma.done [#allocation11], 9216
        $region64: #{tpu_custom_call.1} parent=47 // pred_fallthru
          _
        %s315 = sand.u32 %s34, 1
        %s316 = scalar_lea.sflag [#allocation5], %s315
        %s317 = sand.u32 %s34, 1
        %s318 = smul.addr %s317, 128
        %s319 = scalar_lea.vmem [#allocation4], %s318
        %p320 = pneg %p47
        %p321 = pneg %p44
        %p322 = pneg %p68
        %p323 = pneg %p65
        %p324 = pneg %p89
        %p325 = pneg %p86
        %p326 = pneg %p110
        %p327 = pneg %p107
        %p328 = pneg %p131
        %p329 = pneg %p128
        %p330 = pneg %p152
        %p331 = pneg %p149
        %p332 = pneg %p173
        %p333 = pneg %p170
        %p334 = pneg %p199
        %p335 = pneg %p196
        %s336 = sand.u32 %s186, 1
        %s337 = scalar_lea.sflag [#allocation6], %s336
        %s338 = sand.u32 %s186, 1
        %s339 = smul.addr %s338, 128
        %s340 = scalar_lea.vmem [#allocation12], %s339
        %v342 = vld [vmem:[%s298] sm:$0xf]
        %v343 = vld [vmem:[%s298 + $0x4] sm:$0xf]
        %v344 = vld [vmem:[%s298 + $0x8] sm:$0xf]
        %v345 = vld [vmem:[%s298 + $0xc] sm:$0xf]
        %v346 = vld [vmem:[%s298 + $0x10] sm:$0xf]
        %v347 = vld [vmem:[%s298 + $0x14] sm:$0xf]
        %v348 = vld [vmem:[%s298 + $0x18] sm:$0xf]
        %v349 = vld [vmem:[%s298 + $0x1c] sm:$0xf]
        %v350 = vld [vmem:[%s298 + $0x20] sm:$0xf]
        %v351 = vld [vmem:[%s298 + $0x24] sm:$0xf]
        %v352 = vld [vmem:[%s298 + $0x28] sm:$0xf]
        %v353 = vld [vmem:[%s298 + $0x2c] sm:$0xf]
        %v354 = vld [vmem:[%s298 + $0x30] sm:$0xf]
        %v355 = vld [vmem:[%s298 + $0x34] sm:$0xf]
        %v356 = vld [vmem:[%s298 + $0x38] sm:$0xf]
        %v357 = vld [vmem:[%s298 + $0x3c] sm:$0xf]
        %v358 = vld [vmem:[%s298 + $0x40] sm:$0xf]
        %v359 = vld [vmem:[%s298 + $0x44] sm:$0xf]
        %v360 = vld [vmem:[%s298 + $0x48] sm:$0xf]
        %v361 = vld [vmem:[%s298 + $0x4c] sm:$0xf]
        %v362 = vld [vmem:[%s298 + $0x50] sm:$0xf]
        %v363 = vld [vmem:[%s298 + $0x54] sm:$0xf]
        %v364 = vld [vmem:[%s298 + $0x58] sm:$0xf]
        %v365 = vld [vmem:[%s298 + $0x5c] sm:$0xf]
        %v366 = vld [vmem:[%s298 + $0x60] sm:$0xf]
        %v367 = vld [vmem:[%s298 + $0x64] sm:$0xf]
        %v368 = vld [vmem:[%s298 + $0x68] sm:$0xf]
        %v369 = vld [vmem:[%s298 + $0x6c] sm:$0xf]
        %v370 = vld [vmem:[%s298 + $0x70] sm:$0xf]
        %v371 = vld [vmem:[%s298 + $0x74] sm:$0xf]
        %v372 = vld [vmem:[%s298 + $0x78] sm:$0xf]
        %v373 = vld [vmem:[%s298 + $0x7c] sm:$0xf]
        %v374 = vld [vmem:[#allocation7] sm:$0xf]
        %v375 = vld [vmem:[#allocation7 + $0x4] sm:$0xf]
        %v376 = vld [vmem:[#allocation7 + $0x8] sm:$0xf]
        %v377 = vld [vmem:[#allocation7 + $0xc] sm:$0xf]
        %v378 = vld [vmem:[#allocation7 + $0x10] sm:$0xf]
        %v379 = vld [vmem:[#allocation7 + $0x14] sm:$0xf]
        %v380 = vld [vmem:[#allocation7 + $0x18] sm:$0xf]
        %v381 = vld [vmem:[#allocation7 + $0x1c] sm:$0xf]
        %v382 = vld [vmem:[#allocation7 + $0x20] sm:$0xf]
        %v383 = vld [vmem:[#allocation7 + $0x24] sm:$0xf]
        %v384 = vld [vmem:[#allocation7 + $0x28] sm:$0xf]
        %v385 = vld [vmem:[#allocation7 + $0x2c] sm:$0xf]
        %v386 = vld [vmem:[#allocation7 + $0x30] sm:$0xf]
        %v387 = vld [vmem:[#allocation7 + $0x34] sm:$0xf]
        %v388 = vld [vmem:[#allocation7 + $0x38] sm:$0xf]
        %v389 = vld [vmem:[#allocation7 + $0x3c] sm:$0xf]
        %v390 = vld [vmem:[%s2] sm:$0x1]
        %v392 = vlaneseq
        %v393 = vshrl.u32 %v392, 7
        %v394 = vsub.s32 0, %v393
        %v395 = vrot.slane %v390, %v394
        %v429 = vunpack.c.l.b16 %v342
        %v430 = vunpack.c.l.b16 %v343
        %v431 = vunpack.c.l.b16 %v344
        %v432 = vunpack.c.l.b16 %v345
        %v433 = vunpack.c.l.b16 %v346
        %v434 = vunpack.c.l.b16 %v347
        %v435 = vunpack.c.l.b16 %v348
        %v436 = vunpack.c.l.b16 %v349
        %v437 = vunpack.c.l.b16 %v350
        %v438 = vunpack.c.l.b16 %v351
        %v439 = vunpack.c.l.b16 %v352
        %v440 = vunpack.c.l.b16 %v353
        %v441 = vunpack.c.l.b16 %v354
        %v442 = vunpack.c.l.b16 %v355
        %v443 = vunpack.c.l.b16 %v356
        %v444 = vunpack.c.l.b16 %v357
        %v445 = vunpack.c.l.b16 %v358
        %v446 = vunpack.c.l.b16 %v359
        %v447 = vunpack.c.l.b16 %v360
        %v448 = vunpack.c.l.b16 %v361
        %v449 = vunpack.c.l.b16 %v362
        %v450 = vunpack.c.l.b16 %v363
        %v451 = vunpack.c.l.b16 %v364
        %v452 = vunpack.c.l.b16 %v365
        %v453 = vunpack.c.l.b16 %v366
        %v454 = vunpack.c.l.b16 %v367
        %v455 = vunpack.c.l.b16 %v368
        %v456 = vunpack.c.l.b16 %v369
        %v457 = vunpack.c.l.b16 %v370
        %v458 = vunpack.c.l.b16 %v371
        %v459 = vunpack.c.l.b16 %v372
        %v460 = vunpack.c.l.b16 %v373
        %v461 = vpack.c.b16 %v430, %v429
        %v462 = vpack.c.b16 %v432, %v431
        %v463 = vpack.c.b16 %v434, %v433
        %v464 = vpack.c.b16 %v436, %v435
        %v465 = vpack.c.b16 %v438, %v437
        %v466 = vpack.c.b16 %v440, %v439
        %v467 = vpack.c.b16 %v442, %v441
        %v468 = vpack.c.b16 %v444, %v443
        %v469 = vpack.c.b16 %v446, %v445
        %v470 = vpack.c.b16 %v448, %v447
        %v471 = vpack.c.b16 %v450, %v449
        %v472 = vpack.c.b16 %v452, %v451
        %v473 = vpack.c.b16 %v454, %v453
        %v474 = vpack.c.b16 %v456, %v455
        %v475 = vpack.c.b16 %v458, %v457
        %v476 = vpack.c.b16 %v460, %v459
        %v509 = vunpack.c.l.b16 %v374
        %v510 = vunpack.c.l.b16 %v375
        %v511 = vunpack.c.l.b16 %v376
        %v512 = vunpack.c.l.b16 %v377
        %v513 = vunpack.c.l.b16 %v378
        %v514 = vunpack.c.l.b16 %v379
        %v515 = vunpack.c.l.b16 %v380
        %v516 = vunpack.c.l.b16 %v381
        %v517 = vunpack.c.l.b16 %v382
        %v518 = vunpack.c.l.b16 %v383
        %v519 = vunpack.c.l.b16 %v384
        %v520 = vunpack.c.l.b16 %v385
        %v521 = vunpack.c.l.b16 %v386
        %v522 = vunpack.c.l.b16 %v387
        %v523 = vunpack.c.l.b16 %v388
        %v524 = vunpack.c.l.b16 %v389
        %v525 = vpack.c.b16 %v510, %v509
        %v526 = vpack.c.b16 %v512, %v511
        %v527 = vpack.c.b16 %v514, %v513
        %v528 = vpack.c.b16 %v516, %v515
        %v529 = vpack.c.b16 %v518, %v517
        %v530 = vpack.c.b16 %v520, %v519
        %v531 = vpack.c.b16 %v522, %v521
        %v532 = vpack.c.b16 %v524, %v523
        %541 = vmatprep.subr.bf16.mxu0 0
        %542 = vmatpush1.bf16.msra.mxu0 %v525
        %543 = vmatprep.subr.bf16.mxu0 0
        %544 = vmatpush1.bf16.msra.mxu0 %v526
        %545 = vmatprep.subr.bf16.mxu0 0
        %546 = vmatpush1.bf16.msra.mxu0 %v527
        %547 = vmatprep.subr.bf16.mxu0 0
        %548 = vmatpush1.bf16.msra.mxu0 %v528
        %549 = vmatprep.subr.bf16.mxu0 0
        %550 = vmatpush1.bf16.msra.mxu0 %v529
        %551 = vmatprep.subr.bf16.mxu0 0
        %552 = vmatpush1.bf16.msra.mxu0 %v530
        %553 = vmatprep.subr.bf16.mxu0 0
        %554 = vmatpush1.bf16.msra.mxu0 %v531
        %555 = vmatprep.subr.bf16.mxu0 0
        %556 = vmatpush1.bf16.msra.mxu0 %v532
        %557 = vmatprep.subr.bf16.mxu0 0
        %558 = vmatpush1.bf16.msra.mxu0 0
        %559 = vmatprep.subr.bf16.mxu0 0
        %560 = vmatpush1.bf16.msra.mxu0 0
        %561 = vmatprep.subr.bf16.mxu0 0
        %562 = vmatpush1.bf16.msra.mxu0 0
        %563 = vmatprep.subr.bf16.mxu0 0
        %564 = vmatpush1.bf16.msra.mxu0 0
        %565 = vmatprep.subr.bf16.mxu0 0
        %566 = vmatpush1.bf16.msra.mxu0 0
        %567 = vmatprep.subr.bf16.mxu0 0
        %568 = vmatpush1.bf16.msra.mxu0 0
        %569 = vmatprep.subr.bf16.mxu0 0
        %570 = vmatpush1.bf16.msra.mxu0 0
        %571 = vmatprep.subr.bf16.mxu0 0
        %572 = vmatpush1.bf16.msra.mxu0 0
        %573 = vmatprep.mubr.bf16.mxu0 0
        %574 = vmatmul.mubr.bf16.gmra.mrb[0].mxu0 %v461
        %v575 = vpop.f32.mrb[0].mxu0
        %v576 = vadd.f32 %v395, %v575
        %v577 = vpop.f32.mrb[0].mxu0
        %v578 = vpop.f32.mrb[0].mxu0
        %v579 = vadd.f32 %v395, %v578
        %v580 = vpop.f32.mrb[0].mxu0
        %581 = vmatprep.mubr.bf16.mxu0 0
        %582 = vmatmul.mubr.bf16.gmra.mrb[0].mxu0 %v462
        %v583 = vpop.f32.mrb[0].mxu0
        %v584 = vadd.f32 %v395, %v583
        %v585 = vpop.f32.mrb[0].mxu0
        %v586 = vpop.f32.mrb[0].mxu0
        %v587 = vadd.f32 %v395, %v586
        %v588 = vpop.f32.mrb[0].mxu0
        %589 = vmatprep.mubr.bf16.mxu0 0
        %590 = vmatmul.mubr.bf16.gmra.mrb[0].mxu0 %v463
        %v591 = vpop.f32.mrb[0].mxu0
        %v592 = vadd.f32 %v395, %v591
        %v593 = vpop.f32.mrb[0].mxu0
        %v594 = vpop.f32.mrb[0].mxu0
        %v595 = vadd.f32 %v395, %v594
        %v596 = vpop.f32.mrb[0].mxu0
        %597 = vmatprep.mubr.bf16.mxu0 0
        %598 = vmatmul.mubr.bf16.gmra.mrb[0].mxu0 %v464
        %v599 = vpop.f32.mrb[0].mxu0
        %v600 = vadd.f32 %v395, %v599
        %v601 = vpop.f32.mrb[0].mxu0
        %v602 = vpop.f32.mrb[0].mxu0
        %v603 = vadd.f32 %v395, %v602
        %v604 = vpop.f32.mrb[0].mxu0
        %605 = vmatprep.mubr.bf16.mxu0 0
        %606 = vmatmul.mubr.bf16.gmra.mrb[0].mxu0 %v465
        %v607 = vpop.f32.mrb[0].mxu0
        %v608 = vadd.f32 %v395, %v607
        %v609 = vpop.f32.mrb[0].mxu0
        %v610 = vpop.f32.mrb[0].mxu0
        %v611 = vadd.f32 %v395, %v610
        %v612 = vpop.f32.mrb[0].mxu0
        %613 = vmatprep.mubr.bf16.mxu0 0
        %614 = vmatmul.mubr.bf16.gmra.mrb[0].mxu0 %v466
        %v615 = vpop.f32.mrb[0].mxu0
        %v616 = vadd.f32 %v395, %v615
        %v617 = vpop.f32.mrb[0].mxu0
        %v618 = vpop.f32.mrb[0].mxu0
        %v619 = vadd.f32 %v395, %v618
        %v620 = vpop.f32.mrb[0].mxu0
        %621 = vmatprep.mubr.bf16.mxu0 0
        %622 = vmatmul.mubr.bf16.gmra.mrb[0].mxu0 %v467
        %v623 = vpop.f32.mrb[0].mxu0
        %v624 = vadd.f32 %v395, %v623
        %v625 = vpop.f32.mrb[0].mxu0
        %v626 = vpop.f32.mrb[0].mxu0
        %v627 = vadd.f32 %v395, %v626
        %v628 = vpop.f32.mrb[0].mxu0
        %629 = vmatprep.mubr.bf16.mxu0 0
        %630 = vmatmul.mubr.bf16.gmra.mrb[0].mxu0 %v468
        %v631 = vpop.f32.mrb[0].mxu0
        %v632 = vadd.f32 %v395, %v631
        %v633 = vpop.f32.mrb[0].mxu0
        %v634 = vpop.f32.mrb[0].mxu0
        %v635 = vadd.f32 %v395, %v634
        %v636 = vpop.f32.mrb[0].mxu0
        %637 = vmatprep.mubr.bf16.mxu0 0
        %638 = vmatmul.mubr.bf16.gmra.mrb[0].mxu0 %v469
        %v639 = vpop.f32.mrb[0].mxu0
        %v640 = vadd.f32 %v395, %v639
        %v641 = vpop.f32.mrb[0].mxu0
        %v642 = vpop.f32.mrb[0].mxu0
        %v643 = vadd.f32 %v395, %v642
        %v644 = vpop.f32.mrb[0].mxu0
        %645 = vmatprep.mubr.bf16.mxu0 0
        %646 = vmatmul.mubr.bf16.gmra.mrb[0].mxu0 %v470
        %v647 = vpop.f32.mrb[0].mxu0
        %v648 = vadd.f32 %v395, %v647
        %v649 = vpop.f32.mrb[0].mxu0
        %v650 = vpop.f32.mrb[0].mxu0
        %v651 = vadd.f32 %v395, %v650
        %v652 = vpop.f32.mrb[0].mxu0
        %653 = vmatprep.mubr.bf16.mxu0 0
        %654 = vmatmul.mubr.bf16.gmra.mrb[0].mxu0 %v471
        %v655 = vpop.f32.mrb[0].mxu0
        %v656 = vadd.f32 %v395, %v655
        %v657 = vpop.f32.mrb[0].mxu0
        %v658 = vpop.f32.mrb[0].mxu0
        %v659 = vadd.f32 %v395, %v658
        %v660 = vpop.f32.mrb[0].mxu0
        %661 = vmatprep.mubr.bf16.mxu0 0
        %662 = vmatmul.mubr.bf16.gmra.mrb[0].mxu0 %v472
        %v663 = vpop.f32.mrb[0].mxu0
        %v664 = vadd.f32 %v395, %v663
        %v665 = vpop.f32.mrb[0].mxu0
        %v666 = vpop.f32.mrb[0].mxu0
        %v667 = vadd.f32 %v395, %v666
        %v668 = vpop.f32.mrb[0].mxu0
        %669 = vmatprep.mubr.bf16.mxu0 0
        %670 = vmatmul.mubr.bf16.gmra.mrb[0].mxu0 %v473
        %v671 = vpop.f32.mrb[0].mxu0
        %v672 = vadd.f32 %v395, %v671
        %v673 = vpop.f32.mrb[0].mxu0
        %v674 = vpop.f32.mrb[0].mxu0
        %v675 = vadd.f32 %v395, %v674
        %v676 = vpop.f32.mrb[0].mxu0
        %677 = vmatprep.mubr.bf16.mxu0 0
        %678 = vmatmul.mubr.bf16.gmra.mrb[0].mxu0 %v474
        %v679 = vpop.f32.mrb[0].mxu0
        %v680 = vadd.f32 %v395, %v679
        %v681 = vpop.f32.mrb[0].mxu0
        %v682 = vpop.f32.mrb[0].mxu0
        %v683 = vadd.f32 %v395, %v682
        %v684 = vpop.f32.mrb[0].mxu0
        %685 = vmatprep.mubr.bf16.mxu0 0
        %686 = vmatmul.mubr.bf16.gmra.mrb[0].mxu0 %v475
        %v687 = vpop.f32.mrb[0].mxu0
        %v688 = vadd.f32 %v395, %v687
        %v689 = vpop.f32.mrb[0].mxu0
        %v690 = vpop.f32.mrb[0].mxu0
        %v691 = vadd.f32 %v395, %v690
        %v692 = vpop.f32.mrb[0].mxu0
        %693 = vmatprep.mubr.bf16.mxu0 0
        %694 = vmatmul.mubr.bf16.gmra.mrb[0].mxu0 %v476
        %v695 = vpop.f32.mrb[0].mxu0
        %v696 = vadd.f32 %v395, %v695
        %v697 = vpop.f32.mrb[0].mxu0
        %v698 = vpop.f32.mrb[0].mxu0
        %v699 = vadd.f32 %v395, %v698
        %v700 = vpop.f32.mrb[0].mxu0
        %701 = vdwg.mxu0
        %v702 = vmax.f32 %v576, 0.0
        %v703 = vmax.f32 %v579, 0.0
        %v704 = vmax.f32 %v584, 0.0
        %v705 = vmax.f32 %v587, 0.0
        %v706 = vmax.f32 %v592, 0.0
        %v707 = vmax.f32 %v595, 0.0
        %v708 = vmax.f32 %v600, 0.0
        %v709 = vmax.f32 %v603, 0.0
        %v710 = vmax.f32 %v608, 0.0
        %v711 = vmax.f32 %v611, 0.0
        %v712 = vmax.f32 %v616, 0.0
        %v713 = vmax.f32 %v619, 0.0
        %v714 = vmax.f32 %v624, 0.0
        %v715 = vmax.f32 %v627, 0.0
        %v716 = vmax.f32 %v632, 0.0
        %v717 = vmax.f32 %v635, 0.0
        %v718 = vmax.f32 %v640, 0.0
        %v719 = vmax.f32 %v643, 0.0
        %v720 = vmax.f32 %v648, 0.0
        %v721 = vmax.f32 %v651, 0.0
        %v722 = vmax.f32 %v656, 0.0
        %v723 = vmax.f32 %v659, 0.0
        %v724 = vmax.f32 %v664, 0.0
        %v725 = vmax.f32 %v667, 0.0
        %v726 = vmax.f32 %v672, 0.0
        %v727 = vmax.f32 %v675, 0.0
        %v728 = vmax.f32 %v680, 0.0
        %v729 = vmax.f32 %v683, 0.0
        %v730 = vmax.f32 %v688, 0.0
        %v731 = vmax.f32 %v691, 0.0
        %v732 = vmax.f32 %v696, 0.0
        %v733 = vmax.f32 %v699, 0.0
        %734 = vst [vmem:[#allocation2] sm:$0xff] 0
        %735 = vst [vmem:[#allocation2 + $0x8] sm:$0xff] 0
        %s736 = scalar_lea.vmem [#allocation2], 272
        %737 = vst [vmem:[%s736] sm:$0xff] 0
        %738 = vst [vmem:[%s736 + $0x8] sm:$0xff] 0
        %s739 = scalar_lea.vmem [#allocation2], 16
        %vm740 = vcmask 1043459
        %vm741 = vsmask.f32 7950
        %vm742 = vmand %vm740, %vm741
        %v743 = vld [vmem:[%s739] sm:$0x8]
        %v744 = vsel %vm742, 0, %v743
        %745 = vst [vmem:[%s739] sm:$0x8] %v744
        %v746 = vld [vmem:[%s739 + $0x10] sm:$0x8]
        %v747 = vsel %vm742, 0, %v746
        %748 = vst [vmem:[%s739 + $0x10] sm:$0x8] %v747
        %v749 = vld [vmem:[%s739 + $0x20] sm:$0x8]
        %v750 = vsel %vm742, 0, %v749
        %751 = vst [vmem:[%s739 + $0x20] sm:$0x8] %v750
        %v752 = vld [vmem:[%s739 + $0x30] sm:$0x8]
        %v753 = vsel %vm742, 0, %v752
        %754 = vst [vmem:[%s739 + $0x30] sm:$0x8] %v753
        %v755 = vld [vmem:[%s739 + $0x40] sm:$0x8]
        %v756 = vsel %vm742, 0, %v755
        %757 = vst [vmem:[%s739 + $0x40] sm:$0x8] %v756
        %v758 = vld [vmem:[%s739 + $0x50] sm:$0x8]
        %v759 = vsel %vm742, 0, %v758
        %760 = vst [vmem:[%s739 + $0x50] sm:$0x8] %v759
        %v761 = vld [vmem:[%s739 + $0x60] sm:$0x8]
        %v762 = vsel %vm742, 0, %v761
        %763 = vst [vmem:[%s739 + $0x60] sm:$0x8] %v762
        %v764 = vld [vmem:[%s739 + $0x70] sm:$0x8]
        %v765 = vsel %vm742, 0, %v764
        %766 = vst [vmem:[%s739 + $0x70] sm:$0x8] %v765
        %v767 = vld [vmem:[%s739 + $0x80] sm:$0x8]
        %v768 = vsel %vm742, 0, %v767
        %769 = vst [vmem:[%s739 + $0x80] sm:$0x8] %v768
        %v770 = vld [vmem:[%s739 + $0x90] sm:$0x8]
        %v771 = vsel %vm742, 0, %v770
        %772 = vst [vmem:[%s739 + $0x90] sm:$0x8] %v771
        %v773 = vld [vmem:[%s739 + $0xa0] sm:$0x8]
        %v774 = vsel %vm742, 0, %v773
        %775 = vst [vmem:[%s739 + $0xa0] sm:$0x8] %v774
        %v776 = vld [vmem:[%s739 + $0xb0] sm:$0x8]
        %v777 = vsel %vm742, 0, %v776
        %778 = vst [vmem:[%s739 + $0xb0] sm:$0x8] %v777
        %v779 = vld [vmem:[%s739 + $0xc0] sm:$0x8]
        %v780 = vsel %vm742, 0, %v779
        %781 = vst [vmem:[%s739 + $0xc0] sm:$0x8] %v780
        %v782 = vld [vmem:[%s739 + $0xd0] sm:$0x8]
        %v783 = vsel %vm742, 0, %v782
        %784 = vst [vmem:[%s739 + $0xd0] sm:$0x8] %v783
        %v785 = vld [vmem:[%s739 + $0xe0] sm:$0x8]
        %v786 = vsel %vm742, 0, %v785
        %787 = vst [vmem:[%s739 + $0xe0] sm:$0x8] %v786
        %v788 = vld [vmem:[%s739 + $0xf0] sm:$0x8]
        %v789 = vsel %vm742, 0, %v788
        %790 = vst [vmem:[%s739 + $0xf0] sm:$0x8] %v789
        %vm791 = vcmask 1044484
        %vm792 = vsmask.f32 4352
        %vm793 = vmand %vm791, %vm792
        %v794 = vld [vmem:[%s739 + $0x8] sm:$0x10]
        %v795 = vsel %vm793, 0, %v794
        %796 = vst [vmem:[%s739 + $0x8] sm:$0x10] %v795
        %v797 = vld [vmem:[%s739 + $0x18] sm:$0x10]
        %v798 = vsel %vm793, 0, %v797
        %799 = vst [vmem:[%s739 + $0x18] sm:$0x10] %v798
        %v800 = vld [vmem:[%s739 + $0x28] sm:$0x10]
        %v801 = vsel %vm793, 0, %v800
        %802 = vst [vmem:[%s739 + $0x28] sm:$0x10] %v801
        %v803 = vld [vmem:[%s739 + $0x38] sm:$0x10]
        %v804 = vsel %vm793, 0, %v803
        %805 = vst [vmem:[%s739 + $0x38] sm:$0x10] %v804
        %v806 = vld [vmem:[%s739 + $0x48] sm:$0x10]
        %v807 = vsel %vm793, 0, %v806
        %808 = vst [vmem:[%s739 + $0x48] sm:$0x10] %v807
        %v809 = vld [vmem:[%s739 + $0x58] sm:$0x10]
        %v810 = vsel %vm793, 0, %v809
        %811 = vst [vmem:[%s739 + $0x58] sm:$0x10] %v810
        %v812 = vld [vmem:[%s739 + $0x68] sm:$0x10]
        %v813 = vsel %vm793, 0, %v812
        %814 = vst [vmem:[%s739 + $0x68] sm:$0x10] %v813
        %v815 = vld [vmem:[%s739 + $0x78] sm:$0x10]
        %v816 = vsel %vm793, 0, %v815
        %817 = vst [vmem:[%s739 + $0x78] sm:$0x10] %v816
        %v818 = vld [vmem:[%s739 + $0x88] sm:$0x10]
        %v819 = vsel %vm793, 0, %v818
        %820 = vst [vmem:[%s739 + $0x88] sm:$0x10] %v819
        %v821 = vld [vmem:[%s739 + $0x98] sm:$0x10]
        %v822 = vsel %vm793, 0, %v821
        %823 = vst [vmem:[%s739 + $0x98] sm:$0x10] %v822
        %v824 = vld [vmem:[%s739 + $0xa8] sm:$0x10]
        %v825 = vsel %vm793, 0, %v824
        %826 = vst [vmem:[%s739 + $0xa8] sm:$0x10] %v825
        %v827 = vld [vmem:[%s739 + $0xb8] sm:$0x10]
        %v828 = vsel %vm793, 0, %v827
        %829 = vst [vmem:[%s739 + $0xb8] sm:$0x10] %v828
        %v830 = vld [vmem:[%s739 + $0xc8] sm:$0x10]
        %v831 = vsel %vm793, 0, %v830
        %832 = vst [vmem:[%s739 + $0xc8] sm:$0x10] %v831
        %v833 = vld [vmem:[%s739 + $0xd8] sm:$0x10]
        %v834 = vsel %vm793, 0, %v833
        %835 = vst [vmem:[%s739 + $0xd8] sm:$0x10] %v834
        %v836 = vld [vmem:[%s739 + $0xe8] sm:$0x10]
        %v837 = vsel %vm793, 0, %v836
        %838 = vst [vmem:[%s739 + $0xe8] sm:$0x10] %v837
        %v839 = vld [vmem:[%s739 + $0xf8] sm:$0x10]
        %v840 = vsel %vm793, 0, %v839
        %841 = vst [vmem:[%s739 + $0xf8] sm:$0x10] %v840
        %v842 = vpack.c.bf16 %v703, %v702
        %v843 = vpack.c.bf16 %v705, %v704
        %v844 = vpack.c.bf16 %v707, %v706
        %v845 = vpack.c.bf16 %v709, %v708
        %v846 = vpack.c.bf16 %v711, %v710
        %v847 = vpack.c.bf16 %v713, %v712
        %v848 = vpack.c.bf16 %v715, %v714
        %v849 = vpack.c.bf16 %v717, %v716
        %v850 = vpack.c.bf16 %v719, %v718
        %v851 = vpack.c.bf16 %v721, %v720
        %v852 = vpack.c.bf16 %v723, %v722
        %v853 = vpack.c.bf16 %v725, %v724
        %v854 = vpack.c.bf16 %v727, %v726
        %v855 = vpack.c.bf16 %v729, %v728
        %v856 = vpack.c.bf16 %v731, %v730
        %v857 = vpack.c.bf16 %v733, %v732
        %v874 = vrot.slane %v842, 4
        %v875 = vrot.slane %v843, 4
        %v876 = vrot.slane %v844, 4
        %v877 = vrot.slane %v845, 4
        %v878 = vrot.slane %v846, 4
        %v879 = vrot.slane %v847, 4
        %v880 = vrot.slane %v848, 4
        %v881 = vrot.slane %v849, 4
        %v882 = vrot.slane %v850, 4
        %v883 = vrot.slane %v851, 4
        %v884 = vrot.slane %v852, 4
        %v885 = vrot.slane %v853, 4
        %v886 = vrot.slane %v854, 4
        %v887 = vrot.slane %v855, 4
        %v888 = vrot.slane %v856, 4
        %v889 = vrot.slane %v857, 4
        %906 = vst [vmem:[%s739] sm:$0xf0] %v874
        %907 = vst [vmem:[%s739 + $0x8] sm:$0xf] %v874
        %908 = vst [vmem:[%s739 + $0x10] sm:$0xf0] %v875
        %909 = vst [vmem:[%s739 + $0x18] sm:$0xf] %v875
        %910 = vst [vmem:[%s739 + $0x20] sm:$0xf0] %v876
        %911 = vst [vmem:[%s739 + $0x28] sm:$0xf] %v876
        %912 = vst [vmem:[%s739 + $0x30] sm:$0xf0] %v877
        %913 = vst [vmem:[%s739 + $0x38] sm:$0xf] %v877
        %914 = vst [vmem:[%s739 + $0x40] sm:$0xf0] %v878
        %915 = vst [vmem:[%s739 + $0x48] sm:$0xf] %v878
        %916 = vst [vmem:[%s739 + $0x50] sm:$0xf0] %v879
        %917 = vst [vmem:[%s739 + $0x58] sm:$0xf] %v879
        %918 = vst [vmem:[%s739 + $0x60] sm:$0xf0] %v880
        %919 = vst [vmem:[%s739 + $0x68] sm:$0xf] %v880
        %920 = vst [vmem:[%s739 + $0x70] sm:$0xf0] %v881
        %921 = vst [vmem:[%s739 + $0x78] sm:$0xf] %v881
        %922 = vst [vmem:[%s739 + $0x80] sm:$0xf0] %v882
        %923 = vst [vmem:[%s739 + $0x88] sm:$0xf] %v882
        %924 = vst [vmem:[%s739 + $0x90] sm:$0xf0] %v883
        %925 = vst [vmem:[%s739 + $0x98] sm:$0xf] %v883
        %926 = vst [vmem:[%s739 + $0xa0] sm:$0xf0] %v884
        %927 = vst [vmem:[%s739 + $0xa8] sm:$0xf] %v884
        %928 = vst [vmem:[%s739 + $0xb0] sm:$0xf0] %v885
        %929 = vst [vmem:[%s739 + $0xb8] sm:$0xf] %v885
        %930 = vst [vmem:[%s739 + $0xc0] sm:$0xf0] %v886
        %931 = vst [vmem:[%s739 + $0xc8] sm:$0xf] %v886
        %932 = vst [vmem:[%s739 + $0xd0] sm:$0xf0] %v887
        %933 = vst [vmem:[%s739 + $0xd8] sm:$0xf] %v887
        %934 = vst [vmem:[%s739 + $0xe0] sm:$0xf0] %v888
        %935 = vst [vmem:[%s739 + $0xe8] sm:$0xf] %v888
        %936 = vst [vmem:[%s739 + $0xf0] sm:$0xf0] %v889
        %937 = vst [vmem:[%s739 + $0xf8] sm:$0xf] %v889
        %v938 = vld [vmem:[#allocation2] sm:$0xf8]
        %v939 = vld [vmem:[#allocation2 + $0x8] sm:$0xf]
        %v940 = vld [vmem:[#allocation2 + $0x10] sm:$0xf8]
        %v941 = vld [vmem:[#allocation2 + $0x18] sm:$0xf]
        %v942 = vld [vmem:[#allocation2 + $0x20] sm:$0xf8]
        %v943 = vld [vmem:[#allocation2 + $0x28] sm:$0xf]
        %v944 = vld [vmem:[#allocation2 + $0x30] sm:$0xf8]
        %v945 = vld [vmem:[#allocation2 + $0x38] sm:$0xf]
        %v946 = vld [vmem:[#allocation2 + $0x40] sm:$0xf8]
        %v947 = vld [vmem:[#allocation2 + $0x48] sm:$0xf]
        %v948 = vld [vmem:[#allocation2 + $0x50] sm:$0xf8]
        %v949 = vld [vmem:[#allocation2 + $0x58] sm:$0xf]
        %v950 = vld [vmem:[#allocation2 + $0x60] sm:$0xf8]
        %v951 = vld [vmem:[#allocation2 + $0x68] sm:$0xf]
        %v952 = vld [vmem:[#allocation2 + $0x70] sm:$0xf8]
        %v953 = vld [vmem:[#allocation2 + $0x78] sm:$0xf]
        %v954 = vld [vmem:[#allocation2 + $0x80] sm:$0xf8]
        %v955 = vld [vmem:[#allocation2 + $0x88] sm:$0xf]
        %v956 = vld [vmem:[#allocation2 + $0x90] sm:$0xf8]
        %v957 = vld [vmem:[#allocation2 + $0x98] sm:$0xf]
        %v958 = vld [vmem:[#allocation2 + $0xa0] sm:$0xf8]
        %v959 = vld [vmem:[#allocation2 + $0xa8] sm:$0xf]
        %v960 = vld [vmem:[#allocation2 + $0xb0] sm:$0xf8]
        %v961 = vld [vmem:[#allocation2 + $0xb8] sm:$0xf]
        %v962 = vld [vmem:[#allocation2 + $0xc0] sm:$0xf8]
        %v963 = vld [vmem:[#allocation2 + $0xc8] sm:$0xf]
        %v964 = vld [vmem:[#allocation2 + $0xd0] sm:$0xf8]
        %v965 = vld [vmem:[#allocation2 + $0xd8] sm:$0xf]
        %v966 = vld [vmem:[#allocation2 + $0xe0] sm:$0xf8]
        %v967 = vld [vmem:[#allocation2 + $0xe8] sm:$0xf]
        %v968 = vld [vmem:[#allocation2 + $0xf0] sm:$0xf8]
        %v969 = vld [vmem:[#allocation2 + $0xf8] sm:$0xf]
        %v971 = vshrl.u32 %v938, 16
        %v973 = vrot.slane %v971, 3
        %v974 = vshll.u32 %v938, 16
        %v976 = vrot.slane %v974, 4
        %v977 = vor.u32 %v973, %v976
        %v979 = vshrl.u32 %v939, 16
        %v981 = vrot.slane %v979, 3
        %v982 = vshll.u32 %v939, 16
        %v984 = vrot.slane %v982, 4
        %v985 = vor.u32 %v981, %v984
        %v986 = vsel %vm792, %v977, %v985
        %v988 = vshrl.u32 %v940, 16
        %v990 = vrot.slane %v988, 3
        %v991 = vshll.u32 %v940, 16
        %v993 = vrot.slane %v991, 4
        %v994 = vor.u32 %v990, %v993
        %v996 = vshrl.u32 %v941, 16
        %v998 = vrot.slane %v996, 3
        %v999 = vshll.u32 %v941, 16
        %v1001 = vrot.slane %v999, 4
        %v1002 = vor.u32 %v998, %v1001
        %v1003 = vsel %vm792, %v994, %v1002
        %v1005 = vshrl.u32 %v942, 16
        %v1007 = vrot.slane %v1005, 3
        %v1008 = vshll.u32 %v942, 16
        %v1010 = vrot.slane %v1008, 4
        %v1011 = vor.u32 %v1007, %v1010
        %v1013 = vshrl.u32 %v943, 16
        %v1015 = vrot.slane %v1013, 3
        %v1016 = vshll.u32 %v943, 16
        %v1018 = vrot.slane %v1016, 4
        %v1019 = vor.u32 %v1015, %v1018
        %v1020 = vsel %vm792, %v1011, %v1019
        %v1022 = vshrl.u32 %v944, 16
        %v1024 = vrot.slane %v1022, 3
        %v1025 = vshll.u32 %v944, 16
        %v1027 = vrot.slane %v1025, 4
        %v1028 = vor.u32 %v1024, %v1027
        %v1030 = vshrl.u32 %v945, 16
        %v1032 = vrot.slane %v1030, 3
        %v1033 = vshll.u32 %v945, 16
        %v1035 = vrot.slane %v1033, 4
        %v1036 = vor.u32 %v1032, %v1035
        %v1037 = vsel %vm792, %v1028, %v1036
        %v1039 = vshrl.u32 %v946, 16
        %v1041 = vrot.slane %v1039, 3
        %v1042 = vshll.u32 %v946, 16
        %v1044 = vrot.slane %v1042, 4
        %v1045 = vor.u32 %v1041, %v1044
        %v1047 = vshrl.u32 %v947, 16
        %v1049 = vrot.slane %v1047, 3
        %v1050 = vshll.u32 %v947, 16
        %v1052 = vrot.slane %v1050, 4
        %v1053 = vor.u32 %v1049, %v1052
        %v1054 = vsel %vm792, %v1045, %v1053
        %v1056 = vshrl.u32 %v948, 16
        %v1058 = vrot.slane %v1056, 3
        %v1059 = vshll.u32 %v948, 16
        %v1061 = vrot.slane %v1059, 4
        %v1062 = vor.u32 %v1058, %v1061
        %v1064 = vshrl.u32 %v949, 16
        %v1066 = vrot.slane %v1064, 3
        %v1067 = vshll.u32 %v949, 16
        %v1069 = vrot.slane %v1067, 4
        %v1070 = vor.u32 %v1066, %v1069
        %v1071 = vsel %vm792, %v1062, %v1070
        %v1073 = vshrl.u32 %v950, 16
        %v1075 = vrot.slane %v1073, 3
        %v1076 = vshll.u32 %v950, 16
        %v1078 = vrot.slane %v1076, 4
        %v1079 = vor.u32 %v1075, %v1078
        %v1081 = vshrl.u32 %v951, 16
        %v1083 = vrot.slane %v1081, 3
        %v1084 = vshll.u32 %v951, 16
        %v1086 = vrot.slane %v1084, 4
        %v1087 = vor.u32 %v1083, %v1086
        %v1088 = vsel %vm792, %v1079, %v1087
        %v1090 = vshrl.u32 %v952, 16
        %v1092 = vrot.slane %v1090, 3
        %v1093 = vshll.u32 %v952, 16
        %v1095 = vrot.slane %v1093, 4
        %v1096 = vor.u32 %v1092, %v1095
        %v1098 = vshrl.u32 %v953, 16
        %v1100 = vrot.slane %v1098, 3
        %v1101 = vshll.u32 %v953, 16
        %v1103 = vrot.slane %v1101, 4
        %v1104 = vor.u32 %v1100, %v1103
        %v1105 = vsel %vm792, %v1096, %v1104
        %v1107 = vshrl.u32 %v954, 16
        %v1109 = vrot.slane %v1107, 3
        %v1110 = vshll.u32 %v954, 16
        %v1112 = vrot.slane %v1110, 4
        %v1113 = vor.u32 %v1109, %v1112
        %v1115 = vshrl.u32 %v955, 16
        %v1117 = vrot.slane %v1115, 3
        %v1118 = vshll.u32 %v955, 16
        %v1120 = vrot.slane %v1118, 4
        %v1121 = vor.u32 %v1117, %v1120
        %v1122 = vsel %vm792, %v1113, %v1121
        %v1124 = vshrl.u32 %v956, 16
        %v1126 = vrot.slane %v1124, 3
        %v1127 = vshll.u32 %v956, 16
        %v1129 = vrot.slane %v1127, 4
        %v1130 = vor.u32 %v1126, %v1129
        %v1132 = vshrl.u32 %v957, 16
        %v1134 = vrot.slane %v1132, 3
        %v1135 = vshll.u32 %v957, 16
        %v1137 = vrot.slane %v1135, 4
        %v1138 = vor.u32 %v1134, %v1137
        %v1139 = vsel %vm792, %v1130, %v1138
        %v1141 = vshrl.u32 %v958, 16
        %v1143 = vrot.slane %v1141, 3
        %v1144 = vshll.u32 %v958, 16
        %v1146 = vrot.slane %v1144, 4
        %v1147 = vor.u32 %v1143, %v1146
        %v1149 = vshrl.u32 %v959, 16
        %v1151 = vrot.slane %v1149, 3
        %v1152 = vshll.u32 %v959, 16
        %v1154 = vrot.slane %v1152, 4
        %v1155 = vor.u32 %v1151, %v1154
        %v1156 = vsel %vm792, %v1147, %v1155
        %v1158 = vshrl.u32 %v960, 16
        %v1160 = vrot.slane %v1158, 3
        %v1161 = vshll.u32 %v960, 16
        %v1163 = vrot.slane %v1161, 4
        %v1164 = vor.u32 %v1160, %v1163
        %v1166 = vshrl.u32 %v961, 16
        %v1168 = vrot.slane %v1166, 3
        %v1169 = vshll.u32 %v961, 16
        %v1171 = vrot.slane %v1169, 4
        %v1172 = vor.u32 %v1168, %v1171
        %v1173 = vsel %vm792, %v1164, %v1172
        %v1175 = vshrl.u32 %v962, 16
        %v1177 = vrot.slane %v1175, 3
        %v1178 = vshll.u32 %v962, 16
        %v1180 = vrot.slane %v1178, 4
        %v1181 = vor.u32 %v1177, %v1180
        %v1183 = vshrl.u32 %v963, 16
        %v1185 = vrot.slane %v1183, 3
        %v1186 = vshll.u32 %v963, 16
        %v1188 = vrot.slane %v1186, 4
        %v1189 = vor.u32 %v1185, %v1188
        %v1190 = vsel %vm792, %v1181, %v1189
        %v1192 = vshrl.u32 %v964, 16
        %v1194 = vrot.slane %v1192, 3
        %v1195 = vshll.u32 %v964, 16
        %v1197 = vrot.slane %v1195, 4
        %v1198 = vor.u32 %v1194, %v1197
        %v1200 = vshrl.u32 %v965, 16
        %v1202 = vrot.slane %v1200, 3
        %v1203 = vshll.u32 %v965, 16
        %v1205 = vrot.slane %v1203, 4
        %v1206 = vor.u32 %v1202, %v1205
        %v1207 = vsel %vm792, %v1198, %v1206
        %v1209 = vshrl.u32 %v966, 16
        %v1211 = vrot.slane %v1209, 3
        %v1212 = vshll.u32 %v966, 16
        %v1214 = vrot.slane %v1212, 4
        %v1215 = vor.u32 %v1211, %v1214
        %v1217 = vshrl.u32 %v967, 16
        %v1219 = vrot.slane %v1217, 3
        %v1220 = vshll.u32 %v967, 16
        %v1222 = vrot.slane %v1220, 4
        %v1223 = vor.u32 %v1219, %v1222
        %v1224 = vsel %vm792, %v1215, %v1223
        %v1226 = vshrl.u32 %v968, 16
        %v1228 = vrot.slane %v1226, 3
        %v1229 = vshll.u32 %v968, 16
        %v1231 = vrot.slane %v1229, 4
        %v1232 = vor.u32 %v1228, %v1231
        %v1234 = vshrl.u32 %v969, 16
        %v1236 = vrot.slane %v1234, 3
        %v1237 = vshll.u32 %v969, 16
        %v1239 = vrot.slane %v1237, 4
        %v1240 = vor.u32 %v1236, %v1239
        %v1241 = vsel %vm792, %v1232, %v1240
        %v1258 = vld [vmem:[#allocation9] sm:$0xf]
        %v1259 = vld [vmem:[#allocation9 + $0x4] sm:$0xf]
        %v1260 = vld [vmem:[#allocation9 + $0x8] sm:$0xf]
        %v1261 = vld [vmem:[#allocation9 + $0xc] sm:$0xf]
        %v1262 = vld [vmem:[#allocation9 + $0x10] sm:$0xf]
        %v1263 = vld [vmem:[#allocation9 + $0x14] sm:$0xf]
        %v1264 = vld [vmem:[#allocation9 + $0x18] sm:$0xf]
        %v1265 = vld [vmem:[#allocation9 + $0x1c] sm:$0xf]
        %v1266 = vld [vmem:[#allocation9 + $0x20] sm:$0xf]
        %v1267 = vld [vmem:[#allocation9 + $0x24] sm:$0xf]
        %v1268 = vld [vmem:[#allocation9 + $0x28] sm:$0xf]
        %v1269 = vld [vmem:[#allocation9 + $0x2c] sm:$0xf]
        %v1270 = vld [vmem:[#allocation9 + $0x30] sm:$0xf]
        %v1271 = vld [vmem:[#allocation9 + $0x34] sm:$0xf]
        %v1272 = vld [vmem:[#allocation9 + $0x38] sm:$0xf]
        %v1273 = vld [vmem:[#allocation9 + $0x3c] sm:$0xf]
        %v1274 = vld [vmem:[#allocation2] sm:$0xf0]
        %v1275 = vld [vmem:[#allocation2 + $0x10] sm:$0xf0]
        %v1276 = vld [vmem:[#allocation2 + $0x20] sm:$0xf0]
        %v1277 = vld [vmem:[#allocation2 + $0x30] sm:$0xf0]
        %v1278 = vld [vmem:[#allocation2 + $0x40] sm:$0xf0]
        %v1279 = vld [vmem:[#allocation2 + $0x50] sm:$0xf0]
        %v1280 = vld [vmem:[#allocation2 + $0x60] sm:$0xf0]
        %v1281 = vld [vmem:[#allocation2 + $0x70] sm:$0xf0]
        %v1282 = vld [vmem:[#allocation2 + $0x80] sm:$0xf0]
        %v1283 = vld [vmem:[#allocation2 + $0x90] sm:$0xf0]
        %v1284 = vld [vmem:[#allocation2 + $0xa0] sm:$0xf0]
        %v1285 = vld [vmem:[#allocation2 + $0xb0] sm:$0xf0]
        %v1286 = vld [vmem:[#allocation2 + $0xc0] sm:$0xf0]
        %v1287 = vld [vmem:[#allocation2 + $0xd0] sm:$0xf0]
        %v1288 = vld [vmem:[#allocation2 + $0xe0] sm:$0xf0]
        %v1289 = vld [vmem:[#allocation2 + $0xf0] sm:$0xf0]
        %vm1322 = vcmask 1043456
        %v1323 = vrot.slane %v1274, 4
        %v1324 = vrot.slane %v939, 4
        %v1325 = vsel %vm1322, %v1323, %v1324
        %v1326 = vrot.slane %v1275, 4
        %v1327 = vrot.slane %v941, 4
        %v1328 = vsel %vm1322, %v1326, %v1327
        %v1329 = vrot.slane %v1276, 4
        %v1330 = vrot.slane %v943, 4
        %v1331 = vsel %vm1322, %v1329, %v1330
        %v1332 = vrot.slane %v1277, 4
        %v1333 = vrot.slane %v945, 4
        %v1334 = vsel %vm1322, %v1332, %v1333
        %v1335 = vrot.slane %v1278, 4
        %v1336 = vrot.slane %v947, 4
        %v1337 = vsel %vm1322, %v1335, %v1336
        %v1338 = vrot.slane %v1279, 4
        %v1339 = vrot.slane %v949, 4
        %v1340 = vsel %vm1322, %v1338, %v1339
        %v1341 = vrot.slane %v1280, 4
        %v1342 = vrot.slane %v951, 4
        %v1343 = vsel %vm1322, %v1341, %v1342
        %v1344 = vrot.slane %v1281, 4
        %v1345 = vrot.slane %v953, 4
        %v1346 = vsel %vm1322, %v1344, %v1345
        %v1347 = vrot.slane %v1282, 4
        %v1348 = vrot.slane %v955, 4
        %v1349 = vsel %vm1322, %v1347, %v1348
        %v1350 = vrot.slane %v1283, 4
        %v1351 = vrot.slane %v957, 4
        %v1352 = vsel %vm1322, %v1350, %v1351
        %v1353 = vrot.slane %v1284, 4
        %v1354 = vrot.slane %v959, 4
        %v1355 = vsel %vm1322, %v1353, %v1354
        %v1356 = vrot.slane %v1285, 4
        %v1357 = vrot.slane %v961, 4
        %v1358 = vsel %vm1322, %v1356, %v1357
        %v1359 = vrot.slane %v1286, 4
        %v1360 = vrot.slane %v963, 4
        %v1361 = vsel %vm1322, %v1359, %v1360
        %v1362 = vrot.slane %v1287, 4
        %v1363 = vrot.slane %v965, 4
        %v1364 = vsel %vm1322, %v1362, %v1363
        %v1365 = vrot.slane %v1288, 4
        %v1366 = vrot.slane %v967, 4
        %v1367 = vsel %vm1322, %v1365, %v1366
        %v1368 = vrot.slane %v1289, 4
        %v1369 = vrot.slane %v969, 4
        %v1370 = vsel %vm1322, %v1368, %v1369
        %s1387 = scalar_lea.vmem [#allocation9], 64
        %v1388 = vld [vmem:[%s1387] sm:$0xf]
        %v1389 = vld [vmem:[%s1387 + $0x4] sm:$0xf]
        %v1390 = vld [vmem:[%s1387 + $0x8] sm:$0xf]
        %v1391 = vld [vmem:[%s1387 + $0xc] sm:$0xf]
        %v1392 = vld [vmem:[%s1387 + $0x10] sm:$0xf]
        %v1393 = vld [vmem:[%s1387 + $0x14] sm:$0xf]
        %v1394 = vld [vmem:[%s1387 + $0x18] sm:$0xf]
        %v1395 = vld [vmem:[%s1387 + $0x1c] sm:$0xf]
        %v1396 = vld [vmem:[%s1387 + $0x20] sm:$0xf]
        %v1397 = vld [vmem:[%s1387 + $0x24] sm:$0xf]
        %v1398 = vld [vmem:[%s1387 + $0x28] sm:$0xf]
        %v1399 = vld [vmem:[%s1387 + $0x2c] sm:$0xf]
        %v1400 = vld [vmem:[%s1387 + $0x30] sm:$0xf]
        %v1401 = vld [vmem:[%s1387 + $0x34] sm:$0xf]
        %v1402 = vld [vmem:[%s1387 + $0x38] sm:$0xf]
        %v1403 = vld [vmem:[%s1387 + $0x3c] sm:$0xf]
        %v1420 = vunpack.c.l.b16 %v1388
        %v1421 = vunpack.c.l.b16 %v1389
        %v1422 = vunpack.c.l.b16 %v1390
        %v1423 = vunpack.c.l.b16 %v1391
        %v1424 = vunpack.c.l.b16 %v1392
        %v1425 = vunpack.c.l.b16 %v1393
        %v1426 = vunpack.c.l.b16 %v1394
        %v1427 = vunpack.c.l.b16 %v1395
        %v1428 = vunpack.c.l.b16 %v1396
        %v1429 = vunpack.c.l.b16 %v1397
        %v1430 = vunpack.c.l.b16 %v1398
        %v1431 = vunpack.c.l.b16 %v1399
        %v1432 = vunpack.c.l.b16 %v1400
        %v1433 = vunpack.c.l.b16 %v1401
        %v1434 = vunpack.c.l.b16 %v1402
        %v1435 = vunpack.c.l.b16 %v1403
        %v1436 = vpack.c.b16 %v1421, %v1420
        %v1437 = vpack.c.b16 %v1423, %v1422
        %v1438 = vpack.c.b16 %v1425, %v1424
        %v1439 = vpack.c.b16 %v1427, %v1426
        %v1440 = vpack.c.b16 %v1429, %v1428
        %v1441 = vpack.c.b16 %v1431, %v1430
        %v1442 = vpack.c.b16 %v1433, %v1432
        %v1443 = vpack.c.b16 %v1435, %v1434
        %1452 = vmatprep.subr.bf16.mxu0 0
        %1453 = vmatpush1.bf16.msra.mxu0 %v1436
        %1454 = vmatprep.subr.bf16.mxu0 0
        %1455 = vmatpush1.bf16.msra.mxu0 %v1437
        %1456 = vmatprep.subr.bf16.mxu0 0
        %1457 = vmatpush1.bf16.msra.mxu0 %v1438
        %1458 = vmatprep.subr.bf16.mxu0 0
        %1459 = vmatpush1.bf16.msra.mxu0 %v1439
        %1460 = vmatprep.subr.bf16.mxu0 0
        %1461 = vmatpush1.bf16.msra.mxu0 %v1440
        %1462 = vmatprep.subr.bf16.mxu0 0
        %1463 = vmatpush1.bf16.msra.mxu0 %v1441
        %1464 = vmatprep.subr.bf16.mxu0 0
        %1465 = vmatpush1.bf16.msra.mxu0 %v1442
        %1466 = vmatprep.subr.bf16.mxu0 0
        %1467 = vmatpush1.bf16.msra.mxu0 %v1443
        %1468 = vmatprep.subr.bf16.mxu0 0
        %1469 = vmatpush1.bf16.msra.mxu0 0
        %1470 = vmatprep.subr.bf16.mxu0 0
        %1471 = vmatpush1.bf16.msra.mxu0 0
        %1472 = vmatprep.subr.bf16.mxu0 0
        %1473 = vmatpush1.bf16.msra.mxu0 0
        %1474 = vmatprep.subr.bf16.mxu0 0
        %1475 = vmatpush1.bf16.msra.mxu0 0
        %1476 = vmatprep.subr.bf16.mxu0 0
        %1477 = vmatpush1.bf16.msra.mxu0 0
        %1478 = vmatprep.subr.bf16.mxu0 0
        %1479 = vmatpush1.bf16.msra.mxu0 0
        %1480 = vmatprep.subr.bf16.mxu0 0
        %1481 = vmatpush1.bf16.msra.mxu0 0
        %1482 = vmatprep.subr.bf16.mxu0 0
        %1483 = vmatpush1.bf16.msra.mxu0 0
        %1484 = vmatprep.mubr.bf16.mxu0 0
        %1485 = vmatmul.mubr.bf16.gmra.mrb[0].mxu0 %v1325
        %v1486 = vpop.f32.mrb[0].mxu0
        %v1487 = vadd.f32 0.0, %v1486
        %v1488 = vpop.f32.mrb[0].mxu0
        %v1489 = vpop.f32.mrb[0].mxu0
        %v1490 = vadd.f32 0.0, %v1489
        %v1491 = vpop.f32.mrb[0].mxu0
        %1492 = vmatprep.mubr.bf16.mxu0 0
        %1493 = vmatmul.mubr.bf16.gmra.mrb[0].mxu0 %v1328
        %v1494 = vpop.f32.mrb[0].mxu0
        %v1495 = vadd.f32 0.0, %v1494
        %v1496 = vpop.f32.mrb[0].mxu0
        %v1497 = vpop.f32.mrb[0].mxu0
        %v1498 = vadd.f32 0.0, %v1497
        %v1499 = vpop.f32.mrb[0].mxu0
        %1500 = vmatprep.mubr.bf16.mxu0 0
        %1501 = vmatmul.mubr.bf16.gmra.mrb[0].mxu0 %v1331
        %v1502 = vpop.f32.mrb[0].mxu0
        %v1503 = vadd.f32 0.0, %v1502
        %v1504 = vpop.f32.mrb[0].mxu0
        %v1505 = vpop.f32.mrb[0].mxu0
        %v1506 = vadd.f32 0.0, %v1505
        %v1507 = vpop.f32.mrb[0].mxu0
        %1508 = vmatprep.mubr.bf16.mxu0 0
        %1509 = vmatmul.mubr.bf16.gmra.mrb[0].mxu0 %v1334
        %v1510 = vpop.f32.mrb[0].mxu0
        %v1511 = vadd.f32 0.0, %v1510
        %v1512 = vpop.f32.mrb[0].mxu0
        %v1513 = vpop.f32.mrb[0].mxu0
        %v1514 = vadd.f32 0.0, %v1513
        %v1515 = vpop.f32.mrb[0].mxu0
        %1516 = vmatprep.mubr.bf16.mxu0 0
        %1517 = vmatmul.mubr.bf16.gmra.mrb[0].mxu0 %v1337
        %v1518 = vpop.f32.mrb[0].mxu0
        %v1519 = vadd.f32 0.0, %v1518
        %v1520 = vpop.f32.mrb[0].mxu0
        %v1521 = vpop.f32.mrb[0].mxu0
        %v1522 = vadd.f32 0.0, %v1521
        %v1523 = vpop.f32.mrb[0].mxu0
        %1524 = vmatprep.mubr.bf16.mxu0 0
        %1525 = vmatmul.mubr.bf16.gmra.mrb[0].mxu0 %v1340
        %v1526 = vpop.f32.mrb[0].mxu0
        %v1527 = vadd.f32 0.0, %v1526
        %v1528 = vpop.f32.mrb[0].mxu0
        %v1529 = vpop.f32.mrb[0].mxu0
        %v1530 = vadd.f32 0.0, %v1529
        %v1531 = vpop.f32.mrb[0].mxu0
        %1532 = vmatprep.mubr.bf16.mxu0 0
        %1533 = vmatmul.mubr.bf16.gmra.mrb[0].mxu0 %v1343
        %v1534 = vpop.f32.mrb[0].mxu0
        %v1535 = vadd.f32 0.0, %v1534
        %v1536 = vpop.f32.mrb[0].mxu0
        %v1537 = vpop.f32.mrb[0].mxu0
        %v1538 = vadd.f32 0.0, %v1537
        %v1539 = vpop.f32.mrb[0].mxu0
        %1540 = vmatprep.mubr.bf16.mxu0 0
        %1541 = vmatmul.mubr.bf16.gmra.mrb[0].mxu0 %v1346
        %v1542 = vpop.f32.mrb[0].mxu0
        %v1543 = vadd.f32 0.0, %v1542
        %v1544 = vpop.f32.mrb[0].mxu0
        %v1545 = vpop.f32.mrb[0].mxu0
        %v1546 = vadd.f32 0.0, %v1545
        %v1547 = vpop.f32.mrb[0].mxu0
        %1548 = vmatprep.mubr.bf16.mxu0 0
        %1549 = vmatmul.mubr.bf16.gmra.mrb[0].mxu0 %v1349
        %v1550 = vpop.f32.mrb[0].mxu0
        %v1551 = vadd.f32 0.0, %v1550
        %v1552 = vpop.f32.mrb[0].mxu0
        %v1553 = vpop.f32.mrb[0].mxu0
        %v1554 = vadd.f32 0.0, %v1553
        %v1555 = vpop.f32.mrb[0].mxu0
        %1556 = vmatprep.mubr.bf16.mxu0 0
        %1557 = vmatmul.mubr.bf16.gmra.mrb[0].mxu0 %v1352
        %v1558 = vpop.f32.mrb[0].mxu0
        %v1559 = vadd.f32 0.0, %v1558
        %v1560 = vpop.f32.mrb[0].mxu0
        %v1561 = vpop.f32.mrb[0].mxu0
        %v1562 = vadd.f32 0.0, %v1561
        %v1563 = vpop.f32.mrb[0].mxu0
        %1564 = vmatprep.mubr.bf16.mxu0 0
        %1565 = vmatmul.mubr.bf16.gmra.mrb[0].mxu0 %v1355
        %v1566 = vpop.f32.mrb[0].mxu0
        %v1567 = vadd.f32 0.0, %v1566
        %v1568 = vpop.f32.mrb[0].mxu0
        %v1569 = vpop.f32.mrb[0].mxu0
        %v1570 = vadd.f32 0.0, %v1569
        %v1571 = vpop.f32.mrb[0].mxu0
        %1572 = vmatprep.mubr.bf16.mxu0 0
        %1573 = vmatmul.mubr.bf16.gmra.mrb[0].mxu0 %v1358
        %v1574 = vpop.f32.mrb[0].mxu0
        %v1575 = vadd.f32 0.0, %v1574
        %v1576 = vpop.f32.mrb[0].mxu0
        %v1577 = vpop.f32.mrb[0].mxu0
        %v1578 = vadd.f32 0.0, %v1577
        %v1579 = vpop.f32.mrb[0].mxu0
        %1580 = vmatprep.mubr.bf16.mxu0 0
        %1581 = vmatmul.mubr.bf16.gmra.mrb[0].mxu0 %v1361
        %v1582 = vpop.f32.mrb[0].mxu0
        %v1583 = vadd.f32 0.0, %v1582
        %v1584 = vpop.f32.mrb[0].mxu0
        %v1585 = vpop.f32.mrb[0].mxu0
        %v1586 = vadd.f32 0.0, %v1585
        %v1587 = vpop.f32.mrb[0].mxu0
        %1588 = vmatprep.mubr.bf16.mxu0 0
        %1589 = vmatmul.mubr.bf16.gmra.mrb[0].mxu0 %v1364
        %v1590 = vpop.f32.mrb[0].mxu0
        %v1591 = vadd.f32 0.0, %v1590
        %v1592 = vpop.f32.mrb[0].mxu0
        %v1593 = vpop.f32.mrb[0].mxu0
        %v1594 = vadd.f32 0.0, %v1593
        %v1595 = vpop.f32.mrb[0].mxu0
        %1596 = vmatprep.mubr.bf16.mxu0 0
        %1597 = vmatmul.mubr.bf16.gmra.mrb[0].mxu0 %v1367
        %v1598 = vpop.f32.mrb[0].mxu0
        %v1599 = vadd.f32 0.0, %v1598
        %v1600 = vpop.f32.mrb[0].mxu0
        %v1601 = vpop.f32.mrb[0].mxu0
        %v1602 = vadd.f32 0.0, %v1601
        %v1603 = vpop.f32.mrb[0].mxu0
        %1604 = vmatprep.mubr.bf16.mxu0 0
        %1605 = vmatmul.mubr.bf16.gmra.mrb[0].mxu0 %v1370
        %v1606 = vpop.f32.mrb[0].mxu0
        %v1607 = vadd.f32 0.0, %v1606
        %v1608 = vpop.f32.mrb[0].mxu0
        %v1609 = vpop.f32.mrb[0].mxu0
        %v1610 = vadd.f32 0.0, %v1609
        %v1611 = vpop.f32.mrb[0].mxu0
        %1612 = vdwg.mxu0
        %v1629 = vunpack.c.l.b16 %v1258
        %v1630 = vunpack.c.l.b16 %v1259
        %v1631 = vunpack.c.l.b16 %v1260
        %v1632 = vunpack.c.l.b16 %v1261
        %v1633 = vunpack.c.l.b16 %v1262
        %v1634 = vunpack.c.l.b16 %v1263
        %v1635 = vunpack.c.l.b16 %v1264
        %v1636 = vunpack.c.l.b16 %v1265
        %v1637 = vunpack.c.l.b16 %v1266
        %v1638 = vunpack.c.l.b16 %v1267
        %v1639 = vunpack.c.l.b16 %v1268
        %v1640 = vunpack.c.l.b16 %v1269
        %v1641 = vunpack.c.l.b16 %v1270
        %v1642 = vunpack.c.l.b16 %v1271
        %v1643 = vunpack.c.l.b16 %v1272
        %v1644 = vunpack.c.l.b16 %v1273
        %v1645 = vpack.c.b16 %v1630, %v1629
        %v1646 = vpack.c.b16 %v1632, %v1631
        %v1647 = vpack.c.b16 %v1634, %v1633
        %v1648 = vpack.c.b16 %v1636, %v1635
        %v1649 = vpack.c.b16 %v1638, %v1637
        %v1650 = vpack.c.b16 %v1640, %v1639
        %v1651 = vpack.c.b16 %v1642, %v1641
        %v1652 = vpack.c.b16 %v1644, %v1643
        %1661 = vmatprep.subr.bf16.mxu0 0
        %1662 = vmatpush1.bf16.msra.mxu0 %v1645
        %1663 = vmatprep.subr.bf16.mxu0 0
        %1664 = vmatpush1.bf16.msra.mxu0 %v1646
        %1665 = vmatprep.subr.bf16.mxu0 0
        %1666 = vmatpush1.bf16.msra.mxu0 %v1647
        %1667 = vmatprep.subr.bf16.mxu0 0
        %1668 = vmatpush1.bf16.msra.mxu0 %v1648
        %1669 = vmatprep.subr.bf16.mxu0 0
        %1670 = vmatpush1.bf16.msra.mxu0 %v1649
        %1671 = vmatprep.subr.bf16.mxu0 0
        %1672 = vmatpush1.bf16.msra.mxu0 %v1650
        %1673 = vmatprep.subr.bf16.mxu0 0
        %1674 = vmatpush1.bf16.msra.mxu0 %v1651
        %1675 = vmatprep.subr.bf16.mxu0 0
        %1676 = vmatpush1.bf16.msra.mxu0 %v1652
        %1677 = vmatprep.subr.bf16.mxu0 0
        %1678 = vmatpush1.bf16.msra.mxu0 0
        %1679 = vmatprep.subr.bf16.mxu0 0
        %1680 = vmatpush1.bf16.msra.mxu0 0
        %1681 = vmatprep.subr.bf16.mxu0 0
        %1682 = vmatpush1.bf16.msra.mxu0 0
        %1683 = vmatprep.subr.bf16.mxu0 0
        %1684 = vmatpush1.bf16.msra.mxu0 0
        %1685 = vmatprep.subr.bf16.mxu0 0
        %1686 = vmatpush1.bf16.msra.mxu0 0
        %1687 = vmatprep.subr.bf16.mxu0 0
        %1688 = vmatpush1.bf16.msra.mxu0 0
        %1689 = vmatprep.subr.bf16.mxu0 0
        %1690 = vmatpush1.bf16.msra.mxu0 0
        %1691 = vmatprep.subr.bf16.mxu0 0
        %1692 = vmatpush1.bf16.msra.mxu0 0
        %1693 = vmatprep.mubr.bf16.mxu0 0
        %1694 = vmatmul.mubr.bf16.gmra.mrb[0].mxu0 %v986
        %v1695 = vpop.f32.mrb[0].mxu0
        %v1696 = vadd.f32 %v1487, %v1695
        %v1697 = vpop.f32.mrb[0].mxu0
        %v1698 = vpop.f32.mrb[0].mxu0
        %v1699 = vadd.f32 %v1490, %v1698
        %v1700 = vpop.f32.mrb[0].mxu0
        %1701 = vmatprep.mubr.bf16.mxu0 0
        %1702 = vmatmul.mubr.bf16.gmra.mrb[0].mxu0 %v1003
        %v1703 = vpop.f32.mrb[0].mxu0
        %v1704 = vadd.f32 %v1495, %v1703
        %v1705 = vpop.f32.mrb[0].mxu0
        %v1706 = vpop.f32.mrb[0].mxu0
        %v1707 = vadd.f32 %v1498, %v1706
        %v1708 = vpop.f32.mrb[0].mxu0
        %1709 = vmatprep.mubr.bf16.mxu0 0
        %1710 = vmatmul.mubr.bf16.gmra.mrb[0].mxu0 %v1020
        %v1711 = vpop.f32.mrb[0].mxu0
        %v1712 = vadd.f32 %v1503, %v1711
        %v1713 = vpop.f32.mrb[0].mxu0
        %v1714 = vpop.f32.mrb[0].mxu0
        %v1715 = vadd.f32 %v1506, %v1714
        %v1716 = vpop.f32.mrb[0].mxu0
        %1717 = vmatprep.mubr.bf16.mxu0 0
        %1718 = vmatmul.mubr.bf16.gmra.mrb[0].mxu0 %v1037
        %v1719 = vpop.f32.mrb[0].mxu0
        %v1720 = vadd.f32 %v1511, %v1719
        %v1721 = vpop.f32.mrb[0].mxu0
        %v1722 = vpop.f32.mrb[0].mxu0
        %v1723 = vadd.f32 %v1514, %v1722
        %v1724 = vpop.f32.mrb[0].mxu0
        %1725 = vmatprep.mubr.bf16.mxu0 0
        %1726 = vmatmul.mubr.bf16.gmra.mrb[0].mxu0 %v1054
        %v1727 = vpop.f32.mrb[0].mxu0
        %v1728 = vadd.f32 %v1519, %v1727
        %v1729 = vpop.f32.mrb[0].mxu0
        %v1730 = vpop.f32.mrb[0].mxu0
        %v1731 = vadd.f32 %v1522, %v1730
        %v1732 = vpop.f32.mrb[0].mxu0
        %1733 = vmatprep.mubr.bf16.mxu0 0
        %1734 = vmatmul.mubr.bf16.gmra.mrb[0].mxu0 %v1071
        %v1735 = vpop.f32.mrb[0].mxu0
        %v1736 = vadd.f32 %v1527, %v1735
        %v1737 = vpop.f32.mrb[0].mxu0
        %v1738 = vpop.f32.mrb[0].mxu0
        %v1739 = vadd.f32 %v1530, %v1738
        %v1740 = vpop.f32.mrb[0].mxu0
        %1741 = vmatprep.mubr.bf16.mxu0 0
        %1742 = vmatmul.mubr.bf16.gmra.mrb[0].mxu0 %v1088
        %v1743 = vpop.f32.mrb[0].mxu0
        %v1744 = vadd.f32 %v1535, %v1743
        %v1745 = vpop.f32.mrb[0].mxu0
        %v1746 = vpop.f32.mrb[0].mxu0
        %v1747 = vadd.f32 %v1538, %v1746
        %v1748 = vpop.f32.mrb[0].mxu0
        %1749 = vmatprep.mubr.bf16.mxu0 0
        %1750 = vmatmul.mubr.bf16.gmra.mrb[0].mxu0 %v1105
        %v1751 = vpop.f32.mrb[0].mxu0
        %v1752 = vadd.f32 %v1543, %v1751
        %v1753 = vpop.f32.mrb[0].mxu0
        %v1754 = vpop.f32.mrb[0].mxu0
        %v1755 = vadd.f32 %v1546, %v1754
        %v1756 = vpop.f32.mrb[0].mxu0
        %1757 = vmatprep.mubr.bf16.mxu0 0
        %1758 = vmatmul.mubr.bf16.gmra.mrb[0].mxu0 %v1122
        %v1759 = vpop.f32.mrb[0].mxu0
        %v1760 = vadd.f32 %v1551, %v1759
        %v1761 = vpop.f32.mrb[0].mxu0
        %v1762 = vpop.f32.mrb[0].mxu0
        %v1763 = vadd.f32 %v1554, %v1762
        %v1764 = vpop.f32.mrb[0].mxu0
        %1765 = vmatprep.mubr.bf16.mxu0 0
        %1766 = vmatmul.mubr.bf16.gmra.mrb[0].mxu0 %v1139
        %v1767 = vpop.f32.mrb[0].mxu0
        %v1768 = vadd.f32 %v1559, %v1767
        %v1769 = vpop.f32.mrb[0].mxu0
        %v1770 = vpop.f32.mrb[0].mxu0
        %v1771 = vadd.f32 %v1562, %v1770
        %v1772 = vpop.f32.mrb[0].mxu0
        %1773 = vmatprep.mubr.bf16.mxu0 0
        %1774 = vmatmul.mubr.bf16.gmra.mrb[0].mxu0 %v1156
        %v1775 = vpop.f32.mrb[0].mxu0
        %v1776 = vadd.f32 %v1567, %v1775
        %v1777 = vpop.f32.mrb[0].mxu0
        %v1778 = vpop.f32.mrb[0].mxu0
        %v1779 = vadd.f32 %v1570, %v1778
        %v1780 = vpop.f32.mrb[0].mxu0
        %1781 = vmatprep.mubr.bf16.mxu0 0
        %1782 = vmatmul.mubr.bf16.gmra.mrb[0].mxu0 %v1173
        %v1783 = vpop.f32.mrb[0].mxu0
        %v1784 = vadd.f32 %v1575, %v1783
        %v1785 = vpop.f32.mrb[0].mxu0
        %v1786 = vpop.f32.mrb[0].mxu0
        %v1787 = vadd.f32 %v1578, %v1786
        %v1788 = vpop.f32.mrb[0].mxu0
        %1789 = vmatprep.mubr.bf16.mxu0 0
        %1790 = vmatmul.mubr.bf16.gmra.mrb[0].mxu0 %v1190
        %v1791 = vpop.f32.mrb[0].mxu0
        %v1792 = vadd.f32 %v1583, %v1791
        %v1793 = vpop.f32.mrb[0].mxu0
        %v1794 = vpop.f32.mrb[0].mxu0
        %v1795 = vadd.f32 %v1586, %v1794
        %v1796 = vpop.f32.mrb[0].mxu0
        %1797 = vmatprep.mubr.bf16.mxu0 0
        %1798 = vmatmul.mubr.bf16.gmra.mrb[0].mxu0 %v1207
        %v1799 = vpop.f32.mrb[0].mxu0
        %v1800 = vadd.f32 %v1591, %v1799
        %v1801 = vpop.f32.mrb[0].mxu0
        %v1802 = vpop.f32.mrb[0].mxu0
        %v1803 = vadd.f32 %v1594, %v1802
        %v1804 = vpop.f32.mrb[0].mxu0
        %1805 = vmatprep.mubr.bf16.mxu0 0
        %1806 = vmatmul.mubr.bf16.gmra.mrb[0].mxu0 %v1224
        %v1807 = vpop.f32.mrb[0].mxu0
        %v1808 = vadd.f32 %v1599, %v1807
        %v1809 = vpop.f32.mrb[0].mxu0
        %v1810 = vpop.f32.mrb[0].mxu0
        %v1811 = vadd.f32 %v1602, %v1810
        %v1812 = vpop.f32.mrb[0].mxu0
        %1813 = vmatprep.mubr.bf16.mxu0 0
        %1814 = vmatmul.mubr.bf16.gmra.mrb[0].mxu0 %v1241
        %v1815 = vpop.f32.mrb[0].mxu0
        %v1816 = vadd.f32 %v1607, %v1815
        %v1817 = vpop.f32.mrb[0].mxu0
        %v1818 = vpop.f32.mrb[0].mxu0
        %v1819 = vadd.f32 %v1610, %v1818
        %v1820 = vpop.f32.mrb[0].mxu0
        %1821 = vdwg.mxu0
        %v1822 = vld [vmem:[#allocation2 + $0x8] sm:$0x1f]
        %v1823 = vld [vmem:[#allocation2 + $0x18] sm:$0x1f]
        %v1824 = vld [vmem:[#allocation2 + $0x28] sm:$0x1f]
        %v1825 = vld [vmem:[#allocation2 + $0x38] sm:$0x1f]
        %v1826 = vld [vmem:[#allocation2 + $0x48] sm:$0x1f]
        %v1827 = vld [vmem:[#allocation2 + $0x58] sm:$0x1f]
        %v1828 = vld [vmem:[#allocation2 + $0x68] sm:$0x1f]
        %v1829 = vld [vmem:[#allocation2 + $0x78] sm:$0x1f]
        %v1830 = vld [vmem:[#allocation2 + $0x88] sm:$0x1f]
        %v1831 = vld [vmem:[#allocation2 + $0x98] sm:$0x1f]
        %v1832 = vld [vmem:[#allocation2 + $0xa8] sm:$0x1f]
        %v1833 = vld [vmem:[#allocation2 + $0xb8] sm:$0x1f]
        %v1834 = vld [vmem:[#allocation2 + $0xc8] sm:$0x1f]
        %v1835 = vld [vmem:[#allocation2 + $0xd8] sm:$0x1f]
        %v1836 = vld [vmem:[#allocation2 + $0xe8] sm:$0x1f]
        %v1837 = vld [vmem:[#allocation2 + $0xf8] sm:$0x1f]
        %vm1838 = vsmask.f32 3328
        %v1840 = vshrl.u32 %v1274, 16
        %v1842 = vrot.slane %v1840, 4
        %v1843 = vshll.u32 %v1274, 16
        %v1845 = vrot.slane %v1843, 5
        %v1846 = vor.u32 %v1842, %v1845
        %v1848 = vshrl.u32 %v1822, 16
        %v1850 = vrot.slane %v1848, 4
        %v1851 = vshll.u32 %v1822, 16
        %v1853 = vrot.slane %v1851, 5
        %v1854 = vor.u32 %v1850, %v1853
        %v1855 = vsel %vm1838, %v1846, %v1854
        %v1857 = vshrl.u32 %v1275, 16
        %v1859 = vrot.slane %v1857, 4
        %v1860 = vshll.u32 %v1275, 16
        %v1862 = vrot.slane %v1860, 5
        %v1863 = vor.u32 %v1859, %v1862
        %v1865 = vshrl.u32 %v1823, 16
        %v1867 = vrot.slane %v1865, 4
        %v1868 = vshll.u32 %v1823, 16
        %v1870 = vrot.slane %v1868, 5
        %v1871 = vor.u32 %v1867, %v1870
        %v1872 = vsel %vm1838, %v1863, %v1871
        %v1874 = vshrl.u32 %v1276, 16
        %v1876 = vrot.slane %v1874, 4
        %v1877 = vshll.u32 %v1276, 16
        %v1879 = vrot.slane %v1877, 5
        %v1880 = vor.u32 %v1876, %v1879
        %v1882 = vshrl.u32 %v1824, 16
        %v1884 = vrot.slane %v1882, 4
        %v1885 = vshll.u32 %v1824, 16
        %v1887 = vrot.slane %v1885, 5
        %v1888 = vor.u32 %v1884, %v1887
        %v1889 = vsel %vm1838, %v1880, %v1888
        %v1891 = vshrl.u32 %v1277, 16
        %v1893 = vrot.slane %v1891, 4
        %v1894 = vshll.u32 %v1277, 16
        %v1896 = vrot.slane %v1894, 5
        %v1897 = vor.u32 %v1893, %v1896
        %v1899 = vshrl.u32 %v1825, 16
        %v1901 = vrot.slane %v1899, 4
        %v1902 = vshll.u32 %v1825, 16
        %v1904 = vrot.slane %v1902, 5
        %v1905 = vor.u32 %v1901, %v1904
        %v1906 = vsel %vm1838, %v1897, %v1905
        %v1908 = vshrl.u32 %v1278, 16
        %v1910 = vrot.slane %v1908, 4
        %v1911 = vshll.u32 %v1278, 16
        %v1913 = vrot.slane %v1911, 5
        %v1914 = vor.u32 %v1910, %v1913
        %v1916 = vshrl.u32 %v1826, 16
        %v1918 = vrot.slane %v1916, 4
        %v1919 = vshll.u32 %v1826, 16
        %v1921 = vrot.slane %v1919, 5
        %v1922 = vor.u32 %v1918, %v1921
        %v1923 = vsel %vm1838, %v1914, %v1922
        %v1925 = vshrl.u32 %v1279, 16
        %v1927 = vrot.slane %v1925, 4
        %v1928 = vshll.u32 %v1279, 16
        %v1930 = vrot.slane %v1928, 5
        %v1931 = vor.u32 %v1927, %v1930
        %v1933 = vshrl.u32 %v1827, 16
        %v1935 = vrot.slane %v1933, 4
        %v1936 = vshll.u32 %v1827, 16
        %v1938 = vrot.slane %v1936, 5
        %v1939 = vor.u32 %v1935, %v1938
        %v1940 = vsel %vm1838, %v1931, %v1939
        %v1942 = vshrl.u32 %v1280, 16
        %v1944 = vrot.slane %v1942, 4
        %v1945 = vshll.u32 %v1280, 16
        %v1947 = vrot.slane %v1945, 5
        %v1948 = vor.u32 %v1944, %v1947
        %v1950 = vshrl.u32 %v1828, 16
        %v1952 = vrot.slane %v1950, 4
        %v1953 = vshll.u32 %v1828, 16
        %v1955 = vrot.slane %v1953, 5
        %v1956 = vor.u32 %v1952, %v1955
        %v1957 = vsel %vm1838, %v1948, %v1956
        %v1959 = vshrl.u32 %v1281, 16
        %v1961 = vrot.slane %v1959, 4
        %v1962 = vshll.u32 %v1281, 16
        %v1964 = vrot.slane %v1962, 5
        %v1965 = vor.u32 %v1961, %v1964
        %v1967 = vshrl.u32 %v1829, 16
        %v1969 = vrot.slane %v1967, 4
        %v1970 = vshll.u32 %v1829, 16
        %v1972 = vrot.slane %v1970, 5
        %v1973 = vor.u32 %v1969, %v1972
        %v1974 = vsel %vm1838, %v1965, %v1973
        %v1976 = vshrl.u32 %v1282, 16
        %v1978 = vrot.slane %v1976, 4
        %v1979 = vshll.u32 %v1282, 16
        %v1981 = vrot.slane %v1979, 5
        %v1982 = vor.u32 %v1978, %v1981
        %v1984 = vshrl.u32 %v1830, 16
        %v1986 = vrot.slane %v1984, 4
        %v1987 = vshll.u32 %v1830, 16
        %v1989 = vrot.slane %v1987, 5
        %v1990 = vor.u32 %v1986, %v1989
        %v1991 = vsel %vm1838, %v1982, %v1990
        %v1993 = vshrl.u32 %v1283, 16
        %v1995 = vrot.slane %v1993, 4
        %v1996 = vshll.u32 %v1283, 16
        %v1998 = vrot.slane %v1996, 5
        %v1999 = vor.u32 %v1995, %v1998
        %v2001 = vshrl.u32 %v1831, 16
        %v2003 = vrot.slane %v2001, 4
        %v2004 = vshll.u32 %v1831, 16
        %v2006 = vrot.slane %v2004, 5
        %v2007 = vor.u32 %v2003, %v2006
        %v2008 = vsel %vm1838, %v1999, %v2007
        %v2010 = vshrl.u32 %v1284, 16
        %v2012 = vrot.slane %v2010, 4
        %v2013 = vshll.u32 %v1284, 16
        %v2015 = vrot.slane %v2013, 5
        %v2016 = vor.u32 %v2012, %v2015
        %v2018 = vshrl.u32 %v1832, 16
        %v2020 = vrot.slane %v2018, 4
        %v2021 = vshll.u32 %v1832, 16
        %v2023 = vrot.slane %v2021, 5
        %v2024 = vor.u32 %v2020, %v2023
        %v2025 = vsel %vm1838, %v2016, %v2024
        %v2027 = vshrl.u32 %v1285, 16
        %v2029 = vrot.slane %v2027, 4
        %v2030 = vshll.u32 %v1285, 16
        %v2032 = vrot.slane %v2030, 5
        %v2033 = vor.u32 %v2029, %v2032
        %v2035 = vshrl.u32 %v1833, 16
        %v2037 = vrot.slane %v2035, 4
        %v2038 = vshll.u32 %v1833, 16
        %v2040 = vrot.slane %v2038, 5
        %v2041 = vor.u32 %v2037, %v2040
        %v2042 = vsel %vm1838, %v2033, %v2041
        %v2044 = vshrl.u32 %v1286, 16
        %v2046 = vrot.slane %v2044, 4
        %v2047 = vshll.u32 %v1286, 16
        %v2049 = vrot.slane %v2047, 5
        %v2050 = vor.u32 %v2046, %v2049
        %v2052 = vshrl.u32 %v1834, 16
        %v2054 = vrot.slane %v2052, 4
        %v2055 = vshll.u32 %v1834, 16
        %v2057 = vrot.slane %v2055, 5
        %v2058 = vor.u32 %v2054, %v2057
        %v2059 = vsel %vm1838, %v2050, %v2058
        %v2061 = vshrl.u32 %v1287, 16
        %v2063 = vrot.slane %v2061, 4
        %v2064 = vshll.u32 %v1287, 16
        %v2066 = vrot.slane %v2064, 5
        %v2067 = vor.u32 %v2063, %v2066
        %v2069 = vshrl.u32 %v1835, 16
        %v2071 = vrot.slane %v2069, 4
        %v2072 = vshll.u32 %v1835, 16
        %v2074 = vrot.slane %v2072, 5
        %v2075 = vor.u32 %v2071, %v2074
        %v2076 = vsel %vm1838, %v2067, %v2075
        %v2078 = vshrl.u32 %v1288, 16
        %v2080 = vrot.slane %v2078, 4
        %v2081 = vshll.u32 %v1288, 16
        %v2083 = vrot.slane %v2081, 5
        %v2084 = vor.u32 %v2080, %v2083
        %v2086 = vshrl.u32 %v1836, 16
        %v2088 = vrot.slane %v2086, 4
        %v2089 = vshll.u32 %v1836, 16
        %v2091 = vrot.slane %v2089, 5
        %v2092 = vor.u32 %v2088, %v2091
        %v2093 = vsel %vm1838, %v2084, %v2092
        %v2095 = vshrl.u32 %v1289, 16
        %v2097 = vrot.slane %v2095, 4
        %v2098 = vshll.u32 %v1289, 16
        %v2100 = vrot.slane %v2098, 5
        %v2101 = vor.u32 %v2097, %v2100
        %v2103 = vshrl.u32 %v1837, 16
        %v2105 = vrot.slane %v2103, 4
        %v2106 = vshll.u32 %v1837, 16
        %v2108 = vrot.slane %v2106, 5
        %v2109 = vor.u32 %v2105, %v2108
        %v2110 = vsel %vm1838, %v2101, %v2109
        %s2127 = scalar_lea.vmem [#allocation9], 128
        %v2128 = vld [vmem:[%s2127] sm:$0xf]
        %v2129 = vld [vmem:[%s2127 + $0x4] sm:$0xf]
        %v2130 = vld [vmem:[%s2127 + $0x8] sm:$0xf]
        %v2131 = vld [vmem:[%s2127 + $0xc] sm:$0xf]
        %v2132 = vld [vmem:[%s2127 + $0x10] sm:$0xf]
        %v2133 = vld [vmem:[%s2127 + $0x14] sm:$0xf]
        %v2134 = vld [vmem:[%s2127 + $0x18] sm:$0xf]
        %v2135 = vld [vmem:[%s2127 + $0x1c] sm:$0xf]
        %v2136 = vld [vmem:[%s2127 + $0x20] sm:$0xf]
        %v2137 = vld [vmem:[%s2127 + $0x24] sm:$0xf]
        %v2138 = vld [vmem:[%s2127 + $0x28] sm:$0xf]
        %v2139 = vld [vmem:[%s2127 + $0x2c] sm:$0xf]
        %v2140 = vld [vmem:[%s2127 + $0x30] sm:$0xf]
        %v2141 = vld [vmem:[%s2127 + $0x34] sm:$0xf]
        %v2142 = vld [vmem:[%s2127 + $0x38] sm:$0xf]
        %v2143 = vld [vmem:[%s2127 + $0x3c] sm:$0xf]
        %v2160 = vunpack.c.l.b16 %v2128
        %v2161 = vunpack.c.l.b16 %v2129
        %v2162 = vunpack.c.l.b16 %v2130
        %v2163 = vunpack.c.l.b16 %v2131
        %v2164 = vunpack.c.l.b16 %v2132
        %v2165 = vunpack.c.l.b16 %v2133
        %v2166 = vunpack.c.l.b16 %v2134
        %v2167 = vunpack.c.l.b16 %v2135
        %v2168 = vunpack.c.l.b16 %v2136
        %v2169 = vunpack.c.l.b16 %v2137
        %v2170 = vunpack.c.l.b16 %v2138
        %v2171 = vunpack.c.l.b16 %v2139
        %v2172 = vunpack.c.l.b16 %v2140
        %v2173 = vunpack.c.l.b16 %v2141
        %v2174 = vunpack.c.l.b16 %v2142
        %v2175 = vunpack.c.l.b16 %v2143
        %v2176 = vpack.c.b16 %v2161, %v2160
        %v2177 = vpack.c.b16 %v2163, %v2162
        %v2178 = vpack.c.b16 %v2165, %v2164
        %v2179 = vpack.c.b16 %v2167, %v2166
        %v2180 = vpack.c.b16 %v2169, %v2168
        %v2181 = vpack.c.b16 %v2171, %v2170
        %v2182 = vpack.c.b16 %v2173, %v2172
        %v2183 = vpack.c.b16 %v2175, %v2174
        %2192 = vmatprep.subr.bf16.mxu0 0
        %2193 = vmatpush1.bf16.msra.mxu0 %v2176
        %2194 = vmatprep.subr.bf16.mxu0 0
        %2195 = vmatpush1.bf16.msra.mxu0 %v2177
        %2196 = vmatprep.subr.bf16.mxu0 0
        %2197 = vmatpush1.bf16.msra.mxu0 %v2178
        %2198 = vmatprep.subr.bf16.mxu0 0
        %2199 = vmatpush1.bf16.msra.mxu0 %v2179
        %2200 = vmatprep.subr.bf16.mxu0 0
        %2201 = vmatpush1.bf16.msra.mxu0 %v2180
        %2202 = vmatprep.subr.bf16.mxu0 0
        %2203 = vmatpush1.bf16.msra.mxu0 %v2181
        %2204 = vmatprep.subr.bf16.mxu0 0
        %2205 = vmatpush1.bf16.msra.mxu0 %v2182
        %2206 = vmatprep.subr.bf16.mxu0 0
        %2207 = vmatpush1.bf16.msra.mxu0 %v2183
        %2208 = vmatprep.subr.bf16.mxu0 0
        %2209 = vmatpush1.bf16.msra.mxu0 0
        %2210 = vmatprep.subr.bf16.mxu0 0
        %2211 = vmatpush1.bf16.msra.mxu0 0
        %2212 = vmatprep.subr.bf16.mxu0 0
        %2213 = vmatpush1.bf16.msra.mxu0 0
        %2214 = vmatprep.subr.bf16.mxu0 0
        %2215 = vmatpush1.bf16.msra.mxu0 0
        %2216 = vmatprep.subr.bf16.mxu0 0
        %2217 = vmatpush1.bf16.msra.mxu0 0
        %2218 = vmatprep.subr.bf16.mxu0 0
        %2219 = vmatpush1.bf16.msra.mxu0 0
        %2220 = vmatprep.subr.bf16.mxu0 0
        %2221 = vmatpush1.bf16.msra.mxu0 0
        %2222 = vmatprep.subr.bf16.mxu0 0
        %2223 = vmatpush1.bf16.msra.mxu0 0
        %2224 = vmatprep.mubr.bf16.mxu0 0
        %2225 = vmatmul.mubr.bf16.gmra.mrb[0].mxu0 %v1855
        %v2226 = vpop.f32.mrb[0].mxu0
        %v2227 = vadd.f32 0.0, %v2226
        %v2228 = vpop.f32.mrb[0].mxu0
        %v2229 = vpop.f32.mrb[0].mxu0
        %v2230 = vadd.f32 0.0, %v2229
        %v2231 = vpop.f32.mrb[0].mxu0
        %2232 = vmatprep.mubr.bf16.mxu0 0
        %2233 = vmatmul.mubr.bf16.gmra.mrb[0].mxu0 %v1872
        %v2234 = vpop.f32.mrb[0].mxu0
        %v2235 = vadd.f32 0.0, %v2234
        %v2236 = vpop.f32.mrb[0].mxu0
        %v2237 = vpop.f32.mrb[0].mxu0
        %v2238 = vadd.f32 0.0, %v2237
        %v2239 = vpop.f32.mrb[0].mxu0
        %2240 = vmatprep.mubr.bf16.mxu0 0
        %2241 = vmatmul.mubr.bf16.gmra.mrb[0].mxu0 %v1889
        %v2242 = vpop.f32.mrb[0].mxu0
        %v2243 = vadd.f32 0.0, %v2242
        %v2244 = vpop.f32.mrb[0].mxu0
        %v2245 = vpop.f32.mrb[0].mxu0
        %v2246 = vadd.f32 0.0, %v2245
        %v2247 = vpop.f32.mrb[0].mxu0
        %2248 = vmatprep.mubr.bf16.mxu0 0
        %2249 = vmatmul.mubr.bf16.gmra.mrb[0].mxu0 %v1906
        %v2250 = vpop.f32.mrb[0].mxu0
        %v2251 = vadd.f32 0.0, %v2250
        %v2252 = vpop.f32.mrb[0].mxu0
        %v2253 = vpop.f32.mrb[0].mxu0
        %v2254 = vadd.f32 0.0, %v2253
        %v2255 = vpop.f32.mrb[0].mxu0
        %2256 = vmatprep.mubr.bf16.mxu0 0
        %2257 = vmatmul.mubr.bf16.gmra.mrb[0].mxu0 %v1923
        %v2258 = vpop.f32.mrb[0].mxu0
        %v2259 = vadd.f32 0.0, %v2258
        %v2260 = vpop.f32.mrb[0].mxu0
        %v2261 = vpop.f32.mrb[0].mxu0
        %v2262 = vadd.f32 0.0, %v2261
        %v2263 = vpop.f32.mrb[0].mxu0
        %2264 = vmatprep.mubr.bf16.mxu0 0
        %2265 = vmatmul.mubr.bf16.gmra.mrb[0].mxu0 %v1940
        %v2266 = vpop.f32.mrb[0].mxu0
        %v2267 = vadd.f32 0.0, %v2266
        %v2268 = vpop.f32.mrb[0].mxu0
        %v2269 = vpop.f32.mrb[0].mxu0
        %v2270 = vadd.f32 0.0, %v2269
        %v2271 = vpop.f32.mrb[0].mxu0
        %2272 = vmatprep.mubr.bf16.mxu0 0
        %2273 = vmatmul.mubr.bf16.gmra.mrb[0].mxu0 %v1957
        %v2274 = vpop.f32.mrb[0].mxu0
        %v2275 = vadd.f32 0.0, %v2274
        %v2276 = vpop.f32.mrb[0].mxu0
        %v2277 = vpop.f32.mrb[0].mxu0
        %v2278 = vadd.f32 0.0, %v2277
        %v2279 = vpop.f32.mrb[0].mxu0
        %2280 = vmatprep.mubr.bf16.mxu0 0
        %2281 = vmatmul.mubr.bf16.gmra.mrb[0].mxu0 %v1974
        %v2282 = vpop.f32.mrb[0].mxu0
        %v2283 = vadd.f32 0.0, %v2282
        %v2284 = vpop.f32.mrb[0].mxu0
        %v2285 = vpop.f32.mrb[0].mxu0
        %v2286 = vadd.f32 0.0, %v2285
        %v2287 = vpop.f32.mrb[0].mxu0
        %2288 = vmatprep.mubr.bf16.mxu0 0
        %2289 = vmatmul.mubr.bf16.gmra.mrb[0].mxu0 %v1991
        %v2290 = vpop.f32.mrb[0].mxu0
        %v2291 = vadd.f32 0.0, %v2290
        %v2292 = vpop.f32.mrb[0].mxu0
        %v2293 = vpop.f32.mrb[0].mxu0
        %v2294 = vadd.f32 0.0, %v2293
        %v2295 = vpop.f32.mrb[0].mxu0
        %2296 = vmatprep.mubr.bf16.mxu0 0
        %2297 = vmatmul.mubr.bf16.gmra.mrb[0].mxu0 %v2008
        %v2298 = vpop.f32.mrb[0].mxu0
        %v2299 = vadd.f32 0.0, %v2298
        %v2300 = vpop.f32.mrb[0].mxu0
        %v2301 = vpop.f32.mrb[0].mxu0
        %v2302 = vadd.f32 0.0, %v2301
        %v2303 = vpop.f32.mrb[0].mxu0
        %2304 = vmatprep.mubr.bf16.mxu0 0
        %2305 = vmatmul.mubr.bf16.gmra.mrb[0].mxu0 %v2025
        %v2306 = vpop.f32.mrb[0].mxu0
        %v2307 = vadd.f32 0.0, %v2306
        %v2308 = vpop.f32.mrb[0].mxu0
        %v2309 = vpop.f32.mrb[0].mxu0
        %v2310 = vadd.f32 0.0, %v2309
        %v2311 = vpop.f32.mrb[0].mxu0
        %2312 = vmatprep.mubr.bf16.mxu0 0
        %2313 = vmatmul.mubr.bf16.gmra.mrb[0].mxu0 %v2042
        %v2314 = vpop.f32.mrb[0].mxu0
        %v2315 = vadd.f32 0.0, %v2314
        %v2316 = vpop.f32.mrb[0].mxu0
        %v2317 = vpop.f32.mrb[0].mxu0
        %v2318 = vadd.f32 0.0, %v2317
        %v2319 = vpop.f32.mrb[0].mxu0
        %2320 = vmatprep.mubr.bf16.mxu0 0
        %2321 = vmatmul.mubr.bf16.gmra.mrb[0].mxu0 %v2059
        %v2322 = vpop.f32.mrb[0].mxu0
        %v2323 = vadd.f32 0.0, %v2322
        %v2324 = vpop.f32.mrb[0].mxu0
        %v2325 = vpop.f32.mrb[0].mxu0
        %v2326 = vadd.f32 0.0, %v2325
        %v2327 = vpop.f32.mrb[0].mxu0
        %2328 = vmatprep.mubr.bf16.mxu0 0
        %2329 = vmatmul.mubr.bf16.gmra.mrb[0].mxu0 %v2076
        %v2330 = vpop.f32.mrb[0].mxu0
        %v2331 = vadd.f32 0.0, %v2330
        %v2332 = vpop.f32.mrb[0].mxu0
        %v2333 = vpop.f32.mrb[0].mxu0
        %v2334 = vadd.f32 0.0, %v2333
        %v2335 = vpop.f32.mrb[0].mxu0
        %2336 = vmatprep.mubr.bf16.mxu0 0
        %2337 = vmatmul.mubr.bf16.gmra.mrb[0].mxu0 %v2093
        %v2338 = vpop.f32.mrb[0].mxu0
        %v2339 = vadd.f32 0.0, %v2338
        %v2340 = vpop.f32.mrb[0].mxu0
        %v2341 = vpop.f32.mrb[0].mxu0
        %v2342 = vadd.f32 0.0, %v2341
        %v2343 = vpop.f32.mrb[0].mxu0
        %2344 = vmatprep.mubr.bf16.mxu0 0
        %2345 = vmatmul.mubr.bf16.gmra.mrb[0].mxu0 %v2110
        %v2346 = vpop.f32.mrb[0].mxu0
        %v2347 = vadd.f32 0.0, %v2346
        %v2348 = vpop.f32.mrb[0].mxu0
        %v2349 = vpop.f32.mrb[0].mxu0
        %v2350 = vadd.f32 0.0, %v2349
        %v2351 = vpop.f32.mrb[0].mxu0
        %2352 = vdwg.mxu0
        %v2353 = vadd.f32 %v1696, %v2227
        %v2354 = vadd.f32 %v1699, %v2230
        %v2355 = vadd.f32 %v1704, %v2235
        %v2356 = vadd.f32 %v1707, %v2238
        %v2357 = vadd.f32 %v1712, %v2243
        %v2358 = vadd.f32 %v1715, %v2246
        %v2359 = vadd.f32 %v1720, %v2251
        %v2360 = vadd.f32 %v1723, %v2254
        %v2361 = vadd.f32 %v1728, %v2259
        %v2362 = vadd.f32 %v1731, %v2262
        %v2363 = vadd.f32 %v1736, %v2267
        %v2364 = vadd.f32 %v1739, %v2270
        %v2365 = vadd.f32 %v1744, %v2275
        %v2366 = vadd.f32 %v1747, %v2278
        %v2367 = vadd.f32 %v1752, %v2283
        %v2368 = vadd.f32 %v1755, %v2286
        %v2369 = vadd.f32 %v1760, %v2291
        %v2370 = vadd.f32 %v1763, %v2294
        %v2371 = vadd.f32 %v1768, %v2299
        %v2372 = vadd.f32 %v1771, %v2302
        %v2373 = vadd.f32 %v1776, %v2307
        %v2374 = vadd.f32 %v1779, %v2310
        %v2375 = vadd.f32 %v1784, %v2315
        %v2376 = vadd.f32 %v1787, %v2318
        %v2377 = vadd.f32 %v1792, %v2323
        %v2378 = vadd.f32 %v1795, %v2326
        %v2379 = vadd.f32 %v1800, %v2331
        %v2380 = vadd.f32 %v1803, %v2334
        %v2381 = vadd.f32 %v1808, %v2339
        %v2382 = vadd.f32 %v1811, %v2342
        %v2383 = vadd.f32 %v1816, %v2347
        %v2384 = vadd.f32 %v1819, %v2350
        %v2385 = vld [vmem:[%s739] sm:$0xf8]
        %v2386 = vld [vmem:[%s739 + $0x8] sm:$0xf]
        %v2387 = vld [vmem:[%s739 + $0x10] sm:$0xf8]
        %v2388 = vld [vmem:[%s739 + $0x18] sm:$0xf]
        %v2389 = vld [vmem:[%s739 + $0x20] sm:$0xf8]
        %v2390 = vld [vmem:[%s739 + $0x28] sm:$0xf]
        %v2391 = vld [vmem:[%s739 + $0x30] sm:$0xf8]
        %v2392 = vld [vmem:[%s739 + $0x38] sm:$0xf]
        %v2393 = vld [vmem:[%s739 + $0x40] sm:$0xf8]
        %v2394 = vld [vmem:[%s739 + $0x48] sm:$0xf]
        %v2395 = vld [vmem:[%s739 + $0x50] sm:$0xf8]
        %v2396 = vld [vmem:[%s739 + $0x58] sm:$0xf]
        %v2397 = vld [vmem:[%s739 + $0x60] sm:$0xf8]
        %v2398 = vld [vmem:[%s739 + $0x68] sm:$0xf]
        %v2399 = vld [vmem:[%s739 + $0x70] sm:$0xf8]
        %v2400 = vld [vmem:[%s739 + $0x78] sm:$0xf]
        %v2401 = vld [vmem:[%s739 + $0x80] sm:$0xf8]
        %v2402 = vld [vmem:[%s739 + $0x88] sm:$0xf]
        %v2403 = vld [vmem:[%s739 + $0x90] sm:$0xf8]
        %v2404 = vld [vmem:[%s739 + $0x98] sm:$0xf]
        %v2405 = vld [vmem:[%s739 + $0xa0] sm:$0xf8]
        %v2406 = vld [vmem:[%s739 + $0xa8] sm:$0xf]
        %v2407 = vld [vmem:[%s739 + $0xb0] sm:$0xf8]
        %v2408 = vld [vmem:[%s739 + $0xb8] sm:$0xf]
        %v2409 = vld [vmem:[%s739 + $0xc0] sm:$0xf8]
        %v2410 = vld [vmem:[%s739 + $0xc8] sm:$0xf]
        %v2411 = vld [vmem:[%s739 + $0xd0] sm:$0xf8]
        %v2412 = vld [vmem:[%s739 + $0xd8] sm:$0xf]
        %v2413 = vld [vmem:[%s739 + $0xe0] sm:$0xf8]
        %v2414 = vld [vmem:[%s739 + $0xe8] sm:$0xf]
        %v2415 = vld [vmem:[%s739 + $0xf0] sm:$0xf8]
        %v2416 = vld [vmem:[%s739 + $0xf8] sm:$0xf]
        %v2418 = vshrl.u32 %v2385, 16
        %v2420 = vrot.slane %v2418, 3
        %v2421 = vshll.u32 %v2385, 16
        %v2423 = vrot.slane %v2421, 4
        %v2424 = vor.u32 %v2420, %v2423
        %v2426 = vshrl.u32 %v2386, 16
        %v2428 = vrot.slane %v2426, 3
        %v2429 = vshll.u32 %v2386, 16
        %v2431 = vrot.slane %v2429, 4
        %v2432 = vor.u32 %v2428, %v2431
        %v2433 = vsel %vm792, %v2424, %v2432
        %v2435 = vshrl.u32 %v2387, 16
        %v2437 = vrot.slane %v2435, 3
        %v2438 = vshll.u32 %v2387, 16
        %v2440 = vrot.slane %v2438, 4
        %v2441 = vor.u32 %v2437, %v2440
        %v2443 = vshrl.u32 %v2388, 16
        %v2445 = vrot.slane %v2443, 3
        %v2446 = vshll.u32 %v2388, 16
        %v2448 = vrot.slane %v2446, 4
        %v2449 = vor.u32 %v2445, %v2448
        %v2450 = vsel %vm792, %v2441, %v2449
        %v2452 = vshrl.u32 %v2389, 16
        %v2454 = vrot.slane %v2452, 3
        %v2455 = vshll.u32 %v2389, 16
        %v2457 = vrot.slane %v2455, 4
        %v2458 = vor.u32 %v2454, %v2457
        %v2460 = vshrl.u32 %v2390, 16
        %v2462 = vrot.slane %v2460, 3
        %v2463 = vshll.u32 %v2390, 16
        %v2465 = vrot.slane %v2463, 4
        %v2466 = vor.u32 %v2462, %v2465
        %v2467 = vsel %vm792, %v2458, %v2466
        %v2469 = vshrl.u32 %v2391, 16
        %v2471 = vrot.slane %v2469, 3
        %v2472 = vshll.u32 %v2391, 16
        %v2474 = vrot.slane %v2472, 4
        %v2475 = vor.u32 %v2471, %v2474
        %v2477 = vshrl.u32 %v2392, 16
        %v2479 = vrot.slane %v2477, 3
        %v2480 = vshll.u32 %v2392, 16
        %v2482 = vrot.slane %v2480, 4
        %v2483 = vor.u32 %v2479, %v2482
        %v2484 = vsel %vm792, %v2475, %v2483
        %v2486 = vshrl.u32 %v2393, 16
        %v2488 = vrot.slane %v2486, 3
        %v2489 = vshll.u32 %v2393, 16
        %v2491 = vrot.slane %v2489, 4
        %v2492 = vor.u32 %v2488, %v2491
        %v2494 = vshrl.u32 %v2394, 16
        %v2496 = vrot.slane %v2494, 3
        %v2497 = vshll.u32 %v2394, 16
        %v2499 = vrot.slane %v2497, 4
        %v2500 = vor.u32 %v2496, %v2499
        %v2501 = vsel %vm792, %v2492, %v2500
        %v2503 = vshrl.u32 %v2395, 16
        %v2505 = vrot.slane %v2503, 3
        %v2506 = vshll.u32 %v2395, 16
        %v2508 = vrot.slane %v2506, 4
        %v2509 = vor.u32 %v2505, %v2508
        %v2511 = vshrl.u32 %v2396, 16
        %v2513 = vrot.slane %v2511, 3
        %v2514 = vshll.u32 %v2396, 16
        %v2516 = vrot.slane %v2514, 4
        %v2517 = vor.u32 %v2513, %v2516
        %v2518 = vsel %vm792, %v2509, %v2517
        %v2520 = vshrl.u32 %v2397, 16
        %v2522 = vrot.slane %v2520, 3
        %v2523 = vshll.u32 %v2397, 16
        %v2525 = vrot.slane %v2523, 4
        %v2526 = vor.u32 %v2522, %v2525
        %v2528 = vshrl.u32 %v2398, 16
        %v2530 = vrot.slane %v2528, 3
        %v2531 = vshll.u32 %v2398, 16
        %v2533 = vrot.slane %v2531, 4
        %v2534 = vor.u32 %v2530, %v2533
        %v2535 = vsel %vm792, %v2526, %v2534
        %v2537 = vshrl.u32 %v2399, 16
        %v2539 = vrot.slane %v2537, 3
        %v2540 = vshll.u32 %v2399, 16
        %v2542 = vrot.slane %v2540, 4
        %v2543 = vor.u32 %v2539, %v2542
        %v2545 = vshrl.u32 %v2400, 16
        %v2547 = vrot.slane %v2545, 3
        %v2548 = vshll.u32 %v2400, 16
        %v2550 = vrot.slane %v2548, 4
        %v2551 = vor.u32 %v2547, %v2550
        %v2552 = vsel %vm792, %v2543, %v2551
        %v2554 = vshrl.u32 %v2401, 16
        %v2556 = vrot.slane %v2554, 3
        %v2557 = vshll.u32 %v2401, 16
        %v2559 = vrot.slane %v2557, 4
        %v2560 = vor.u32 %v2556, %v2559
        %v2562 = vshrl.u32 %v2402, 16
        %v2564 = vrot.slane %v2562, 3
        %v2565 = vshll.u32 %v2402, 16
        %v2567 = vrot.slane %v2565, 4
        %v2568 = vor.u32 %v2564, %v2567
        %v2569 = vsel %vm792, %v2560, %v2568
        %v2571 = vshrl.u32 %v2403, 16
        %v2573 = vrot.slane %v2571, 3
        %v2574 = vshll.u32 %v2403, 16
        %v2576 = vrot.slane %v2574, 4
        %v2577 = vor.u32 %v2573, %v2576
        %v2579 = vshrl.u32 %v2404, 16
        %v2581 = vrot.slane %v2579, 3
        %v2582 = vshll.u32 %v2404, 16
        %v2584 = vrot.slane %v2582, 4
        %v2585 = vor.u32 %v2581, %v2584
        %v2586 = vsel %vm792, %v2577, %v2585
        %v2588 = vshrl.u32 %v2405, 16
        %v2590 = vrot.slane %v2588, 3
        %v2591 = vshll.u32 %v2405, 16
        %v2593 = vrot.slane %v2591, 4
        %v2594 = vor.u32 %v2590, %v2593
        %v2596 = vshrl.u32 %v2406, 16
        %v2598 = vrot.slane %v2596, 3
        %v2599 = vshll.u32 %v2406, 16
        %v2601 = vrot.slane %v2599, 4
        %v2602 = vor.u32 %v2598, %v2601
        %v2603 = vsel %vm792, %v2594, %v2602
        %v2605 = vshrl.u32 %v2407, 16
        %v2607 = vrot.slane %v2605, 3
        %v2608 = vshll.u32 %v2407, 16
        %v2610 = vrot.slane %v2608, 4
        %v2611 = vor.u32 %v2607, %v2610
        %v2613 = vshrl.u32 %v2408, 16
        %v2615 = vrot.slane %v2613, 3
        %v2616 = vshll.u32 %v2408, 16
        %v2618 = vrot.slane %v2616, 4
        %v2619 = vor.u32 %v2615, %v2618
        %v2620 = vsel %vm792, %v2611, %v2619
        %v2622 = vshrl.u32 %v2409, 16
        %v2624 = vrot.slane %v2622, 3
        %v2625 = vshll.u32 %v2409, 16
        %v2627 = vrot.slane %v2625, 4
        %v2628 = vor.u32 %v2624, %v2627
        %v2630 = vshrl.u32 %v2410, 16
        %v2632 = vrot.slane %v2630, 3
        %v2633 = vshll.u32 %v2410, 16
        %v2635 = vrot.slane %v2633, 4
        %v2636 = vor.u32 %v2632, %v2635
        %v2637 = vsel %vm792, %v2628, %v2636
        %v2639 = vshrl.u32 %v2411, 16
        %v2641 = vrot.slane %v2639, 3
        %v2642 = vshll.u32 %v2411, 16
        %v2644 = vrot.slane %v2642, 4
        %v2645 = vor.u32 %v2641, %v2644
        %v2647 = vshrl.u32 %v2412, 16
        %v2649 = vrot.slane %v2647, 3
        %v2650 = vshll.u32 %v2412, 16
        %v2652 = vrot.slane %v2650, 4
        %v2653 = vor.u32 %v2649, %v2652
        %v2654 = vsel %vm792, %v2645, %v2653
        %v2656 = vshrl.u32 %v2413, 16
        %v2658 = vrot.slane %v2656, 3
        %v2659 = vshll.u32 %v2413, 16
        %v2661 = vrot.slane %v2659, 4
        %v2662 = vor.u32 %v2658, %v2661
        %v2664 = vshrl.u32 %v2414, 16
        %v2666 = vrot.slane %v2664, 3
        %v2667 = vshll.u32 %v2414, 16
        %v2669 = vrot.slane %v2667, 4
        %v2670 = vor.u32 %v2666, %v2669
        %v2671 = vsel %vm792, %v2662, %v2670
        %v2673 = vshrl.u32 %v2415, 16
        %v2675 = vrot.slane %v2673, 3
        %v2676 = vshll.u32 %v2415, 16
        %v2678 = vrot.slane %v2676, 4
        %v2679 = vor.u32 %v2675, %v2678
        %v2681 = vshrl.u32 %v2416, 16
        %v2683 = vrot.slane %v2681, 3
        %v2684 = vshll.u32 %v2416, 16
        %v2686 = vrot.slane %v2684, 4
        %v2687 = vor.u32 %v2683, %v2686
        %v2688 = vsel %vm792, %v2679, %v2687
        %s2705 = scalar_lea.vmem [#allocation9], 192
        %v2706 = vld [vmem:[%s2705] sm:$0xf]
        %v2707 = vld [vmem:[%s2705 + $0x4] sm:$0xf]
        %v2708 = vld [vmem:[%s2705 + $0x8] sm:$0xf]
        %v2709 = vld [vmem:[%s2705 + $0xc] sm:$0xf]
        %v2710 = vld [vmem:[%s2705 + $0x10] sm:$0xf]
        %v2711 = vld [vmem:[%s2705 + $0x14] sm:$0xf]
        %v2712 = vld [vmem:[%s2705 + $0x18] sm:$0xf]
        %v2713 = vld [vmem:[%s2705 + $0x1c] sm:$0xf]
        %v2714 = vld [vmem:[%s2705 + $0x20] sm:$0xf]
        %v2715 = vld [vmem:[%s2705 + $0x24] sm:$0xf]
        %v2716 = vld [vmem:[%s2705 + $0x28] sm:$0xf]
        %v2717 = vld [vmem:[%s2705 + $0x2c] sm:$0xf]
        %v2718 = vld [vmem:[%s2705 + $0x30] sm:$0xf]
        %v2719 = vld [vmem:[%s2705 + $0x34] sm:$0xf]
        %v2720 = vld [vmem:[%s2705 + $0x38] sm:$0xf]
        %v2721 = vld [vmem:[%s2705 + $0x3c] sm:$0xf]
        %v2738 = vunpack.c.l.b16 %v2706
        %v2739 = vunpack.c.l.b16 %v2707
        %v2740 = vunpack.c.l.b16 %v2708
        %v2741 = vunpack.c.l.b16 %v2709
        %v2742 = vunpack.c.l.b16 %v2710
        %v2743 = vunpack.c.l.b16 %v2711
        %v2744 = vunpack.c.l.b16 %v2712
        %v2745 = vunpack.c.l.b16 %v2713
        %v2746 = vunpack.c.l.b16 %v2714
        %v2747 = vunpack.c.l.b16 %v2715
        %v2748 = vunpack.c.l.b16 %v2716
        %v2749 = vunpack.c.l.b16 %v2717
        %v2750 = vunpack.c.l.b16 %v2718
        %v2751 = vunpack.c.l.b16 %v2719
        %v2752 = vunpack.c.l.b16 %v2720
        %v2753 = vunpack.c.l.b16 %v2721
        %v2754 = vpack.c.b16 %v2739, %v2738
        %v2755 = vpack.c.b16 %v2741, %v2740
        %v2756 = vpack.c.b16 %v2743, %v2742
        %v2757 = vpack.c.b16 %v2745, %v2744
        %v2758 = vpack.c.b16 %v2747, %v2746
        %v2759 = vpack.c.b16 %v2749, %v2748
        %v2760 = vpack.c.b16 %v2751, %v2750
        %v2761 = vpack.c.b16 %v2753, %v2752
        %2770 = vmatprep.subr.bf16.mxu0 0
        %2771 = vmatpush1.bf16.msra.mxu0 %v2754
        %2772 = vmatprep.subr.bf16.mxu0 0
        %2773 = vmatpush1.bf16.msra.mxu0 %v2755
        %2774 = vmatprep.subr.bf16.mxu0 0
        %2775 = vmatpush1.bf16.msra.mxu0 %v2756
        %2776 = vmatprep.subr.bf16.mxu0 0
        %2777 = vmatpush1.bf16.msra.mxu0 %v2757
        %2778 = vmatprep.subr.bf16.mxu0 0
        %2779 = vmatpush1.bf16.msra.mxu0 %v2758
        %2780 = vmatprep.subr.bf16.mxu0 0
        %2781 = vmatpush1.bf16.msra.mxu0 %v2759
        %2782 = vmatprep.subr.bf16.mxu0 0
        %2783 = vmatpush1.bf16.msra.mxu0 %v2760
        %2784 = vmatprep.subr.bf16.mxu0 0
        %2785 = vmatpush1.bf16.msra.mxu0 %v2761
        %2786 = vmatprep.subr.bf16.mxu0 0
        %2787 = vmatpush1.bf16.msra.mxu0 0
        %2788 = vmatprep.subr.bf16.mxu0 0
        %2789 = vmatpush1.bf16.msra.mxu0 0
        %2790 = vmatprep.subr.bf16.mxu0 0
        %2791 = vmatpush1.bf16.msra.mxu0 0
        %2792 = vmatprep.subr.bf16.mxu0 0
        %2793 = vmatpush1.bf16.msra.mxu0 0
        %2794 = vmatprep.subr.bf16.mxu0 0
        %2795 = vmatpush1.bf16.msra.mxu0 0
        %2796 = vmatprep.subr.bf16.mxu0 0
        %2797 = vmatpush1.bf16.msra.mxu0 0
        %2798 = vmatprep.subr.bf16.mxu0 0
        %2799 = vmatpush1.bf16.msra.mxu0 0
        %2800 = vmatprep.subr.bf16.mxu0 0
        %2801 = vmatpush1.bf16.msra.mxu0 0
        %2802 = vmatprep.mubr.bf16.mxu0 0
        %2803 = vmatmul.mubr.bf16.gmra.mrb[0].mxu0 %v2433
        %v2804 = vpop.f32.mrb[0].mxu0
        %v2805 = vadd.f32 0.0, %v2804
        %v2806 = vpop.f32.mrb[0].mxu0
        %v2807 = vpop.f32.mrb[0].mxu0
        %v2808 = vadd.f32 0.0, %v2807
        %v2809 = vpop.f32.mrb[0].mxu0
        %2810 = vmatprep.mubr.bf16.mxu0 0
        %2811 = vmatmul.mubr.bf16.gmra.mrb[0].mxu0 %v2450
        %v2812 = vpop.f32.mrb[0].mxu0
        %v2813 = vadd.f32 0.0, %v2812
        %v2814 = vpop.f32.mrb[0].mxu0
        %v2815 = vpop.f32.mrb[0].mxu0
        %v2816 = vadd.f32 0.0, %v2815
        %v2817 = vpop.f32.mrb[0].mxu0
        %2818 = vmatprep.mubr.bf16.mxu0 0
        %2819 = vmatmul.mubr.bf16.gmra.mrb[0].mxu0 %v2467
        %v2820 = vpop.f32.mrb[0].mxu0
        %v2821 = vadd.f32 0.0, %v2820
        %v2822 = vpop.f32.mrb[0].mxu0
        %v2823 = vpop.f32.mrb[0].mxu0
        %v2824 = vadd.f32 0.0, %v2823
        %v2825 = vpop.f32.mrb[0].mxu0
        %2826 = vmatprep.mubr.bf16.mxu0 0
        %2827 = vmatmul.mubr.bf16.gmra.mrb[0].mxu0 %v2484
        %v2828 = vpop.f32.mrb[0].mxu0
        %v2829 = vadd.f32 0.0, %v2828
        %v2830 = vpop.f32.mrb[0].mxu0
        %v2831 = vpop.f32.mrb[0].mxu0
        %v2832 = vadd.f32 0.0, %v2831
        %v2833 = vpop.f32.mrb[0].mxu0
        %2834 = vmatprep.mubr.bf16.mxu0 0
        %2835 = vmatmul.mubr.bf16.gmra.mrb[0].mxu0 %v2501
        %v2836 = vpop.f32.mrb[0].mxu0
        %v2837 = vadd.f32 0.0, %v2836
        %v2838 = vpop.f32.mrb[0].mxu0
        %v2839 = vpop.f32.mrb[0].mxu0
        %v2840 = vadd.f32 0.0, %v2839
        %v2841 = vpop.f32.mrb[0].mxu0
        %2842 = vmatprep.mubr.bf16.mxu0 0
        %2843 = vmatmul.mubr.bf16.gmra.mrb[0].mxu0 %v2518
        %v2844 = vpop.f32.mrb[0].mxu0
        %v2845 = vadd.f32 0.0, %v2844
        %v2846 = vpop.f32.mrb[0].mxu0
        %v2847 = vpop.f32.mrb[0].mxu0
        %v2848 = vadd.f32 0.0, %v2847
        %v2849 = vpop.f32.mrb[0].mxu0
        %2850 = vmatprep.mubr.bf16.mxu0 0
        %2851 = vmatmul.mubr.bf16.gmra.mrb[0].mxu0 %v2535
        %v2852 = vpop.f32.mrb[0].mxu0
        %v2853 = vadd.f32 0.0, %v2852
        %v2854 = vpop.f32.mrb[0].mxu0
        %v2855 = vpop.f32.mrb[0].mxu0
        %v2856 = vadd.f32 0.0, %v2855
        %v2857 = vpop.f32.mrb[0].mxu0
        %2858 = vmatprep.mubr.bf16.mxu0 0
        %2859 = vmatmul.mubr.bf16.gmra.mrb[0].mxu0 %v2552
        %v2860 = vpop.f32.mrb[0].mxu0
        %v2861 = vadd.f32 0.0, %v2860
        %v2862 = vpop.f32.mrb[0].mxu0
        %v2863 = vpop.f32.mrb[0].mxu0
        %v2864 = vadd.f32 0.0, %v2863
        %v2865 = vpop.f32.mrb[0].mxu0
        %2866 = vmatprep.mubr.bf16.mxu0 0
        %2867 = vmatmul.mubr.bf16.gmra.mrb[0].mxu0 %v2569
        %v2868 = vpop.f32.mrb[0].mxu0
        %v2869 = vadd.f32 0.0, %v2868
        %v2870 = vpop.f32.mrb[0].mxu0
        %v2871 = vpop.f32.mrb[0].mxu0
        %v2872 = vadd.f32 0.0, %v2871
        %v2873 = vpop.f32.mrb[0].mxu0
        %2874 = vmatprep.mubr.bf16.mxu0 0
        %2875 = vmatmul.mubr.bf16.gmra.mrb[0].mxu0 %v2586
        %v2876 = vpop.f32.mrb[0].mxu0
        %v2877 = vadd.f32 0.0, %v2876
        %v2878 = vpop.f32.mrb[0].mxu0
        %v2879 = vpop.f32.mrb[0].mxu0
        %v2880 = vadd.f32 0.0, %v2879
        %v2881 = vpop.f32.mrb[0].mxu0
        %2882 = vmatprep.mubr.bf16.mxu0 0
        %2883 = vmatmul.mubr.bf16.gmra.mrb[0].mxu0 %v2603
        %v2884 = vpop.f32.mrb[0].mxu0
        %v2885 = vadd.f32 0.0, %v2884
        %v2886 = vpop.f32.mrb[0].mxu0
        %v2887 = vpop.f32.mrb[0].mxu0
        %v2888 = vadd.f32 0.0, %v2887
        %v2889 = vpop.f32.mrb[0].mxu0
        %2890 = vmatprep.mubr.bf16.mxu0 0
        %2891 = vmatmul.mubr.bf16.gmra.mrb[0].mxu0 %v2620
        %v2892 = vpop.f32.mrb[0].mxu0
        %v2893 = vadd.f32 0.0, %v2892
        %v2894 = vpop.f32.mrb[0].mxu0
        %v2895 = vpop.f32.mrb[0].mxu0
        %v2896 = vadd.f32 0.0, %v2895
        %v2897 = vpop.f32.mrb[0].mxu0
        %2898 = vmatprep.mubr.bf16.mxu0 0
        %2899 = vmatmul.mubr.bf16.gmra.mrb[0].mxu0 %v2637
        %v2900 = vpop.f32.mrb[0].mxu0
        %v2901 = vadd.f32 0.0, %v2900
        %v2902 = vpop.f32.mrb[0].mxu0
        %v2903 = vpop.f32.mrb[0].mxu0
        %v2904 = vadd.f32 0.0, %v2903
        %v2905 = vpop.f32.mrb[0].mxu0
        %2906 = vmatprep.mubr.bf16.mxu0 0
        %2907 = vmatmul.mubr.bf16.gmra.mrb[0].mxu0 %v2654
        %v2908 = vpop.f32.mrb[0].mxu0
        %v2909 = vadd.f32 0.0, %v2908
        %v2910 = vpop.f32.mrb[0].mxu0
        %v2911 = vpop.f32.mrb[0].mxu0
        %v2912 = vadd.f32 0.0, %v2911
        %v2913 = vpop.f32.mrb[0].mxu0
        %2914 = vmatprep.mubr.bf16.mxu0 0
        %2915 = vmatmul.mubr.bf16.gmra.mrb[0].mxu0 %v2671
        %v2916 = vpop.f32.mrb[0].mxu0
        %v2917 = vadd.f32 0.0, %v2916
        %v2918 = vpop.f32.mrb[0].mxu0
        %v2919 = vpop.f32.mrb[0].mxu0
        %v2920 = vadd.f32 0.0, %v2919
        %v2921 = vpop.f32.mrb[0].mxu0
        %2922 = vmatprep.mubr.bf16.mxu0 0
        %2923 = vmatmul.mubr.bf16.gmra.mrb[0].mxu0 %v2688
        %v2924 = vpop.f32.mrb[0].mxu0
        %v2925 = vadd.f32 0.0, %v2924
        %v2926 = vpop.f32.mrb[0].mxu0
        %v2927 = vpop.f32.mrb[0].mxu0
        %v2928 = vadd.f32 0.0, %v2927
        %v2929 = vpop.f32.mrb[0].mxu0
        %2930 = vdwg.mxu0
        %v2931 = vadd.f32 %v2353, %v2805
        %v2932 = vadd.f32 %v2354, %v2808
        %v2933 = vadd.f32 %v2355, %v2813
        %v2934 = vadd.f32 %v2356, %v2816
        %v2935 = vadd.f32 %v2357, %v2821
        %v2936 = vadd.f32 %v2358, %v2824
        %v2937 = vadd.f32 %v2359, %v2829
        %v2938 = vadd.f32 %v2360, %v2832
        %v2939 = vadd.f32 %v2361, %v2837
        %v2940 = vadd.f32 %v2362, %v2840
        %v2941 = vadd.f32 %v2363, %v2845
        %v2942 = vadd.f32 %v2364, %v2848
        %v2943 = vadd.f32 %v2365, %v2853
        %v2944 = vadd.f32 %v2366, %v2856
        %v2945 = vadd.f32 %v2367, %v2861
        %v2946 = vadd.f32 %v2368, %v2864
        %v2947 = vadd.f32 %v2369, %v2869
        %v2948 = vadd.f32 %v2370, %v2872
        %v2949 = vadd.f32 %v2371, %v2877
        %v2950 = vadd.f32 %v2372, %v2880
        %v2951 = vadd.f32 %v2373, %v2885
        %v2952 = vadd.f32 %v2374, %v2888
        %v2953 = vadd.f32 %v2375, %v2893
        %v2954 = vadd.f32 %v2376, %v2896
        %v2955 = vadd.f32 %v2377, %v2901
        %v2956 = vadd.f32 %v2378, %v2904
        %v2957 = vadd.f32 %v2379, %v2909
        %v2958 = vadd.f32 %v2380, %v2912
        %v2959 = vadd.f32 %v2381, %v2917
        %v2960 = vadd.f32 %v2382, %v2920
        %v2961 = vadd.f32 %v2383, %v2925
        %v2962 = vadd.f32 %v2384, %v2928
        %v2963 = vld [vmem:[%s739] sm:$0xf0]
        %v2964 = vld [vmem:[%s739 + $0x10] sm:$0xf0]
        %v2965 = vld [vmem:[%s739 + $0x20] sm:$0xf0]
        %v2966 = vld [vmem:[%s739 + $0x30] sm:$0xf0]
        %v2967 = vld [vmem:[%s739 + $0x40] sm:$0xf0]
        %v2968 = vld [vmem:[%s739 + $0x50] sm:$0xf0]
        %v2969 = vld [vmem:[%s739 + $0x60] sm:$0xf0]
        %v2970 = vld [vmem:[%s739 + $0x70] sm:$0xf0]
        %v2971 = vld [vmem:[%s739 + $0x80] sm:$0xf0]
        %v2972 = vld [vmem:[%s739 + $0x90] sm:$0xf0]
        %v2973 = vld [vmem:[%s739 + $0xa0] sm:$0xf0]
        %v2974 = vld [vmem:[%s739 + $0xb0] sm:$0xf0]
        %v2975 = vld [vmem:[%s739 + $0xc0] sm:$0xf0]
        %v2976 = vld [vmem:[%s739 + $0xd0] sm:$0xf0]
        %v2977 = vld [vmem:[%s739 + $0xe0] sm:$0xf0]
        %v2978 = vld [vmem:[%s739 + $0xf0] sm:$0xf0]
        %v3011 = vrot.slane %v2963, 4
        %v3012 = vrot.slane %v2386, 4
        %v3013 = vsel %vm1322, %v3011, %v3012
        %v3014 = vrot.slane %v2964, 4
        %v3015 = vrot.slane %v2388, 4
        %v3016 = vsel %vm1322, %v3014, %v3015
        %v3017 = vrot.slane %v2965, 4
        %v3018 = vrot.slane %v2390, 4
        %v3019 = vsel %vm1322, %v3017, %v3018
        %v3020 = vrot.slane %v2966, 4
        %v3021 = vrot.slane %v2392, 4
        %v3022 = vsel %vm1322, %v3020, %v3021
        %v3023 = vrot.slane %v2967, 4
        %v3024 = vrot.slane %v2394, 4
        %v3025 = vsel %vm1322, %v3023, %v3024
        %v3026 = vrot.slane %v2968, 4
        %v3027 = vrot.slane %v2396, 4
        %v3028 = vsel %vm1322, %v3026, %v3027
        %v3029 = vrot.slane %v2969, 4
        %v3030 = vrot.slane %v2398, 4
        %v3031 = vsel %vm1322, %v3029, %v3030
        %v3032 = vrot.slane %v2970, 4
        %v3033 = vrot.slane %v2400, 4
        %v3034 = vsel %vm1322, %v3032, %v3033
        %v3035 = vrot.slane %v2971, 4
        %v3036 = vrot.slane %v2402, 4
        %v3037 = vsel %vm1322, %v3035, %v3036
        %v3038 = vrot.slane %v2972, 4
        %v3039 = vrot.slane %v2404, 4
        %v3040 = vsel %vm1322, %v3038, %v3039
        %v3041 = vrot.slane %v2973, 4
        %v3042 = vrot.slane %v2406, 4
        %v3043 = vsel %vm1322, %v3041, %v3042
        %v3044 = vrot.slane %v2974, 4
        %v3045 = vrot.slane %v2408, 4
        %v3046 = vsel %vm1322, %v3044, %v3045
        %v3047 = vrot.slane %v2975, 4
        %v3048 = vrot.slane %v2410, 4
        %v3049 = vsel %vm1322, %v3047, %v3048
        %v3050 = vrot.slane %v2976, 4
        %v3051 = vrot.slane %v2412, 4
        %v3052 = vsel %vm1322, %v3050, %v3051
        %v3053 = vrot.slane %v2977, 4
        %v3054 = vrot.slane %v2414, 4
        %v3055 = vsel %vm1322, %v3053, %v3054
        %v3056 = vrot.slane %v2978, 4
        %v3057 = vrot.slane %v2416, 4
        %v3058 = vsel %vm1322, %v3056, %v3057
        %s3075 = scalar_lea.vmem [#allocation9], 256
        %v3076 = vld [vmem:[%s3075] sm:$0xf]
        %v3077 = vld [vmem:[%s3075 + $0x4] sm:$0xf]
        %v3078 = vld [vmem:[%s3075 + $0x8] sm:$0xf]
        %v3079 = vld [vmem:[%s3075 + $0xc] sm:$0xf]
        %v3080 = vld [vmem:[%s3075 + $0x10] sm:$0xf]
        %v3081 = vld [vmem:[%s3075 + $0x14] sm:$0xf]
        %v3082 = vld [vmem:[%s3075 + $0x18] sm:$0xf]
        %v3083 = vld [vmem:[%s3075 + $0x1c] sm:$0xf]
        %v3084 = vld [vmem:[%s3075 + $0x20] sm:$0xf]
        %v3085 = vld [vmem:[%s3075 + $0x24] sm:$0xf]
        %v3086 = vld [vmem:[%s3075 + $0x28] sm:$0xf]
        %v3087 = vld [vmem:[%s3075 + $0x2c] sm:$0xf]
        %v3088 = vld [vmem:[%s3075 + $0x30] sm:$0xf]
        %v3089 = vld [vmem:[%s3075 + $0x34] sm:$0xf]
        %v3090 = vld [vmem:[%s3075 + $0x38] sm:$0xf]
        %v3091 = vld [vmem:[%s3075 + $0x3c] sm:$0xf]
        %v3108 = vunpack.c.l.b16 %v3076
        %v3109 = vunpack.c.l.b16 %v3077
        %v3110 = vunpack.c.l.b16 %v3078
        %v3111 = vunpack.c.l.b16 %v3079
        %v3112 = vunpack.c.l.b16 %v3080
        %v3113 = vunpack.c.l.b16 %v3081
        %v3114 = vunpack.c.l.b16 %v3082
        %v3115 = vunpack.c.l.b16 %v3083
        %v3116 = vunpack.c.l.b16 %v3084
        %v3117 = vunpack.c.l.b16 %v3085
        %v3118 = vunpack.c.l.b16 %v3086
        %v3119 = vunpack.c.l.b16 %v3087
        %v3120 = vunpack.c.l.b16 %v3088
        %v3121 = vunpack.c.l.b16 %v3089
        %v3122 = vunpack.c.l.b16 %v3090
        %v3123 = vunpack.c.l.b16 %v3091
        %v3124 = vpack.c.b16 %v3109, %v3108
        %v3125 = vpack.c.b16 %v3111, %v3110
        %v3126 = vpack.c.b16 %v3113, %v3112
        %v3127 = vpack.c.b16 %v3115, %v3114
        %v3128 = vpack.c.b16 %v3117, %v3116
        %v3129 = vpack.c.b16 %v3119, %v3118
        %v3130 = vpack.c.b16 %v3121, %v3120
        %v3131 = vpack.c.b16 %v3123, %v3122
        %3140 = vmatprep.subr.bf16.mxu0 0
        %3141 = vmatpush1.bf16.msra.mxu0 %v3124
        %3142 = vmatprep.subr.bf16.mxu0 0
        %3143 = vmatpush1.bf16.msra.mxu0 %v3125
        %3144 = vmatprep.subr.bf16.mxu0 0
        %3145 = vmatpush1.bf16.msra.mxu0 %v3126
        %3146 = vmatprep.subr.bf16.mxu0 0
        %3147 = vmatpush1.bf16.msra.mxu0 %v3127
        %3148 = vmatprep.subr.bf16.mxu0 0
        %3149 = vmatpush1.bf16.msra.mxu0 %v3128
        %3150 = vmatprep.subr.bf16.mxu0 0
        %3151 = vmatpush1.bf16.msra.mxu0 %v3129
        %3152 = vmatprep.subr.bf16.mxu0 0
        %3153 = vmatpush1.bf16.msra.mxu0 %v3130
        %3154 = vmatprep.subr.bf16.mxu0 0
        %3155 = vmatpush1.bf16.msra.mxu0 %v3131
        %3156 = vmatprep.subr.bf16.mxu0 0
        %3157 = vmatpush1.bf16.msra.mxu0 0
        %3158 = vmatprep.subr.bf16.mxu0 0
        %3159 = vmatpush1.bf16.msra.mxu0 0
        %3160 = vmatprep.subr.bf16.mxu0 0
        %3161 = vmatpush1.bf16.msra.mxu0 0
        %3162 = vmatprep.subr.bf16.mxu0 0
        %3163 = vmatpush1.bf16.msra.mxu0 0
        %3164 = vmatprep.subr.bf16.mxu0 0
        %3165 = vmatpush1.bf16.msra.mxu0 0
        %3166 = vmatprep.subr.bf16.mxu0 0
        %3167 = vmatpush1.bf16.msra.mxu0 0
        %3168 = vmatprep.subr.bf16.mxu0 0
        %3169 = vmatpush1.bf16.msra.mxu0 0
        %3170 = vmatprep.subr.bf16.mxu0 0
        %3171 = vmatpush1.bf16.msra.mxu0 0
        %3172 = vmatprep.mubr.bf16.mxu0 0
        %3173 = vmatmul.mubr.bf16.gmra.mrb[0].mxu0 %v3013
        %v3174 = vpop.f32.mrb[0].mxu0
        %v3175 = vadd.f32 0.0, %v3174
        %v3176 = vpop.f32.mrb[0].mxu0
        %v3177 = vpop.f32.mrb[0].mxu0
        %v3178 = vadd.f32 0.0, %v3177
        %v3179 = vpop.f32.mrb[0].mxu0
        %3180 = vmatprep.mubr.bf16.mxu0 0
        %3181 = vmatmul.mubr.bf16.gmra.mrb[0].mxu0 %v3016
        %v3182 = vpop.f32.mrb[0].mxu0
        %v3183 = vadd.f32 0.0, %v3182
        %v3184 = vpop.f32.mrb[0].mxu0
        %v3185 = vpop.f32.mrb[0].mxu0
        %v3186 = vadd.f32 0.0, %v3185
        %v3187 = vpop.f32.mrb[0].mxu0
        %3188 = vmatprep.mubr.bf16.mxu0 0
        %3189 = vmatmul.mubr.bf16.gmra.mrb[0].mxu0 %v3019
        %v3190 = vpop.f32.mrb[0].mxu0
        %v3191 = vadd.f32 0.0, %v3190
        %v3192 = vpop.f32.mrb[0].mxu0
        %v3193 = vpop.f32.mrb[0].mxu0
        %v3194 = vadd.f32 0.0, %v3193
        %v3195 = vpop.f32.mrb[0].mxu0
        %3196 = vmatprep.mubr.bf16.mxu0 0
        %3197 = vmatmul.mubr.bf16.gmra.mrb[0].mxu0 %v3022
        %v3198 = vpop.f32.mrb[0].mxu0
        %v3199 = vadd.f32 0.0, %v3198
        %v3200 = vpop.f32.mrb[0].mxu0
        %v3201 = vpop.f32.mrb[0].mxu0
        %v3202 = vadd.f32 0.0, %v3201
        %v3203 = vpop.f32.mrb[0].mxu0
        %3204 = vmatprep.mubr.bf16.mxu0 0
        %3205 = vmatmul.mubr.bf16.gmra.mrb[0].mxu0 %v3025
        %v3206 = vpop.f32.mrb[0].mxu0
        %v3207 = vadd.f32 0.0, %v3206
        %v3208 = vpop.f32.mrb[0].mxu0
        %v3209 = vpop.f32.mrb[0].mxu0
        %v3210 = vadd.f32 0.0, %v3209
        %v3211 = vpop.f32.mrb[0].mxu0
        %3212 = vmatprep.mubr.bf16.mxu0 0
        %3213 = vmatmul.mubr.bf16.gmra.mrb[0].mxu0 %v3028
        %v3214 = vpop.f32.mrb[0].mxu0
        %v3215 = vadd.f32 0.0, %v3214
        %v3216 = vpop.f32.mrb[0].mxu0
        %v3217 = vpop.f32.mrb[0].mxu0
        %v3218 = vadd.f32 0.0, %v3217
        %v3219 = vpop.f32.mrb[0].mxu0
        %3220 = vmatprep.mubr.bf16.mxu0 0
        %3221 = vmatmul.mubr.bf16.gmra.mrb[0].mxu0 %v3031
        %v3222 = vpop.f32.mrb[0].mxu0
        %v3223 = vadd.f32 0.0, %v3222
        %v3224 = vpop.f32.mrb[0].mxu0
        %v3225 = vpop.f32.mrb[0].mxu0
        %v3226 = vadd.f32 0.0, %v3225
        %v3227 = vpop.f32.mrb[0].mxu0
        %3228 = vmatprep.mubr.bf16.mxu0 0
        %3229 = vmatmul.mubr.bf16.gmra.mrb[0].mxu0 %v3034
        %v3230 = vpop.f32.mrb[0].mxu0
        %v3231 = vadd.f32 0.0, %v3230
        %v3232 = vpop.f32.mrb[0].mxu0
        %v3233 = vpop.f32.mrb[0].mxu0
        %v3234 = vadd.f32 0.0, %v3233
        %v3235 = vpop.f32.mrb[0].mxu0
        %3236 = vmatprep.mubr.bf16.mxu0 0
        %3237 = vmatmul.mubr.bf16.gmra.mrb[0].mxu0 %v3037
        %v3238 = vpop.f32.mrb[0].mxu0
        %v3239 = vadd.f32 0.0, %v3238
        %v3240 = vpop.f32.mrb[0].mxu0
        %v3241 = vpop.f32.mrb[0].mxu0
        %v3242 = vadd.f32 0.0, %v3241
        %v3243 = vpop.f32.mrb[0].mxu0
        %3244 = vmatprep.mubr.bf16.mxu0 0
        %3245 = vmatmul.mubr.bf16.gmra.mrb[0].mxu0 %v3040
        %v3246 = vpop.f32.mrb[0].mxu0
        %v3247 = vadd.f32 0.0, %v3246
        %v3248 = vpop.f32.mrb[0].mxu0
        %v3249 = vpop.f32.mrb[0].mxu0
        %v3250 = vadd.f32 0.0, %v3249
        %v3251 = vpop.f32.mrb[0].mxu0
        %3252 = vmatprep.mubr.bf16.mxu0 0
        %3253 = vmatmul.mubr.bf16.gmra.mrb[0].mxu0 %v3043
        %v3254 = vpop.f32.mrb[0].mxu0
        %v3255 = vadd.f32 0.0, %v3254
        %v3256 = vpop.f32.mrb[0].mxu0
        %v3257 = vpop.f32.mrb[0].mxu0
        %v3258 = vadd.f32 0.0, %v3257
        %v3259 = vpop.f32.mrb[0].mxu0
        %3260 = vmatprep.mubr.bf16.mxu0 0
        %3261 = vmatmul.mubr.bf16.gmra.mrb[0].mxu0 %v3046
        %v3262 = vpop.f32.mrb[0].mxu0
        %v3263 = vadd.f32 0.0, %v3262
        %v3264 = vpop.f32.mrb[0].mxu0
        %v3265 = vpop.f32.mrb[0].mxu0
        %v3266 = vadd.f32 0.0, %v3265
        %v3267 = vpop.f32.mrb[0].mxu0
        %3268 = vmatprep.mubr.bf16.mxu0 0
        %3269 = vmatmul.mubr.bf16.gmra.mrb[0].mxu0 %v3049
        %v3270 = vpop.f32.mrb[0].mxu0
        %v3271 = vadd.f32 0.0, %v3270
        %v3272 = vpop.f32.mrb[0].mxu0
        %v3273 = vpop.f32.mrb[0].mxu0
        %v3274 = vadd.f32 0.0, %v3273
        %v3275 = vpop.f32.mrb[0].mxu0
        %3276 = vmatprep.mubr.bf16.mxu0 0
        %3277 = vmatmul.mubr.bf16.gmra.mrb[0].mxu0 %v3052
        %v3278 = vpop.f32.mrb[0].mxu0
        %v3279 = vadd.f32 0.0, %v3278
        %v3280 = vpop.f32.mrb[0].mxu0
        %v3281 = vpop.f32.mrb[0].mxu0
        %v3282 = vadd.f32 0.0, %v3281
        %v3283 = vpop.f32.mrb[0].mxu0
        %3284 = vmatprep.mubr.bf16.mxu0 0
        %3285 = vmatmul.mubr.bf16.gmra.mrb[0].mxu0 %v3055
        %v3286 = vpop.f32.mrb[0].mxu0
        %v3287 = vadd.f32 0.0, %v3286
        %v3288 = vpop.f32.mrb[0].mxu0
        %v3289 = vpop.f32.mrb[0].mxu0
        %v3290 = vadd.f32 0.0, %v3289
        %v3291 = vpop.f32.mrb[0].mxu0
        %3292 = vmatprep.mubr.bf16.mxu0 0
        %3293 = vmatmul.mubr.bf16.gmra.mrb[0].mxu0 %v3058
        %v3294 = vpop.f32.mrb[0].mxu0
        %v3295 = vadd.f32 0.0, %v3294
        %v3296 = vpop.f32.mrb[0].mxu0
        %v3297 = vpop.f32.mrb[0].mxu0
        %v3298 = vadd.f32 0.0, %v3297
        %v3299 = vpop.f32.mrb[0].mxu0
        %3300 = vdwg.mxu0
        %v3301 = vadd.f32 %v2931, %v3175
        %v3302 = vadd.f32 %v2932, %v3178
        %v3303 = vadd.f32 %v2933, %v3183
        %v3304 = vadd.f32 %v2934, %v3186
        %v3305 = vadd.f32 %v2935, %v3191
        %v3306 = vadd.f32 %v2936, %v3194
        %v3307 = vadd.f32 %v2937, %v3199
        %v3308 = vadd.f32 %v2938, %v3202
        %v3309 = vadd.f32 %v2939, %v3207
        %v3310 = vadd.f32 %v2940, %v3210
        %v3311 = vadd.f32 %v2941, %v3215
        %v3312 = vadd.f32 %v2942, %v3218
        %v3313 = vadd.f32 %v2943, %v3223
        %v3314 = vadd.f32 %v2944, %v3226
        %v3315 = vadd.f32 %v2945, %v3231
        %v3316 = vadd.f32 %v2946, %v3234
        %v3317 = vadd.f32 %v2947, %v3239
        %v3318 = vadd.f32 %v2948, %v3242
        %v3319 = vadd.f32 %v2949, %v3247
        %v3320 = vadd.f32 %v2950, %v3250
        %v3321 = vadd.f32 %v2951, %v3255
        %v3322 = vadd.f32 %v2952, %v3258
        %v3323 = vadd.f32 %v2953, %v3263
        %v3324 = vadd.f32 %v2954, %v3266
        %v3325 = vadd.f32 %v2955, %v3271
        %v3326 = vadd.f32 %v2956, %v3274
        %v3327 = vadd.f32 %v2957, %v3279
        %v3328 = vadd.f32 %v2958, %v3282
        %v3329 = vadd.f32 %v2959, %v3287
        %v3330 = vadd.f32 %v2960, %v3290
        %v3331 = vadd.f32 %v2961, %v3295
        %v3332 = vadd.f32 %v2962, %v3298
        %v3333 = vld [vmem:[%s739 + $0x8] sm:$0x1f]
        %v3334 = vld [vmem:[%s739 + $0x18] sm:$0x1f]
        %v3335 = vld [vmem:[%s739 + $0x28] sm:$0x1f]
        %v3336 = vld [vmem:[%s739 + $0x38] sm:$0x1f]
        %v3337 = vld [vmem:[%s739 + $0x48] sm:$0x1f]
        %v3338 = vld [vmem:[%s739 + $0x58] sm:$0x1f]
        %v3339 = vld [vmem:[%s739 + $0x68] sm:$0x1f]
        %v3340 = vld [vmem:[%s739 + $0x78] sm:$0x1f]
        %v3341 = vld [vmem:[%s739 + $0x88] sm:$0x1f]
        %v3342 = vld [vmem:[%s739 + $0x98] sm:$0x1f]
        %v3343 = vld [vmem:[%s739 + $0xa8] sm:$0x1f]
        %v3344 = vld [vmem:[%s739 + $0xb8] sm:$0x1f]
        %v3345 = vld [vmem:[%s739 + $0xc8] sm:$0x1f]
        %v3346 = vld [vmem:[%s739 + $0xd8] sm:$0x1f]
        %v3347 = vld [vmem:[%s739 + $0xe8] sm:$0x1f]
        %v3348 = vld [vmem:[%s739 + $0xf8] sm:$0x1f]
        %v3350 = vshrl.u32 %v2963, 16
        %v3352 = vrot.slane %v3350, 4
        %v3353 = vshll.u32 %v2963, 16
        %v3355 = vrot.slane %v3353, 5
        %v3356 = vor.u32 %v3352, %v3355
        %v3358 = vshrl.u32 %v3333, 16
        %v3360 = vrot.slane %v3358, 4
        %v3361 = vshll.u32 %v3333, 16
        %v3363 = vrot.slane %v3361, 5
        %v3364 = vor.u32 %v3360, %v3363
        %v3365 = vsel %vm1838, %v3356, %v3364
        %v3367 = vshrl.u32 %v2964, 16
        %v3369 = vrot.slane %v3367, 4
        %v3370 = vshll.u32 %v2964, 16
        %v3372 = vrot.slane %v3370, 5
        %v3373 = vor.u32 %v3369, %v3372
        %v3375 = vshrl.u32 %v3334, 16
        %v3377 = vrot.slane %v3375, 4
        %v3378 = vshll.u32 %v3334, 16
        %v3380 = vrot.slane %v3378, 5
        %v3381 = vor.u32 %v3377, %v3380
        %v3382 = vsel %vm1838, %v3373, %v3381
        %v3384 = vshrl.u32 %v2965, 16
        %v3386 = vrot.slane %v3384, 4
        %v3387 = vshll.u32 %v2965, 16
        %v3389 = vrot.slane %v3387, 5
        %v3390 = vor.u32 %v3386, %v3389
        %v3392 = vshrl.u32 %v3335, 16
        %v3394 = vrot.slane %v3392, 4
        %v3395 = vshll.u32 %v3335, 16
        %v3397 = vrot.slane %v3395, 5
        %v3398 = vor.u32 %v3394, %v3397
        %v3399 = vsel %vm1838, %v3390, %v3398
        %v3401 = vshrl.u32 %v2966, 16
        %v3403 = vrot.slane %v3401, 4
        %v3404 = vshll.u32 %v2966, 16
        %v3406 = vrot.slane %v3404, 5
        %v3407 = vor.u32 %v3403, %v3406
        %v3409 = vshrl.u32 %v3336, 16
        %v3411 = vrot.slane %v3409, 4
        %v3412 = vshll.u32 %v3336, 16
        %v3414 = vrot.slane %v3412, 5
        %v3415 = vor.u32 %v3411, %v3414
        %v3416 = vsel %vm1838, %v3407, %v3415
        %v3418 = vshrl.u32 %v2967, 16
        %v3420 = vrot.slane %v3418, 4
        %v3421 = vshll.u32 %v2967, 16
        %v3423 = vrot.slane %v3421, 5
        %v3424 = vor.u32 %v3420, %v3423
        %v3426 = vshrl.u32 %v3337, 16
        %v3428 = vrot.slane %v3426, 4
        %v3429 = vshll.u32 %v3337, 16
        %v3431 = vrot.slane %v3429, 5
        %v3432 = vor.u32 %v3428, %v3431
        %v3433 = vsel %vm1838, %v3424, %v3432
        %v3435 = vshrl.u32 %v2968, 16
        %v3437 = vrot.slane %v3435, 4
        %v3438 = vshll.u32 %v2968, 16
        %v3440 = vrot.slane %v3438, 5
        %v3441 = vor.u32 %v3437, %v3440
        %v3443 = vshrl.u32 %v3338, 16
        %v3445 = vrot.slane %v3443, 4
        %v3446 = vshll.u32 %v3338, 16
        %v3448 = vrot.slane %v3446, 5
        %v3449 = vor.u32 %v3445, %v3448
        %v3450 = vsel %vm1838, %v3441, %v3449
        %v3452 = vshrl.u32 %v2969, 16
        %v3454 = vrot.slane %v3452, 4
        %v3455 = vshll.u32 %v2969, 16
        %v3457 = vrot.slane %v3455, 5
        %v3458 = vor.u32 %v3454, %v3457
        %v3460 = vshrl.u32 %v3339, 16
        %v3462 = vrot.slane %v3460, 4
        %v3463 = vshll.u32 %v3339, 16
        %v3465 = vrot.slane %v3463, 5
        %v3466 = vor.u32 %v3462, %v3465
        %v3467 = vsel %vm1838, %v3458, %v3466
        %v3469 = vshrl.u32 %v2970, 16
        %v3471 = vrot.slane %v3469, 4
        %v3472 = vshll.u32 %v2970, 16
        %v3474 = vrot.slane %v3472, 5
        %v3475 = vor.u32 %v3471, %v3474
        %v3477 = vshrl.u32 %v3340, 16
        %v3479 = vrot.slane %v3477, 4
        %v3480 = vshll.u32 %v3340, 16
        %v3482 = vrot.slane %v3480, 5
        %v3483 = vor.u32 %v3479, %v3482
        %v3484 = vsel %vm1838, %v3475, %v3483
        %v3486 = vshrl.u32 %v2971, 16
        %v3488 = vrot.slane %v3486, 4
        %v3489 = vshll.u32 %v2971, 16
        %v3491 = vrot.slane %v3489, 5
        %v3492 = vor.u32 %v3488, %v3491
        %v3494 = vshrl.u32 %v3341, 16
        %v3496 = vrot.slane %v3494, 4
        %v3497 = vshll.u32 %v3341, 16
        %v3499 = vrot.slane %v3497, 5
        %v3500 = vor.u32 %v3496, %v3499
        %v3501 = vsel %vm1838, %v3492, %v3500
        %v3503 = vshrl.u32 %v2972, 16
        %v3505 = vrot.slane %v3503, 4
        %v3506 = vshll.u32 %v2972, 16
        %v3508 = vrot.slane %v3506, 5
        %v3509 = vor.u32 %v3505, %v3508
        %v3511 = vshrl.u32 %v3342, 16
        %v3513 = vrot.slane %v3511, 4
        %v3514 = vshll.u32 %v3342, 16
        %v3516 = vrot.slane %v3514, 5
        %v3517 = vor.u32 %v3513, %v3516
        %v3518 = vsel %vm1838, %v3509, %v3517
        %v3520 = vshrl.u32 %v2973, 16
        %v3522 = vrot.slane %v3520, 4
        %v3523 = vshll.u32 %v2973, 16
        %v3525 = vrot.slane %v3523, 5
        %v3526 = vor.u32 %v3522, %v3525
        %v3528 = vshrl.u32 %v3343, 16
        %v3530 = vrot.slane %v3528, 4
        %v3531 = vshll.u32 %v3343, 16
        %v3533 = vrot.slane %v3531, 5
        %v3534 = vor.u32 %v3530, %v3533
        %v3535 = vsel %vm1838, %v3526, %v3534
        %v3537 = vshrl.u32 %v2974, 16
        %v3539 = vrot.slane %v3537, 4
        %v3540 = vshll.u32 %v2974, 16
        %v3542 = vrot.slane %v3540, 5
        %v3543 = vor.u32 %v3539, %v3542
        %v3545 = vshrl.u32 %v3344, 16
        %v3547 = vrot.slane %v3545, 4
        %v3548 = vshll.u32 %v3344, 16
        %v3550 = vrot.slane %v3548, 5
        %v3551 = vor.u32 %v3547, %v3550
        %v3552 = vsel %vm1838, %v3543, %v3551
        %v3554 = vshrl.u32 %v2975, 16
        %v3556 = vrot.slane %v3554, 4
        %v3557 = vshll.u32 %v2975, 16
        %v3559 = vrot.slane %v3557, 5
        %v3560 = vor.u32 %v3556, %v3559
        %v3562 = vshrl.u32 %v3345, 16
        %v3564 = vrot.slane %v3562, 4
        %v3565 = vshll.u32 %v3345, 16
        %v3567 = vrot.slane %v3565, 5
        %v3568 = vor.u32 %v3564, %v3567
        %v3569 = vsel %vm1838, %v3560, %v3568
        %v3571 = vshrl.u32 %v2976, 16
        %v3573 = vrot.slane %v3571, 4
        %v3574 = vshll.u32 %v2976, 16
        %v3576 = vrot.slane %v3574, 5
        %v3577 = vor.u32 %v3573, %v3576
        %v3579 = vshrl.u32 %v3346, 16
        %v3581 = vrot.slane %v3579, 4
        %v3582 = vshll.u32 %v3346, 16
        %v3584 = vrot.slane %v3582, 5
        %v3585 = vor.u32 %v3581, %v3584
        %v3586 = vsel %vm1838, %v3577, %v3585
        %v3588 = vshrl.u32 %v2977, 16
        %v3590 = vrot.slane %v3588, 4
        %v3591 = vshll.u32 %v2977, 16
        %v3593 = vrot.slane %v3591, 5
        %v3594 = vor.u32 %v3590, %v3593
        %v3596 = vshrl.u32 %v3347, 16
        %v3598 = vrot.slane %v3596, 4
        %v3599 = vshll.u32 %v3347, 16
        %v3601 = vrot.slane %v3599, 5
        %v3602 = vor.u32 %v3598, %v3601
        %v3603 = vsel %vm1838, %v3594, %v3602
        %v3605 = vshrl.u32 %v2978, 16
        %v3607 = vrot.slane %v3605, 4
        %v3608 = vshll.u32 %v2978, 16
        %v3610 = vrot.slane %v3608, 5
        %v3611 = vor.u32 %v3607, %v3610
        %v3613 = vshrl.u32 %v3348, 16
        %v3615 = vrot.slane %v3613, 4
        %v3616 = vshll.u32 %v3348, 16
        %v3618 = vrot.slane %v3616, 5
        %v3619 = vor.u32 %v3615, %v3618
        %v3620 = vsel %vm1838, %v3611, %v3619
        %s3637 = scalar_lea.vmem [#allocation9], 320
        %v3638 = vld [vmem:[%s3637] sm:$0xf]
        %v3639 = vld [vmem:[%s3637 + $0x4] sm:$0xf]
        %v3640 = vld [vmem:[%s3637 + $0x8] sm:$0xf]
        %v3641 = vld [vmem:[%s3637 + $0xc] sm:$0xf]
        %v3642 = vld [vmem:[%s3637 + $0x10] sm:$0xf]
        %v3643 = vld [vmem:[%s3637 + $0x14] sm:$0xf]
        %v3644 = vld [vmem:[%s3637 + $0x18] sm:$0xf]
        %v3645 = vld [vmem:[%s3637 + $0x1c] sm:$0xf]
        %v3646 = vld [vmem:[%s3637 + $0x20] sm:$0xf]
        %v3647 = vld [vmem:[%s3637 + $0x24] sm:$0xf]
        %v3648 = vld [vmem:[%s3637 + $0x28] sm:$0xf]
        %v3649 = vld [vmem:[%s3637 + $0x2c] sm:$0xf]
        %v3650 = vld [vmem:[%s3637 + $0x30] sm:$0xf]
        %v3651 = vld [vmem:[%s3637 + $0x34] sm:$0xf]
        %v3652 = vld [vmem:[%s3637 + $0x38] sm:$0xf]
        %v3653 = vld [vmem:[%s3637 + $0x3c] sm:$0xf]
        %v3670 = vunpack.c.l.b16 %v3638
        %v3671 = vunpack.c.l.b16 %v3639
        %v3672 = vunpack.c.l.b16 %v3640
        %v3673 = vunpack.c.l.b16 %v3641
        %v3674 = vunpack.c.l.b16 %v3642
        %v3675 = vunpack.c.l.b16 %v3643
        %v3676 = vunpack.c.l.b16 %v3644
        %v3677 = vunpack.c.l.b16 %v3645
        %v3678 = vunpack.c.l.b16 %v3646
        %v3679 = vunpack.c.l.b16 %v3647
        %v3680 = vunpack.c.l.b16 %v3648
        %v3681 = vunpack.c.l.b16 %v3649
        %v3682 = vunpack.c.l.b16 %v3650
        %v3683 = vunpack.c.l.b16 %v3651
        %v3684 = vunpack.c.l.b16 %v3652
        %v3685 = vunpack.c.l.b16 %v3653
        %v3686 = vpack.c.b16 %v3671, %v3670
        %v3687 = vpack.c.b16 %v3673, %v3672
        %v3688 = vpack.c.b16 %v3675, %v3674
        %v3689 = vpack.c.b16 %v3677, %v3676
        %v3690 = vpack.c.b16 %v3679, %v3678
        %v3691 = vpack.c.b16 %v3681, %v3680
        %v3692 = vpack.c.b16 %v3683, %v3682
        %v3693 = vpack.c.b16 %v3685, %v3684
        %3702 = vmatprep.subr.bf16.mxu0 0
        %3703 = vmatpush1.bf16.msra.mxu0 %v3686
        %3704 = vmatprep.subr.bf16.mxu0 0
        %3705 = vmatpush1.bf16.msra.mxu0 %v3687
        %3706 = vmatprep.subr.bf16.mxu0 0
        %3707 = vmatpush1.bf16.msra.mxu0 %v3688
        %3708 = vmatprep.subr.bf16.mxu0 0
        %3709 = vmatpush1.bf16.msra.mxu0 %v3689
        %3710 = vmatprep.subr.bf16.mxu0 0
        %3711 = vmatpush1.bf16.msra.mxu0 %v3690
        %3712 = vmatprep.subr.bf16.mxu0 0
        %3713 = vmatpush1.bf16.msra.mxu0 %v3691
        %3714 = vmatprep.subr.bf16.mxu0 0
        %3715 = vmatpush1.bf16.msra.mxu0 %v3692
        %3716 = vmatprep.subr.bf16.mxu0 0
        %3717 = vmatpush1.bf16.msra.mxu0 %v3693
        %3718 = vmatprep.subr.bf16.mxu0 0
        %3719 = vmatpush1.bf16.msra.mxu0 0
        %3720 = vmatprep.subr.bf16.mxu0 0
        %3721 = vmatpush1.bf16.msra.mxu0 0
        %3722 = vmatprep.subr.bf16.mxu0 0
        %3723 = vmatpush1.bf16.msra.mxu0 0
        %3724 = vmatprep.subr.bf16.mxu0 0
        %3725 = vmatpush1.bf16.msra.mxu0 0
        %3726 = vmatprep.subr.bf16.mxu0 0
        %3727 = vmatpush1.bf16.msra.mxu0 0
        %3728 = vmatprep.subr.bf16.mxu0 0
        %3729 = vmatpush1.bf16.msra.mxu0 0
        %3730 = vmatprep.subr.bf16.mxu0 0
        %3731 = vmatpush1.bf16.msra.mxu0 0
        %3732 = vmatprep.subr.bf16.mxu0 0
        %3733 = vmatpush1.bf16.msra.mxu0 0
        %3734 = vmatprep.mubr.bf16.mxu0 0
        %3735 = vmatmul.mubr.bf16.gmra.mrb[0].mxu0 %v3365
        %v3736 = vpop.f32.mrb[0].mxu0
        %v3737 = vadd.f32 0.0, %v3736
        %v3738 = vpop.f32.mrb[0].mxu0
        %v3739 = vpop.f32.mrb[0].mxu0
        %v3740 = vadd.f32 0.0, %v3739
        %v3741 = vpop.f32.mrb[0].mxu0
        %3742 = vmatprep.mubr.bf16.mxu0 0
        %3743 = vmatmul.mubr.bf16.gmra.mrb[0].mxu0 %v3382
        %v3744 = vpop.f32.mrb[0].mxu0
        %v3745 = vadd.f32 0.0, %v3744
        %v3746 = vpop.f32.mrb[0].mxu0
        %v3747 = vpop.f32.mrb[0].mxu0
        %v3748 = vadd.f32 0.0, %v3747
        %v3749 = vpop.f32.mrb[0].mxu0
        %3750 = vmatprep.mubr.bf16.mxu0 0
        %3751 = vmatmul.mubr.bf16.gmra.mrb[0].mxu0 %v3399
        %v3752 = vpop.f32.mrb[0].mxu0
        %v3753 = vadd.f32 0.0, %v3752
        %v3754 = vpop.f32.mrb[0].mxu0
        %v3755 = vpop.f32.mrb[0].mxu0
        %v3756 = vadd.f32 0.0, %v3755
        %v3757 = vpop.f32.mrb[0].mxu0
        %3758 = vmatprep.mubr.bf16.mxu0 0
        %3759 = vmatmul.mubr.bf16.gmra.mrb[0].mxu0 %v3416
        %v3760 = vpop.f32.mrb[0].mxu0
        %v3761 = vadd.f32 0.0, %v3760
        %v3762 = vpop.f32.mrb[0].mxu0
        %v3763 = vpop.f32.mrb[0].mxu0
        %v3764 = vadd.f32 0.0, %v3763
        %v3765 = vpop.f32.mrb[0].mxu0
        %3766 = vmatprep.mubr.bf16.mxu0 0
        %3767 = vmatmul.mubr.bf16.gmra.mrb[0].mxu0 %v3433
        %v3768 = vpop.f32.mrb[0].mxu0
        %v3769 = vadd.f32 0.0, %v3768
        %v3770 = vpop.f32.mrb[0].mxu0
        %v3771 = vpop.f32.mrb[0].mxu0
        %v3772 = vadd.f32 0.0, %v3771
        %v3773 = vpop.f32.mrb[0].mxu0
        %3774 = vmatprep.mubr.bf16.mxu0 0
        %3775 = vmatmul.mubr.bf16.gmra.mrb[0].mxu0 %v3450
        %v3776 = vpop.f32.mrb[0].mxu0
        %v3777 = vadd.f32 0.0, %v3776
        %v3778 = vpop.f32.mrb[0].mxu0
        %v3779 = vpop.f32.mrb[0].mxu0
        %v3780 = vadd.f32 0.0, %v3779
        %v3781 = vpop.f32.mrb[0].mxu0
        %3782 = vmatprep.mubr.bf16.mxu0 0
        %3783 = vmatmul.mubr.bf16.gmra.mrb[0].mxu0 %v3467
        %v3784 = vpop.f32.mrb[0].mxu0
        %v3785 = vadd.f32 0.0, %v3784
        %v3786 = vpop.f32.mrb[0].mxu0
        %v3787 = vpop.f32.mrb[0].mxu0
        %v3788 = vadd.f32 0.0, %v3787
        %v3789 = vpop.f32.mrb[0].mxu0
        %3790 = vmatprep.mubr.bf16.mxu0 0
        %3791 = vmatmul.mubr.bf16.gmra.mrb[0].mxu0 %v3484
        %v3792 = vpop.f32.mrb[0].mxu0
        %v3793 = vadd.f32 0.0, %v3792
        %v3794 = vpop.f32.mrb[0].mxu0
        %v3795 = vpop.f32.mrb[0].mxu0
        %v3796 = vadd.f32 0.0, %v3795
        %v3797 = vpop.f32.mrb[0].mxu0
        %3798 = vmatprep.mubr.bf16.mxu0 0
        %3799 = vmatmul.mubr.bf16.gmra.mrb[0].mxu0 %v3501
        %v3800 = vpop.f32.mrb[0].mxu0
        %v3801 = vadd.f32 0.0, %v3800
        %v3802 = vpop.f32.mrb[0].mxu0
        %v3803 = vpop.f32.mrb[0].mxu0
        %v3804 = vadd.f32 0.0, %v3803
        %v3805 = vpop.f32.mrb[0].mxu0
        %3806 = vmatprep.mubr.bf16.mxu0 0
        %3807 = vmatmul.mubr.bf16.gmra.mrb[0].mxu0 %v3518
        %v3808 = vpop.f32.mrb[0].mxu0
        %v3809 = vadd.f32 0.0, %v3808
        %v3810 = vpop.f32.mrb[0].mxu0
        %v3811 = vpop.f32.mrb[0].mxu0
        %v3812 = vadd.f32 0.0, %v3811
        %v3813 = vpop.f32.mrb[0].mxu0
        %3814 = vmatprep.mubr.bf16.mxu0 0
        %3815 = vmatmul.mubr.bf16.gmra.mrb[0].mxu0 %v3535
        %v3816 = vpop.f32.mrb[0].mxu0
        %v3817 = vadd.f32 0.0, %v3816
        %v3818 = vpop.f32.mrb[0].mxu0
        %v3819 = vpop.f32.mrb[0].mxu0
        %v3820 = vadd.f32 0.0, %v3819
        %v3821 = vpop.f32.mrb[0].mxu0
        %3822 = vmatprep.mubr.bf16.mxu0 0
        %3823 = vmatmul.mubr.bf16.gmra.mrb[0].mxu0 %v3552
        %v3824 = vpop.f32.mrb[0].mxu0
        %v3825 = vadd.f32 0.0, %v3824
        %v3826 = vpop.f32.mrb[0].mxu0
        %v3827 = vpop.f32.mrb[0].mxu0
        %v3828 = vadd.f32 0.0, %v3827
        %v3829 = vpop.f32.mrb[0].mxu0
        %3830 = vmatprep.mubr.bf16.mxu0 0
        %3831 = vmatmul.mubr.bf16.gmra.mrb[0].mxu0 %v3569
        %v3832 = vpop.f32.mrb[0].mxu0
        %v3833 = vadd.f32 0.0, %v3832
        %v3834 = vpop.f32.mrb[0].mxu0
        %v3835 = vpop.f32.mrb[0].mxu0
        %v3836 = vadd.f32 0.0, %v3835
        %v3837 = vpop.f32.mrb[0].mxu0
        %3838 = vmatprep.mubr.bf16.mxu0 0
        %3839 = vmatmul.mubr.bf16.gmra.mrb[0].mxu0 %v3586
        %v3840 = vpop.f32.mrb[0].mxu0
        %v3841 = vadd.f32 0.0, %v3840
        %v3842 = vpop.f32.mrb[0].mxu0
        %v3843 = vpop.f32.mrb[0].mxu0
        %v3844 = vadd.f32 0.0, %v3843
        %v3845 = vpop.f32.mrb[0].mxu0
        %3846 = vmatprep.mubr.bf16.mxu0 0
        %3847 = vmatmul.mubr.bf16.gmra.mrb[0].mxu0 %v3603
        %v3848 = vpop.f32.mrb[0].mxu0
        %v3849 = vadd.f32 0.0, %v3848
        %v3850 = vpop.f32.mrb[0].mxu0
        %v3851 = vpop.f32.mrb[0].mxu0
        %v3852 = vadd.f32 0.0, %v3851
        %v3853 = vpop.f32.mrb[0].mxu0
        %3854 = vmatprep.mubr.bf16.mxu0 0
        %3855 = vmatmul.mubr.bf16.gmra.mrb[0].mxu0 %v3620
        %v3856 = vpop.f32.mrb[0].mxu0
        %v3857 = vadd.f32 0.0, %v3856
        %v3858 = vpop.f32.mrb[0].mxu0
        %v3859 = vpop.f32.mrb[0].mxu0
        %v3860 = vadd.f32 0.0, %v3859
        %v3861 = vpop.f32.mrb[0].mxu0
        %3862 = vdwg.mxu0
        %v3863 = vadd.f32 %v3301, %v3737
        %v3864 = vadd.f32 %v3302, %v3740
        %v3865 = vadd.f32 %v3303, %v3745
        %v3866 = vadd.f32 %v3304, %v3748
        %v3867 = vadd.f32 %v3305, %v3753
        %v3868 = vadd.f32 %v3306, %v3756
        %v3869 = vadd.f32 %v3307, %v3761
        %v3870 = vadd.f32 %v3308, %v3764
        %v3871 = vadd.f32 %v3309, %v3769
        %v3872 = vadd.f32 %v3310, %v3772
        %v3873 = vadd.f32 %v3311, %v3777
        %v3874 = vadd.f32 %v3312, %v3780
        %v3875 = vadd.f32 %v3313, %v3785
        %v3876 = vadd.f32 %v3314, %v3788
        %v3877 = vadd.f32 %v3315, %v3793
        %v3878 = vadd.f32 %v3316, %v3796
        %v3879 = vadd.f32 %v3317, %v3801
        %v3880 = vadd.f32 %v3318, %v3804
        %v3881 = vadd.f32 %v3319, %v3809
        %v3882 = vadd.f32 %v3320, %v3812
        %v3883 = vadd.f32 %v3321, %v3817
        %v3884 = vadd.f32 %v3322, %v3820
        %v3885 = vadd.f32 %v3323, %v3825
        %v3886 = vadd.f32 %v3324, %v3828
        %v3887 = vadd.f32 %v3325, %v3833
        %v3888 = vadd.f32 %v3326, %v3836
        %v3889 = vadd.f32 %v3327, %v3841
        %v3890 = vadd.f32 %v3328, %v3844
        %v3891 = vadd.f32 %v3329, %v3849
        %v3892 = vadd.f32 %v3330, %v3852
        %v3893 = vadd.f32 %v3331, %v3857
        %v3894 = vadd.f32 %v3332, %v3860
        %s3895 = scalar_lea.vmem [#allocation2], 32
        %v3896 = vld [vmem:[%s3895] sm:$0xf8]
        %v3897 = vld [vmem:[%s3895 + $0x8] sm:$0xf]
        %v3898 = vld [vmem:[%s3895 + $0x10] sm:$0xf8]
        %v3899 = vld [vmem:[%s3895 + $0x18] sm:$0xf]
        %v3900 = vld [vmem:[%s3895 + $0x20] sm:$0xf8]
        %v3901 = vld [vmem:[%s3895 + $0x28] sm:$0xf]
        %v3902 = vld [vmem:[%s3895 + $0x30] sm:$0xf8]
        %v3903 = vld [vmem:[%s3895 + $0x38] sm:$0xf]
        %v3904 = vld [vmem:[%s3895 + $0x40] sm:$0xf8]
        %v3905 = vld [vmem:[%s3895 + $0x48] sm:$0xf]
        %v3906 = vld [vmem:[%s3895 + $0x50] sm:$0xf8]
        %v3907 = vld [vmem:[%s3895 + $0x58] sm:$0xf]
        %v3908 = vld [vmem:[%s3895 + $0x60] sm:$0xf8]
        %v3909 = vld [vmem:[%s3895 + $0x68] sm:$0xf]
        %v3910 = vld [vmem:[%s3895 + $0x70] sm:$0xf8]
        %v3911 = vld [vmem:[%s3895 + $0x78] sm:$0xf]
        %v3912 = vld [vmem:[%s3895 + $0x80] sm:$0xf8]
        %v3913 = vld [vmem:[%s3895 + $0x88] sm:$0xf]
        %v3914 = vld [vmem:[%s3895 + $0x90] sm:$0xf8]
        %v3915 = vld [vmem:[%s3895 + $0x98] sm:$0xf]
        %v3916 = vld [vmem:[%s3895 + $0xa0] sm:$0xf8]
        %v3917 = vld [vmem:[%s3895 + $0xa8] sm:$0xf]
        %v3918 = vld [vmem:[%s3895 + $0xb0] sm:$0xf8]
        %v3919 = vld [vmem:[%s3895 + $0xb8] sm:$0xf]
        %v3920 = vld [vmem:[%s3895 + $0xc0] sm:$0xf8]
        %v3921 = vld [vmem:[%s3895 + $0xc8] sm:$0xf]
        %v3922 = vld [vmem:[%s3895 + $0xd0] sm:$0xf8]
        %v3923 = vld [vmem:[%s3895 + $0xd8] sm:$0xf]
        %v3924 = vld [vmem:[%s3895 + $0xe0] sm:$0xf8]
        %v3925 = vld [vmem:[%s3895 + $0xe8] sm:$0xf]
        %v3926 = vld [vmem:[%s3895 + $0xf0] sm:$0xf8]
        %v3927 = vld [vmem:[%s3895 + $0xf8] sm:$0xf]
        %v3929 = vshrl.u32 %v3896, 16
        %v3931 = vrot.slane %v3929, 3
        %v3932 = vshll.u32 %v3896, 16
        %v3934 = vrot.slane %v3932, 4
        %v3935 = vor.u32 %v3931, %v3934
        %v3937 = vshrl.u32 %v3897, 16
        %v3939 = vrot.slane %v3937, 3
        %v3940 = vshll.u32 %v3897, 16
        %v3942 = vrot.slane %v3940, 4
        %v3943 = vor.u32 %v3939, %v3942
        %v3944 = vsel %vm792, %v3935, %v3943
        %v3946 = vshrl.u32 %v3898, 16
        %v3948 = vrot.slane %v3946, 3
        %v3949 = vshll.u32 %v3898, 16
        %v3951 = vrot.slane %v3949, 4
        %v3952 = vor.u32 %v3948, %v3951
        %v3954 = vshrl.u32 %v3899, 16
        %v3956 = vrot.slane %v3954, 3
        %v3957 = vshll.u32 %v3899, 16
        %v3959 = vrot.slane %v3957, 4
        %v3960 = vor.u32 %v3956, %v3959
        %v3961 = vsel %vm792, %v3952, %v3960
        %v3963 = vshrl.u32 %v3900, 16
        %v3965 = vrot.slane %v3963, 3
        %v3966 = vshll.u32 %v3900, 16
        %v3968 = vrot.slane %v3966, 4
        %v3969 = vor.u32 %v3965, %v3968
        %v3971 = vshrl.u32 %v3901, 16
        %v3973 = vrot.slane %v3971, 3
        %v3974 = vshll.u32 %v3901, 16
        %v3976 = vrot.slane %v3974, 4
        %v3977 = vor.u32 %v3973, %v3976
        %v3978 = vsel %vm792, %v3969, %v3977
        %v3980 = vshrl.u32 %v3902, 16
        %v3982 = vrot.slane %v3980, 3
        %v3983 = vshll.u32 %v3902, 16
        %v3985 = vrot.slane %v3983, 4
        %v3986 = vor.u32 %v3982, %v3985
        %v3988 = vshrl.u32 %v3903, 16
        %v3990 = vrot.slane %v3988, 3
        %v3991 = vshll.u32 %v3903, 16
        %v3993 = vrot.slane %v3991, 4
        %v3994 = vor.u32 %v3990, %v3993
        %v3995 = vsel %vm792, %v3986, %v3994
        %v3997 = vshrl.u32 %v3904, 16
        %v3999 = vrot.slane %v3997, 3
        %v4000 = vshll.u32 %v3904, 16
        %v4002 = vrot.slane %v4000, 4
        %v4003 = vor.u32 %v3999, %v4002
        %v4005 = vshrl.u32 %v3905, 16
        %v4007 = vrot.slane %v4005, 3
        %v4008 = vshll.u32 %v3905, 16
        %v4010 = vrot.slane %v4008, 4
        %v4011 = vor.u32 %v4007, %v4010
        %v4012 = vsel %vm792, %v4003, %v4011
        %v4014 = vshrl.u32 %v3906, 16
        %v4016 = vrot.slane %v4014, 3
        %v4017 = vshll.u32 %v3906, 16
        %v4019 = vrot.slane %v4017, 4
        %v4020 = vor.u32 %v4016, %v4019
        %v4022 = vshrl.u32 %v3907, 16
        %v4024 = vrot.slane %v4022, 3
        %v4025 = vshll.u32 %v3907, 16
        %v4027 = vrot.slane %v4025, 4
        %v4028 = vor.u32 %v4024, %v4027
        %v4029 = vsel %vm792, %v4020, %v4028
        %v4031 = vshrl.u32 %v3908, 16
        %v4033 = vrot.slane %v4031, 3
        %v4034 = vshll.u32 %v3908, 16
        %v4036 = vrot.slane %v4034, 4
        %v4037 = vor.u32 %v4033, %v4036
        %v4039 = vshrl.u32 %v3909, 16
        %v4041 = vrot.slane %v4039, 3
        %v4042 = vshll.u32 %v3909, 16
        %v4044 = vrot.slane %v4042, 4
        %v4045 = vor.u32 %v4041, %v4044
        %v4046 = vsel %vm792, %v4037, %v4045
        %v4048 = vshrl.u32 %v3910, 16
        %v4050 = vrot.slane %v4048, 3
        %v4051 = vshll.u32 %v3910, 16
        %v4053 = vrot.slane %v4051, 4
        %v4054 = vor.u32 %v4050, %v4053
        %v4056 = vshrl.u32 %v3911, 16
        %v4058 = vrot.slane %v4056, 3
        %v4059 = vshll.u32 %v3911, 16
        %v4061 = vrot.slane %v4059, 4
        %v4062 = vor.u32 %v4058, %v4061
        %v4063 = vsel %vm792, %v4054, %v4062
        %v4065 = vshrl.u32 %v3912, 16
        %v4067 = vrot.slane %v4065, 3
        %v4068 = vshll.u32 %v3912, 16
        %v4070 = vrot.slane %v4068, 4
        %v4071 = vor.u32 %v4067, %v4070
        %v4073 = vshrl.u32 %v3913, 16
        %v4075 = vrot.slane %v4073, 3
        %v4076 = vshll.u32 %v3913, 16
        %v4078 = vrot.slane %v4076, 4
        %v4079 = vor.u32 %v4075, %v4078
        %v4080 = vsel %vm792, %v4071, %v4079
        %v4082 = vshrl.u32 %v3914, 16
        %v4084 = vrot.slane %v4082, 3
        %v4085 = vshll.u32 %v3914, 16
        %v4087 = vrot.slane %v4085, 4
        %v4088 = vor.u32 %v4084, %v4087
        %v4090 = vshrl.u32 %v3915, 16
        %v4092 = vrot.slane %v4090, 3
        %v4093 = vshll.u32 %v3915, 16
        %v4095 = vrot.slane %v4093, 4
        %v4096 = vor.u32 %v4092, %v4095
        %v4097 = vsel %vm792, %v4088, %v4096
        %v4099 = vshrl.u32 %v3916, 16
        %v4101 = vrot.slane %v4099, 3
        %v4102 = vshll.u32 %v3916, 16
        %v4104 = vrot.slane %v4102, 4
        %v4105 = vor.u32 %v4101, %v4104
        %v4107 = vshrl.u32 %v3917, 16
        %v4109 = vrot.slane %v4107, 3
        %v4110 = vshll.u32 %v3917, 16
        %v4112 = vrot.slane %v4110, 4
        %v4113 = vor.u32 %v4109, %v4112
        %v4114 = vsel %vm792, %v4105, %v4113
        %v4116 = vshrl.u32 %v3918, 16
        %v4118 = vrot.slane %v4116, 3
        %v4119 = vshll.u32 %v3918, 16
        %v4121 = vrot.slane %v4119, 4
        %v4122 = vor.u32 %v4118, %v4121
        %v4124 = vshrl.u32 %v3919, 16
        %v4126 = vrot.slane %v4124, 3
        %v4127 = vshll.u32 %v3919, 16
        %v4129 = vrot.slane %v4127, 4
        %v4130 = vor.u32 %v4126, %v4129
        %v4131 = vsel %vm792, %v4122, %v4130
        %v4133 = vshrl.u32 %v3920, 16
        %v4135 = vrot.slane %v4133, 3
        %v4136 = vshll.u32 %v3920, 16
        %v4138 = vrot.slane %v4136, 4
        %v4139 = vor.u32 %v4135, %v4138
        %v4141 = vshrl.u32 %v3921, 16
        %v4143 = vrot.slane %v4141, 3
        %v4144 = vshll.u32 %v3921, 16
        %v4146 = vrot.slane %v4144, 4
        %v4147 = vor.u32 %v4143, %v4146
        %v4148 = vsel %vm792, %v4139, %v4147
        %v4150 = vshrl.u32 %v3922, 16
        %v4152 = vrot.slane %v4150, 3
        %v4153 = vshll.u32 %v3922, 16
        %v4155 = vrot.slane %v4153, 4
        %v4156 = vor.u32 %v4152, %v4155
        %v4158 = vshrl.u32 %v3923, 16
        %v4160 = vrot.slane %v4158, 3
        %v4161 = vshll.u32 %v3923, 16
        %v4163 = vrot.slane %v4161, 4
        %v4164 = vor.u32 %v4160, %v4163
        %v4165 = vsel %vm792, %v4156, %v4164
        %v4167 = vshrl.u32 %v3924, 16
        %v4169 = vrot.slane %v4167, 3
        %v4170 = vshll.u32 %v3924, 16
        %v4172 = vrot.slane %v4170, 4
        %v4173 = vor.u32 %v4169, %v4172
        %v4175 = vshrl.u32 %v3925, 16
        %v4177 = vrot.slane %v4175, 3
        %v4178 = vshll.u32 %v3925, 16
        %v4180 = vrot.slane %v4178, 4
        %v4181 = vor.u32 %v4177, %v4180
        %v4182 = vsel %vm792, %v4173, %v4181
        %v4184 = vshrl.u32 %v3926, 16
        %v4186 = vrot.slane %v4184, 3
        %v4187 = vshll.u32 %v3926, 16
        %v4189 = vrot.slane %v4187, 4
        %v4190 = vor.u32 %v4186, %v4189
        %v4192 = vshrl.u32 %v3927, 16
        %v4194 = vrot.slane %v4192, 3
        %v4195 = vshll.u32 %v3927, 16
        %v4197 = vrot.slane %v4195, 4
        %v4198 = vor.u32 %v4194, %v4197
        %v4199 = vsel %vm792, %v4190, %v4198
        %s4216 = scalar_lea.vmem [#allocation9], 384
        %v4217 = vld [vmem:[%s4216] sm:$0xf]
        %v4218 = vld [vmem:[%s4216 + $0x4] sm:$0xf]
        %v4219 = vld [vmem:[%s4216 + $0x8] sm:$0xf]
        %v4220 = vld [vmem:[%s4216 + $0xc] sm:$0xf]
        %v4221 = vld [vmem:[%s4216 + $0x10] sm:$0xf]
        %v4222 = vld [vmem:[%s4216 + $0x14] sm:$0xf]
        %v4223 = vld [vmem:[%s4216 + $0x18] sm:$0xf]
        %v4224 = vld [vmem:[%s4216 + $0x1c] sm:$0xf]
        %v4225 = vld [vmem:[%s4216 + $0x20] sm:$0xf]
        %v4226 = vld [vmem:[%s4216 + $0x24] sm:$0xf]
        %v4227 = vld [vmem:[%s4216 + $0x28] sm:$0xf]
        %v4228 = vld [vmem:[%s4216 + $0x2c] sm:$0xf]
        %v4229 = vld [vmem:[%s4216 + $0x30] sm:$0xf]
        %v4230 = vld [vmem:[%s4216 + $0x34] sm:$0xf]
        %v4231 = vld [vmem:[%s4216 + $0x38] sm:$0xf]
        %v4232 = vld [vmem:[%s4216 + $0x3c] sm:$0xf]
        %v4249 = vunpack.c.l.b16 %v4217
        %v4250 = vunpack.c.l.b16 %v4218
        %v4251 = vunpack.c.l.b16 %v4219
        %v4252 = vunpack.c.l.b16 %v4220
        %v4253 = vunpack.c.l.b16 %v4221
        %v4254 = vunpack.c.l.b16 %v4222
        %v4255 = vunpack.c.l.b16 %v4223
        %v4256 = vunpack.c.l.b16 %v4224
        %v4257 = vunpack.c.l.b16 %v4225
        %v4258 = vunpack.c.l.b16 %v4226
        %v4259 = vunpack.c.l.b16 %v4227
        %v4260 = vunpack.c.l.b16 %v4228
        %v4261 = vunpack.c.l.b16 %v4229
        %v4262 = vunpack.c.l.b16 %v4230
        %v4263 = vunpack.c.l.b16 %v4231
        %v4264 = vunpack.c.l.b16 %v4232
        %v4265 = vpack.c.b16 %v4250, %v4249
        %v4266 = vpack.c.b16 %v4252, %v4251
        %v4267 = vpack.c.b16 %v4254, %v4253
        %v4268 = vpack.c.b16 %v4256, %v4255
        %v4269 = vpack.c.b16 %v4258, %v4257
        %v4270 = vpack.c.b16 %v4260, %v4259
        %v4271 = vpack.c.b16 %v4262, %v4261
        %v4272 = vpack.c.b16 %v4264, %v4263
        %4281 = vmatprep.subr.bf16.mxu0 0
        %4282 = vmatpush1.bf16.msra.mxu0 %v4265
        %4283 = vmatprep.subr.bf16.mxu0 0
        %4284 = vmatpush1.bf16.msra.mxu0 %v4266
        %4285 = vmatprep.subr.bf16.mxu0 0
        %4286 = vmatpush1.bf16.msra.mxu0 %v4267
        %4287 = vmatprep.subr.bf16.mxu0 0
        %4288 = vmatpush1.bf16.msra.mxu0 %v4268
        %4289 = vmatprep.subr.bf16.mxu0 0
        %4290 = vmatpush1.bf16.msra.mxu0 %v4269
        %4291 = vmatprep.subr.bf16.mxu0 0
        %4292 = vmatpush1.bf16.msra.mxu0 %v4270
        %4293 = vmatprep.subr.bf16.mxu0 0
        %4294 = vmatpush1.bf16.msra.mxu0 %v4271
        %4295 = vmatprep.subr.bf16.mxu0 0
        %4296 = vmatpush1.bf16.msra.mxu0 %v4272
        %4297 = vmatprep.subr.bf16.mxu0 0
        %4298 = vmatpush1.bf16.msra.mxu0 0
        %4299 = vmatprep.subr.bf16.mxu0 0
        %4300 = vmatpush1.bf16.msra.mxu0 0
        %4301 = vmatprep.subr.bf16.mxu0 0
        %4302 = vmatpush1.bf16.msra.mxu0 0
        %4303 = vmatprep.subr.bf16.mxu0 0
        %4304 = vmatpush1.bf16.msra.mxu0 0
        %4305 = vmatprep.subr.bf16.mxu0 0
        %4306 = vmatpush1.bf16.msra.mxu0 0
        %4307 = vmatprep.subr.bf16.mxu0 0
        %4308 = vmatpush1.bf16.msra.mxu0 0
        %4309 = vmatprep.subr.bf16.mxu0 0
        %4310 = vmatpush1.bf16.msra.mxu0 0
        %4311 = vmatprep.subr.bf16.mxu0 0
        %4312 = vmatpush1.bf16.msra.mxu0 0
        %4313 = vmatprep.mubr.bf16.mxu0 0
        %4314 = vmatmul.mubr.bf16.gmra.mrb[0].mxu0 %v3944
        %v4315 = vpop.f32.mrb[0].mxu0
        %v4316 = vadd.f32 0.0, %v4315
        %v4317 = vpop.f32.mrb[0].mxu0
        %v4318 = vpop.f32.mrb[0].mxu0
        %v4319 = vadd.f32 0.0, %v4318
        %v4320 = vpop.f32.mrb[0].mxu0
        %4321 = vmatprep.mubr.bf16.mxu0 0
        %4322 = vmatmul.mubr.bf16.gmra.mrb[0].mxu0 %v3961
        %v4323 = vpop.f32.mrb[0].mxu0
        %v4324 = vadd.f32 0.0, %v4323
        %v4325 = vpop.f32.mrb[0].mxu0
        %v4326 = vpop.f32.mrb[0].mxu0
        %v4327 = vadd.f32 0.0, %v4326
        %v4328 = vpop.f32.mrb[0].mxu0
        %4329 = vmatprep.mubr.bf16.mxu0 0
        %4330 = vmatmul.mubr.bf16.gmra.mrb[0].mxu0 %v3978
        %v4331 = vpop.f32.mrb[0].mxu0
        %v4332 = vadd.f32 0.0, %v4331
        %v4333 = vpop.f32.mrb[0].mxu0
        %v4334 = vpop.f32.mrb[0].mxu0
        %v4335 = vadd.f32 0.0, %v4334
        %v4336 = vpop.f32.mrb[0].mxu0
        %4337 = vmatprep.mubr.bf16.mxu0 0
        %4338 = vmatmul.mubr.bf16.gmra.mrb[0].mxu0 %v3995
        %v4339 = vpop.f32.mrb[0].mxu0
        %v4340 = vadd.f32 0.0, %v4339
        %v4341 = vpop.f32.mrb[0].mxu0
        %v4342 = vpop.f32.mrb[0].mxu0
        %v4343 = vadd.f32 0.0, %v4342
        %v4344 = vpop.f32.mrb[0].mxu0
        %4345 = vmatprep.mubr.bf16.mxu0 0
        %4346 = vmatmul.mubr.bf16.gmra.mrb[0].mxu0 %v4012
        %v4347 = vpop.f32.mrb[0].mxu0
        %v4348 = vadd.f32 0.0, %v4347
        %v4349 = vpop.f32.mrb[0].mxu0
        %v4350 = vpop.f32.mrb[0].mxu0
        %v4351 = vadd.f32 0.0, %v4350
        %v4352 = vpop.f32.mrb[0].mxu0
        %4353 = vmatprep.mubr.bf16.mxu0 0
        %4354 = vmatmul.mubr.bf16.gmra.mrb[0].mxu0 %v4029
        %v4355 = vpop.f32.mrb[0].mxu0
        %v4356 = vadd.f32 0.0, %v4355
        %v4357 = vpop.f32.mrb[0].mxu0
        %v4358 = vpop.f32.mrb[0].mxu0
        %v4359 = vadd.f32 0.0, %v4358
        %v4360 = vpop.f32.mrb[0].mxu0
        %4361 = vmatprep.mubr.bf16.mxu0 0
        %4362 = vmatmul.mubr.bf16.gmra.mrb[0].mxu0 %v4046
        %v4363 = vpop.f32.mrb[0].mxu0
        %v4364 = vadd.f32 0.0, %v4363
        %v4365 = vpop.f32.mrb[0].mxu0
        %v4366 = vpop.f32.mrb[0].mxu0
        %v4367 = vadd.f32 0.0, %v4366
        %v4368 = vpop.f32.mrb[0].mxu0
        %4369 = vmatprep.mubr.bf16.mxu0 0
        %4370 = vmatmul.mubr.bf16.gmra.mrb[0].mxu0 %v4063
        %v4371 = vpop.f32.mrb[0].mxu0
        %v4372 = vadd.f32 0.0, %v4371
        %v4373 = vpop.f32.mrb[0].mxu0
        %v4374 = vpop.f32.mrb[0].mxu0
        %v4375 = vadd.f32 0.0, %v4374
        %v4376 = vpop.f32.mrb[0].mxu0
        %4377 = vmatprep.mubr.bf16.mxu0 0
        %4378 = vmatmul.mubr.bf16.gmra.mrb[0].mxu0 %v4080
        %v4379 = vpop.f32.mrb[0].mxu0
        %v4380 = vadd.f32 0.0, %v4379
        %v4381 = vpop.f32.mrb[0].mxu0
        %v4382 = vpop.f32.mrb[0].mxu0
        %v4383 = vadd.f32 0.0, %v4382
        %v4384 = vpop.f32.mrb[0].mxu0
        %4385 = vmatprep.mubr.bf16.mxu0 0
        %4386 = vmatmul.mubr.bf16.gmra.mrb[0].mxu0 %v4097
        %v4387 = vpop.f32.mrb[0].mxu0
        %v4388 = vadd.f32 0.0, %v4387
        %v4389 = vpop.f32.mrb[0].mxu0
        %v4390 = vpop.f32.mrb[0].mxu0
        %v4391 = vadd.f32 0.0, %v4390
        %v4392 = vpop.f32.mrb[0].mxu0
        %4393 = vmatprep.mubr.bf16.mxu0 0
        %4394 = vmatmul.mubr.bf16.gmra.mrb[0].mxu0 %v4114
        %v4395 = vpop.f32.mrb[0].mxu0
        %v4396 = vadd.f32 0.0, %v4395
        %v4397 = vpop.f32.mrb[0].mxu0
        %v4398 = vpop.f32.mrb[0].mxu0
        %v4399 = vadd.f32 0.0, %v4398
        %v4400 = vpop.f32.mrb[0].mxu0
        %4401 = vmatprep.mubr.bf16.mxu0 0
        %4402 = vmatmul.mubr.bf16.gmra.mrb[0].mxu0 %v4131
        %v4403 = vpop.f32.mrb[0].mxu0
        %v4404 = vadd.f32 0.0, %v4403
        %v4405 = vpop.f32.mrb[0].mxu0
        %v4406 = vpop.f32.mrb[0].mxu0
        %v4407 = vadd.f32 0.0, %v4406
        %v4408 = vpop.f32.mrb[0].mxu0
        %4409 = vmatprep.mubr.bf16.mxu0 0
        %4410 = vmatmul.mubr.bf16.gmra.mrb[0].mxu0 %v4148
        %v4411 = vpop.f32.mrb[0].mxu0
        %v4412 = vadd.f32 0.0, %v4411
        %v4413 = vpop.f32.mrb[0].mxu0
        %v4414 = vpop.f32.mrb[0].mxu0
        %v4415 = vadd.f32 0.0, %v4414
        %v4416 = vpop.f32.mrb[0].mxu0
        %4417 = vmatprep.mubr.bf16.mxu0 0
        %4418 = vmatmul.mubr.bf16.gmra.mrb[0].mxu0 %v4165
        %v4419 = vpop.f32.mrb[0].mxu0
        %v4420 = vadd.f32 0.0, %v4419
        %v4421 = vpop.f32.mrb[0].mxu0
        %v4422 = vpop.f32.mrb[0].mxu0
        %v4423 = vadd.f32 0.0, %v4422
        %v4424 = vpop.f32.mrb[0].mxu0
        %4425 = vmatprep.mubr.bf16.mxu0 0
        %4426 = vmatmul.mubr.bf16.gmra.mrb[0].mxu0 %v4182
        %v4427 = vpop.f32.mrb[0].mxu0
        %v4428 = vadd.f32 0.0, %v4427
        %v4429 = vpop.f32.mrb[0].mxu0
        %v4430 = vpop.f32.mrb[0].mxu0
        %v4431 = vadd.f32 0.0, %v4430
        %v4432 = vpop.f32.mrb[0].mxu0
        %4433 = vmatprep.mubr.bf16.mxu0 0
        %4434 = vmatmul.mubr.bf16.gmra.mrb[0].mxu0 %v4199
        %v4435 = vpop.f32.mrb[0].mxu0
        %v4436 = vadd.f32 0.0, %v4435
        %v4437 = vpop.f32.mrb[0].mxu0
        %v4438 = vpop.f32.mrb[0].mxu0
        %v4439 = vadd.f32 0.0, %v4438
        %v4440 = vpop.f32.mrb[0].mxu0
        %4441 = vdwg.mxu0
        %v4442 = vadd.f32 %v3863, %v4316
        %v4443 = vadd.f32 %v3864, %v4319
        %v4444 = vadd.f32 %v3865, %v4324
        %v4445 = vadd.f32 %v3866, %v4327
        %v4446 = vadd.f32 %v3867, %v4332
        %v4447 = vadd.f32 %v3868, %v4335
        %v4448 = vadd.f32 %v3869, %v4340
        %v4449 = vadd.f32 %v3870, %v4343
        %v4450 = vadd.f32 %v3871, %v4348
        %v4451 = vadd.f32 %v3872, %v4351
        %v4452 = vadd.f32 %v3873, %v4356
        %v4453 = vadd.f32 %v3874, %v4359
        %v4454 = vadd.f32 %v3875, %v4364
        %v4455 = vadd.f32 %v3876, %v4367
        %v4456 = vadd.f32 %v3877, %v4372
        %v4457 = vadd.f32 %v3878, %v4375
        %v4458 = vadd.f32 %v3879, %v4380
        %v4459 = vadd.f32 %v3880, %v4383
        %v4460 = vadd.f32 %v3881, %v4388
        %v4461 = vadd.f32 %v3882, %v4391
        %v4462 = vadd.f32 %v3883, %v4396
        %v4463 = vadd.f32 %v3884, %v4399
        %v4464 = vadd.f32 %v3885, %v4404
        %v4465 = vadd.f32 %v3886, %v4407
        %v4466 = vadd.f32 %v3887, %v4412
        %v4467 = vadd.f32 %v3888, %v4415
        %v4468 = vadd.f32 %v3889, %v4420
        %v4469 = vadd.f32 %v3890, %v4423
        %v4470 = vadd.f32 %v3891, %v4428
        %v4471 = vadd.f32 %v3892, %v4431
        %v4472 = vadd.f32 %v3893, %v4436
        %v4473 = vadd.f32 %v3894, %v4439
        %v4474 = vld [vmem:[%s3895] sm:$0xf0]
        %v4475 = vld [vmem:[%s3895 + $0x10] sm:$0xf0]
        %v4476 = vld [vmem:[%s3895 + $0x20] sm:$0xf0]
        %v4477 = vld [vmem:[%s3895 + $0x30] sm:$0xf0]
        %v4478 = vld [vmem:[%s3895 + $0x40] sm:$0xf0]
        %v4479 = vld [vmem:[%s3895 + $0x50] sm:$0xf0]
        %v4480 = vld [vmem:[%s3895 + $0x60] sm:$0xf0]
        %v4481 = vld [vmem:[%s3895 + $0x70] sm:$0xf0]
        %v4482 = vld [vmem:[%s3895 + $0x80] sm:$0xf0]
        %v4483 = vld [vmem:[%s3895 + $0x90] sm:$0xf0]
        %v4484 = vld [vmem:[%s3895 + $0xa0] sm:$0xf0]
        %v4485 = vld [vmem:[%s3895 + $0xb0] sm:$0xf0]
        %v4486 = vld [vmem:[%s3895 + $0xc0] sm:$0xf0]
        %v4487 = vld [vmem:[%s3895 + $0xd0] sm:$0xf0]
        %v4488 = vld [vmem:[%s3895 + $0xe0] sm:$0xf0]
        %v4489 = vld [vmem:[%s3895 + $0xf0] sm:$0xf0]
        %v4522 = vrot.slane %v4474, 4
        %v4523 = vrot.slane %v3897, 4
        %v4524 = vsel %vm1322, %v4522, %v4523
        %v4525 = vrot.slane %v4475, 4
        %v4526 = vrot.slane %v3899, 4
        %v4527 = vsel %vm1322, %v4525, %v4526
        %v4528 = vrot.slane %v4476, 4
        %v4529 = vrot.slane %v3901, 4
        %v4530 = vsel %vm1322, %v4528, %v4529
        %v4531 = vrot.slane %v4477, 4
        %v4532 = vrot.slane %v3903, 4
        %v4533 = vsel %vm1322, %v4531, %v4532
        %v4534 = vrot.slane %v4478, 4
        %v4535 = vrot.slane %v3905, 4
        %v4536 = vsel %vm1322, %v4534, %v4535
        %v4537 = vrot.slane %v4479, 4
        %v4538 = vrot.slane %v3907, 4
        %v4539 = vsel %vm1322, %v4537, %v4538
        %v4540 = vrot.slane %v4480, 4
        %v4541 = vrot.slane %v3909, 4
        %v4542 = vsel %vm1322, %v4540, %v4541
        %v4543 = vrot.slane %v4481, 4
        %v4544 = vrot.slane %v3911, 4
        %v4545 = vsel %vm1322, %v4543, %v4544
        %v4546 = vrot.slane %v4482, 4
        %v4547 = vrot.slane %v3913, 4
        %v4548 = vsel %vm1322, %v4546, %v4547
        %v4549 = vrot.slane %v4483, 4
        %v4550 = vrot.slane %v3915, 4
        %v4551 = vsel %vm1322, %v4549, %v4550
        %v4552 = vrot.slane %v4484, 4
        %v4553 = vrot.slane %v3917, 4
        %v4554 = vsel %vm1322, %v4552, %v4553
        %v4555 = vrot.slane %v4485, 4
        %v4556 = vrot.slane %v3919, 4
        %v4557 = vsel %vm1322, %v4555, %v4556
        %v4558 = vrot.slane %v4486, 4
        %v4559 = vrot.slane %v3921, 4
        %v4560 = vsel %vm1322, %v4558, %v4559
        %v4561 = vrot.slane %v4487, 4
        %v4562 = vrot.slane %v3923, 4
        %v4563 = vsel %vm1322, %v4561, %v4562
        %v4564 = vrot.slane %v4488, 4
        %v4565 = vrot.slane %v3925, 4
        %v4566 = vsel %vm1322, %v4564, %v4565
        %v4567 = vrot.slane %v4489, 4
        %v4568 = vrot.slane %v3927, 4
        %v4569 = vsel %vm1322, %v4567, %v4568
        %s4586 = scalar_lea.vmem [#allocation9], 448
        %v4587 = vld [vmem:[%s4586] sm:$0xf]
        %v4588 = vld [vmem:[%s4586 + $0x4] sm:$0xf]
        %v4589 = vld [vmem:[%s4586 + $0x8] sm:$0xf]
        %v4590 = vld [vmem:[%s4586 + $0xc] sm:$0xf]
        %v4591 = vld [vmem:[%s4586 + $0x10] sm:$0xf]
        %v4592 = vld [vmem:[%s4586 + $0x14] sm:$0xf]
        %v4593 = vld [vmem:[%s4586 + $0x18] sm:$0xf]
        %v4594 = vld [vmem:[%s4586 + $0x1c] sm:$0xf]
        %v4595 = vld [vmem:[%s4586 + $0x20] sm:$0xf]
        %v4596 = vld [vmem:[%s4586 + $0x24] sm:$0xf]
        %v4597 = vld [vmem:[%s4586 + $0x28] sm:$0xf]
        %v4598 = vld [vmem:[%s4586 + $0x2c] sm:$0xf]
        %v4599 = vld [vmem:[%s4586 + $0x30] sm:$0xf]
        %v4600 = vld [vmem:[%s4586 + $0x34] sm:$0xf]
        %v4601 = vld [vmem:[%s4586 + $0x38] sm:$0xf]
        %v4602 = vld [vmem:[%s4586 + $0x3c] sm:$0xf]
        %v4619 = vunpack.c.l.b16 %v4587
        %v4620 = vunpack.c.l.b16 %v4588
        %v4621 = vunpack.c.l.b16 %v4589
        %v4622 = vunpack.c.l.b16 %v4590
        %v4623 = vunpack.c.l.b16 %v4591
        %v4624 = vunpack.c.l.b16 %v4592
        %v4625 = vunpack.c.l.b16 %v4593
        %v4626 = vunpack.c.l.b16 %v4594
        %v4627 = vunpack.c.l.b16 %v4595
        %v4628 = vunpack.c.l.b16 %v4596
        %v4629 = vunpack.c.l.b16 %v4597
        %v4630 = vunpack.c.l.b16 %v4598
        %v4631 = vunpack.c.l.b16 %v4599
        %v4632 = vunpack.c.l.b16 %v4600
        %v4633 = vunpack.c.l.b16 %v4601
        %v4634 = vunpack.c.l.b16 %v4602
        %v4635 = vpack.c.b16 %v4620, %v4619
        %v4636 = vpack.c.b16 %v4622, %v4621
        %v4637 = vpack.c.b16 %v4624, %v4623
        %v4638 = vpack.c.b16 %v4626, %v4625
        %v4639 = vpack.c.b16 %v4628, %v4627
        %v4640 = vpack.c.b16 %v4630, %v4629
        %v4641 = vpack.c.b16 %v4632, %v4631
        %v4642 = vpack.c.b16 %v4634, %v4633
        %4651 = vmatprep.subr.bf16.mxu0 0
        %4652 = vmatpush1.bf16.msra.mxu0 %v4635
        %4653 = vmatprep.subr.bf16.mxu0 0
        %4654 = vmatpush1.bf16.msra.mxu0 %v4636
        %4655 = vmatprep.subr.bf16.mxu0 0
        %4656 = vmatpush1.bf16.msra.mxu0 %v4637
        %4657 = vmatprep.subr.bf16.mxu0 0
        %4658 = vmatpush1.bf16.msra.mxu0 %v4638
        %4659 = vmatprep.subr.bf16.mxu0 0
        %4660 = vmatpush1.bf16.msra.mxu0 %v4639
        %4661 = vmatprep.subr.bf16.mxu0 0
        %4662 = vmatpush1.bf16.msra.mxu0 %v4640
        %4663 = vmatprep.subr.bf16.mxu0 0
        %4664 = vmatpush1.bf16.msra.mxu0 %v4641
        %4665 = vmatprep.subr.bf16.mxu0 0
        %4666 = vmatpush1.bf16.msra.mxu0 %v4642
        %4667 = vmatprep.subr.bf16.mxu0 0
        %4668 = vmatpush1.bf16.msra.mxu0 0
        %4669 = vmatprep.subr.bf16.mxu0 0
        %4670 = vmatpush1.bf16.msra.mxu0 0
        %4671 = vmatprep.subr.bf16.mxu0 0
        %4672 = vmatpush1.bf16.msra.mxu0 0
        %4673 = vmatprep.subr.bf16.mxu0 0
        %4674 = vmatpush1.bf16.msra.mxu0 0
        %4675 = vmatprep.subr.bf16.mxu0 0
        %4676 = vmatpush1.bf16.msra.mxu0 0
        %4677 = vmatprep.subr.bf16.mxu0 0
        %4678 = vmatpush1.bf16.msra.mxu0 0
        %4679 = vmatprep.subr.bf16.mxu0 0
        %4680 = vmatpush1.bf16.msra.mxu0 0
        %4681 = vmatprep.subr.bf16.mxu0 0
        %4682 = vmatpush1.bf16.msra.mxu0 0
        %4683 = vmatprep.mubr.bf16.mxu0 0
        %4684 = vmatmul.mubr.bf16.gmra.mrb[0].mxu0 %v4524
        %v4685 = vpop.f32.mrb[0].mxu0
        %v4686 = vadd.f32 0.0, %v4685
        %v4687 = vpop.f32.mrb[0].mxu0
        %v4688 = vpop.f32.mrb[0].mxu0
        %v4689 = vadd.f32 0.0, %v4688
        %v4690 = vpop.f32.mrb[0].mxu0
        %4691 = vmatprep.mubr.bf16.mxu0 0
        %4692 = vmatmul.mubr.bf16.gmra.mrb[0].mxu0 %v4527
        %v4693 = vpop.f32.mrb[0].mxu0
        %v4694 = vadd.f32 0.0, %v4693
        %v4695 = vpop.f32.mrb[0].mxu0
        %v4696 = vpop.f32.mrb[0].mxu0
        %v4697 = vadd.f32 0.0, %v4696
        %v4698 = vpop.f32.mrb[0].mxu0
        %4699 = vmatprep.mubr.bf16.mxu0 0
        %4700 = vmatmul.mubr.bf16.gmra.mrb[0].mxu0 %v4530
        %v4701 = vpop.f32.mrb[0].mxu0
        %v4702 = vadd.f32 0.0, %v4701
        %v4703 = vpop.f32.mrb[0].mxu0
        %v4704 = vpop.f32.mrb[0].mxu0
        %v4705 = vadd.f32 0.0, %v4704
        %v4706 = vpop.f32.mrb[0].mxu0
        %4707 = vmatprep.mubr.bf16.mxu0 0
        %4708 = vmatmul.mubr.bf16.gmra.mrb[0].mxu0 %v4533
        %v4709 = vpop.f32.mrb[0].mxu0
        %v4710 = vadd.f32 0.0, %v4709
        %v4711 = vpop.f32.mrb[0].mxu0
        %v4712 = vpop.f32.mrb[0].mxu0
        %v4713 = vadd.f32 0.0, %v4712
        %v4714 = vpop.f32.mrb[0].mxu0
        %4715 = vmatprep.mubr.bf16.mxu0 0
        %4716 = vmatmul.mubr.bf16.gmra.mrb[0].mxu0 %v4536
        %v4717 = vpop.f32.mrb[0].mxu0
        %v4718 = vadd.f32 0.0, %v4717
        %v4719 = vpop.f32.mrb[0].mxu0
        %v4720 = vpop.f32.mrb[0].mxu0
        %v4721 = vadd.f32 0.0, %v4720
        %v4722 = vpop.f32.mrb[0].mxu0
        %4723 = vmatprep.mubr.bf16.mxu0 0
        %4724 = vmatmul.mubr.bf16.gmra.mrb[0].mxu0 %v4539
        %v4725 = vpop.f32.mrb[0].mxu0
        %v4726 = vadd.f32 0.0, %v4725
        %v4727 = vpop.f32.mrb[0].mxu0
        %v4728 = vpop.f32.mrb[0].mxu0
        %v4729 = vadd.f32 0.0, %v4728
        %v4730 = vpop.f32.mrb[0].mxu0
        %4731 = vmatprep.mubr.bf16.mxu0 0
        %4732 = vmatmul.mubr.bf16.gmra.mrb[0].mxu0 %v4542
        %v4733 = vpop.f32.mrb[0].mxu0
        %v4734 = vadd.f32 0.0, %v4733
        %v4735 = vpop.f32.mrb[0].mxu0
        %v4736 = vpop.f32.mrb[0].mxu0
        %v4737 = vadd.f32 0.0, %v4736
        %v4738 = vpop.f32.mrb[0].mxu0
        %4739 = vmatprep.mubr.bf16.mxu0 0
        %4740 = vmatmul.mubr.bf16.gmra.mrb[0].mxu0 %v4545
        %v4741 = vpop.f32.mrb[0].mxu0
        %v4742 = vadd.f32 0.0, %v4741
        %v4743 = vpop.f32.mrb[0].mxu0
        %v4744 = vpop.f32.mrb[0].mxu0
        %v4745 = vadd.f32 0.0, %v4744
        %v4746 = vpop.f32.mrb[0].mxu0
        %4747 = vmatprep.mubr.bf16.mxu0 0
        %4748 = vmatmul.mubr.bf16.gmra.mrb[0].mxu0 %v4548
        %v4749 = vpop.f32.mrb[0].mxu0
        %v4750 = vadd.f32 0.0, %v4749
        %v4751 = vpop.f32.mrb[0].mxu0
        %v4752 = vpop.f32.mrb[0].mxu0
        %v4753 = vadd.f32 0.0, %v4752
        %v4754 = vpop.f32.mrb[0].mxu0
        %4755 = vmatprep.mubr.bf16.mxu0 0
        %4756 = vmatmul.mubr.bf16.gmra.mrb[0].mxu0 %v4551
        %v4757 = vpop.f32.mrb[0].mxu0
        %v4758 = vadd.f32 0.0, %v4757
        %v4759 = vpop.f32.mrb[0].mxu0
        %v4760 = vpop.f32.mrb[0].mxu0
        %v4761 = vadd.f32 0.0, %v4760
        %v4762 = vpop.f32.mrb[0].mxu0
        %4763 = vmatprep.mubr.bf16.mxu0 0
        %4764 = vmatmul.mubr.bf16.gmra.mrb[0].mxu0 %v4554
        %v4765 = vpop.f32.mrb[0].mxu0
        %v4766 = vadd.f32 0.0, %v4765
        %v4767 = vpop.f32.mrb[0].mxu0
        %v4768 = vpop.f32.mrb[0].mxu0
        %v4769 = vadd.f32 0.0, %v4768
        %v4770 = vpop.f32.mrb[0].mxu0
        %4771 = vmatprep.mubr.bf16.mxu0 0
        %4772 = vmatmul.mubr.bf16.gmra.mrb[0].mxu0 %v4557
        %v4773 = vpop.f32.mrb[0].mxu0
        %v4774 = vadd.f32 0.0, %v4773
        %v4775 = vpop.f32.mrb[0].mxu0
        %v4776 = vpop.f32.mrb[0].mxu0
        %v4777 = vadd.f32 0.0, %v4776
        %v4778 = vpop.f32.mrb[0].mxu0
        %4779 = vmatprep.mubr.bf16.mxu0 0
        %4780 = vmatmul.mubr.bf16.gmra.mrb[0].mxu0 %v4560
        %v4781 = vpop.f32.mrb[0].mxu0
        %v4782 = vadd.f32 0.0, %v4781
        %v4783 = vpop.f32.mrb[0].mxu0
        %v4784 = vpop.f32.mrb[0].mxu0
        %v4785 = vadd.f32 0.0, %v4784
        %v4786 = vpop.f32.mrb[0].mxu0
        %4787 = vmatprep.mubr.bf16.mxu0 0
        %4788 = vmatmul.mubr.bf16.gmra.mrb[0].mxu0 %v4563
        %v4789 = vpop.f32.mrb[0].mxu0
        %v4790 = vadd.f32 0.0, %v4789
        %v4791 = vpop.f32.mrb[0].mxu0
        %v4792 = vpop.f32.mrb[0].mxu0
        %v4793 = vadd.f32 0.0, %v4792
        %v4794 = vpop.f32.mrb[0].mxu0
        %4795 = vmatprep.mubr.bf16.mxu0 0
        %4796 = vmatmul.mubr.bf16.gmra.mrb[0].mxu0 %v4566
        %v4797 = vpop.f32.mrb[0].mxu0
        %v4798 = vadd.f32 0.0, %v4797
        %v4799 = vpop.f32.mrb[0].mxu0
        %v4800 = vpop.f32.mrb[0].mxu0
        %v4801 = vadd.f32 0.0, %v4800
        %v4802 = vpop.f32.mrb[0].mxu0
        %4803 = vmatprep.mubr.bf16.mxu0 0
        %4804 = vmatmul.mubr.bf16.gmra.mrb[0].mxu0 %v4569
        %v4805 = vpop.f32.mrb[0].mxu0
        %v4806 = vadd.f32 0.0, %v4805
        %v4807 = vpop.f32.mrb[0].mxu0
        %v4808 = vpop.f32.mrb[0].mxu0
        %v4809 = vadd.f32 0.0, %v4808
        %v4810 = vpop.f32.mrb[0].mxu0
        %4811 = vdwg.mxu0
        %v4812 = vadd.f32 %v4442, %v4686
        %v4813 = vadd.f32 %v4443, %v4689
        %v4814 = vadd.f32 %v4444, %v4694
        %v4815 = vadd.f32 %v4445, %v4697
        %v4816 = vadd.f32 %v4446, %v4702
        %v4817 = vadd.f32 %v4447, %v4705
        %v4818 = vadd.f32 %v4448, %v4710
        %v4819 = vadd.f32 %v4449, %v4713
        %v4820 = vadd.f32 %v4450, %v4718
        %v4821 = vadd.f32 %v4451, %v4721
        %v4822 = vadd.f32 %v4452, %v4726
        %v4823 = vadd.f32 %v4453, %v4729
        %v4824 = vadd.f32 %v4454, %v4734
        %v4825 = vadd.f32 %v4455, %v4737
        %v4826 = vadd.f32 %v4456, %v4742
        %v4827 = vadd.f32 %v4457, %v4745
        %v4828 = vadd.f32 %v4458, %v4750
        %v4829 = vadd.f32 %v4459, %v4753
        %v4830 = vadd.f32 %v4460, %v4758
        %v4831 = vadd.f32 %v4461, %v4761
        %v4832 = vadd.f32 %v4462, %v4766
        %v4833 = vadd.f32 %v4463, %v4769
        %v4834 = vadd.f32 %v4464, %v4774
        %v4835 = vadd.f32 %v4465, %v4777
        %v4836 = vadd.f32 %v4466, %v4782
        %v4837 = vadd.f32 %v4467, %v4785
        %v4838 = vadd.f32 %v4468, %v4790
        %v4839 = vadd.f32 %v4469, %v4793
        %v4840 = vadd.f32 %v4470, %v4798
        %v4841 = vadd.f32 %v4471, %v4801
        %v4842 = vadd.f32 %v4472, %v4806
        %v4843 = vadd.f32 %v4473, %v4809
        %v4844 = vld [vmem:[%s3895 + $0x8] sm:$0x1f]
        %v4845 = vld [vmem:[%s3895 + $0x18] sm:$0x1f]
        %v4846 = vld [vmem:[%s3895 + $0x28] sm:$0x1f]
        %v4847 = vld [vmem:[%s3895 + $0x38] sm:$0x1f]
        %v4848 = vld [vmem:[%s3895 + $0x48] sm:$0x1f]
        %v4849 = vld [vmem:[%s3895 + $0x58] sm:$0x1f]
        %v4850 = vld [vmem:[%s3895 + $0x68] sm:$0x1f]
        %v4851 = vld [vmem:[%s3895 + $0x78] sm:$0x1f]
        %v4852 = vld [vmem:[%s3895 + $0x88] sm:$0x1f]
        %v4853 = vld [vmem:[%s3895 + $0x98] sm:$0x1f]
        %v4854 = vld [vmem:[%s3895 + $0xa8] sm:$0x1f]
        %v4855 = vld [vmem:[%s3895 + $0xb8] sm:$0x1f]
        %v4856 = vld [vmem:[%s3895 + $0xc8] sm:$0x1f]
        %v4857 = vld [vmem:[%s3895 + $0xd8] sm:$0x1f]
        %v4858 = vld [vmem:[%s3895 + $0xe8] sm:$0x1f]
        %v4859 = vld [vmem:[%s3895 + $0xf8] sm:$0x1f]
        %v4861 = vshrl.u32 %v4474, 16
        %v4863 = vrot.slane %v4861, 4
        %v4864 = vshll.u32 %v4474, 16
        %v4866 = vrot.slane %v4864, 5
        %v4867 = vor.u32 %v4863, %v4866
        %v4869 = vshrl.u32 %v4844, 16
        %v4871 = vrot.slane %v4869, 4
        %v4872 = vshll.u32 %v4844, 16
        %v4874 = vrot.slane %v4872, 5
        %v4875 = vor.u32 %v4871, %v4874
        %v4876 = vsel %vm1838, %v4867, %v4875
        %v4878 = vshrl.u32 %v4475, 16
        %v4880 = vrot.slane %v4878, 4
        %v4881 = vshll.u32 %v4475, 16
        %v4883 = vrot.slane %v4881, 5
        %v4884 = vor.u32 %v4880, %v4883
        %v4886 = vshrl.u32 %v4845, 16
        %v4888 = vrot.slane %v4886, 4
        %v4889 = vshll.u32 %v4845, 16
        %v4891 = vrot.slane %v4889, 5
        %v4892 = vor.u32 %v4888, %v4891
        %v4893 = vsel %vm1838, %v4884, %v4892
        %v4895 = vshrl.u32 %v4476, 16
        %v4897 = vrot.slane %v4895, 4
        %v4898 = vshll.u32 %v4476, 16
        %v4900 = vrot.slane %v4898, 5
        %v4901 = vor.u32 %v4897, %v4900
        %v4903 = vshrl.u32 %v4846, 16
        %v4905 = vrot.slane %v4903, 4
        %v4906 = vshll.u32 %v4846, 16
        %v4908 = vrot.slane %v4906, 5
        %v4909 = vor.u32 %v4905, %v4908
        %v4910 = vsel %vm1838, %v4901, %v4909
        %v4912 = vshrl.u32 %v4477, 16
        %v4914 = vrot.slane %v4912, 4
        %v4915 = vshll.u32 %v4477, 16
        %v4917 = vrot.slane %v4915, 5
        %v4918 = vor.u32 %v4914, %v4917
        %v4920 = vshrl.u32 %v4847, 16
        %v4922 = vrot.slane %v4920, 4
        %v4923 = vshll.u32 %v4847, 16
        %v4925 = vrot.slane %v4923, 5
        %v4926 = vor.u32 %v4922, %v4925
        %v4927 = vsel %vm1838, %v4918, %v4926
        %v4929 = vshrl.u32 %v4478, 16
        %v4931 = vrot.slane %v4929, 4
        %v4932 = vshll.u32 %v4478, 16
        %v4934 = vrot.slane %v4932, 5
        %v4935 = vor.u32 %v4931, %v4934
        %v4937 = vshrl.u32 %v4848, 16
        %v4939 = vrot.slane %v4937, 4
        %v4940 = vshll.u32 %v4848, 16
        %v4942 = vrot.slane %v4940, 5
        %v4943 = vor.u32 %v4939, %v4942
        %v4944 = vsel %vm1838, %v4935, %v4943
        %v4946 = vshrl.u32 %v4479, 16
        %v4948 = vrot.slane %v4946, 4
        %v4949 = vshll.u32 %v4479, 16
        %v4951 = vrot.slane %v4949, 5
        %v4952 = vor.u32 %v4948, %v4951
        %v4954 = vshrl.u32 %v4849, 16
        %v4956 = vrot.slane %v4954, 4
        %v4957 = vshll.u32 %v4849, 16
        %v4959 = vrot.slane %v4957, 5
        %v4960 = vor.u32 %v4956, %v4959
        %v4961 = vsel %vm1838, %v4952, %v4960
        %v4963 = vshrl.u32 %v4480, 16
        %v4965 = vrot.slane %v4963, 4
        %v4966 = vshll.u32 %v4480, 16
        %v4968 = vrot.slane %v4966, 5
        %v4969 = vor.u32 %v4965, %v4968
        %v4971 = vshrl.u32 %v4850, 16
        %v4973 = vrot.slane %v4971, 4
        %v4974 = vshll.u32 %v4850, 16
        %v4976 = vrot.slane %v4974, 5
        %v4977 = vor.u32 %v4973, %v4976
        %v4978 = vsel %vm1838, %v4969, %v4977
        %v4980 = vshrl.u32 %v4481, 16
        %v4982 = vrot.slane %v4980, 4
        %v4983 = vshll.u32 %v4481, 16
        %v4985 = vrot.slane %v4983, 5
        %v4986 = vor.u32 %v4982, %v4985
        %v4988 = vshrl.u32 %v4851, 16
        %v4990 = vrot.slane %v4988, 4
        %v4991 = vshll.u32 %v4851, 16
        %v4993 = vrot.slane %v4991, 5
        %v4994 = vor.u32 %v4990, %v4993
        %v4995 = vsel %vm1838, %v4986, %v4994
        %v4997 = vshrl.u32 %v4482, 16
        %v4999 = vrot.slane %v4997, 4
        %v5000 = vshll.u32 %v4482, 16
        %v5002 = vrot.slane %v5000, 5
        %v5003 = vor.u32 %v4999, %v5002
        %v5005 = vshrl.u32 %v4852, 16
        %v5007 = vrot.slane %v5005, 4
        %v5008 = vshll.u32 %v4852, 16
        %v5010 = vrot.slane %v5008, 5
        %v5011 = vor.u32 %v5007, %v5010
        %v5012 = vsel %vm1838, %v5003, %v5011
        %v5014 = vshrl.u32 %v4483, 16
        %v5016 = vrot.slane %v5014, 4
        %v5017 = vshll.u32 %v4483, 16
        %v5019 = vrot.slane %v5017, 5
        %v5020 = vor.u32 %v5016, %v5019
        %v5022 = vshrl.u32 %v4853, 16
        %v5024 = vrot.slane %v5022, 4
        %v5025 = vshll.u32 %v4853, 16
        %v5027 = vrot.slane %v5025, 5
        %v5028 = vor.u32 %v5024, %v5027
        %v5029 = vsel %vm1838, %v5020, %v5028
        %v5031 = vshrl.u32 %v4484, 16
        %v5033 = vrot.slane %v5031, 4
        %v5034 = vshll.u32 %v4484, 16
        %v5036 = vrot.slane %v5034, 5
        %v5037 = vor.u32 %v5033, %v5036
        %v5039 = vshrl.u32 %v4854, 16
        %v5041 = vrot.slane %v5039, 4
        %v5042 = vshll.u32 %v4854, 16
        %v5044 = vrot.slane %v5042, 5
        %v5045 = vor.u32 %v5041, %v5044
        %v5046 = vsel %vm1838, %v5037, %v5045
        %v5048 = vshrl.u32 %v4485, 16
        %v5050 = vrot.slane %v5048, 4
        %v5051 = vshll.u32 %v4485, 16
        %v5053 = vrot.slane %v5051, 5
        %v5054 = vor.u32 %v5050, %v5053
        %v5056 = vshrl.u32 %v4855, 16
        %v5058 = vrot.slane %v5056, 4
        %v5059 = vshll.u32 %v4855, 16
        %v5061 = vrot.slane %v5059, 5
        %v5062 = vor.u32 %v5058, %v5061
        %v5063 = vsel %vm1838, %v5054, %v5062
        %v5065 = vshrl.u32 %v4486, 16
        %v5067 = vrot.slane %v5065, 4
        %v5068 = vshll.u32 %v4486, 16
        %v5070 = vrot.slane %v5068, 5
        %v5071 = vor.u32 %v5067, %v5070
        %v5073 = vshrl.u32 %v4856, 16
        %v5075 = vrot.slane %v5073, 4
        %v5076 = vshll.u32 %v4856, 16
        %v5078 = vrot.slane %v5076, 5
        %v5079 = vor.u32 %v5075, %v5078
        %v5080 = vsel %vm1838, %v5071, %v5079
        %v5082 = vshrl.u32 %v4487, 16
        %v5084 = vrot.slane %v5082, 4
        %v5085 = vshll.u32 %v4487, 16
        %v5087 = vrot.slane %v5085, 5
        %v5088 = vor.u32 %v5084, %v5087
        %v5090 = vshrl.u32 %v4857, 16
        %v5092 = vrot.slane %v5090, 4
        %v5093 = vshll.u32 %v4857, 16
        %v5095 = vrot.slane %v5093, 5
        %v5096 = vor.u32 %v5092, %v5095
        %v5097 = vsel %vm1838, %v5088, %v5096
        %v5099 = vshrl.u32 %v4488, 16
        %v5101 = vrot.slane %v5099, 4
        %v5102 = vshll.u32 %v4488, 16
        %v5104 = vrot.slane %v5102, 5
        %v5105 = vor.u32 %v5101, %v5104
        %v5107 = vshrl.u32 %v4858, 16
        %v5109 = vrot.slane %v5107, 4
        %v5110 = vshll.u32 %v4858, 16
        %v5112 = vrot.slane %v5110, 5
        %v5113 = vor.u32 %v5109, %v5112
        %v5114 = vsel %vm1838, %v5105, %v5113
        %v5116 = vshrl.u32 %v4489, 16
        %v5118 = vrot.slane %v5116, 4
        %v5119 = vshll.u32 %v4489, 16
        %v5121 = vrot.slane %v5119, 5
        %v5122 = vor.u32 %v5118, %v5121
        %v5124 = vshrl.u32 %v4859, 16
        %v5126 = vrot.slane %v5124, 4
        %v5127 = vshll.u32 %v4859, 16
        %v5129 = vrot.slane %v5127, 5
        %v5130 = vor.u32 %v5126, %v5129
        %v5131 = vsel %vm1838, %v5122, %v5130
        %s5148 = scalar_lea.vmem [#allocation9], 512
        %v5149 = vld [vmem:[%s5148] sm:$0xf]
        %v5150 = vld [vmem:[%s5148 + $0x4] sm:$0xf]
        %v5151 = vld [vmem:[%s5148 + $0x8] sm:$0xf]
        %v5152 = vld [vmem:[%s5148 + $0xc] sm:$0xf]
        %v5153 = vld [vmem:[%s5148 + $0x10] sm:$0xf]
        %v5154 = vld [vmem:[%s5148 + $0x14] sm:$0xf]
        %v5155 = vld [vmem:[%s5148 + $0x18] sm:$0xf]
        %v5156 = vld [vmem:[%s5148 + $0x1c] sm:$0xf]
        %v5157 = vld [vmem:[%s5148 + $0x20] sm:$0xf]
        %v5158 = vld [vmem:[%s5148 + $0x24] sm:$0xf]
        %v5159 = vld [vmem:[%s5148 + $0x28] sm:$0xf]
        %v5160 = vld [vmem:[%s5148 + $0x2c] sm:$0xf]
        %v5161 = vld [vmem:[%s5148 + $0x30] sm:$0xf]
        %v5162 = vld [vmem:[%s5148 + $0x34] sm:$0xf]
        %v5163 = vld [vmem:[%s5148 + $0x38] sm:$0xf]
        %v5164 = vld [vmem:[%s5148 + $0x3c] sm:$0xf]
        %v5181 = vunpack.c.l.b16 %v5149
        %v5182 = vunpack.c.l.b16 %v5150
        %v5183 = vunpack.c.l.b16 %v5151
        %v5184 = vunpack.c.l.b16 %v5152
        %v5185 = vunpack.c.l.b16 %v5153
        %v5186 = vunpack.c.l.b16 %v5154
        %v5187 = vunpack.c.l.b16 %v5155
        %v5188 = vunpack.c.l.b16 %v5156
        %v5189 = vunpack.c.l.b16 %v5157
        %v5190 = vunpack.c.l.b16 %v5158
        %v5191 = vunpack.c.l.b16 %v5159
        %v5192 = vunpack.c.l.b16 %v5160
        %v5193 = vunpack.c.l.b16 %v5161
        %v5194 = vunpack.c.l.b16 %v5162
        %v5195 = vunpack.c.l.b16 %v5163
        %v5196 = vunpack.c.l.b16 %v5164
        %v5197 = vpack.c.b16 %v5182, %v5181
        %v5198 = vpack.c.b16 %v5184, %v5183
        %v5199 = vpack.c.b16 %v5186, %v5185
        %v5200 = vpack.c.b16 %v5188, %v5187
        %v5201 = vpack.c.b16 %v5190, %v5189
        %v5202 = vpack.c.b16 %v5192, %v5191
        %v5203 = vpack.c.b16 %v5194, %v5193
        %v5204 = vpack.c.b16 %v5196, %v5195
        %5213 = vmatprep.subr.bf16.mxu0 0
        %5214 = vmatpush1.bf16.msra.mxu0 %v5197
        %5215 = vmatprep.subr.bf16.mxu0 0
        %5216 = vmatpush1.bf16.msra.mxu0 %v5198
        %5217 = vmatprep.subr.bf16.mxu0 0
        %5218 = vmatpush1.bf16.msra.mxu0 %v5199
        %5219 = vmatprep.subr.bf16.mxu0 0
        %5220 = vmatpush1.bf16.msra.mxu0 %v5200
        %5221 = vmatprep.subr.bf16.mxu0 0
        %5222 = vmatpush1.bf16.msra.mxu0 %v5201
        %5223 = vmatprep.subr.bf16.mxu0 0
        %5224 = vmatpush1.bf16.msra.mxu0 %v5202
        %5225 = vmatprep.subr.bf16.mxu0 0
        %5226 = vmatpush1.bf16.msra.mxu0 %v5203
        %5227 = vmatprep.subr.bf16.mxu0 0
        %5228 = vmatpush1.bf16.msra.mxu0 %v5204
        %5229 = vmatprep.subr.bf16.mxu0 0
        %5230 = vmatpush1.bf16.msra.mxu0 0
        %5231 = vmatprep.subr.bf16.mxu0 0
        %5232 = vmatpush1.bf16.msra.mxu0 0
        %5233 = vmatprep.subr.bf16.mxu0 0
        %5234 = vmatpush1.bf16.msra.mxu0 0
        %5235 = vmatprep.subr.bf16.mxu0 0
        %5236 = vmatpush1.bf16.msra.mxu0 0
        %5237 = vmatprep.subr.bf16.mxu0 0
        %5238 = vmatpush1.bf16.msra.mxu0 0
        %5239 = vmatprep.subr.bf16.mxu0 0
        %5240 = vmatpush1.bf16.msra.mxu0 0
        %5241 = vmatprep.subr.bf16.mxu0 0
        %5242 = vmatpush1.bf16.msra.mxu0 0
        %5243 = vmatprep.subr.bf16.mxu0 0
        %5244 = vmatpush1.bf16.msra.mxu0 0
        %5245 = vmatprep.mubr.bf16.mxu0 0
        %5246 = vmatmul.mubr.bf16.gmra.mrb[0].mxu0 %v4876
        %v5247 = vpop.f32.mrb[0].mxu0
        %v5248 = vadd.f32 0.0, %v5247
        %v5249 = vpop.f32.mrb[0].mxu0
        %v5250 = vpop.f32.mrb[0].mxu0
        %v5251 = vadd.f32 0.0, %v5250
        %v5252 = vpop.f32.mrb[0].mxu0
        %5253 = vmatprep.mubr.bf16.mxu0 0
        %5254 = vmatmul.mubr.bf16.gmra.mrb[0].mxu0 %v4893
        %v5255 = vpop.f32.mrb[0].mxu0
        %v5256 = vadd.f32 0.0, %v5255
        %v5257 = vpop.f32.mrb[0].mxu0
        %v5258 = vpop.f32.mrb[0].mxu0
        %v5259 = vadd.f32 0.0, %v5258
        %v5260 = vpop.f32.mrb[0].mxu0
        %5261 = vmatprep.mubr.bf16.mxu0 0
        %5262 = vmatmul.mubr.bf16.gmra.mrb[0].mxu0 %v4910
        %v5263 = vpop.f32.mrb[0].mxu0
        %v5264 = vadd.f32 0.0, %v5263
        %v5265 = vpop.f32.mrb[0].mxu0
        %v5266 = vpop.f32.mrb[0].mxu0
        %v5267 = vadd.f32 0.0, %v5266
        %v5268 = vpop.f32.mrb[0].mxu0
        %5269 = vmatprep.mubr.bf16.mxu0 0
        %5270 = vmatmul.mubr.bf16.gmra.mrb[0].mxu0 %v4927
        %v5271 = vpop.f32.mrb[0].mxu0
        %v5272 = vadd.f32 0.0, %v5271
        %v5273 = vpop.f32.mrb[0].mxu0
        %v5274 = vpop.f32.mrb[0].mxu0
        %v5275 = vadd.f32 0.0, %v5274
        %v5276 = vpop.f32.mrb[0].mxu0
        %5277 = vmatprep.mubr.bf16.mxu0 0
        %5278 = vmatmul.mubr.bf16.gmra.mrb[0].mxu0 %v4944
        %v5279 = vpop.f32.mrb[0].mxu0
        %v5280 = vadd.f32 0.0, %v5279
        %v5281 = vpop.f32.mrb[0].mxu0
        %v5282 = vpop.f32.mrb[0].mxu0
        %v5283 = vadd.f32 0.0, %v5282
        %v5284 = vpop.f32.mrb[0].mxu0
        %5285 = vmatprep.mubr.bf16.mxu0 0
        %5286 = vmatmul.mubr.bf16.gmra.mrb[0].mxu0 %v4961
        %v5287 = vpop.f32.mrb[0].mxu0
        %v5288 = vadd.f32 0.0, %v5287
        %v5289 = vpop.f32.mrb[0].mxu0
        %v5290 = vpop.f32.mrb[0].mxu0
        %v5291 = vadd.f32 0.0, %v5290
        %v5292 = vpop.f32.mrb[0].mxu0
        %5293 = vmatprep.mubr.bf16.mxu0 0
        %5294 = vmatmul.mubr.bf16.gmra.mrb[0].mxu0 %v4978
        %v5295 = vpop.f32.mrb[0].mxu0
        %v5296 = vadd.f32 0.0, %v5295
        %v5297 = vpop.f32.mrb[0].mxu0
        %v5298 = vpop.f32.mrb[0].mxu0
        %v5299 = vadd.f32 0.0, %v5298
        %v5300 = vpop.f32.mrb[0].mxu0
        %5301 = vmatprep.mubr.bf16.mxu0 0
        %5302 = vmatmul.mubr.bf16.gmra.mrb[0].mxu0 %v4995
        %v5303 = vpop.f32.mrb[0].mxu0
        %v5304 = vadd.f32 0.0, %v5303
        %v5305 = vpop.f32.mrb[0].mxu0
        %v5306 = vpop.f32.mrb[0].mxu0
        %v5307 = vadd.f32 0.0, %v5306
        %v5308 = vpop.f32.mrb[0].mxu0
        %5309 = vmatprep.mubr.bf16.mxu0 0
        %5310 = vmatmul.mubr.bf16.gmra.mrb[0].mxu0 %v5012
        %v5311 = vpop.f32.mrb[0].mxu0
        %v5312 = vadd.f32 0.0, %v5311
        %v5313 = vpop.f32.mrb[0].mxu0
        %v5314 = vpop.f32.mrb[0].mxu0
        %v5315 = vadd.f32 0.0, %v5314
        %v5316 = vpop.f32.mrb[0].mxu0
        %5317 = vmatprep.mubr.bf16.mxu0 0
        %5318 = vmatmul.mubr.bf16.gmra.mrb[0].mxu0 %v5029
        %v5319 = vpop.f32.mrb[0].mxu0
        %v5320 = vadd.f32 0.0, %v5319
        %v5321 = vpop.f32.mrb[0].mxu0
        %v5322 = vpop.f32.mrb[0].mxu0
        %v5323 = vadd.f32 0.0, %v5322
        %v5324 = vpop.f32.mrb[0].mxu0
        %5325 = vmatprep.mubr.bf16.mxu0 0
        %5326 = vmatmul.mubr.bf16.gmra.mrb[0].mxu0 %v5046
        %v5327 = vpop.f32.mrb[0].mxu0
        %v5328 = vadd.f32 0.0, %v5327
        %v5329 = vpop.f32.mrb[0].mxu0
        %v5330 = vpop.f32.mrb[0].mxu0
        %v5331 = vadd.f32 0.0, %v5330
        %v5332 = vpop.f32.mrb[0].mxu0
        %5333 = vmatprep.mubr.bf16.mxu0 0
        %5334 = vmatmul.mubr.bf16.gmra.mrb[0].mxu0 %v5063
        %v5335 = vpop.f32.mrb[0].mxu0
        %v5336 = vadd.f32 0.0, %v5335
        %v5337 = vpop.f32.mrb[0].mxu0
        %v5338 = vpop.f32.mrb[0].mxu0
        %v5339 = vadd.f32 0.0, %v5338
        %v5340 = vpop.f32.mrb[0].mxu0
        %5341 = vmatprep.mubr.bf16.mxu0 0
        %5342 = vmatmul.mubr.bf16.gmra.mrb[0].mxu0 %v5080
        %v5343 = vpop.f32.mrb[0].mxu0
        %v5344 = vadd.f32 0.0, %v5343
        %v5345 = vpop.f32.mrb[0].mxu0
        %v5346 = vpop.f32.mrb[0].mxu0
        %v5347 = vadd.f32 0.0, %v5346
        %v5348 = vpop.f32.mrb[0].mxu0
        %5349 = vmatprep.mubr.bf16.mxu0 0
        %5350 = vmatmul.mubr.bf16.gmra.mrb[0].mxu0 %v5097
        %v5351 = vpop.f32.mrb[0].mxu0
        %v5352 = vadd.f32 0.0, %v5351
        %v5353 = vpop.f32.mrb[0].mxu0
        %v5354 = vpop.f32.mrb[0].mxu0
        %v5355 = vadd.f32 0.0, %v5354
        %v5356 = vpop.f32.mrb[0].mxu0
        %5357 = vmatprep.mubr.bf16.mxu0 0
        %5358 = vmatmul.mubr.bf16.gmra.mrb[0].mxu0 %v5114
        %v5359 = vpop.f32.mrb[0].mxu0
        %v5360 = vadd.f32 0.0, %v5359
        %v5361 = vpop.f32.mrb[0].mxu0
        %v5362 = vpop.f32.mrb[0].mxu0
        %v5363 = vadd.f32 0.0, %v5362
        %v5364 = vpop.f32.mrb[0].mxu0
        %5365 = vmatprep.mubr.bf16.mxu0 0
        %5366 = vmatmul.mubr.bf16.gmra.mrb[0].mxu0 %v5131
        %v5367 = vpop.f32.mrb[0].mxu0
        %v5368 = vadd.f32 0.0, %v5367
        %v5369 = vpop.f32.mrb[0].mxu0
        %v5370 = vpop.f32.mrb[0].mxu0
        %v5371 = vadd.f32 0.0, %v5370
        %v5372 = vpop.f32.mrb[0].mxu0
        %5373 = vdwg.mxu0
        %v5374 = vadd.f32 %v4812, %v5248
        %v5375 = vadd.f32 %v4813, %v5251
        %v5376 = vadd.f32 %v4814, %v5256
        %v5377 = vadd.f32 %v4815, %v5259
        %v5378 = vadd.f32 %v4816, %v5264
        %v5379 = vadd.f32 %v4817, %v5267
        %v5380 = vadd.f32 %v4818, %v5272
        %v5381 = vadd.f32 %v4819, %v5275
        %v5382 = vadd.f32 %v4820, %v5280
        %v5383 = vadd.f32 %v4821, %v5283
        %v5384 = vadd.f32 %v4822, %v5288
        %v5385 = vadd.f32 %v4823, %v5291
        %v5386 = vadd.f32 %v4824, %v5296
        %v5387 = vadd.f32 %v4825, %v5299
        %v5388 = vadd.f32 %v4826, %v5304
        %v5389 = vadd.f32 %v4827, %v5307
        %v5390 = vadd.f32 %v4828, %v5312
        %v5391 = vadd.f32 %v4829, %v5315
        %v5392 = vadd.f32 %v4830, %v5320
        %v5393 = vadd.f32 %v4831, %v5323
        %v5394 = vadd.f32 %v4832, %v5328
        %v5395 = vadd.f32 %v4833, %v5331
        %v5396 = vadd.f32 %v4834, %v5336
        %v5397 = vadd.f32 %v4835, %v5339
        %v5398 = vadd.f32 %v4836, %v5344
        %v5399 = vadd.f32 %v4837, %v5347
        %v5400 = vadd.f32 %v4838, %v5352
        %v5401 = vadd.f32 %v4839, %v5355
        %v5402 = vadd.f32 %v4840, %v5360
        %v5403 = vadd.f32 %v4841, %v5363
        %v5404 = vadd.f32 %v4842, %v5368
        %v5405 = vadd.f32 %v4843, %v5371
        %v5406 = vld [vmem:[%s4] sm:$0x1]
        %v5408 = vlaneseq
        %v5409 = vshrl.u32 %v5408, 7
        %v5410 = vsub.s32 0, %v5409
        %v5411 = vrot.slane %v5406, %v5410
        %v5413 = vadd.f32 %v5374, %v5411
        %v5414 = vadd.f32 %v5375, %v5411
        %v5415 = vadd.f32 %v5376, %v5411
        %v5416 = vadd.f32 %v5377, %v5411
        %v5417 = vadd.f32 %v5378, %v5411
        %v5418 = vadd.f32 %v5379, %v5411
        %v5419 = vadd.f32 %v5380, %v5411
        %v5420 = vadd.f32 %v5381, %v5411
        %v5421 = vadd.f32 %v5382, %v5411
        %v5422 = vadd.f32 %v5383, %v5411
        %v5423 = vadd.f32 %v5384, %v5411
        %v5424 = vadd.f32 %v5385, %v5411
        %v5425 = vadd.f32 %v5386, %v5411
        %v5426 = vadd.f32 %v5387, %v5411
        %v5427 = vadd.f32 %v5388, %v5411
        %v5428 = vadd.f32 %v5389, %v5411
        %v5429 = vadd.f32 %v5390, %v5411
        %v5430 = vadd.f32 %v5391, %v5411
        %v5431 = vadd.f32 %v5392, %v5411
        %v5432 = vadd.f32 %v5393, %v5411
        %v5433 = vadd.f32 %v5394, %v5411
        %v5434 = vadd.f32 %v5395, %v5411
        %v5435 = vadd.f32 %v5396, %v5411
        %v5436 = vadd.f32 %v5397, %v5411
        %v5437 = vadd.f32 %v5398, %v5411
        %v5438 = vadd.f32 %v5399, %v5411
        %v5439 = vadd.f32 %v5400, %v5411
        %v5440 = vadd.f32 %v5401, %v5411
        %v5441 = vadd.f32 %v5402, %v5411
        %v5442 = vadd.f32 %v5403, %v5411
        %v5443 = vadd.f32 %v5404, %v5411
        %v5444 = vadd.f32 %v5405, %v5411
        %v5445 = vmax.f32 %v5413, 0.0
        %v5446 = vmax.f32 %v5414, 0.0
        %v5447 = vmax.f32 %v5415, 0.0
        %v5448 = vmax.f32 %v5416, 0.0
        %v5449 = vmax.f32 %v5417, 0.0
        %v5450 = vmax.f32 %v5418, 0.0
        %v5451 = vmax.f32 %v5419, 0.0
        %v5452 = vmax.f32 %v5420, 0.0
        %v5453 = vmax.f32 %v5421, 0.0
        %v5454 = vmax.f32 %v5422, 0.0
        %v5455 = vmax.f32 %v5423, 0.0
        %v5456 = vmax.f32 %v5424, 0.0
        %v5457 = vmax.f32 %v5425, 0.0
        %v5458 = vmax.f32 %v5426, 0.0
        %v5459 = vmax.f32 %v5427, 0.0
        %v5460 = vmax.f32 %v5428, 0.0
        %v5461 = vmax.f32 %v5429, 0.0
        %v5462 = vmax.f32 %v5430, 0.0
        %v5463 = vmax.f32 %v5431, 0.0
        %v5464 = vmax.f32 %v5432, 0.0
        %v5465 = vmax.f32 %v5433, 0.0
        %v5466 = vmax.f32 %v5434, 0.0
        %v5467 = vmax.f32 %v5435, 0.0
        %v5468 = vmax.f32 %v5436, 0.0
        %v5469 = vmax.f32 %v5437, 0.0
        %v5470 = vmax.f32 %v5438, 0.0
        %v5471 = vmax.f32 %v5439, 0.0
        %v5472 = vmax.f32 %v5440, 0.0
        %v5473 = vmax.f32 %v5441, 0.0
        %v5474 = vmax.f32 %v5442, 0.0
        %v5475 = vmax.f32 %v5443, 0.0
        %v5476 = vmax.f32 %v5444, 0.0
        %5477 = vst [vmem:[#allocation3] sm:$0xff] 0
        %5478 = vst [vmem:[#allocation3 + $0x8] sm:$0xff] 0
        %s5479 = scalar_lea.vmem [#allocation3], 272
        %5480 = vst [vmem:[%s5479] sm:$0xff] 0
        %5481 = vst [vmem:[%s5479 + $0x8] sm:$0xff] 0
        %s5482 = scalar_lea.vmem [#allocation3], 16
        %v5483 = vld [vmem:[%s5482] sm:$0x8]
        %v5484 = vsel %vm742, 0, %v5483
        %5485 = vst [vmem:[%s5482] sm:$0x8] %v5484
        %v5486 = vld [vmem:[%s5482 + $0x10] sm:$0x8]
        %v5487 = vsel %vm742, 0, %v5486
        %5488 = vst [vmem:[%s5482 + $0x10] sm:$0x8] %v5487
        %v5489 = vld [vmem:[%s5482 + $0x20] sm:$0x8]
        %v5490 = vsel %vm742, 0, %v5489
        %5491 = vst [vmem:[%s5482 + $0x20] sm:$0x8] %v5490
        %v5492 = vld [vmem:[%s5482 + $0x30] sm:$0x8]
        %v5493 = vsel %vm742, 0, %v5492
        %5494 = vst [vmem:[%s5482 + $0x30] sm:$0x8] %v5493
        %v5495 = vld [vmem:[%s5482 + $0x40] sm:$0x8]
        %v5496 = vsel %vm742, 0, %v5495
        %5497 = vst [vmem:[%s5482 + $0x40] sm:$0x8] %v5496
        %v5498 = vld [vmem:[%s5482 + $0x50] sm:$0x8]
        %v5499 = vsel %vm742, 0, %v5498
        %5500 = vst [vmem:[%s5482 + $0x50] sm:$0x8] %v5499
        %v5501 = vld [vmem:[%s5482 + $0x60] sm:$0x8]
        %v5502 = vsel %vm742, 0, %v5501
        %5503 = vst [vmem:[%s5482 + $0x60] sm:$0x8] %v5502
        %v5504 = vld [vmem:[%s5482 + $0x70] sm:$0x8]
        %v5505 = vsel %vm742, 0, %v5504
        %5506 = vst [vmem:[%s5482 + $0x70] sm:$0x8] %v5505
        %v5507 = vld [vmem:[%s5482 + $0x80] sm:$0x8]
        %v5508 = vsel %vm742, 0, %v5507
        %5509 = vst [vmem:[%s5482 + $0x80] sm:$0x8] %v5508
        %v5510 = vld [vmem:[%s5482 + $0x90] sm:$0x8]
        %v5511 = vsel %vm742, 0, %v5510
        %5512 = vst [vmem:[%s5482 + $0x90] sm:$0x8] %v5511
        %v5513 = vld [vmem:[%s5482 + $0xa0] sm:$0x8]
        %v5514 = vsel %vm742, 0, %v5513
        %5515 = vst [vmem:[%s5482 + $0xa0] sm:$0x8] %v5514
        %v5516 = vld [vmem:[%s5482 + $0xb0] sm:$0x8]
        %v5517 = vsel %vm742, 0, %v5516
        %5518 = vst [vmem:[%s5482 + $0xb0] sm:$0x8] %v5517
        %v5519 = vld [vmem:[%s5482 + $0xc0] sm:$0x8]
        %v5520 = vsel %vm742, 0, %v5519
        %5521 = vst [vmem:[%s5482 + $0xc0] sm:$0x8] %v5520
        %v5522 = vld [vmem:[%s5482 + $0xd0] sm:$0x8]
        %v5523 = vsel %vm742, 0, %v5522
        %5524 = vst [vmem:[%s5482 + $0xd0] sm:$0x8] %v5523
        %v5525 = vld [vmem:[%s5482 + $0xe0] sm:$0x8]
        %v5526 = vsel %vm742, 0, %v5525
        %5527 = vst [vmem:[%s5482 + $0xe0] sm:$0x8] %v5526
        %v5528 = vld [vmem:[%s5482 + $0xf0] sm:$0x8]
        %v5529 = vsel %vm742, 0, %v5528
        %5530 = vst [vmem:[%s5482 + $0xf0] sm:$0x8] %v5529
        %v5531 = vld [vmem:[%s5482 + $0x8] sm:$0x10]
        %v5532 = vsel %vm793, 0, %v5531
        %5533 = vst [vmem:[%s5482 + $0x8] sm:$0x10] %v5532
        %v5534 = vld [vmem:[%s5482 + $0x18] sm:$0x10]
        %v5535 = vsel %vm793, 0, %v5534
        %5536 = vst [vmem:[%s5482 + $0x18] sm:$0x10] %v5535
        %v5537 = vld [vmem:[%s5482 + $0x28] sm:$0x10]
        %v5538 = vsel %vm793, 0, %v5537
        %5539 = vst [vmem:[%s5482 + $0x28] sm:$0x10] %v5538
        %v5540 = vld [vmem:[%s5482 + $0x38] sm:$0x10]
        %v5541 = vsel %vm793, 0, %v5540
        %5542 = vst [vmem:[%s5482 + $0x38] sm:$0x10] %v5541
        %v5543 = vld [vmem:[%s5482 + $0x48] sm:$0x10]
        %v5544 = vsel %vm793, 0, %v5543
        %5545 = vst [vmem:[%s5482 + $0x48] sm:$0x10] %v5544
        %v5546 = vld [vmem:[%s5482 + $0x58] sm:$0x10]
        %v5547 = vsel %vm793, 0, %v5546
        %5548 = vst [vmem:[%s5482 + $0x58] sm:$0x10] %v5547
        %v5549 = vld [vmem:[%s5482 + $0x68] sm:$0x10]
        %v5550 = vsel %vm793, 0, %v5549
        %5551 = vst [vmem:[%s5482 + $0x68] sm:$0x10] %v5550
        %v5552 = vld [vmem:[%s5482 + $0x78] sm:$0x10]
        %v5553 = vsel %vm793, 0, %v5552
        %5554 = vst [vmem:[%s5482 + $0x78] sm:$0x10] %v5553
        %v5555 = vld [vmem:[%s5482 + $0x88] sm:$0x10]
        %v5556 = vsel %vm793, 0, %v5555
        %5557 = vst [vmem:[%s5482 + $0x88] sm:$0x10] %v5556
        %v5558 = vld [vmem:[%s5482 + $0x98] sm:$0x10]
        %v5559 = vsel %vm793, 0, %v5558
        %5560 = vst [vmem:[%s5482 + $0x98] sm:$0x10] %v5559
        %v5561 = vld [vmem:[%s5482 + $0xa8] sm:$0x10]
        %v5562 = vsel %vm793, 0, %v5561
        %5563 = vst [vmem:[%s5482 + $0xa8] sm:$0x10] %v5562
        %v5564 = vld [vmem:[%s5482 + $0xb8] sm:$0x10]
        %v5565 = vsel %vm793, 0, %v5564
        %5566 = vst [vmem:[%s5482 + $0xb8] sm:$0x10] %v5565
        %v5567 = vld [vmem:[%s5482 + $0xc8] sm:$0x10]
        %v5568 = vsel %vm793, 0, %v5567
        %5569 = vst [vmem:[%s5482 + $0xc8] sm:$0x10] %v5568
        %v5570 = vld [vmem:[%s5482 + $0xd8] sm:$0x10]
        %v5571 = vsel %vm793, 0, %v5570
        %5572 = vst [vmem:[%s5482 + $0xd8] sm:$0x10] %v5571
        %v5573 = vld [vmem:[%s5482 + $0xe8] sm:$0x10]
        %v5574 = vsel %vm793, 0, %v5573
        %5575 = vst [vmem:[%s5482 + $0xe8] sm:$0x10] %v5574
        %v5576 = vld [vmem:[%s5482 + $0xf8] sm:$0x10]
        %v5577 = vsel %vm793, 0, %v5576
        %5578 = vst [vmem:[%s5482 + $0xf8] sm:$0x10] %v5577
        %v5579 = vpack.c.bf16 %v5446, %v5445
        %v5580 = vpack.c.bf16 %v5448, %v5447
        %v5581 = vpack.c.bf16 %v5450, %v5449
        %v5582 = vpack.c.bf16 %v5452, %v5451
        %v5583 = vpack.c.bf16 %v5454, %v5453
        %v5584 = vpack.c.bf16 %v5456, %v5455
        %v5585 = vpack.c.bf16 %v5458, %v5457
        %v5586 = vpack.c.bf16 %v5460, %v5459
        %v5587 = vpack.c.bf16 %v5462, %v5461
        %v5588 = vpack.c.bf16 %v5464, %v5463
        %v5589 = vpack.c.bf16 %v5466, %v5465
        %v5590 = vpack.c.bf16 %v5468, %v5467
        %v5591 = vpack.c.bf16 %v5470, %v5469
        %v5592 = vpack.c.bf16 %v5472, %v5471
        %v5593 = vpack.c.bf16 %v5474, %v5473
        %v5594 = vpack.c.bf16 %v5476, %v5475
        %v5611 = vrot.slane %v5579, 4
        %v5612 = vrot.slane %v5580, 4
        %v5613 = vrot.slane %v5581, 4
        %v5614 = vrot.slane %v5582, 4
        %v5615 = vrot.slane %v5583, 4
        %v5616 = vrot.slane %v5584, 4
        %v5617 = vrot.slane %v5585, 4
        %v5618 = vrot.slane %v5586, 4
        %v5619 = vrot.slane %v5587, 4
        %v5620 = vrot.slane %v5588, 4
        %v5621 = vrot.slane %v5589, 4
        %v5622 = vrot.slane %v5590, 4
        %v5623 = vrot.slane %v5591, 4
        %v5624 = vrot.slane %v5592, 4
        %v5625 = vrot.slane %v5593, 4
        %v5626 = vrot.slane %v5594, 4
        %5643 = vst [vmem:[%s5482] sm:$0xf0] %v5611
        %5644 = vst [vmem:[%s5482 + $0x8] sm:$0xf] %v5611
        %5645 = vst [vmem:[%s5482 + $0x10] sm:$0xf0] %v5612
        %5646 = vst [vmem:[%s5482 + $0x18] sm:$0xf] %v5612
        %5647 = vst [vmem:[%s5482 + $0x20] sm:$0xf0] %v5613
        %5648 = vst [vmem:[%s5482 + $0x28] sm:$0xf] %v5613
        %5649 = vst [vmem:[%s5482 + $0x30] sm:$0xf0] %v5614
        %5650 = vst [vmem:[%s5482 + $0x38] sm:$0xf] %v5614
        %5651 = vst [vmem:[%s5482 + $0x40] sm:$0xf0] %v5615
        %5652 = vst [vmem:[%s5482 + $0x48] sm:$0xf] %v5615
        %5653 = vst [vmem:[%s5482 + $0x50] sm:$0xf0] %v5616
        %5654 = vst [vmem:[%s5482 + $0x58] sm:$0xf] %v5616
        %5655 = vst [vmem:[%s5482 + $0x60] sm:$0xf0] %v5617
        %5656 = vst [vmem:[%s5482 + $0x68] sm:$0xf] %v5617
        %5657 = vst [vmem:[%s5482 + $0x70] sm:$0xf0] %v5618
        %5658 = vst [vmem:[%s5482 + $0x78] sm:$0xf] %v5618
        %5659 = vst [vmem:[%s5482 + $0x80] sm:$0xf0] %v5619
        %5660 = vst [vmem:[%s5482 + $0x88] sm:$0xf] %v5619
        %5661 = vst [vmem:[%s5482 + $0x90] sm:$0xf0] %v5620
        %5662 = vst [vmem:[%s5482 + $0x98] sm:$0xf] %v5620
        %5663 = vst [vmem:[%s5482 + $0xa0] sm:$0xf0] %v5621
        %5664 = vst [vmem:[%s5482 + $0xa8] sm:$0xf] %v5621
        %5665 = vst [vmem:[%s5482 + $0xb0] sm:$0xf0] %v5622
        %5666 = vst [vmem:[%s5482 + $0xb8] sm:$0xf] %v5622
        %5667 = vst [vmem:[%s5482 + $0xc0] sm:$0xf0] %v5623
        %5668 = vst [vmem:[%s5482 + $0xc8] sm:$0xf] %v5623
        %5669 = vst [vmem:[%s5482 + $0xd0] sm:$0xf0] %v5624
        %5670 = vst [vmem:[%s5482 + $0xd8] sm:$0xf] %v5624
        %5671 = vst [vmem:[%s5482 + $0xe0] sm:$0xf0] %v5625
        %5672 = vst [vmem:[%s5482 + $0xe8] sm:$0xf] %v5625
        %5673 = vst [vmem:[%s5482 + $0xf0] sm:$0xf0] %v5626
        %5674 = vst [vmem:[%s5482 + $0xf8] sm:$0xf] %v5626
        %v5675 = vld [vmem:[#allocation3] sm:$0xf8]
        %v5676 = vld [vmem:[#allocation3 + $0x8] sm:$0xf]
        %v5677 = vld [vmem:[#allocation3 + $0x10] sm:$0xf8]
        %v5678 = vld [vmem:[#allocation3 + $0x18] sm:$0xf]
        %v5679 = vld [vmem:[#allocation3 + $0x20] sm:$0xf8]
        %v5680 = vld [vmem:[#allocation3 + $0x28] sm:$0xf]
        %v5681 = vld [vmem:[#allocation3 + $0x30] sm:$0xf8]
        %v5682 = vld [vmem:[#allocation3 + $0x38] sm:$0xf]
        %v5683 = vld [vmem:[#allocation3 + $0x40] sm:$0xf8]
        %v5684 = vld [vmem:[#allocation3 + $0x48] sm:$0xf]
        %v5685 = vld [vmem:[#allocation3 + $0x50] sm:$0xf8]
        %v5686 = vld [vmem:[#allocation3 + $0x58] sm:$0xf]
        %v5687 = vld [vmem:[#allocation3 + $0x60] sm:$0xf8]
        %v5688 = vld [vmem:[#allocation3 + $0x68] sm:$0xf]
        %v5689 = vld [vmem:[#allocation3 + $0x70] sm:$0xf8]
        %v5690 = vld [vmem:[#allocation3 + $0x78] sm:$0xf]
        %v5691 = vld [vmem:[#allocation3 + $0x80] sm:$0xf8]
        %v5692 = vld [vmem:[#allocation3 + $0x88] sm:$0xf]
        %v5693 = vld [vmem:[#allocation3 + $0x90] sm:$0xf8]
        %v5694 = vld [vmem:[#allocation3 + $0x98] sm:$0xf]
        %v5695 = vld [vmem:[#allocation3 + $0xa0] sm:$0xf8]
        %v5696 = vld [vmem:[#allocation3 + $0xa8] sm:$0xf]
        %v5697 = vld [vmem:[#allocation3 + $0xb0] sm:$0xf8]
        %v5698 = vld [vmem:[#allocation3 + $0xb8] sm:$0xf]
        %v5699 = vld [vmem:[#allocation3 + $0xc0] sm:$0xf8]
        %v5700 = vld [vmem:[#allocation3 + $0xc8] sm:$0xf]
        %v5701 = vld [vmem:[#allocation3 + $0xd0] sm:$0xf8]
        %v5702 = vld [vmem:[#allocation3 + $0xd8] sm:$0xf]
        %v5703 = vld [vmem:[#allocation3 + $0xe0] sm:$0xf8]
        %v5704 = vld [vmem:[#allocation3 + $0xe8] sm:$0xf]
        %v5705 = vld [vmem:[#allocation3 + $0xf0] sm:$0xf8]
        %v5706 = vld [vmem:[#allocation3 + $0xf8] sm:$0xf]
        %v5708 = vshrl.u32 %v5675, 16
        %v5710 = vrot.slane %v5708, 3
        %v5711 = vshll.u32 %v5675, 16
        %v5713 = vrot.slane %v5711, 4
        %v5714 = vor.u32 %v5710, %v5713
        %v5716 = vshrl.u32 %v5676, 16
        %v5718 = vrot.slane %v5716, 3
        %v5719 = vshll.u32 %v5676, 16
        %v5721 = vrot.slane %v5719, 4
        %v5722 = vor.u32 %v5718, %v5721
        %v5723 = vsel %vm792, %v5714, %v5722
        %v5725 = vshrl.u32 %v5677, 16
        %v5727 = vrot.slane %v5725, 3
        %v5728 = vshll.u32 %v5677, 16
        %v5730 = vrot.slane %v5728, 4
        %v5731 = vor.u32 %v5727, %v5730
        %v5733 = vshrl.u32 %v5678, 16
        %v5735 = vrot.slane %v5733, 3
        %v5736 = vshll.u32 %v5678, 16
        %v5738 = vrot.slane %v5736, 4
        %v5739 = vor.u32 %v5735, %v5738
        %v5740 = vsel %vm792, %v5731, %v5739
        %v5742 = vshrl.u32 %v5679, 16
        %v5744 = vrot.slane %v5742, 3
        %v5745 = vshll.u32 %v5679, 16
        %v5747 = vrot.slane %v5745, 4
        %v5748 = vor.u32 %v5744, %v5747
        %v5750 = vshrl.u32 %v5680, 16
        %v5752 = vrot.slane %v5750, 3
        %v5753 = vshll.u32 %v5680, 16
        %v5755 = vrot.slane %v5753, 4
        %v5756 = vor.u32 %v5752, %v5755
        %v5757 = vsel %vm792, %v5748, %v5756
        %v5759 = vshrl.u32 %v5681, 16
        %v5761 = vrot.slane %v5759, 3
        %v5762 = vshll.u32 %v5681, 16
        %v5764 = vrot.slane %v5762, 4
        %v5765 = vor.u32 %v5761, %v5764
        %v5767 = vshrl.u32 %v5682, 16
        %v5769 = vrot.slane %v5767, 3
        %v5770 = vshll.u32 %v5682, 16
        %v5772 = vrot.slane %v5770, 4
        %v5773 = vor.u32 %v5769, %v5772
        %v5774 = vsel %vm792, %v5765, %v5773
        %v5776 = vshrl.u32 %v5683, 16
        %v5778 = vrot.slane %v5776, 3
        %v5779 = vshll.u32 %v5683, 16
        %v5781 = vrot.slane %v5779, 4
        %v5782 = vor.u32 %v5778, %v5781
        %v5784 = vshrl.u32 %v5684, 16
        %v5786 = vrot.slane %v5784, 3
        %v5787 = vshll.u32 %v5684, 16
        %v5789 = vrot.slane %v5787, 4
        %v5790 = vor.u32 %v5786, %v5789
        %v5791 = vsel %vm792, %v5782, %v5790
        %v5793 = vshrl.u32 %v5685, 16
        %v5795 = vrot.slane %v5793, 3
        %v5796 = vshll.u32 %v5685, 16
        %v5798 = vrot.slane %v5796, 4
        %v5799 = vor.u32 %v5795, %v5798
        %v5801 = vshrl.u32 %v5686, 16
        %v5803 = vrot.slane %v5801, 3
        %v5804 = vshll.u32 %v5686, 16
        %v5806 = vrot.slane %v5804, 4
        %v5807 = vor.u32 %v5803, %v5806
        %v5808 = vsel %vm792, %v5799, %v5807
        %v5810 = vshrl.u32 %v5687, 16
        %v5812 = vrot.slane %v5810, 3
        %v5813 = vshll.u32 %v5687, 16
        %v5815 = vrot.slane %v5813, 4
        %v5816 = vor.u32 %v5812, %v5815
        %v5818 = vshrl.u32 %v5688, 16
        %v5820 = vrot.slane %v5818, 3
        %v5821 = vshll.u32 %v5688, 16
        %v5823 = vrot.slane %v5821, 4
        %v5824 = vor.u32 %v5820, %v5823
        %v5825 = vsel %vm792, %v5816, %v5824
        %v5827 = vshrl.u32 %v5689, 16
        %v5829 = vrot.slane %v5827, 3
        %v5830 = vshll.u32 %v5689, 16
        %v5832 = vrot.slane %v5830, 4
        %v5833 = vor.u32 %v5829, %v5832
        %v5835 = vshrl.u32 %v5690, 16
        %v5837 = vrot.slane %v5835, 3
        %v5838 = vshll.u32 %v5690, 16
        %v5840 = vrot.slane %v5838, 4
        %v5841 = vor.u32 %v5837, %v5840
        %v5842 = vsel %vm792, %v5833, %v5841
        %v5844 = vshrl.u32 %v5691, 16
        %v5846 = vrot.slane %v5844, 3
        %v5847 = vshll.u32 %v5691, 16
        %v5849 = vrot.slane %v5847, 4
        %v5850 = vor.u32 %v5846, %v5849
        %v5852 = vshrl.u32 %v5692, 16
        %v5854 = vrot.slane %v5852, 3
        %v5855 = vshll.u32 %v5692, 16
        %v5857 = vrot.slane %v5855, 4
        %v5858 = vor.u32 %v5854, %v5857
        %v5859 = vsel %vm792, %v5850, %v5858
        %v5861 = vshrl.u32 %v5693, 16
        %v5863 = vrot.slane %v5861, 3
        %v5864 = vshll.u32 %v5693, 16
        %v5866 = vrot.slane %v5864, 4
        %v5867 = vor.u32 %v5863, %v5866
        %v5869 = vshrl.u32 %v5694, 16
        %v5871 = vrot.slane %v5869, 3
        %v5872 = vshll.u32 %v5694, 16
        %v5874 = vrot.slane %v5872, 4
        %v5875 = vor.u32 %v5871, %v5874
        %v5876 = vsel %vm792, %v5867, %v5875
        %v5878 = vshrl.u32 %v5695, 16
        %v5880 = vrot.slane %v5878, 3
        %v5881 = vshll.u32 %v5695, 16
        %v5883 = vrot.slane %v5881, 4
        %v5884 = vor.u32 %v5880, %v5883
        %v5886 = vshrl.u32 %v5696, 16
        %v5888 = vrot.slane %v5886, 3
        %v5889 = vshll.u32 %v5696, 16
        %v5891 = vrot.slane %v5889, 4
        %v5892 = vor.u32 %v5888, %v5891
        %v5893 = vsel %vm792, %v5884, %v5892
        %v5895 = vshrl.u32 %v5697, 16
        %v5897 = vrot.slane %v5895, 3
        %v5898 = vshll.u32 %v5697, 16
        %v5900 = vrot.slane %v5898, 4
        %v5901 = vor.u32 %v5897, %v5900
        %v5903 = vshrl.u32 %v5698, 16
        %v5905 = vrot.slane %v5903, 3
        %v5906 = vshll.u32 %v5698, 16
        %v5908 = vrot.slane %v5906, 4
        %v5909 = vor.u32 %v5905, %v5908
        %v5910 = vsel %vm792, %v5901, %v5909
        %v5912 = vshrl.u32 %v5699, 16
        %v5914 = vrot.slane %v5912, 3
        %v5915 = vshll.u32 %v5699, 16
        %v5917 = vrot.slane %v5915, 4
        %v5918 = vor.u32 %v5914, %v5917
        %v5920 = vshrl.u32 %v5700, 16
        %v5922 = vrot.slane %v5920, 3
        %v5923 = vshll.u32 %v5700, 16
        %v5925 = vrot.slane %v5923, 4
        %v5926 = vor.u32 %v5922, %v5925
        %v5927 = vsel %vm792, %v5918, %v5926
        %v5929 = vshrl.u32 %v5701, 16
        %v5931 = vrot.slane %v5929, 3
        %v5932 = vshll.u32 %v5701, 16
        %v5934 = vrot.slane %v5932, 4
        %v5935 = vor.u32 %v5931, %v5934
        %v5937 = vshrl.u32 %v5702, 16
        %v5939 = vrot.slane %v5937, 3
        %v5940 = vshll.u32 %v5702, 16
        %v5942 = vrot.slane %v5940, 4
        %v5943 = vor.u32 %v5939, %v5942
        %v5944 = vsel %vm792, %v5935, %v5943
        %v5946 = vshrl.u32 %v5703, 16
        %v5948 = vrot.slane %v5946, 3
        %v5949 = vshll.u32 %v5703, 16
        %v5951 = vrot.slane %v5949, 4
        %v5952 = vor.u32 %v5948, %v5951
        %v5954 = vshrl.u32 %v5704, 16
        %v5956 = vrot.slane %v5954, 3
        %v5957 = vshll.u32 %v5704, 16
        %v5959 = vrot.slane %v5957, 4
        %v5960 = vor.u32 %v5956, %v5959
        %v5961 = vsel %vm792, %v5952, %v5960
        %v5963 = vshrl.u32 %v5705, 16
        %v5965 = vrot.slane %v5963, 3
        %v5966 = vshll.u32 %v5705, 16
        %v5968 = vrot.slane %v5966, 4
        %v5969 = vor.u32 %v5965, %v5968
        %v5971 = vshrl.u32 %v5706, 16
        %v5973 = vrot.slane %v5971, 3
        %v5974 = vshll.u32 %v5706, 16
        %v5976 = vrot.slane %v5974, 4
        %v5977 = vor.u32 %v5973, %v5976
        %v5978 = vsel %vm792, %v5969, %v5977
        %v5995 = vld [vmem:[#allocation10] sm:$0xf]
        %v5996 = vld [vmem:[#allocation10 + $0x4] sm:$0xf]
        %v5997 = vld [vmem:[#allocation10 + $0x8] sm:$0xf]
        %v5998 = vld [vmem:[#allocation10 + $0xc] sm:$0xf]
        %v5999 = vld [vmem:[#allocation10 + $0x10] sm:$0xf]
        %v6000 = vld [vmem:[#allocation10 + $0x14] sm:$0xf]
        %v6001 = vld [vmem:[#allocation10 + $0x18] sm:$0xf]
        %v6002 = vld [vmem:[#allocation10 + $0x1c] sm:$0xf]
        %v6003 = vld [vmem:[#allocation10 + $0x20] sm:$0xf]
        %v6004 = vld [vmem:[#allocation10 + $0x24] sm:$0xf]
        %v6005 = vld [vmem:[#allocation10 + $0x28] sm:$0xf]
        %v6006 = vld [vmem:[#allocation10 + $0x2c] sm:$0xf]
        %v6007 = vld [vmem:[#allocation10 + $0x30] sm:$0xf]
        %v6008 = vld [vmem:[#allocation10 + $0x34] sm:$0xf]
        %v6009 = vld [vmem:[#allocation10 + $0x38] sm:$0xf]
        %v6010 = vld [vmem:[#allocation10 + $0x3c] sm:$0xf]
        %v6011 = vld [vmem:[#allocation3] sm:$0xf0]
        %v6012 = vld [vmem:[#allocation3 + $0x10] sm:$0xf0]
        %v6013 = vld [vmem:[#allocation3 + $0x20] sm:$0xf0]
        %v6014 = vld [vmem:[#allocation3 + $0x30] sm:$0xf0]
        %v6015 = vld [vmem:[#allocation3 + $0x40] sm:$0xf0]
        %v6016 = vld [vmem:[#allocation3 + $0x50] sm:$0xf0]
        %v6017 = vld [vmem:[#allocation3 + $0x60] sm:$0xf0]
        %v6018 = vld [vmem:[#allocation3 + $0x70] sm:$0xf0]
        %v6019 = vld [vmem:[#allocation3 + $0x80] sm:$0xf0]
        %v6020 = vld [vmem:[#allocation3 + $0x90] sm:$0xf0]
        %v6021 = vld [vmem:[#allocation3 + $0xa0] sm:$0xf0]
        %v6022 = vld [vmem:[#allocation3 + $0xb0] sm:$0xf0]
        %v6023 = vld [vmem:[#allocation3 + $0xc0] sm:$0xf0]
        %v6024 = vld [vmem:[#allocation3 + $0xd0] sm:$0xf0]
        %v6025 = vld [vmem:[#allocation3 + $0xe0] sm:$0xf0]
        %v6026 = vld [vmem:[#allocation3 + $0xf0] sm:$0xf0]
        %v6059 = vrot.slane %v6011, 4
        %v6060 = vrot.slane %v5676, 4
        %v6061 = vsel %vm1322, %v6059, %v6060
        %v6062 = vrot.slane %v6012, 4
        %v6063 = vrot.slane %v5678, 4
        %v6064 = vsel %vm1322, %v6062, %v6063
        %v6065 = vrot.slane %v6013, 4
        %v6066 = vrot.slane %v5680, 4
        %v6067 = vsel %vm1322, %v6065, %v6066
        %v6068 = vrot.slane %v6014, 4
        %v6069 = vrot.slane %v5682, 4
        %v6070 = vsel %vm1322, %v6068, %v6069
        %v6071 = vrot.slane %v6015, 4
        %v6072 = vrot.slane %v5684, 4
        %v6073 = vsel %vm1322, %v6071, %v6072
        %v6074 = vrot.slane %v6016, 4
        %v6075 = vrot.slane %v5686, 4
        %v6076 = vsel %vm1322, %v6074, %v6075
        %v6077 = vrot.slane %v6017, 4
        %v6078 = vrot.slane %v5688, 4
        %v6079 = vsel %vm1322, %v6077, %v6078
        %v6080 = vrot.slane %v6018, 4
        %v6081 = vrot.slane %v5690, 4
        %v6082 = vsel %vm1322, %v6080, %v6081
        %v6083 = vrot.slane %v6019, 4
        %v6084 = vrot.slane %v5692, 4
        %v6085 = vsel %vm1322, %v6083, %v6084
        %v6086 = vrot.slane %v6020, 4
        %v6087 = vrot.slane %v5694, 4
        %v6088 = vsel %vm1322, %v6086, %v6087
        %v6089 = vrot.slane %v6021, 4
        %v6090 = vrot.slane %v5696, 4
        %v6091 = vsel %vm1322, %v6089, %v6090
        %v6092 = vrot.slane %v6022, 4
        %v6093 = vrot.slane %v5698, 4
        %v6094 = vsel %vm1322, %v6092, %v6093
        %v6095 = vrot.slane %v6023, 4
        %v6096 = vrot.slane %v5700, 4
        %v6097 = vsel %vm1322, %v6095, %v6096
        %v6098 = vrot.slane %v6024, 4
        %v6099 = vrot.slane %v5702, 4
        %v6100 = vsel %vm1322, %v6098, %v6099
        %v6101 = vrot.slane %v6025, 4
        %v6102 = vrot.slane %v5704, 4
        %v6103 = vsel %vm1322, %v6101, %v6102
        %v6104 = vrot.slane %v6026, 4
        %v6105 = vrot.slane %v5706, 4
        %v6106 = vsel %vm1322, %v6104, %v6105
        %s6123 = scalar_lea.vmem [#allocation10], 64
        %v6124 = vld [vmem:[%s6123] sm:$0xf]
        %v6125 = vld [vmem:[%s6123 + $0x4] sm:$0xf]
        %v6126 = vld [vmem:[%s6123 + $0x8] sm:$0xf]
        %v6127 = vld [vmem:[%s6123 + $0xc] sm:$0xf]
        %v6128 = vld [vmem:[%s6123 + $0x10] sm:$0xf]
        %v6129 = vld [vmem:[%s6123 + $0x14] sm:$0xf]
        %v6130 = vld [vmem:[%s6123 + $0x18] sm:$0xf]
        %v6131 = vld [vmem:[%s6123 + $0x1c] sm:$0xf]
        %v6132 = vld [vmem:[%s6123 + $0x20] sm:$0xf]
        %v6133 = vld [vmem:[%s6123 + $0x24] sm:$0xf]
        %v6134 = vld [vmem:[%s6123 + $0x28] sm:$0xf]
        %v6135 = vld [vmem:[%s6123 + $0x2c] sm:$0xf]
        %v6136 = vld [vmem:[%s6123 + $0x30] sm:$0xf]
        %v6137 = vld [vmem:[%s6123 + $0x34] sm:$0xf]
        %v6138 = vld [vmem:[%s6123 + $0x38] sm:$0xf]
        %v6139 = vld [vmem:[%s6123 + $0x3c] sm:$0xf]
        %v6156 = vunpack.c.l.b16 %v6124
        %v6157 = vunpack.c.l.b16 %v6125
        %v6158 = vunpack.c.l.b16 %v6126
        %v6159 = vunpack.c.l.b16 %v6127
        %v6160 = vunpack.c.l.b16 %v6128
        %v6161 = vunpack.c.l.b16 %v6129
        %v6162 = vunpack.c.l.b16 %v6130
        %v6163 = vunpack.c.l.b16 %v6131
        %v6164 = vunpack.c.l.b16 %v6132
        %v6165 = vunpack.c.l.b16 %v6133
        %v6166 = vunpack.c.l.b16 %v6134
        %v6167 = vunpack.c.l.b16 %v6135
        %v6168 = vunpack.c.l.b16 %v6136
        %v6169 = vunpack.c.l.b16 %v6137
        %v6170 = vunpack.c.l.b16 %v6138
        %v6171 = vunpack.c.l.b16 %v6139
        %v6172 = vpack.c.b16 %v6157, %v6156
        %v6173 = vpack.c.b16 %v6159, %v6158
        %v6174 = vpack.c.b16 %v6161, %v6160
        %v6175 = vpack.c.b16 %v6163, %v6162
        %v6176 = vpack.c.b16 %v6165, %v6164
        %v6177 = vpack.c.b16 %v6167, %v6166
        %v6178 = vpack.c.b16 %v6169, %v6168
        %v6179 = vpack.c.b16 %v6171, %v6170
        %6188 = vmatprep.subr.bf16.mxu0 0
        %6189 = vmatpush1.bf16.msra.mxu0 %v6172
        %6190 = vmatprep.subr.bf16.mxu0 0
        %6191 = vmatpush1.bf16.msra.mxu0 %v6173
        %6192 = vmatprep.subr.bf16.mxu0 0
        %6193 = vmatpush1.bf16.msra.mxu0 %v6174
        %6194 = vmatprep.subr.bf16.mxu0 0
        %6195 = vmatpush1.bf16.msra.mxu0 %v6175
        %6196 = vmatprep.subr.bf16.mxu0 0
        %6197 = vmatpush1.bf16.msra.mxu0 %v6176
        %6198 = vmatprep.subr.bf16.mxu0 0
        %6199 = vmatpush1.bf16.msra.mxu0 %v6177
        %6200 = vmatprep.subr.bf16.mxu0 0
        %6201 = vmatpush1.bf16.msra.mxu0 %v6178
        %6202 = vmatprep.subr.bf16.mxu0 0
        %6203 = vmatpush1.bf16.msra.mxu0 %v6179
        %6204 = vmatprep.subr.bf16.mxu0 0
        %6205 = vmatpush1.bf16.msra.mxu0 0
        %6206 = vmatprep.subr.bf16.mxu0 0
        %6207 = vmatpush1.bf16.msra.mxu0 0
        %6208 = vmatprep.subr.bf16.mxu0 0
        %6209 = vmatpush1.bf16.msra.mxu0 0
        %6210 = vmatprep.subr.bf16.mxu0 0
        %6211 = vmatpush1.bf16.msra.mxu0 0
        %6212 = vmatprep.subr.bf16.mxu0 0
        %6213 = vmatpush1.bf16.msra.mxu0 0
        %6214 = vmatprep.subr.bf16.mxu0 0
        %6215 = vmatpush1.bf16.msra.mxu0 0
        %6216 = vmatprep.subr.bf16.mxu0 0
        %6217 = vmatpush1.bf16.msra.mxu0 0
        %6218 = vmatprep.subr.bf16.mxu0 0
        %6219 = vmatpush1.bf16.msra.mxu0 0
        %6220 = vmatprep.mubr.bf16.mxu0 0
        %6221 = vmatmul.mubr.bf16.gmra.mrb[0].mxu0 %v6061
        %v6222 = vpop.f32.mrb[0].mxu0
        %v6223 = vadd.f32 0.0, %v6222
        %v6224 = vpop.f32.mrb[0].mxu0
        %v6225 = vpop.f32.mrb[0].mxu0
        %v6226 = vadd.f32 0.0, %v6225
        %v6227 = vpop.f32.mrb[0].mxu0
        %6228 = vmatprep.mubr.bf16.mxu0 0
        %6229 = vmatmul.mubr.bf16.gmra.mrb[0].mxu0 %v6064
        %v6230 = vpop.f32.mrb[0].mxu0
        %v6231 = vadd.f32 0.0, %v6230
        %v6232 = vpop.f32.mrb[0].mxu0
        %v6233 = vpop.f32.mrb[0].mxu0
        %v6234 = vadd.f32 0.0, %v6233
        %v6235 = vpop.f32.mrb[0].mxu0
        %6236 = vmatprep.mubr.bf16.mxu0 0
        %6237 = vmatmul.mubr.bf16.gmra.mrb[0].mxu0 %v6067
        %v6238 = vpop.f32.mrb[0].mxu0
        %v6239 = vadd.f32 0.0, %v6238
        %v6240 = vpop.f32.mrb[0].mxu0
        %v6241 = vpop.f32.mrb[0].mxu0
        %v6242 = vadd.f32 0.0, %v6241
        %v6243 = vpop.f32.mrb[0].mxu0
        %6244 = vmatprep.mubr.bf16.mxu0 0
        %6245 = vmatmul.mubr.bf16.gmra.mrb[0].mxu0 %v6070
        %v6246 = vpop.f32.mrb[0].mxu0
        %v6247 = vadd.f32 0.0, %v6246
        %v6248 = vpop.f32.mrb[0].mxu0
        %v6249 = vpop.f32.mrb[0].mxu0
        %v6250 = vadd.f32 0.0, %v6249
        %v6251 = vpop.f32.mrb[0].mxu0
        %6252 = vmatprep.mubr.bf16.mxu0 0
        %6253 = vmatmul.mubr.bf16.gmra.mrb[0].mxu0 %v6073
        %v6254 = vpop.f32.mrb[0].mxu0
        %v6255 = vadd.f32 0.0, %v6254
        %v6256 = vpop.f32.mrb[0].mxu0
        %v6257 = vpop.f32.mrb[0].mxu0
        %v6258 = vadd.f32 0.0, %v6257
        %v6259 = vpop.f32.mrb[0].mxu0
        %6260 = vmatprep.mubr.bf16.mxu0 0
        %6261 = vmatmul.mubr.bf16.gmra.mrb[0].mxu0 %v6076
        %v6262 = vpop.f32.mrb[0].mxu0
        %v6263 = vadd.f32 0.0, %v6262
        %v6264 = vpop.f32.mrb[0].mxu0
        %v6265 = vpop.f32.mrb[0].mxu0
        %v6266 = vadd.f32 0.0, %v6265
        %v6267 = vpop.f32.mrb[0].mxu0
        %6268 = vmatprep.mubr.bf16.mxu0 0
        %6269 = vmatmul.mubr.bf16.gmra.mrb[0].mxu0 %v6079
        %v6270 = vpop.f32.mrb[0].mxu0
        %v6271 = vadd.f32 0.0, %v6270
        %v6272 = vpop.f32.mrb[0].mxu0
        %v6273 = vpop.f32.mrb[0].mxu0
        %v6274 = vadd.f32 0.0, %v6273
        %v6275 = vpop.f32.mrb[0].mxu0
        %6276 = vmatprep.mubr.bf16.mxu0 0
        %6277 = vmatmul.mubr.bf16.gmra.mrb[0].mxu0 %v6082
        %v6278 = vpop.f32.mrb[0].mxu0
        %v6279 = vadd.f32 0.0, %v6278
        %v6280 = vpop.f32.mrb[0].mxu0
        %v6281 = vpop.f32.mrb[0].mxu0
        %v6282 = vadd.f32 0.0, %v6281
        %v6283 = vpop.f32.mrb[0].mxu0
        %6284 = vmatprep.mubr.bf16.mxu0 0
        %6285 = vmatmul.mubr.bf16.gmra.mrb[0].mxu0 %v6085
        %v6286 = vpop.f32.mrb[0].mxu0
        %v6287 = vadd.f32 0.0, %v6286
        %v6288 = vpop.f32.mrb[0].mxu0
        %v6289 = vpop.f32.mrb[0].mxu0
        %v6290 = vadd.f32 0.0, %v6289
        %v6291 = vpop.f32.mrb[0].mxu0
        %6292 = vmatprep.mubr.bf16.mxu0 0
        %6293 = vmatmul.mubr.bf16.gmra.mrb[0].mxu0 %v6088
        %v6294 = vpop.f32.mrb[0].mxu0
        %v6295 = vadd.f32 0.0, %v6294
        %v6296 = vpop.f32.mrb[0].mxu0
        %v6297 = vpop.f32.mrb[0].mxu0
        %v6298 = vadd.f32 0.0, %v6297
        %v6299 = vpop.f32.mrb[0].mxu0
        %6300 = vmatprep.mubr.bf16.mxu0 0
        %6301 = vmatmul.mubr.bf16.gmra.mrb[0].mxu0 %v6091
        %v6302 = vpop.f32.mrb[0].mxu0
        %v6303 = vadd.f32 0.0, %v6302
        %v6304 = vpop.f32.mrb[0].mxu0
        %v6305 = vpop.f32.mrb[0].mxu0
        %v6306 = vadd.f32 0.0, %v6305
        %v6307 = vpop.f32.mrb[0].mxu0
        %6308 = vmatprep.mubr.bf16.mxu0 0
        %6309 = vmatmul.mubr.bf16.gmra.mrb[0].mxu0 %v6094
        %v6310 = vpop.f32.mrb[0].mxu0
        %v6311 = vadd.f32 0.0, %v6310
        %v6312 = vpop.f32.mrb[0].mxu0
        %v6313 = vpop.f32.mrb[0].mxu0
        %v6314 = vadd.f32 0.0, %v6313
        %v6315 = vpop.f32.mrb[0].mxu0
        %6316 = vmatprep.mubr.bf16.mxu0 0
        %6317 = vmatmul.mubr.bf16.gmra.mrb[0].mxu0 %v6097
        %v6318 = vpop.f32.mrb[0].mxu0
        %v6319 = vadd.f32 0.0, %v6318
        %v6320 = vpop.f32.mrb[0].mxu0
        %v6321 = vpop.f32.mrb[0].mxu0
        %v6322 = vadd.f32 0.0, %v6321
        %v6323 = vpop.f32.mrb[0].mxu0
        %6324 = vmatprep.mubr.bf16.mxu0 0
        %6325 = vmatmul.mubr.bf16.gmra.mrb[0].mxu0 %v6100
        %v6326 = vpop.f32.mrb[0].mxu0
        %v6327 = vadd.f32 0.0, %v6326
        %v6328 = vpop.f32.mrb[0].mxu0
        %v6329 = vpop.f32.mrb[0].mxu0
        %v6330 = vadd.f32 0.0, %v6329
        %v6331 = vpop.f32.mrb[0].mxu0
        %6332 = vmatprep.mubr.bf16.mxu0 0
        %6333 = vmatmul.mubr.bf16.gmra.mrb[0].mxu0 %v6103
        %v6334 = vpop.f32.mrb[0].mxu0
        %v6335 = vadd.f32 0.0, %v6334
        %v6336 = vpop.f32.mrb[0].mxu0
        %v6337 = vpop.f32.mrb[0].mxu0
        %v6338 = vadd.f32 0.0, %v6337
        %v6339 = vpop.f32.mrb[0].mxu0
        %6340 = vmatprep.mubr.bf16.mxu0 0
        %6341 = vmatmul.mubr.bf16.gmra.mrb[0].mxu0 %v6106
        %v6342 = vpop.f32.mrb[0].mxu0
        %v6343 = vadd.f32 0.0, %v6342
        %v6344 = vpop.f32.mrb[0].mxu0
        %v6345 = vpop.f32.mrb[0].mxu0
        %v6346 = vadd.f32 0.0, %v6345
        %v6347 = vpop.f32.mrb[0].mxu0
        %6348 = vdwg.mxu0
        %v6365 = vunpack.c.l.b16 %v5995
        %v6366 = vunpack.c.l.b16 %v5996
        %v6367 = vunpack.c.l.b16 %v5997
        %v6368 = vunpack.c.l.b16 %v5998
        %v6369 = vunpack.c.l.b16 %v5999
        %v6370 = vunpack.c.l.b16 %v6000
        %v6371 = vunpack.c.l.b16 %v6001
        %v6372 = vunpack.c.l.b16 %v6002
        %v6373 = vunpack.c.l.b16 %v6003
        %v6374 = vunpack.c.l.b16 %v6004
        %v6375 = vunpack.c.l.b16 %v6005
        %v6376 = vunpack.c.l.b16 %v6006
        %v6377 = vunpack.c.l.b16 %v6007
        %v6378 = vunpack.c.l.b16 %v6008
        %v6379 = vunpack.c.l.b16 %v6009
        %v6380 = vunpack.c.l.b16 %v6010
        %v6381 = vpack.c.b16 %v6366, %v6365
        %v6382 = vpack.c.b16 %v6368, %v6367
        %v6383 = vpack.c.b16 %v6370, %v6369
        %v6384 = vpack.c.b16 %v6372, %v6371
        %v6385 = vpack.c.b16 %v6374, %v6373
        %v6386 = vpack.c.b16 %v6376, %v6375
        %v6387 = vpack.c.b16 %v6378, %v6377
        %v6388 = vpack.c.b16 %v6380, %v6379
        %6397 = vmatprep.subr.bf16.mxu0 0
        %6398 = vmatpush1.bf16.msra.mxu0 %v6381
        %6399 = vmatprep.subr.bf16.mxu0 0
        %6400 = vmatpush1.bf16.msra.mxu0 %v6382
        %6401 = vmatprep.subr.bf16.mxu0 0
        %6402 = vmatpush1.bf16.msra.mxu0 %v6383
        %6403 = vmatprep.subr.bf16.mxu0 0
        %6404 = vmatpush1.bf16.msra.mxu0 %v6384
        %6405 = vmatprep.subr.bf16.mxu0 0
        %6406 = vmatpush1.bf16.msra.mxu0 %v6385
        %6407 = vmatprep.subr.bf16.mxu0 0
        %6408 = vmatpush1.bf16.msra.mxu0 %v6386
        %6409 = vmatprep.subr.bf16.mxu0 0
        %6410 = vmatpush1.bf16.msra.mxu0 %v6387
        %6411 = vmatprep.subr.bf16.mxu0 0
        %6412 = vmatpush1.bf16.msra.mxu0 %v6388
        %6413 = vmatprep.subr.bf16.mxu0 0
        %6414 = vmatpush1.bf16.msra.mxu0 0
        %6415 = vmatprep.subr.bf16.mxu0 0
        %6416 = vmatpush1.bf16.msra.mxu0 0
        %6417 = vmatprep.subr.bf16.mxu0 0
        %6418 = vmatpush1.bf16.msra.mxu0 0
        %6419 = vmatprep.subr.bf16.mxu0 0
        %6420 = vmatpush1.bf16.msra.mxu0 0
        %6421 = vmatprep.subr.bf16.mxu0 0
        %6422 = vmatpush1.bf16.msra.mxu0 0
        %6423 = vmatprep.subr.bf16.mxu0 0
        %6424 = vmatpush1.bf16.msra.mxu0 0
        %6425 = vmatprep.subr.bf16.mxu0 0
        %6426 = vmatpush1.bf16.msra.mxu0 0
        %6427 = vmatprep.subr.bf16.mxu0 0
        %6428 = vmatpush1.bf16.msra.mxu0 0
        %6429 = vmatprep.mubr.bf16.mxu0 0
        %6430 = vmatmul.mubr.bf16.gmra.mrb[0].mxu0 %v5723
        %v6431 = vpop.f32.mrb[0].mxu0
        %v6432 = vadd.f32 %v6223, %v6431
        %v6433 = vpop.f32.mrb[0].mxu0
        %v6434 = vpop.f32.mrb[0].mxu0
        %v6435 = vadd.f32 %v6226, %v6434
        %v6436 = vpop.f32.mrb[0].mxu0
        %6437 = vmatprep.mubr.bf16.mxu0 0
        %6438 = vmatmul.mubr.bf16.gmra.mrb[0].mxu0 %v5740
        %v6439 = vpop.f32.mrb[0].mxu0
        %v6440 = vadd.f32 %v6231, %v6439
        %v6441 = vpop.f32.mrb[0].mxu0
        %v6442 = vpop.f32.mrb[0].mxu0
        %v6443 = vadd.f32 %v6234, %v6442
        %v6444 = vpop.f32.mrb[0].mxu0
        %6445 = vmatprep.mubr.bf16.mxu0 0
        %6446 = vmatmul.mubr.bf16.gmra.mrb[0].mxu0 %v5757
        %v6447 = vpop.f32.mrb[0].mxu0
        %v6448 = vadd.f32 %v6239, %v6447
        %v6449 = vpop.f32.mrb[0].mxu0
        %v6450 = vpop.f32.mrb[0].mxu0
        %v6451 = vadd.f32 %v6242, %v6450
        %v6452 = vpop.f32.mrb[0].mxu0
        %6453 = vmatprep.mubr.bf16.mxu0 0
        %6454 = vmatmul.mubr.bf16.gmra.mrb[0].mxu0 %v5774
        %v6455 = vpop.f32.mrb[0].mxu0
        %v6456 = vadd.f32 %v6247, %v6455
        %v6457 = vpop.f32.mrb[0].mxu0
        %v6458 = vpop.f32.mrb[0].mxu0
        %v6459 = vadd.f32 %v6250, %v6458
        %v6460 = vpop.f32.mrb[0].mxu0
        %6461 = vmatprep.mubr.bf16.mxu0 0
        %6462 = vmatmul.mubr.bf16.gmra.mrb[0].mxu0 %v5791
        %v6463 = vpop.f32.mrb[0].mxu0
        %v6464 = vadd.f32 %v6255, %v6463
        %v6465 = vpop.f32.mrb[0].mxu0
        %v6466 = vpop.f32.mrb[0].mxu0
        %v6467 = vadd.f32 %v6258, %v6466
        %v6468 = vpop.f32.mrb[0].mxu0
        %6469 = vmatprep.mubr.bf16.mxu0 0
        %6470 = vmatmul.mubr.bf16.gmra.mrb[0].mxu0 %v5808
        %v6471 = vpop.f32.mrb[0].mxu0
        %v6472 = vadd.f32 %v6263, %v6471
        %v6473 = vpop.f32.mrb[0].mxu0
        %v6474 = vpop.f32.mrb[0].mxu0
        %v6475 = vadd.f32 %v6266, %v6474
        %v6476 = vpop.f32.mrb[0].mxu0
        %6477 = vmatprep.mubr.bf16.mxu0 0
        %6478 = vmatmul.mubr.bf16.gmra.mrb[0].mxu0 %v5825
        %v6479 = vpop.f32.mrb[0].mxu0
        %v6480 = vadd.f32 %v6271, %v6479
        %v6481 = vpop.f32.mrb[0].mxu0
        %v6482 = vpop.f32.mrb[0].mxu0
        %v6483 = vadd.f32 %v6274, %v6482
        %v6484 = vpop.f32.mrb[0].mxu0
        %6485 = vmatprep.mubr.bf16.mxu0 0
        %6486 = vmatmul.mubr.bf16.gmra.mrb[0].mxu0 %v5842
        %v6487 = vpop.f32.mrb[0].mxu0
        %v6488 = vadd.f32 %v6279, %v6487
        %v6489 = vpop.f32.mrb[0].mxu0
        %v6490 = vpop.f32.mrb[0].mxu0
        %v6491 = vadd.f32 %v6282, %v6490
        %v6492 = vpop.f32.mrb[0].mxu0
        %6493 = vmatprep.mubr.bf16.mxu0 0
        %6494 = vmatmul.mubr.bf16.gmra.mrb[0].mxu0 %v5859
        %v6495 = vpop.f32.mrb[0].mxu0
        %v6496 = vadd.f32 %v6287, %v6495
        %v6497 = vpop.f32.mrb[0].mxu0
        %v6498 = vpop.f32.mrb[0].mxu0
        %v6499 = vadd.f32 %v6290, %v6498
        %v6500 = vpop.f32.mrb[0].mxu0
        %6501 = vmatprep.mubr.bf16.mxu0 0
        %6502 = vmatmul.mubr.bf16.gmra.mrb[0].mxu0 %v5876
        %v6503 = vpop.f32.mrb[0].mxu0
        %v6504 = vadd.f32 %v6295, %v6503
        %v6505 = vpop.f32.mrb[0].mxu0
        %v6506 = vpop.f32.mrb[0].mxu0
        %v6507 = vadd.f32 %v6298, %v6506
        %v6508 = vpop.f32.mrb[0].mxu0
        %6509 = vmatprep.mubr.bf16.mxu0 0
        %6510 = vmatmul.mubr.bf16.gmra.mrb[0].mxu0 %v5893
        %v6511 = vpop.f32.mrb[0].mxu0
        %v6512 = vadd.f32 %v6303, %v6511
        %v6513 = vpop.f32.mrb[0].mxu0
        %v6514 = vpop.f32.mrb[0].mxu0
        %v6515 = vadd.f32 %v6306, %v6514
        %v6516 = vpop.f32.mrb[0].mxu0
        %6517 = vmatprep.mubr.bf16.mxu0 0
        %6518 = vmatmul.mubr.bf16.gmra.mrb[0].mxu0 %v5910
        %v6519 = vpop.f32.mrb[0].mxu0
        %v6520 = vadd.f32 %v6311, %v6519
        %v6521 = vpop.f32.mrb[0].mxu0
        %v6522 = vpop.f32.mrb[0].mxu0
        %v6523 = vadd.f32 %v6314, %v6522
        %v6524 = vpop.f32.mrb[0].mxu0
        %6525 = vmatprep.mubr.bf16.mxu0 0
        %6526 = vmatmul.mubr.bf16.gmra.mrb[0].mxu0 %v5927
        %v6527 = vpop.f32.mrb[0].mxu0
        %v6528 = vadd.f32 %v6319, %v6527
        %v6529 = vpop.f32.mrb[0].mxu0
        %v6530 = vpop.f32.mrb[0].mxu0
        %v6531 = vadd.f32 %v6322, %v6530
        %v6532 = vpop.f32.mrb[0].mxu0
        %6533 = vmatprep.mubr.bf16.mxu0 0
        %6534 = vmatmul.mubr.bf16.gmra.mrb[0].mxu0 %v5944
        %v6535 = vpop.f32.mrb[0].mxu0
        %v6536 = vadd.f32 %v6327, %v6535
        %v6537 = vpop.f32.mrb[0].mxu0
        %v6538 = vpop.f32.mrb[0].mxu0
        %v6539 = vadd.f32 %v6330, %v6538
        %v6540 = vpop.f32.mrb[0].mxu0
        %6541 = vmatprep.mubr.bf16.mxu0 0
        %6542 = vmatmul.mubr.bf16.gmra.mrb[0].mxu0 %v5961
        %v6543 = vpop.f32.mrb[0].mxu0
        %v6544 = vadd.f32 %v6335, %v6543
        %v6545 = vpop.f32.mrb[0].mxu0
        %v6546 = vpop.f32.mrb[0].mxu0
        %v6547 = vadd.f32 %v6338, %v6546
        %v6548 = vpop.f32.mrb[0].mxu0
        %6549 = vmatprep.mubr.bf16.mxu0 0
        %6550 = vmatmul.mubr.bf16.gmra.mrb[0].mxu0 %v5978
        %v6551 = vpop.f32.mrb[0].mxu0
        %v6552 = vadd.f32 %v6343, %v6551
        %v6553 = vpop.f32.mrb[0].mxu0
        %v6554 = vpop.f32.mrb[0].mxu0
        %v6555 = vadd.f32 %v6346, %v6554
        %v6556 = vpop.f32.mrb[0].mxu0
        %6557 = vdwg.mxu0
        %v6558 = vld [vmem:[#allocation3 + $0x8] sm:$0x1f]
        %v6559 = vld [vmem:[#allocation3 + $0x18] sm:$0x1f]
        %v6560 = vld [vmem:[#allocation3 + $0x28] sm:$0x1f]
        %v6561 = vld [vmem:[#allocation3 + $0x38] sm:$0x1f]
        %v6562 = vld [vmem:[#allocation3 + $0x48] sm:$0x1f]
        %v6563 = vld [vmem:[#allocation3 + $0x58] sm:$0x1f]
        %v6564 = vld [vmem:[#allocation3 + $0x68] sm:$0x1f]
        %v6565 = vld [vmem:[#allocation3 + $0x78] sm:$0x1f]
        %v6566 = vld [vmem:[#allocation3 + $0x88] sm:$0x1f]
        %v6567 = vld [vmem:[#allocation3 + $0x98] sm:$0x1f]
        %v6568 = vld [vmem:[#allocation3 + $0xa8] sm:$0x1f]
        %v6569 = vld [vmem:[#allocation3 + $0xb8] sm:$0x1f]
        %v6570 = vld [vmem:[#allocation3 + $0xc8] sm:$0x1f]
        %v6571 = vld [vmem:[#allocation3 + $0xd8] sm:$0x1f]
        %v6572 = vld [vmem:[#allocation3 + $0xe8] sm:$0x1f]
        %v6573 = vld [vmem:[#allocation3 + $0xf8] sm:$0x1f]
        %v6575 = vshrl.u32 %v6011, 16
        %v6577 = vrot.slane %v6575, 4
        %v6578 = vshll.u32 %v6011, 16
        %v6580 = vrot.slane %v6578, 5
        %v6581 = vor.u32 %v6577, %v6580
        %v6583 = vshrl.u32 %v6558, 16
        %v6585 = vrot.slane %v6583, 4
        %v6586 = vshll.u32 %v6558, 16
        %v6588 = vrot.slane %v6586, 5
        %v6589 = vor.u32 %v6585, %v6588
        %v6590 = vsel %vm1838, %v6581, %v6589
        %v6592 = vshrl.u32 %v6012, 16
        %v6594 = vrot.slane %v6592, 4
        %v6595 = vshll.u32 %v6012, 16
        %v6597 = vrot.slane %v6595, 5
        %v6598 = vor.u32 %v6594, %v6597
        %v6600 = vshrl.u32 %v6559, 16
        %v6602 = vrot.slane %v6600, 4
        %v6603 = vshll.u32 %v6559, 16
        %v6605 = vrot.slane %v6603, 5
        %v6606 = vor.u32 %v6602, %v6605
        %v6607 = vsel %vm1838, %v6598, %v6606
        %v6609 = vshrl.u32 %v6013, 16
        %v6611 = vrot.slane %v6609, 4
        %v6612 = vshll.u32 %v6013, 16
        %v6614 = vrot.slane %v6612, 5
        %v6615 = vor.u32 %v6611, %v6614
        %v6617 = vshrl.u32 %v6560, 16
        %v6619 = vrot.slane %v6617, 4
        %v6620 = vshll.u32 %v6560, 16
        %v6622 = vrot.slane %v6620, 5
        %v6623 = vor.u32 %v6619, %v6622
        %v6624 = vsel %vm1838, %v6615, %v6623
        %v6626 = vshrl.u32 %v6014, 16
        %v6628 = vrot.slane %v6626, 4
        %v6629 = vshll.u32 %v6014, 16
        %v6631 = vrot.slane %v6629, 5
        %v6632 = vor.u32 %v6628, %v6631
        %v6634 = vshrl.u32 %v6561, 16
        %v6636 = vrot.slane %v6634, 4
        %v6637 = vshll.u32 %v6561, 16
        %v6639 = vrot.slane %v6637, 5
        %v6640 = vor.u32 %v6636, %v6639
        %v6641 = vsel %vm1838, %v6632, %v6640
        %v6643 = vshrl.u32 %v6015, 16
        %v6645 = vrot.slane %v6643, 4
        %v6646 = vshll.u32 %v6015, 16
        %v6648 = vrot.slane %v6646, 5
        %v6649 = vor.u32 %v6645, %v6648
        %v6651 = vshrl.u32 %v6562, 16
        %v6653 = vrot.slane %v6651, 4
        %v6654 = vshll.u32 %v6562, 16
        %v6656 = vrot.slane %v6654, 5
        %v6657 = vor.u32 %v6653, %v6656
        %v6658 = vsel %vm1838, %v6649, %v6657
        %v6660 = vshrl.u32 %v6016, 16
        %v6662 = vrot.slane %v6660, 4
        %v6663 = vshll.u32 %v6016, 16
        %v6665 = vrot.slane %v6663, 5
        %v6666 = vor.u32 %v6662, %v6665
        %v6668 = vshrl.u32 %v6563, 16
        %v6670 = vrot.slane %v6668, 4
        %v6671 = vshll.u32 %v6563, 16
        %v6673 = vrot.slane %v6671, 5
        %v6674 = vor.u32 %v6670, %v6673
        %v6675 = vsel %vm1838, %v6666, %v6674
        %v6677 = vshrl.u32 %v6017, 16
        %v6679 = vrot.slane %v6677, 4
        %v6680 = vshll.u32 %v6017, 16
        %v6682 = vrot.slane %v6680, 5
        %v6683 = vor.u32 %v6679, %v6682
        %v6685 = vshrl.u32 %v6564, 16
        %v6687 = vrot.slane %v6685, 4
        %v6688 = vshll.u32 %v6564, 16
        %v6690 = vrot.slane %v6688, 5
        %v6691 = vor.u32 %v6687, %v6690
        %v6692 = vsel %vm1838, %v6683, %v6691
        %v6694 = vshrl.u32 %v6018, 16
        %v6696 = vrot.slane %v6694, 4
        %v6697 = vshll.u32 %v6018, 16
        %v6699 = vrot.slane %v6697, 5
        %v6700 = vor.u32 %v6696, %v6699
        %v6702 = vshrl.u32 %v6565, 16
        %v6704 = vrot.slane %v6702, 4
        %v6705 = vshll.u32 %v6565, 16
        %v6707 = vrot.slane %v6705, 5
        %v6708 = vor.u32 %v6704, %v6707
        %v6709 = vsel %vm1838, %v6700, %v6708
        %v6711 = vshrl.u32 %v6019, 16
        %v6713 = vrot.slane %v6711, 4
        %v6714 = vshll.u32 %v6019, 16
        %v6716 = vrot.slane %v6714, 5
        %v6717 = vor.u32 %v6713, %v6716
        %v6719 = vshrl.u32 %v6566, 16
        %v6721 = vrot.slane %v6719, 4
        %v6722 = vshll.u32 %v6566, 16
        %v6724 = vrot.slane %v6722, 5
        %v6725 = vor.u32 %v6721, %v6724
        %v6726 = vsel %vm1838, %v6717, %v6725
        %v6728 = vshrl.u32 %v6020, 16
        %v6730 = vrot.slane %v6728, 4
        %v6731 = vshll.u32 %v6020, 16
        %v6733 = vrot.slane %v6731, 5
        %v6734 = vor.u32 %v6730, %v6733
        %v6736 = vshrl.u32 %v6567, 16
        %v6738 = vrot.slane %v6736, 4
        %v6739 = vshll.u32 %v6567, 16
        %v6741 = vrot.slane %v6739, 5
        %v6742 = vor.u32 %v6738, %v6741
        %v6743 = vsel %vm1838, %v6734, %v6742
        %v6745 = vshrl.u32 %v6021, 16
        %v6747 = vrot.slane %v6745, 4
        %v6748 = vshll.u32 %v6021, 16
        %v6750 = vrot.slane %v6748, 5
        %v6751 = vor.u32 %v6747, %v6750
        %v6753 = vshrl.u32 %v6568, 16
        %v6755 = vrot.slane %v6753, 4
        %v6756 = vshll.u32 %v6568, 16
        %v6758 = vrot.slane %v6756, 5
        %v6759 = vor.u32 %v6755, %v6758
        %v6760 = vsel %vm1838, %v6751, %v6759
        %v6762 = vshrl.u32 %v6022, 16
        %v6764 = vrot.slane %v6762, 4
        %v6765 = vshll.u32 %v6022, 16
        %v6767 = vrot.slane %v6765, 5
        %v6768 = vor.u32 %v6764, %v6767
        %v6770 = vshrl.u32 %v6569, 16
        %v6772 = vrot.slane %v6770, 4
        %v6773 = vshll.u32 %v6569, 16
        %v6775 = vrot.slane %v6773, 5
        %v6776 = vor.u32 %v6772, %v6775
        %v6777 = vsel %vm1838, %v6768, %v6776
        %v6779 = vshrl.u32 %v6023, 16
        %v6781 = vrot.slane %v6779, 4
        %v6782 = vshll.u32 %v6023, 16
        %v6784 = vrot.slane %v6782, 5
        %v6785 = vor.u32 %v6781, %v6784
        %v6787 = vshrl.u32 %v6570, 16
        %v6789 = vrot.slane %v6787, 4
        %v6790 = vshll.u32 %v6570, 16
        %v6792 = vrot.slane %v6790, 5
        %v6793 = vor.u32 %v6789, %v6792
        %v6794 = vsel %vm1838, %v6785, %v6793
        %v6796 = vshrl.u32 %v6024, 16
        %v6798 = vrot.slane %v6796, 4
        %v6799 = vshll.u32 %v6024, 16
        %v6801 = vrot.slane %v6799, 5
        %v6802 = vor.u32 %v6798, %v6801
        %v6804 = vshrl.u32 %v6571, 16
        %v6806 = vrot.slane %v6804, 4
        %v6807 = vshll.u32 %v6571, 16
        %v6809 = vrot.slane %v6807, 5
        %v6810 = vor.u32 %v6806, %v6809
        %v6811 = vsel %vm1838, %v6802, %v6810
        %v6813 = vshrl.u32 %v6025, 16
        %v6815 = vrot.slane %v6813, 4
        %v6816 = vshll.u32 %v6025, 16
        %v6818 = vrot.slane %v6816, 5
        %v6819 = vor.u32 %v6815, %v6818
        %v6821 = vshrl.u32 %v6572, 16
        %v6823 = vrot.slane %v6821, 4
        %v6824 = vshll.u32 %v6572, 16
        %v6826 = vrot.slane %v6824, 5
        %v6827 = vor.u32 %v6823, %v6826
        %v6828 = vsel %vm1838, %v6819, %v6827
        %v6830 = vshrl.u32 %v6026, 16
        %v6832 = vrot.slane %v6830, 4
        %v6833 = vshll.u32 %v6026, 16
        %v6835 = vrot.slane %v6833, 5
        %v6836 = vor.u32 %v6832, %v6835
        %v6838 = vshrl.u32 %v6573, 16
        %v6840 = vrot.slane %v6838, 4
        %v6841 = vshll.u32 %v6573, 16
        %v6843 = vrot.slane %v6841, 5
        %v6844 = vor.u32 %v6840, %v6843
        %v6845 = vsel %vm1838, %v6836, %v6844
        %s6862 = scalar_lea.vmem [#allocation10], 128
        %v6863 = vld [vmem:[%s6862] sm:$0xf]
        %v6864 = vld [vmem:[%s6862 + $0x4] sm:$0xf]
        %v6865 = vld [vmem:[%s6862 + $0x8] sm:$0xf]
        %v6866 = vld [vmem:[%s6862 + $0xc] sm:$0xf]
        %v6867 = vld [vmem:[%s6862 + $0x10] sm:$0xf]
        %v6868 = vld [vmem:[%s6862 + $0x14] sm:$0xf]
        %v6869 = vld [vmem:[%s6862 + $0x18] sm:$0xf]
        %v6870 = vld [vmem:[%s6862 + $0x1c] sm:$0xf]
        %v6871 = vld [vmem:[%s6862 + $0x20] sm:$0xf]
        %v6872 = vld [vmem:[%s6862 + $0x24] sm:$0xf]
        %v6873 = vld [vmem:[%s6862 + $0x28] sm:$0xf]
        %v6874 = vld [vmem:[%s6862 + $0x2c] sm:$0xf]
        %v6875 = vld [vmem:[%s6862 + $0x30] sm:$0xf]
        %v6876 = vld [vmem:[%s6862 + $0x34] sm:$0xf]
        %v6877 = vld [vmem:[%s6862 + $0x38] sm:$0xf]
        %v6878 = vld [vmem:[%s6862 + $0x3c] sm:$0xf]
        %v6895 = vunpack.c.l.b16 %v6863
        %v6896 = vunpack.c.l.b16 %v6864
        %v6897 = vunpack.c.l.b16 %v6865
        %v6898 = vunpack.c.l.b16 %v6866
        %v6899 = vunpack.c.l.b16 %v6867
        %v6900 = vunpack.c.l.b16 %v6868
        %v6901 = vunpack.c.l.b16 %v6869
        %v6902 = vunpack.c.l.b16 %v6870
        %v6903 = vunpack.c.l.b16 %v6871
        %v6904 = vunpack.c.l.b16 %v6872
        %v6905 = vunpack.c.l.b16 %v6873
        %v6906 = vunpack.c.l.b16 %v6874
        %v6907 = vunpack.c.l.b16 %v6875
        %v6908 = vunpack.c.l.b16 %v6876
        %v6909 = vunpack.c.l.b16 %v6877
        %v6910 = vunpack.c.l.b16 %v6878
        %v6911 = vpack.c.b16 %v6896, %v6895
        %v6912 = vpack.c.b16 %v6898, %v6897
        %v6913 = vpack.c.b16 %v6900, %v6899
        %v6914 = vpack.c.b16 %v6902, %v6901
        %v6915 = vpack.c.b16 %v6904, %v6903
        %v6916 = vpack.c.b16 %v6906, %v6905
        %v6917 = vpack.c.b16 %v6908, %v6907
        %v6918 = vpack.c.b16 %v6910, %v6909
        %6927 = vmatprep.subr.bf16.mxu0 0
        %6928 = vmatpush1.bf16.msra.mxu0 %v6911
        %6929 = vmatprep.subr.bf16.mxu0 0
        %6930 = vmatpush1.bf16.msra.mxu0 %v6912
        %6931 = vmatprep.subr.bf16.mxu0 0
        %6932 = vmatpush1.bf16.msra.mxu0 %v6913
        %6933 = vmatprep.subr.bf16.mxu0 0
        %6934 = vmatpush1.bf16.msra.mxu0 %v6914
        %6935 = vmatprep.subr.bf16.mxu0 0
        %6936 = vmatpush1.bf16.msra.mxu0 %v6915
        %6937 = vmatprep.subr.bf16.mxu0 0
        %6938 = vmatpush1.bf16.msra.mxu0 %v6916
        %6939 = vmatprep.subr.bf16.mxu0 0
        %6940 = vmatpush1.bf16.msra.mxu0 %v6917
        %6941 = vmatprep.subr.bf16.mxu0 0
        %6942 = vmatpush1.bf16.msra.mxu0 %v6918
        %6943 = vmatprep.subr.bf16.mxu0 0
        %6944 = vmatpush1.bf16.msra.mxu0 0
        %6945 = vmatprep.subr.bf16.mxu0 0
        %6946 = vmatpush1.bf16.msra.mxu0 0
        %6947 = vmatprep.subr.bf16.mxu0 0
        %6948 = vmatpush1.bf16.msra.mxu0 0
        %6949 = vmatprep.subr.bf16.mxu0 0
        %6950 = vmatpush1.bf16.msra.mxu0 0
        %6951 = vmatprep.subr.bf16.mxu0 0
        %6952 = vmatpush1.bf16.msra.mxu0 0
        %6953 = vmatprep.subr.bf16.mxu0 0
        %6954 = vmatpush1.bf16.msra.mxu0 0
        %6955 = vmatprep.subr.bf16.mxu0 0
        %6956 = vmatpush1.bf16.msra.mxu0 0
        %6957 = vmatprep.subr.bf16.mxu0 0
        %6958 = vmatpush1.bf16.msra.mxu0 0
        %6959 = vmatprep.mubr.bf16.mxu0 0
        %6960 = vmatmul.mubr.bf16.gmra.mrb[0].mxu0 %v6590
        %v6961 = vpop.f32.mrb[0].mxu0
        %v6962 = vadd.f32 0.0, %v6961
        %v6963 = vpop.f32.mrb[0].mxu0
        %v6964 = vpop.f32.mrb[0].mxu0
        %v6965 = vadd.f32 0.0, %v6964
        %v6966 = vpop.f32.mrb[0].mxu0
        %6967 = vmatprep.mubr.bf16.mxu0 0
        %6968 = vmatmul.mubr.bf16.gmra.mrb[0].mxu0 %v6607
        %v6969 = vpop.f32.mrb[0].mxu0
        %v6970 = vadd.f32 0.0, %v6969
        %v6971 = vpop.f32.mrb[0].mxu0
        %v6972 = vpop.f32.mrb[0].mxu0
        %v6973 = vadd.f32 0.0, %v6972
        %v6974 = vpop.f32.mrb[0].mxu0
        %6975 = vmatprep.mubr.bf16.mxu0 0
        %6976 = vmatmul.mubr.bf16.gmra.mrb[0].mxu0 %v6624
        %v6977 = vpop.f32.mrb[0].mxu0
        %v6978 = vadd.f32 0.0, %v6977
        %v6979 = vpop.f32.mrb[0].mxu0
        %v6980 = vpop.f32.mrb[0].mxu0
        %v6981 = vadd.f32 0.0, %v6980
        %v6982 = vpop.f32.mrb[0].mxu0
        %6983 = vmatprep.mubr.bf16.mxu0 0
        %6984 = vmatmul.mubr.bf16.gmra.mrb[0].mxu0 %v6641
        %v6985 = vpop.f32.mrb[0].mxu0
        %v6986 = vadd.f32 0.0, %v6985
        %v6987 = vpop.f32.mrb[0].mxu0
        %v6988 = vpop.f32.mrb[0].mxu0
        %v6989 = vadd.f32 0.0, %v6988
        %v6990 = vpop.f32.mrb[0].mxu0
        %6991 = vmatprep.mubr.bf16.mxu0 0
        %6992 = vmatmul.mubr.bf16.gmra.mrb[0].mxu0 %v6658
        %v6993 = vpop.f32.mrb[0].mxu0
        %v6994 = vadd.f32 0.0, %v6993
        %v6995 = vpop.f32.mrb[0].mxu0
        %v6996 = vpop.f32.mrb[0].mxu0
        %v6997 = vadd.f32 0.0, %v6996
        %v6998 = vpop.f32.mrb[0].mxu0
        %6999 = vmatprep.mubr.bf16.mxu0 0
        %7000 = vmatmul.mubr.bf16.gmra.mrb[0].mxu0 %v6675
        %v7001 = vpop.f32.mrb[0].mxu0
        %v7002 = vadd.f32 0.0, %v7001
        %v7003 = vpop.f32.mrb[0].mxu0
        %v7004 = vpop.f32.mrb[0].mxu0
        %v7005 = vadd.f32 0.0, %v7004
        %v7006 = vpop.f32.mrb[0].mxu0
        %7007 = vmatprep.mubr.bf16.mxu0 0
        %7008 = vmatmul.mubr.bf16.gmra.mrb[0].mxu0 %v6692
        %v7009 = vpop.f32.mrb[0].mxu0
        %v7010 = vadd.f32 0.0, %v7009
        %v7011 = vpop.f32.mrb[0].mxu0
        %v7012 = vpop.f32.mrb[0].mxu0
        %v7013 = vadd.f32 0.0, %v7012
        %v7014 = vpop.f32.mrb[0].mxu0
        %7015 = vmatprep.mubr.bf16.mxu0 0
        %7016 = vmatmul.mubr.bf16.gmra.mrb[0].mxu0 %v6709
        %v7017 = vpop.f32.mrb[0].mxu0
        %v7018 = vadd.f32 0.0, %v7017
        %v7019 = vpop.f32.mrb[0].mxu0
        %v7020 = vpop.f32.mrb[0].mxu0
        %v7021 = vadd.f32 0.0, %v7020
        %v7022 = vpop.f32.mrb[0].mxu0
        %7023 = vmatprep.mubr.bf16.mxu0 0
        %7024 = vmatmul.mubr.bf16.gmra.mrb[0].mxu0 %v6726
        %v7025 = vpop.f32.mrb[0].mxu0
        %v7026 = vadd.f32 0.0, %v7025
        %v7027 = vpop.f32.mrb[0].mxu0
        %v7028 = vpop.f32.mrb[0].mxu0
        %v7029 = vadd.f32 0.0, %v7028
        %v7030 = vpop.f32.mrb[0].mxu0
        %7031 = vmatprep.mubr.bf16.mxu0 0
        %7032 = vmatmul.mubr.bf16.gmra.mrb[0].mxu0 %v6743
        %v7033 = vpop.f32.mrb[0].mxu0
        %v7034 = vadd.f32 0.0, %v7033
        %v7035 = vpop.f32.mrb[0].mxu0
        %v7036 = vpop.f32.mrb[0].mxu0
        %v7037 = vadd.f32 0.0, %v7036
        %v7038 = vpop.f32.mrb[0].mxu0
        %7039 = vmatprep.mubr.bf16.mxu0 0
        %7040 = vmatmul.mubr.bf16.gmra.mrb[0].mxu0 %v6760
        %v7041 = vpop.f32.mrb[0].mxu0
        %v7042 = vadd.f32 0.0, %v7041
        %v7043 = vpop.f32.mrb[0].mxu0
        %v7044 = vpop.f32.mrb[0].mxu0
        %v7045 = vadd.f32 0.0, %v7044
        %v7046 = vpop.f32.mrb[0].mxu0
        %7047 = vmatprep.mubr.bf16.mxu0 0
        %7048 = vmatmul.mubr.bf16.gmra.mrb[0].mxu0 %v6777
        %v7049 = vpop.f32.mrb[0].mxu0
        %v7050 = vadd.f32 0.0, %v7049
        %v7051 = vpop.f32.mrb[0].mxu0
        %v7052 = vpop.f32.mrb[0].mxu0
        %v7053 = vadd.f32 0.0, %v7052
        %v7054 = vpop.f32.mrb[0].mxu0
        %7055 = vmatprep.mubr.bf16.mxu0 0
        %7056 = vmatmul.mubr.bf16.gmra.mrb[0].mxu0 %v6794
        %v7057 = vpop.f32.mrb[0].mxu0
        %v7058 = vadd.f32 0.0, %v7057
        %v7059 = vpop.f32.mrb[0].mxu0
        %v7060 = vpop.f32.mrb[0].mxu0
        %v7061 = vadd.f32 0.0, %v7060
        %v7062 = vpop.f32.mrb[0].mxu0
        %7063 = vmatprep.mubr.bf16.mxu0 0
        %7064 = vmatmul.mubr.bf16.gmra.mrb[0].mxu0 %v6811
        %v7065 = vpop.f32.mrb[0].mxu0
        %v7066 = vadd.f32 0.0, %v7065
        %v7067 = vpop.f32.mrb[0].mxu0
        %v7068 = vpop.f32.mrb[0].mxu0
        %v7069 = vadd.f32 0.0, %v7068
        %v7070 = vpop.f32.mrb[0].mxu0
        %7071 = vmatprep.mubr.bf16.mxu0 0
        %7072 = vmatmul.mubr.bf16.gmra.mrb[0].mxu0 %v6828
        %v7073 = vpop.f32.mrb[0].mxu0
        %v7074 = vadd.f32 0.0, %v7073
        %v7075 = vpop.f32.mrb[0].mxu0
        %v7076 = vpop.f32.mrb[0].mxu0
        %v7077 = vadd.f32 0.0, %v7076
        %v7078 = vpop.f32.mrb[0].mxu0
        %7079 = vmatprep.mubr.bf16.mxu0 0
        %7080 = vmatmul.mubr.bf16.gmra.mrb[0].mxu0 %v6845
        %v7081 = vpop.f32.mrb[0].mxu0
        %v7082 = vadd.f32 0.0, %v7081
        %v7083 = vpop.f32.mrb[0].mxu0
        %v7084 = vpop.f32.mrb[0].mxu0
        %v7085 = vadd.f32 0.0, %v7084
        %v7086 = vpop.f32.mrb[0].mxu0
        %7087 = vdwg.mxu0
        %v7088 = vadd.f32 %v6432, %v6962
        %v7089 = vadd.f32 %v6435, %v6965
        %v7090 = vadd.f32 %v6440, %v6970
        %v7091 = vadd.f32 %v6443, %v6973
        %v7092 = vadd.f32 %v6448, %v6978
        %v7093 = vadd.f32 %v6451, %v6981
        %v7094 = vadd.f32 %v6456, %v6986
        %v7095 = vadd.f32 %v6459, %v6989
        %v7096 = vadd.f32 %v6464, %v6994
        %v7097 = vadd.f32 %v6467, %v6997
        %v7098 = vadd.f32 %v6472, %v7002
        %v7099 = vadd.f32 %v6475, %v7005
        %v7100 = vadd.f32 %v6480, %v7010
        %v7101 = vadd.f32 %v6483, %v7013
        %v7102 = vadd.f32 %v6488, %v7018
        %v7103 = vadd.f32 %v6491, %v7021
        %v7104 = vadd.f32 %v6496, %v7026
        %v7105 = vadd.f32 %v6499, %v7029
        %v7106 = vadd.f32 %v6504, %v7034
        %v7107 = vadd.f32 %v6507, %v7037
        %v7108 = vadd.f32 %v6512, %v7042
        %v7109 = vadd.f32 %v6515, %v7045
        %v7110 = vadd.f32 %v6520, %v7050
        %v7111 = vadd.f32 %v6523, %v7053
        %v7112 = vadd.f32 %v6528, %v7058
        %v7113 = vadd.f32 %v6531, %v7061
        %v7114 = vadd.f32 %v6536, %v7066
        %v7115 = vadd.f32 %v6539, %v7069
        %v7116 = vadd.f32 %v6544, %v7074
        %v7117 = vadd.f32 %v6547, %v7077
        %v7118 = vadd.f32 %v6552, %v7082
        %v7119 = vadd.f32 %v6555, %v7085
        %v7120 = vld [vmem:[%s5482] sm:$0xf8]
        %v7121 = vld [vmem:[%s5482 + $0x8] sm:$0xf]
        %v7122 = vld [vmem:[%s5482 + $0x10] sm:$0xf8]
        %v7123 = vld [vmem:[%s5482 + $0x18] sm:$0xf]
        %v7124 = vld [vmem:[%s5482 + $0x20] sm:$0xf8]
        %v7125 = vld [vmem:[%s5482 + $0x28] sm:$0xf]
        %v7126 = vld [vmem:[%s5482 + $0x30] sm:$0xf8]
        %v7127 = vld [vmem:[%s5482 + $0x38] sm:$0xf]
        %v7128 = vld [vmem:[%s5482 + $0x40] sm:$0xf8]
        %v7129 = vld [vmem:[%s5482 + $0x48] sm:$0xf]
        %v7130 = vld [vmem:[%s5482 + $0x50] sm:$0xf8]
        %v7131 = vld [vmem:[%s5482 + $0x58] sm:$0xf]
        %v7132 = vld [vmem:[%s5482 + $0x60] sm:$0xf8]
        %v7133 = vld [vmem:[%s5482 + $0x68] sm:$0xf]
        %v7134 = vld [vmem:[%s5482 + $0x70] sm:$0xf8]
        %v7135 = vld [vmem:[%s5482 + $0x78] sm:$0xf]
        %v7136 = vld [vmem:[%s5482 + $0x80] sm:$0xf8]
        %v7137 = vld [vmem:[%s5482 + $0x88] sm:$0xf]
        %v7138 = vld [vmem:[%s5482 + $0x90] sm:$0xf8]
        %v7139 = vld [vmem:[%s5482 + $0x98] sm:$0xf]
        %v7140 = vld [vmem:[%s5482 + $0xa0] sm:$0xf8]
        %v7141 = vld [vmem:[%s5482 + $0xa8] sm:$0xf]
        %v7142 = vld [vmem:[%s5482 + $0xb0] sm:$0xf8]
        %v7143 = vld [vmem:[%s5482 + $0xb8] sm:$0xf]
        %v7144 = vld [vmem:[%s5482 + $0xc0] sm:$0xf8]
        %v7145 = vld [vmem:[%s5482 + $0xc8] sm:$0xf]
        %v7146 = vld [vmem:[%s5482 + $0xd0] sm:$0xf8]
        %v7147 = vld [vmem:[%s5482 + $0xd8] sm:$0xf]
        %v7148 = vld [vmem:[%s5482 + $0xe0] sm:$0xf8]
        %v7149 = vld [vmem:[%s5482 + $0xe8] sm:$0xf]
        %v7150 = vld [vmem:[%s5482 + $0xf0] sm:$0xf8]
        %v7151 = vld [vmem:[%s5482 + $0xf8] sm:$0xf]
        %v7153 = vshrl.u32 %v7120, 16
        %v7155 = vrot.slane %v7153, 3
        %v7156 = vshll.u32 %v7120, 16
        %v7158 = vrot.slane %v7156, 4
        %v7159 = vor.u32 %v7155, %v7158
        %v7161 = vshrl.u32 %v7121, 16
        %v7163 = vrot.slane %v7161, 3
        %v7164 = vshll.u32 %v7121, 16
        %v7166 = vrot.slane %v7164, 4
        %v7167 = vor.u32 %v7163, %v7166
        %v7168 = vsel %vm792, %v7159, %v7167
        %v7170 = vshrl.u32 %v7122, 16
        %v7172 = vrot.slane %v7170, 3
        %v7173 = vshll.u32 %v7122, 16
        %v7175 = vrot.slane %v7173, 4
        %v7176 = vor.u32 %v7172, %v7175
        %v7178 = vshrl.u32 %v7123, 16
        %v7180 = vrot.slane %v7178, 3
        %v7181 = vshll.u32 %v7123, 16
        %v7183 = vrot.slane %v7181, 4
        %v7184 = vor.u32 %v7180, %v7183
        %v7185 = vsel %vm792, %v7176, %v7184
        %v7187 = vshrl.u32 %v7124, 16
        %v7189 = vrot.slane %v7187, 3
        %v7190 = vshll.u32 %v7124, 16
        %v7192 = vrot.slane %v7190, 4
        %v7193 = vor.u32 %v7189, %v7192
        %v7195 = vshrl.u32 %v7125, 16
        %v7197 = vrot.slane %v7195, 3
        %v7198 = vshll.u32 %v7125, 16
        %v7200 = vrot.slane %v7198, 4
        %v7201 = vor.u32 %v7197, %v7200
        %v7202 = vsel %vm792, %v7193, %v7201
        %v7204 = vshrl.u32 %v7126, 16
        %v7206 = vrot.slane %v7204, 3
        %v7207 = vshll.u32 %v7126, 16
        %v7209 = vrot.slane %v7207, 4
        %v7210 = vor.u32 %v7206, %v7209
        %v7212 = vshrl.u32 %v7127, 16
        %v7214 = vrot.slane %v7212, 3
        %v7215 = vshll.u32 %v7127, 16
        %v7217 = vrot.slane %v7215, 4
        %v7218 = vor.u32 %v7214, %v7217
        %v7219 = vsel %vm792, %v7210, %v7218
        %v7221 = vshrl.u32 %v7128, 16
        %v7223 = vrot.slane %v7221, 3
        %v7224 = vshll.u32 %v7128, 16
        %v7226 = vrot.slane %v7224, 4
        %v7227 = vor.u32 %v7223, %v7226
        %v7229 = vshrl.u32 %v7129, 16
        %v7231 = vrot.slane %v7229, 3
        %v7232 = vshll.u32 %v7129, 16
        %v7234 = vrot.slane %v7232, 4
        %v7235 = vor.u32 %v7231, %v7234
        %v7236 = vsel %vm792, %v7227, %v7235
        %v7238 = vshrl.u32 %v7130, 16
        %v7240 = vrot.slane %v7238, 3
        %v7241 = vshll.u32 %v7130, 16
        %v7243 = vrot.slane %v7241, 4
        %v7244 = vor.u32 %v7240, %v7243
        %v7246 = vshrl.u32 %v7131, 16
        %v7248 = vrot.slane %v7246, 3
        %v7249 = vshll.u32 %v7131, 16
        %v7251 = vrot.slane %v7249, 4
        %v7252 = vor.u32 %v7248, %v7251
        %v7253 = vsel %vm792, %v7244, %v7252
        %v7255 = vshrl.u32 %v7132, 16
        %v7257 = vrot.slane %v7255, 3
        %v7258 = vshll.u32 %v7132, 16
        %v7260 = vrot.slane %v7258, 4
        %v7261 = vor.u32 %v7257, %v7260
        %v7263 = vshrl.u32 %v7133, 16
        %v7265 = vrot.slane %v7263, 3
        %v7266 = vshll.u32 %v7133, 16
        %v7268 = vrot.slane %v7266, 4
        %v7269 = vor.u32 %v7265, %v7268
        %v7270 = vsel %vm792, %v7261, %v7269
        %v7272 = vshrl.u32 %v7134, 16
        %v7274 = vrot.slane %v7272, 3
        %v7275 = vshll.u32 %v7134, 16
        %v7277 = vrot.slane %v7275, 4
        %v7278 = vor.u32 %v7274, %v7277
        %v7280 = vshrl.u32 %v7135, 16
        %v7282 = vrot.slane %v7280, 3
        %v7283 = vshll.u32 %v7135, 16
        %v7285 = vrot.slane %v7283, 4
        %v7286 = vor.u32 %v7282, %v7285
        %v7287 = vsel %vm792, %v7278, %v7286
        %v7289 = vshrl.u32 %v7136, 16
        %v7291 = vrot.slane %v7289, 3
        %v7292 = vshll.u32 %v7136, 16
        %v7294 = vrot.slane %v7292, 4
        %v7295 = vor.u32 %v7291, %v7294
        %v7297 = vshrl.u32 %v7137, 16
        %v7299 = vrot.slane %v7297, 3
        %v7300 = vshll.u32 %v7137, 16
        %v7302 = vrot.slane %v7300, 4
        %v7303 = vor.u32 %v7299, %v7302
        %v7304 = vsel %vm792, %v7295, %v7303
        %v7306 = vshrl.u32 %v7138, 16
        %v7308 = vrot.slane %v7306, 3
        %v7309 = vshll.u32 %v7138, 16
        %v7311 = vrot.slane %v7309, 4
        %v7312 = vor.u32 %v7308, %v7311
        %v7314 = vshrl.u32 %v7139, 16
        %v7316 = vrot.slane %v7314, 3
        %v7317 = vshll.u32 %v7139, 16
        %v7319 = vrot.slane %v7317, 4
        %v7320 = vor.u32 %v7316, %v7319
        %v7321 = vsel %vm792, %v7312, %v7320
        %v7323 = vshrl.u32 %v7140, 16
        %v7325 = vrot.slane %v7323, 3
        %v7326 = vshll.u32 %v7140, 16
        %v7328 = vrot.slane %v7326, 4
        %v7329 = vor.u32 %v7325, %v7328
        %v7331 = vshrl.u32 %v7141, 16
        %v7333 = vrot.slane %v7331, 3
        %v7334 = vshll.u32 %v7141, 16
        %v7336 = vrot.slane %v7334, 4
        %v7337 = vor.u32 %v7333, %v7336
        %v7338 = vsel %vm792, %v7329, %v7337
        %v7340 = vshrl.u32 %v7142, 16
        %v7342 = vrot.slane %v7340, 3
        %v7343 = vshll.u32 %v7142, 16
        %v7345 = vrot.slane %v7343, 4
        %v7346 = vor.u32 %v7342, %v7345
        %v7348 = vshrl.u32 %v7143, 16
        %v7350 = vrot.slane %v7348, 3
        %v7351 = vshll.u32 %v7143, 16
        %v7353 = vrot.slane %v7351, 4
        %v7354 = vor.u32 %v7350, %v7353
        %v7355 = vsel %vm792, %v7346, %v7354
        %v7357 = vshrl.u32 %v7144, 16
        %v7359 = vrot.slane %v7357, 3
        %v7360 = vshll.u32 %v7144, 16
        %v7362 = vrot.slane %v7360, 4
        %v7363 = vor.u32 %v7359, %v7362
        %v7365 = vshrl.u32 %v7145, 16
        %v7367 = vrot.slane %v7365, 3
        %v7368 = vshll.u32 %v7145, 16
        %v7370 = vrot.slane %v7368, 4
        %v7371 = vor.u32 %v7367, %v7370
        %v7372 = vsel %vm792, %v7363, %v7371
        %v7374 = vshrl.u32 %v7146, 16
        %v7376 = vrot.slane %v7374, 3
        %v7377 = vshll.u32 %v7146, 16
        %v7379 = vrot.slane %v7377, 4
        %v7380 = vor.u32 %v7376, %v7379
        %v7382 = vshrl.u32 %v7147, 16
        %v7384 = vrot.slane %v7382, 3
        %v7385 = vshll.u32 %v7147, 16
        %v7387 = vrot.slane %v7385, 4
        %v7388 = vor.u32 %v7384, %v7387
        %v7389 = vsel %vm792, %v7380, %v7388
        %v7391 = vshrl.u32 %v7148, 16
        %v7393 = vrot.slane %v7391, 3
        %v7394 = vshll.u32 %v7148, 16
        %v7396 = vrot.slane %v7394, 4
        %v7397 = vor.u32 %v7393, %v7396
        %v7399 = vshrl.u32 %v7149, 16
        %v7401 = vrot.slane %v7399, 3
        %v7402 = vshll.u32 %v7149, 16
        %v7404 = vrot.slane %v7402, 4
        %v7405 = vor.u32 %v7401, %v7404
        %v7406 = vsel %vm792, %v7397, %v7405
        %v7408 = vshrl.u32 %v7150, 16
        %v7410 = vrot.slane %v7408, 3
        %v7411 = vshll.u32 %v7150, 16
        %v7413 = vrot.slane %v7411, 4
        %v7414 = vor.u32 %v7410, %v7413
        %v7416 = vshrl.u32 %v7151, 16
        %v7418 = vrot.slane %v7416, 3
        %v7419 = vshll.u32 %v7151, 16
        %v7421 = vrot.slane %v7419, 4
        %v7422 = vor.u32 %v7418, %v7421
        %v7423 = vsel %vm792, %v7414, %v7422
        %s7440 = scalar_lea.vmem [#allocation10], 192
        %v7441 = vld [vmem:[%s7440] sm:$0xf]
        %v7442 = vld [vmem:[%s7440 + $0x4] sm:$0xf]
        %v7443 = vld [vmem:[%s7440 + $0x8] sm:$0xf]
        %v7444 = vld [vmem:[%s7440 + $0xc] sm:$0xf]
        %v7445 = vld [vmem:[%s7440 + $0x10] sm:$0xf]
        %v7446 = vld [vmem:[%s7440 + $0x14] sm:$0xf]
        %v7447 = vld [vmem:[%s7440 + $0x18] sm:$0xf]
        %v7448 = vld [vmem:[%s7440 + $0x1c] sm:$0xf]
        %v7449 = vld [vmem:[%s7440 + $0x20] sm:$0xf]
        %v7450 = vld [vmem:[%s7440 + $0x24] sm:$0xf]
        %v7451 = vld [vmem:[%s7440 + $0x28] sm:$0xf]
        %v7452 = vld [vmem:[%s7440 + $0x2c] sm:$0xf]
        %v7453 = vld [vmem:[%s7440 + $0x30] sm:$0xf]
        %v7454 = vld [vmem:[%s7440 + $0x34] sm:$0xf]
        %v7455 = vld [vmem:[%s7440 + $0x38] sm:$0xf]
        %v7456 = vld [vmem:[%s7440 + $0x3c] sm:$0xf]
        %v7473 = vunpack.c.l.b16 %v7441
        %v7474 = vunpack.c.l.b16 %v7442
        %v7475 = vunpack.c.l.b16 %v7443
        %v7476 = vunpack.c.l.b16 %v7444
        %v7477 = vunpack.c.l.b16 %v7445
        %v7478 = vunpack.c.l.b16 %v7446
        %v7479 = vunpack.c.l.b16 %v7447
        %v7480 = vunpack.c.l.b16 %v7448
        %v7481 = vunpack.c.l.b16 %v7449
        %v7482 = vunpack.c.l.b16 %v7450
        %v7483 = vunpack.c.l.b16 %v7451
        %v7484 = vunpack.c.l.b16 %v7452
        %v7485 = vunpack.c.l.b16 %v7453
        %v7486 = vunpack.c.l.b16 %v7454
        %v7487 = vunpack.c.l.b16 %v7455
        %v7488 = vunpack.c.l.b16 %v7456
        %v7489 = vpack.c.b16 %v7474, %v7473
        %v7490 = vpack.c.b16 %v7476, %v7475
        %v7491 = vpack.c.b16 %v7478, %v7477
        %v7492 = vpack.c.b16 %v7480, %v7479
        %v7493 = vpack.c.b16 %v7482, %v7481
        %v7494 = vpack.c.b16 %v7484, %v7483
        %v7495 = vpack.c.b16 %v7486, %v7485
        %v7496 = vpack.c.b16 %v7488, %v7487
        %7505 = vmatprep.subr.bf16.mxu0 0
        %7506 = vmatpush1.bf16.msra.mxu0 %v7489
        %7507 = vmatprep.subr.bf16.mxu0 0
        %7508 = vmatpush1.bf16.msra.mxu0 %v7490
        %7509 = vmatprep.subr.bf16.mxu0 0
        %7510 = vmatpush1.bf16.msra.mxu0 %v7491
        %7511 = vmatprep.subr.bf16.mxu0 0
        %7512 = vmatpush1.bf16.msra.mxu0 %v7492
        %7513 = vmatprep.subr.bf16.mxu0 0
        %7514 = vmatpush1.bf16.msra.mxu0 %v7493
        %7515 = vmatprep.subr.bf16.mxu0 0
        %7516 = vmatpush1.bf16.msra.mxu0 %v7494
        %7517 = vmatprep.subr.bf16.mxu0 0
        %7518 = vmatpush1.bf16.msra.mxu0 %v7495
        %7519 = vmatprep.subr.bf16.mxu0 0
        %7520 = vmatpush1.bf16.msra.mxu0 %v7496
        %7521 = vmatprep.subr.bf16.mxu0 0
        %7522 = vmatpush1.bf16.msra.mxu0 0
        %7523 = vmatprep.subr.bf16.mxu0 0
        %7524 = vmatpush1.bf16.msra.mxu0 0
        %7525 = vmatprep.subr.bf16.mxu0 0
        %7526 = vmatpush1.bf16.msra.mxu0 0
        %7527 = vmatprep.subr.bf16.mxu0 0
        %7528 = vmatpush1.bf16.msra.mxu0 0
        %7529 = vmatprep.subr.bf16.mxu0 0
        %7530 = vmatpush1.bf16.msra.mxu0 0
        %7531 = vmatprep.subr.bf16.mxu0 0
        %7532 = vmatpush1.bf16.msra.mxu0 0
        %7533 = vmatprep.subr.bf16.mxu0 0
        %7534 = vmatpush1.bf16.msra.mxu0 0
        %7535 = vmatprep.subr.bf16.mxu0 0
        %7536 = vmatpush1.bf16.msra.mxu0 0
        %7537 = vmatprep.mubr.bf16.mxu0 0
        %7538 = vmatmul.mubr.bf16.gmra.mrb[0].mxu0 %v7168
        %v7539 = vpop.f32.mrb[0].mxu0
        %v7540 = vadd.f32 0.0, %v7539
        %v7541 = vpop.f32.mrb[0].mxu0
        %v7542 = vpop.f32.mrb[0].mxu0
        %v7543 = vadd.f32 0.0, %v7542
        %v7544 = vpop.f32.mrb[0].mxu0
        %7545 = vmatprep.mubr.bf16.mxu0 0
        %7546 = vmatmul.mubr.bf16.gmra.mrb[0].mxu0 %v7185
        %v7547 = vpop.f32.mrb[0].mxu0
        %v7548 = vadd.f32 0.0, %v7547
        %v7549 = vpop.f32.mrb[0].mxu0
        %v7550 = vpop.f32.mrb[0].mxu0
        %v7551 = vadd.f32 0.0, %v7550
        %v7552 = vpop.f32.mrb[0].mxu0
        %7553 = vmatprep.mubr.bf16.mxu0 0
        %7554 = vmatmul.mubr.bf16.gmra.mrb[0].mxu0 %v7202
        %v7555 = vpop.f32.mrb[0].mxu0
        %v7556 = vadd.f32 0.0, %v7555
        %v7557 = vpop.f32.mrb[0].mxu0
        %v7558 = vpop.f32.mrb[0].mxu0
        %v7559 = vadd.f32 0.0, %v7558
        %v7560 = vpop.f32.mrb[0].mxu0
        %7561 = vmatprep.mubr.bf16.mxu0 0
        %7562 = vmatmul.mubr.bf16.gmra.mrb[0].mxu0 %v7219
        %v7563 = vpop.f32.mrb[0].mxu0
        %v7564 = vadd.f32 0.0, %v7563
        %v7565 = vpop.f32.mrb[0].mxu0
        %v7566 = vpop.f32.mrb[0].mxu0
        %v7567 = vadd.f32 0.0, %v7566
        %v7568 = vpop.f32.mrb[0].mxu0
        %7569 = vmatprep.mubr.bf16.mxu0 0
        %7570 = vmatmul.mubr.bf16.gmra.mrb[0].mxu0 %v7236
        %v7571 = vpop.f32.mrb[0].mxu0
        %v7572 = vadd.f32 0.0, %v7571
        %v7573 = vpop.f32.mrb[0].mxu0
        %v7574 = vpop.f32.mrb[0].mxu0
        %v7575 = vadd.f32 0.0, %v7574
        %v7576 = vpop.f32.mrb[0].mxu0
        %7577 = vmatprep.mubr.bf16.mxu0 0
        %7578 = vmatmul.mubr.bf16.gmra.mrb[0].mxu0 %v7253
        %v7579 = vpop.f32.mrb[0].mxu0
        %v7580 = vadd.f32 0.0, %v7579
        %v7581 = vpop.f32.mrb[0].mxu0
        %v7582 = vpop.f32.mrb[0].mxu0
        %v7583 = vadd.f32 0.0, %v7582
        %v7584 = vpop.f32.mrb[0].mxu0
        %7585 = vmatprep.mubr.bf16.mxu0 0
        %7586 = vmatmul.mubr.bf16.gmra.mrb[0].mxu0 %v7270
        %v7587 = vpop.f32.mrb[0].mxu0
        %v7588 = vadd.f32 0.0, %v7587
        %v7589 = vpop.f32.mrb[0].mxu0
        %v7590 = vpop.f32.mrb[0].mxu0
        %v7591 = vadd.f32 0.0, %v7590
        %v7592 = vpop.f32.mrb[0].mxu0
        %7593 = vmatprep.mubr.bf16.mxu0 0
        %7594 = vmatmul.mubr.bf16.gmra.mrb[0].mxu0 %v7287
        %v7595 = vpop.f32.mrb[0].mxu0
        %v7596 = vadd.f32 0.0, %v7595
        %v7597 = vpop.f32.mrb[0].mxu0
        %v7598 = vpop.f32.mrb[0].mxu0
        %v7599 = vadd.f32 0.0, %v7598
        %v7600 = vpop.f32.mrb[0].mxu0
        %7601 = vmatprep.mubr.bf16.mxu0 0
        %7602 = vmatmul.mubr.bf16.gmra.mrb[0].mxu0 %v7304
        %v7603 = vpop.f32.mrb[0].mxu0
        %v7604 = vadd.f32 0.0, %v7603
        %v7605 = vpop.f32.mrb[0].mxu0
        %v7606 = vpop.f32.mrb[0].mxu0
        %v7607 = vadd.f32 0.0, %v7606
        %v7608 = vpop.f32.mrb[0].mxu0
        %7609 = vmatprep.mubr.bf16.mxu0 0
        %7610 = vmatmul.mubr.bf16.gmra.mrb[0].mxu0 %v7321
        %v7611 = vpop.f32.mrb[0].mxu0
        %v7612 = vadd.f32 0.0, %v7611
        %v7613 = vpop.f32.mrb[0].mxu0
        %v7614 = vpop.f32.mrb[0].mxu0
        %v7615 = vadd.f32 0.0, %v7614
        %v7616 = vpop.f32.mrb[0].mxu0
        %7617 = vmatprep.mubr.bf16.mxu0 0
        %7618 = vmatmul.mubr.bf16.gmra.mrb[0].mxu0 %v7338
        %v7619 = vpop.f32.mrb[0].mxu0
        %v7620 = vadd.f32 0.0, %v7619
        %v7621 = vpop.f32.mrb[0].mxu0
        %v7622 = vpop.f32.mrb[0].mxu0
        %v7623 = vadd.f32 0.0, %v7622
        %v7624 = vpop.f32.mrb[0].mxu0
        %7625 = vmatprep.mubr.bf16.mxu0 0
        %7626 = vmatmul.mubr.bf16.gmra.mrb[0].mxu0 %v7355
        %v7627 = vpop.f32.mrb[0].mxu0
        %v7628 = vadd.f32 0.0, %v7627
        %v7629 = vpop.f32.mrb[0].mxu0
        %v7630 = vpop.f32.mrb[0].mxu0
        %v7631 = vadd.f32 0.0, %v7630
        %v7632 = vpop.f32.mrb[0].mxu0
        %7633 = vmatprep.mubr.bf16.mxu0 0
        %7634 = vmatmul.mubr.bf16.gmra.mrb[0].mxu0 %v7372
        %v7635 = vpop.f32.mrb[0].mxu0
        %v7636 = vadd.f32 0.0, %v7635
        %v7637 = vpop.f32.mrb[0].mxu0
        %v7638 = vpop.f32.mrb[0].mxu0
        %v7639 = vadd.f32 0.0, %v7638
        %v7640 = vpop.f32.mrb[0].mxu0
        %7641 = vmatprep.mubr.bf16.mxu0 0
        %7642 = vmatmul.mubr.bf16.gmra.mrb[0].mxu0 %v7389
        %v7643 = vpop.f32.mrb[0].mxu0
        %v7644 = vadd.f32 0.0, %v7643
        %v7645 = vpop.f32.mrb[0].mxu0
        %v7646 = vpop.f32.mrb[0].mxu0
        %v7647 = vadd.f32 0.0, %v7646
        %v7648 = vpop.f32.mrb[0].mxu0
        %7649 = vmatprep.mubr.bf16.mxu0 0
        %7650 = vmatmul.mubr.bf16.gmra.mrb[0].mxu0 %v7406
        %v7651 = vpop.f32.mrb[0].mxu0
        %v7652 = vadd.f32 0.0, %v7651
        %v7653 = vpop.f32.mrb[0].mxu0
        %v7654 = vpop.f32.mrb[0].mxu0
        %v7655 = vadd.f32 0.0, %v7654
        %v7656 = vpop.f32.mrb[0].mxu0
        %7657 = vmatprep.mubr.bf16.mxu0 0
        %7658 = vmatmul.mubr.bf16.gmra.mrb[0].mxu0 %v7423
        %v7659 = vpop.f32.mrb[0].mxu0
        %v7660 = vadd.f32 0.0, %v7659
        %v7661 = vpop.f32.mrb[0].mxu0
        %v7662 = vpop.f32.mrb[0].mxu0
        %v7663 = vadd.f32 0.0, %v7662
        %v7664 = vpop.f32.mrb[0].mxu0
        %7665 = vdwg.mxu0
        %v7666 = vadd.f32 %v7088, %v7540
        %v7667 = vadd.f32 %v7089, %v7543
        %v7668 = vadd.f32 %v7090, %v7548
        %v7669 = vadd.f32 %v7091, %v7551
        %v7670 = vadd.f32 %v7092, %v7556
        %v7671 = vadd.f32 %v7093, %v7559
        %v7672 = vadd.f32 %v7094, %v7564
        %v7673 = vadd.f32 %v7095, %v7567
        %v7674 = vadd.f32 %v7096, %v7572
        %v7675 = vadd.f32 %v7097, %v7575
        %v7676 = vadd.f32 %v7098, %v7580
        %v7677 = vadd.f32 %v7099, %v7583
        %v7678 = vadd.f32 %v7100, %v7588
        %v7679 = vadd.f32 %v7101, %v7591
        %v7680 = vadd.f32 %v7102, %v7596
        %v7681 = vadd.f32 %v7103, %v7599
        %v7682 = vadd.f32 %v7104, %v7604
        %v7683 = vadd.f32 %v7105, %v7607
        %v7684 = vadd.f32 %v7106, %v7612
        %v7685 = vadd.f32 %v7107, %v7615
        %v7686 = vadd.f32 %v7108, %v7620
        %v7687 = vadd.f32 %v7109, %v7623
        %v7688 = vadd.f32 %v7110, %v7628
        %v7689 = vadd.f32 %v7111, %v7631
        %v7690 = vadd.f32 %v7112, %v7636
        %v7691 = vadd.f32 %v7113, %v7639
        %v7692 = vadd.f32 %v7114, %v7644
        %v7693 = vadd.f32 %v7115, %v7647
        %v7694 = vadd.f32 %v7116, %v7652
        %v7695 = vadd.f32 %v7117, %v7655
        %v7696 = vadd.f32 %v7118, %v7660
        %v7697 = vadd.f32 %v7119, %v7663
        %v7698 = vld [vmem:[%s5482] sm:$0xf0]
        %v7699 = vld [vmem:[%s5482 + $0x10] sm:$0xf0]
        %v7700 = vld [vmem:[%s5482 + $0x20] sm:$0xf0]
        %v7701 = vld [vmem:[%s5482 + $0x30] sm:$0xf0]
        %v7702 = vld [vmem:[%s5482 + $0x40] sm:$0xf0]
        %v7703 = vld [vmem:[%s5482 + $0x50] sm:$0xf0]
        %v7704 = vld [vmem:[%s5482 + $0x60] sm:$0xf0]
        %v7705 = vld [vmem:[%s5482 + $0x70] sm:$0xf0]
        %v7706 = vld [vmem:[%s5482 + $0x80] sm:$0xf0]
        %v7707 = vld [vmem:[%s5482 + $0x90] sm:$0xf0]
        %v7708 = vld [vmem:[%s5482 + $0xa0] sm:$0xf0]
        %v7709 = vld [vmem:[%s5482 + $0xb0] sm:$0xf0]
        %v7710 = vld [vmem:[%s5482 + $0xc0] sm:$0xf0]
        %v7711 = vld [vmem:[%s5482 + $0xd0] sm:$0xf0]
        %v7712 = vld [vmem:[%s5482 + $0xe0] sm:$0xf0]
        %v7713 = vld [vmem:[%s5482 + $0xf0] sm:$0xf0]
        %v7746 = vrot.slane %v7698, 4
        %v7747 = vrot.slane %v7121, 4
        %v7748 = vsel %vm1322, %v7746, %v7747
        %v7749 = vrot.slane %v7699, 4
        %v7750 = vrot.slane %v7123, 4
        %v7751 = vsel %vm1322, %v7749, %v7750
        %v7752 = vrot.slane %v7700, 4
        %v7753 = vrot.slane %v7125, 4
        %v7754 = vsel %vm1322, %v7752, %v7753
        %v7755 = vrot.slane %v7701, 4
        %v7756 = vrot.slane %v7127, 4
        %v7757 = vsel %vm1322, %v7755, %v7756
        %v7758 = vrot.slane %v7702, 4
        %v7759 = vrot.slane %v7129, 4
        %v7760 = vsel %vm1322, %v7758, %v7759
        %v7761 = vrot.slane %v7703, 4
        %v7762 = vrot.slane %v7131, 4
        %v7763 = vsel %vm1322, %v7761, %v7762
        %v7764 = vrot.slane %v7704, 4
        %v7765 = vrot.slane %v7133, 4
        %v7766 = vsel %vm1322, %v7764, %v7765
        %v7767 = vrot.slane %v7705, 4
        %v7768 = vrot.slane %v7135, 4
        %v7769 = vsel %vm1322, %v7767, %v7768
        %v7770 = vrot.slane %v7706, 4
        %v7771 = vrot.slane %v7137, 4
        %v7772 = vsel %vm1322, %v7770, %v7771
        %v7773 = vrot.slane %v7707, 4
        %v7774 = vrot.slane %v7139, 4
        %v7775 = vsel %vm1322, %v7773, %v7774
        %v7776 = vrot.slane %v7708, 4
        %v7777 = vrot.slane %v7141, 4
        %v7778 = vsel %vm1322, %v7776, %v7777
        %v7779 = vrot.slane %v7709, 4
        %v7780 = vrot.slane %v7143, 4
        %v7781 = vsel %vm1322, %v7779, %v7780
        %v7782 = vrot.slane %v7710, 4
        %v7783 = vrot.slane %v7145, 4
        %v7784 = vsel %vm1322, %v7782, %v7783
        %v7785 = vrot.slane %v7711, 4
        %v7786 = vrot.slane %v7147, 4
        %v7787 = vsel %vm1322, %v7785, %v7786
        %v7788 = vrot.slane %v7712, 4
        %v7789 = vrot.slane %v7149, 4
        %v7790 = vsel %vm1322, %v7788, %v7789
        %v7791 = vrot.slane %v7713, 4
        %v7792 = vrot.slane %v7151, 4
        %v7793 = vsel %vm1322, %v7791, %v7792
        %s7810 = scalar_lea.vmem [#allocation10], 256
        %v7811 = vld [vmem:[%s7810] sm:$0xf]
        %v7812 = vld [vmem:[%s7810 + $0x4] sm:$0xf]
        %v7813 = vld [vmem:[%s7810 + $0x8] sm:$0xf]
        %v7814 = vld [vmem:[%s7810 + $0xc] sm:$0xf]
        %v7815 = vld [vmem:[%s7810 + $0x10] sm:$0xf]
        %v7816 = vld [vmem:[%s7810 + $0x14] sm:$0xf]
        %v7817 = vld [vmem:[%s7810 + $0x18] sm:$0xf]
        %v7818 = vld [vmem:[%s7810 + $0x1c] sm:$0xf]
        %v7819 = vld [vmem:[%s7810 + $0x20] sm:$0xf]
        %v7820 = vld [vmem:[%s7810 + $0x24] sm:$0xf]
        %v7821 = vld [vmem:[%s7810 + $0x28] sm:$0xf]
        %v7822 = vld [vmem:[%s7810 + $0x2c] sm:$0xf]
        %v7823 = vld [vmem:[%s7810 + $0x30] sm:$0xf]
        %v7824 = vld [vmem:[%s7810 + $0x34] sm:$0xf]
        %v7825 = vld [vmem:[%s7810 + $0x38] sm:$0xf]
        %v7826 = vld [vmem:[%s7810 + $0x3c] sm:$0xf]
        %v7843 = vunpack.c.l.b16 %v7811
        %v7844 = vunpack.c.l.b16 %v7812
        %v7845 = vunpack.c.l.b16 %v7813
        %v7846 = vunpack.c.l.b16 %v7814
        %v7847 = vunpack.c.l.b16 %v7815
        %v7848 = vunpack.c.l.b16 %v7816
        %v7849 = vunpack.c.l.b16 %v7817
        %v7850 = vunpack.c.l.b16 %v7818
        %v7851 = vunpack.c.l.b16 %v7819
        %v7852 = vunpack.c.l.b16 %v7820
        %v7853 = vunpack.c.l.b16 %v7821
        %v7854 = vunpack.c.l.b16 %v7822
        %v7855 = vunpack.c.l.b16 %v7823
        %v7856 = vunpack.c.l.b16 %v7824
        %v7857 = vunpack.c.l.b16 %v7825
        %v7858 = vunpack.c.l.b16 %v7826
        %v7859 = vpack.c.b16 %v7844, %v7843
        %v7860 = vpack.c.b16 %v7846, %v7845
        %v7861 = vpack.c.b16 %v7848, %v7847
        %v7862 = vpack.c.b16 %v7850, %v7849
        %v7863 = vpack.c.b16 %v7852, %v7851
        %v7864 = vpack.c.b16 %v7854, %v7853
        %v7865 = vpack.c.b16 %v7856, %v7855
        %v7866 = vpack.c.b16 %v7858, %v7857
        %7875 = vmatprep.subr.bf16.mxu0 0
        %7876 = vmatpush1.bf16.msra.mxu0 %v7859
        %7877 = vmatprep.subr.bf16.mxu0 0
        %7878 = vmatpush1.bf16.msra.mxu0 %v7860
        %7879 = vmatprep.subr.bf16.mxu0 0
        %7880 = vmatpush1.bf16.msra.mxu0 %v7861
        %7881 = vmatprep.subr.bf16.mxu0 0
        %7882 = vmatpush1.bf16.msra.mxu0 %v7862
        %7883 = vmatprep.subr.bf16.mxu0 0
        %7884 = vmatpush1.bf16.msra.mxu0 %v7863
        %7885 = vmatprep.subr.bf16.mxu0 0
        %7886 = vmatpush1.bf16.msra.mxu0 %v7864
        %7887 = vmatprep.subr.bf16.mxu0 0
        %7888 = vmatpush1.bf16.msra.mxu0 %v7865
        %7889 = vmatprep.subr.bf16.mxu0 0
        %7890 = vmatpush1.bf16.msra.mxu0 %v7866
        %7891 = vmatprep.subr.bf16.mxu0 0
        %7892 = vmatpush1.bf16.msra.mxu0 0
        %7893 = vmatprep.subr.bf16.mxu0 0
        %7894 = vmatpush1.bf16.msra.mxu0 0
        %7895 = vmatprep.subr.bf16.mxu0 0
        %7896 = vmatpush1.bf16.msra.mxu0 0
        %7897 = vmatprep.subr.bf16.mxu0 0
        %7898 = vmatpush1.bf16.msra.mxu0 0
        %7899 = vmatprep.subr.bf16.mxu0 0
        %7900 = vmatpush1.bf16.msra.mxu0 0
        %7901 = vmatprep.subr.bf16.mxu0 0
        %7902 = vmatpush1.bf16.msra.mxu0 0
        %7903 = vmatprep.subr.bf16.mxu0 0
        %7904 = vmatpush1.bf16.msra.mxu0 0
        %7905 = vmatprep.subr.bf16.mxu0 0
        %7906 = vmatpush1.bf16.msra.mxu0 0
        %7907 = vmatprep.mubr.bf16.mxu0 0
        %7908 = vmatmul.mubr.bf16.gmra.mrb[0].mxu0 %v7748
        %v7909 = vpop.f32.mrb[0].mxu0
        %v7910 = vadd.f32 0.0, %v7909
        %v7911 = vpop.f32.mrb[0].mxu0
        %v7912 = vpop.f32.mrb[0].mxu0
        %v7913 = vadd.f32 0.0, %v7912
        %v7914 = vpop.f32.mrb[0].mxu0
        %7915 = vmatprep.mubr.bf16.mxu0 0
        %7916 = vmatmul.mubr.bf16.gmra.mrb[0].mxu0 %v7751
        %v7917 = vpop.f32.mrb[0].mxu0
        %v7918 = vadd.f32 0.0, %v7917
        %v7919 = vpop.f32.mrb[0].mxu0
        %v7920 = vpop.f32.mrb[0].mxu0
        %v7921 = vadd.f32 0.0, %v7920
        %v7922 = vpop.f32.mrb[0].mxu0
        %7923 = vmatprep.mubr.bf16.mxu0 0
        %7924 = vmatmul.mubr.bf16.gmra.mrb[0].mxu0 %v7754
        %v7925 = vpop.f32.mrb[0].mxu0
        %v7926 = vadd.f32 0.0, %v7925
        %v7927 = vpop.f32.mrb[0].mxu0
        %v7928 = vpop.f32.mrb[0].mxu0
        %v7929 = vadd.f32 0.0, %v7928
        %v7930 = vpop.f32.mrb[0].mxu0
        %7931 = vmatprep.mubr.bf16.mxu0 0
        %7932 = vmatmul.mubr.bf16.gmra.mrb[0].mxu0 %v7757
        %v7933 = vpop.f32.mrb[0].mxu0
        %v7934 = vadd.f32 0.0, %v7933
        %v7935 = vpop.f32.mrb[0].mxu0
        %v7936 = vpop.f32.mrb[0].mxu0
        %v7937 = vadd.f32 0.0, %v7936
        %v7938 = vpop.f32.mrb[0].mxu0
        %7939 = vmatprep.mubr.bf16.mxu0 0
        %7940 = vmatmul.mubr.bf16.gmra.mrb[0].mxu0 %v7760
        %v7941 = vpop.f32.mrb[0].mxu0
        %v7942 = vadd.f32 0.0, %v7941
        %v7943 = vpop.f32.mrb[0].mxu0
        %v7944 = vpop.f32.mrb[0].mxu0
        %v7945 = vadd.f32 0.0, %v7944
        %v7946 = vpop.f32.mrb[0].mxu0
        %7947 = vmatprep.mubr.bf16.mxu0 0
        %7948 = vmatmul.mubr.bf16.gmra.mrb[0].mxu0 %v7763
        %v7949 = vpop.f32.mrb[0].mxu0
        %v7950 = vadd.f32 0.0, %v7949
        %v7951 = vpop.f32.mrb[0].mxu0
        %v7952 = vpop.f32.mrb[0].mxu0
        %v7953 = vadd.f32 0.0, %v7952
        %v7954 = vpop.f32.mrb[0].mxu0
        %7955 = vmatprep.mubr.bf16.mxu0 0
        %7956 = vmatmul.mubr.bf16.gmra.mrb[0].mxu0 %v7766
        %v7957 = vpop.f32.mrb[0].mxu0
        %v7958 = vadd.f32 0.0, %v7957
        %v7959 = vpop.f32.mrb[0].mxu0
        %v7960 = vpop.f32.mrb[0].mxu0
        %v7961 = vadd.f32 0.0, %v7960
        %v7962 = vpop.f32.mrb[0].mxu0
        %7963 = vmatprep.mubr.bf16.mxu0 0
        %7964 = vmatmul.mubr.bf16.gmra.mrb[0].mxu0 %v7769
        %v7965 = vpop.f32.mrb[0].mxu0
        %v7966 = vadd.f32 0.0, %v7965
        %v7967 = vpop.f32.mrb[0].mxu0
        %v7968 = vpop.f32.mrb[0].mxu0
        %v7969 = vadd.f32 0.0, %v7968
        %v7970 = vpop.f32.mrb[0].mxu0
        %7971 = vmatprep.mubr.bf16.mxu0 0
        %7972 = vmatmul.mubr.bf16.gmra.mrb[0].mxu0 %v7772
        %v7973 = vpop.f32.mrb[0].mxu0
        %v7974 = vadd.f32 0.0, %v7973
        %v7975 = vpop.f32.mrb[0].mxu0
        %v7976 = vpop.f32.mrb[0].mxu0
        %v7977 = vadd.f32 0.0, %v7976
        %v7978 = vpop.f32.mrb[0].mxu0
        %7979 = vmatprep.mubr.bf16.mxu0 0
        %7980 = vmatmul.mubr.bf16.gmra.mrb[0].mxu0 %v7775
        %v7981 = vpop.f32.mrb[0].mxu0
        %v7982 = vadd.f32 0.0, %v7981
        %v7983 = vpop.f32.mrb[0].mxu0
        %v7984 = vpop.f32.mrb[0].mxu0
        %v7985 = vadd.f32 0.0, %v7984
        %v7986 = vpop.f32.mrb[0].mxu0
        %7987 = vmatprep.mubr.bf16.mxu0 0
        %7988 = vmatmul.mubr.bf16.gmra.mrb[0].mxu0 %v7778
        %v7989 = vpop.f32.mrb[0].mxu0
        %v7990 = vadd.f32 0.0, %v7989
        %v7991 = vpop.f32.mrb[0].mxu0
        %v7992 = vpop.f32.mrb[0].mxu0
        %v7993 = vadd.f32 0.0, %v7992
        %v7994 = vpop.f32.mrb[0].mxu0
        %7995 = vmatprep.mubr.bf16.mxu0 0
        %7996 = vmatmul.mubr.bf16.gmra.mrb[0].mxu0 %v7781
        %v7997 = vpop.f32.mrb[0].mxu0
        %v7998 = vadd.f32 0.0, %v7997
        %v7999 = vpop.f32.mrb[0].mxu0
        %v8000 = vpop.f32.mrb[0].mxu0
        %v8001 = vadd.f32 0.0, %v8000
        %v8002 = vpop.f32.mrb[0].mxu0
        %8003 = vmatprep.mubr.bf16.mxu0 0
        %8004 = vmatmul.mubr.bf16.gmra.mrb[0].mxu0 %v7784
        %v8005 = vpop.f32.mrb[0].mxu0
        %v8006 = vadd.f32 0.0, %v8005
        %v8007 = vpop.f32.mrb[0].mxu0
        %v8008 = vpop.f32.mrb[0].mxu0
        %v8009 = vadd.f32 0.0, %v8008
        %v8010 = vpop.f32.mrb[0].mxu0
        %8011 = vmatprep.mubr.bf16.mxu0 0
        %8012 = vmatmul.mubr.bf16.gmra.mrb[0].mxu0 %v7787
        %v8013 = vpop.f32.mrb[0].mxu0
        %v8014 = vadd.f32 0.0, %v8013
        %v8015 = vpop.f32.mrb[0].mxu0
        %v8016 = vpop.f32.mrb[0].mxu0
        %v8017 = vadd.f32 0.0, %v8016
        %v8018 = vpop.f32.mrb[0].mxu0
        %8019 = vmatprep.mubr.bf16.mxu0 0
        %8020 = vmatmul.mubr.bf16.gmra.mrb[0].mxu0 %v7790
        %v8021 = vpop.f32.mrb[0].mxu0
        %v8022 = vadd.f32 0.0, %v8021
        %v8023 = vpop.f32.mrb[0].mxu0
        %v8024 = vpop.f32.mrb[0].mxu0
        %v8025 = vadd.f32 0.0, %v8024
        %v8026 = vpop.f32.mrb[0].mxu0
        %8027 = vmatprep.mubr.bf16.mxu0 0
        %8028 = vmatmul.mubr.bf16.gmra.mrb[0].mxu0 %v7793
        %v8029 = vpop.f32.mrb[0].mxu0
        %v8030 = vadd.f32 0.0, %v8029
        %v8031 = vpop.f32.mrb[0].mxu0
        %v8032 = vpop.f32.mrb[0].mxu0
        %v8033 = vadd.f32 0.0, %v8032
        %v8034 = vpop.f32.mrb[0].mxu0
        %8035 = vdwg.mxu0
        %v8036 = vadd.f32 %v7666, %v7910
        %v8037 = vadd.f32 %v7667, %v7913
        %v8038 = vadd.f32 %v7668, %v7918
        %v8039 = vadd.f32 %v7669, %v7921
        %v8040 = vadd.f32 %v7670, %v7926
        %v8041 = vadd.f32 %v7671, %v7929
        %v8042 = vadd.f32 %v7672, %v7934
        %v8043 = vadd.f32 %v7673, %v7937
        %v8044 = vadd.f32 %v7674, %v7942
        %v8045 = vadd.f32 %v7675, %v7945
        %v8046 = vadd.f32 %v7676, %v7950
        %v8047 = vadd.f32 %v7677, %v7953
        %v8048 = vadd.f32 %v7678, %v7958
        %v8049 = vadd.f32 %v7679, %v7961
        %v8050 = vadd.f32 %v7680, %v7966
        %v8051 = vadd.f32 %v7681, %v7969
        %v8052 = vadd.f32 %v7682, %v7974
        %v8053 = vadd.f32 %v7683, %v7977
        %v8054 = vadd.f32 %v7684, %v7982
        %v8055 = vadd.f32 %v7685, %v7985
        %v8056 = vadd.f32 %v7686, %v7990
        %v8057 = vadd.f32 %v7687, %v7993
        %v8058 = vadd.f32 %v7688, %v7998
        %v8059 = vadd.f32 %v7689, %v8001
        %v8060 = vadd.f32 %v7690, %v8006
        %v8061 = vadd.f32 %v7691, %v8009
        %v8062 = vadd.f32 %v7692, %v8014
        %v8063 = vadd.f32 %v7693, %v8017
        %v8064 = vadd.f32 %v7694, %v8022
        %v8065 = vadd.f32 %v7695, %v8025
        %v8066 = vadd.f32 %v7696, %v8030
        %v8067 = vadd.f32 %v7697, %v8033
        %v8068 = vld [vmem:[%s5482 + $0x8] sm:$0x1f]
        %v8069 = vld [vmem:[%s5482 + $0x18] sm:$0x1f]
        %v8070 = vld [vmem:[%s5482 + $0x28] sm:$0x1f]
        %v8071 = vld [vmem:[%s5482 + $0x38] sm:$0x1f]
        %v8072 = vld [vmem:[%s5482 + $0x48] sm:$0x1f]
        %v8073 = vld [vmem:[%s5482 + $0x58] sm:$0x1f]
        %v8074 = vld [vmem:[%s5482 + $0x68] sm:$0x1f]
        %v8075 = vld [vmem:[%s5482 + $0x78] sm:$0x1f]
        %v8076 = vld [vmem:[%s5482 + $0x88] sm:$0x1f]
        %v8077 = vld [vmem:[%s5482 + $0x98] sm:$0x1f]
        %v8078 = vld [vmem:[%s5482 + $0xa8] sm:$0x1f]
        %v8079 = vld [vmem:[%s5482 + $0xb8] sm:$0x1f]
        %v8080 = vld [vmem:[%s5482 + $0xc8] sm:$0x1f]
        %v8081 = vld [vmem:[%s5482 + $0xd8] sm:$0x1f]
        %v8082 = vld [vmem:[%s5482 + $0xe8] sm:$0x1f]
        %v8083 = vld [vmem:[%s5482 + $0xf8] sm:$0x1f]
        %v8085 = vshrl.u32 %v7698, 16
        %v8087 = vrot.slane %v8085, 4
        %v8088 = vshll.u32 %v7698, 16
        %v8090 = vrot.slane %v8088, 5
        %v8091 = vor.u32 %v8087, %v8090
        %v8093 = vshrl.u32 %v8068, 16
        %v8095 = vrot.slane %v8093, 4
        %v8096 = vshll.u32 %v8068, 16
        %v8098 = vrot.slane %v8096, 5
        %v8099 = vor.u32 %v8095, %v8098
        %v8100 = vsel %vm1838, %v8091, %v8099
        %v8102 = vshrl.u32 %v7699, 16
        %v8104 = vrot.slane %v8102, 4
        %v8105 = vshll.u32 %v7699, 16
        %v8107 = vrot.slane %v8105, 5
        %v8108 = vor.u32 %v8104, %v8107
        %v8110 = vshrl.u32 %v8069, 16
        %v8112 = vrot.slane %v8110, 4
        %v8113 = vshll.u32 %v8069, 16
        %v8115 = vrot.slane %v8113, 5
        %v8116 = vor.u32 %v8112, %v8115
        %v8117 = vsel %vm1838, %v8108, %v8116
        %v8119 = vshrl.u32 %v7700, 16
        %v8121 = vrot.slane %v8119, 4
        %v8122 = vshll.u32 %v7700, 16
        %v8124 = vrot.slane %v8122, 5
        %v8125 = vor.u32 %v8121, %v8124
        %v8127 = vshrl.u32 %v8070, 16
        %v8129 = vrot.slane %v8127, 4
        %v8130 = vshll.u32 %v8070, 16
        %v8132 = vrot.slane %v8130, 5
        %v8133 = vor.u32 %v8129, %v8132
        %v8134 = vsel %vm1838, %v8125, %v8133
        %v8136 = vshrl.u32 %v7701, 16
        %v8138 = vrot.slane %v8136, 4
        %v8139 = vshll.u32 %v7701, 16
        %v8141 = vrot.slane %v8139, 5
        %v8142 = vor.u32 %v8138, %v8141
        %v8144 = vshrl.u32 %v8071, 16
        %v8146 = vrot.slane %v8144, 4
        %v8147 = vshll.u32 %v8071, 16
        %v8149 = vrot.slane %v8147, 5
        %v8150 = vor.u32 %v8146, %v8149
        %v8151 = vsel %vm1838, %v8142, %v8150
        %v8153 = vshrl.u32 %v7702, 16
        %v8155 = vrot.slane %v8153, 4
        %v8156 = vshll.u32 %v7702, 16
        %v8158 = vrot.slane %v8156, 5
        %v8159 = vor.u32 %v8155, %v8158
        %v8161 = vshrl.u32 %v8072, 16
        %v8163 = vrot.slane %v8161, 4
        %v8164 = vshll.u32 %v8072, 16
        %v8166 = vrot.slane %v8164, 5
        %v8167 = vor.u32 %v8163, %v8166
        %v8168 = vsel %vm1838, %v8159, %v8167
        %v8170 = vshrl.u32 %v7703, 16
        %v8172 = vrot.slane %v8170, 4
        %v8173 = vshll.u32 %v7703, 16
        %v8175 = vrot.slane %v8173, 5
        %v8176 = vor.u32 %v8172, %v8175
        %v8178 = vshrl.u32 %v8073, 16
        %v8180 = vrot.slane %v8178, 4
        %v8181 = vshll.u32 %v8073, 16
        %v8183 = vrot.slane %v8181, 5
        %v8184 = vor.u32 %v8180, %v8183
        %v8185 = vsel %vm1838, %v8176, %v8184
        %v8187 = vshrl.u32 %v7704, 16
        %v8189 = vrot.slane %v8187, 4
        %v8190 = vshll.u32 %v7704, 16
        %v8192 = vrot.slane %v8190, 5
        %v8193 = vor.u32 %v8189, %v8192
        %v8195 = vshrl.u32 %v8074, 16
        %v8197 = vrot.slane %v8195, 4
        %v8198 = vshll.u32 %v8074, 16
        %v8200 = vrot.slane %v8198, 5
        %v8201 = vor.u32 %v8197, %v8200
        %v8202 = vsel %vm1838, %v8193, %v8201
        %v8204 = vshrl.u32 %v7705, 16
        %v8206 = vrot.slane %v8204, 4
        %v8207 = vshll.u32 %v7705, 16
        %v8209 = vrot.slane %v8207, 5
        %v8210 = vor.u32 %v8206, %v8209
        %v8212 = vshrl.u32 %v8075, 16
        %v8214 = vrot.slane %v8212, 4
        %v8215 = vshll.u32 %v8075, 16
        %v8217 = vrot.slane %v8215, 5
        %v8218 = vor.u32 %v8214, %v8217
        %v8219 = vsel %vm1838, %v8210, %v8218
        %v8221 = vshrl.u32 %v7706, 16
        %v8223 = vrot.slane %v8221, 4
        %v8224 = vshll.u32 %v7706, 16
        %v8226 = vrot.slane %v8224, 5
        %v8227 = vor.u32 %v8223, %v8226
        %v8229 = vshrl.u32 %v8076, 16
        %v8231 = vrot.slane %v8229, 4
        %v8232 = vshll.u32 %v8076, 16
        %v8234 = vrot.slane %v8232, 5
        %v8235 = vor.u32 %v8231, %v8234
        %v8236 = vsel %vm1838, %v8227, %v8235
        %v8238 = vshrl.u32 %v7707, 16
        %v8240 = vrot.slane %v8238, 4
        %v8241 = vshll.u32 %v7707, 16
        %v8243 = vrot.slane %v8241, 5
        %v8244 = vor.u32 %v8240, %v8243
        %v8246 = vshrl.u32 %v8077, 16
        %v8248 = vrot.slane %v8246, 4
        %v8249 = vshll.u32 %v8077, 16
        %v8251 = vrot.slane %v8249, 5
        %v8252 = vor.u32 %v8248, %v8251
        %v8253 = vsel %vm1838, %v8244, %v8252
        %v8255 = vshrl.u32 %v7708, 16
        %v8257 = vrot.slane %v8255, 4
        %v8258 = vshll.u32 %v7708, 16
        %v8260 = vrot.slane %v8258, 5
        %v8261 = vor.u32 %v8257, %v8260
        %v8263 = vshrl.u32 %v8078, 16
        %v8265 = vrot.slane %v8263, 4
        %v8266 = vshll.u32 %v8078, 16
        %v8268 = vrot.slane %v8266, 5
        %v8269 = vor.u32 %v8265, %v8268
        %v8270 = vsel %vm1838, %v8261, %v8269
        %v8272 = vshrl.u32 %v7709, 16
        %v8274 = vrot.slane %v8272, 4
        %v8275 = vshll.u32 %v7709, 16
        %v8277 = vrot.slane %v8275, 5
        %v8278 = vor.u32 %v8274, %v8277
        %v8280 = vshrl.u32 %v8079, 16
        %v8282 = vrot.slane %v8280, 4
        %v8283 = vshll.u32 %v8079, 16
        %v8285 = vrot.slane %v8283, 5
        %v8286 = vor.u32 %v8282, %v8285
        %v8287 = vsel %vm1838, %v8278, %v8286
        %v8289 = vshrl.u32 %v7710, 16
        %v8291 = vrot.slane %v8289, 4
        %v8292 = vshll.u32 %v7710, 16
        %v8294 = vrot.slane %v8292, 5
        %v8295 = vor.u32 %v8291, %v8294
        %v8297 = vshrl.u32 %v8080, 16
        %v8299 = vrot.slane %v8297, 4
        %v8300 = vshll.u32 %v8080, 16
        %v8302 = vrot.slane %v8300, 5
        %v8303 = vor.u32 %v8299, %v8302
        %v8304 = vsel %vm1838, %v8295, %v8303
        %v8306 = vshrl.u32 %v7711, 16
        %v8308 = vrot.slane %v8306, 4
        %v8309 = vshll.u32 %v7711, 16
        %v8311 = vrot.slane %v8309, 5
        %v8312 = vor.u32 %v8308, %v8311
        %v8314 = vshrl.u32 %v8081, 16
        %v8316 = vrot.slane %v8314, 4
        %v8317 = vshll.u32 %v8081, 16
        %v8319 = vrot.slane %v8317, 5
        %v8320 = vor.u32 %v8316, %v8319
        %v8321 = vsel %vm1838, %v8312, %v8320
        %v8323 = vshrl.u32 %v7712, 16
        %v8325 = vrot.slane %v8323, 4
        %v8326 = vshll.u32 %v7712, 16
        %v8328 = vrot.slane %v8326, 5
        %v8329 = vor.u32 %v8325, %v8328
        %v8331 = vshrl.u32 %v8082, 16
        %v8333 = vrot.slane %v8331, 4
        %v8334 = vshll.u32 %v8082, 16
        %v8336 = vrot.slane %v8334, 5
        %v8337 = vor.u32 %v8333, %v8336
        %v8338 = vsel %vm1838, %v8329, %v8337
        %v8340 = vshrl.u32 %v7713, 16
        %v8342 = vrot.slane %v8340, 4
        %v8343 = vshll.u32 %v7713, 16
        %v8345 = vrot.slane %v8343, 5
        %v8346 = vor.u32 %v8342, %v8345
        %v8348 = vshrl.u32 %v8083, 16
        %v8350 = vrot.slane %v8348, 4
        %v8351 = vshll.u32 %v8083, 16
        %v8353 = vrot.slane %v8351, 5
        %v8354 = vor.u32 %v8350, %v8353
        %v8355 = vsel %vm1838, %v8346, %v8354
        %s8372 = scalar_lea.vmem [#allocation10], 320
        %v8373 = vld [vmem:[%s8372] sm:$0xf]
        %v8374 = vld [vmem:[%s8372 + $0x4] sm:$0xf]
        %v8375 = vld [vmem:[%s8372 + $0x8] sm:$0xf]
        %v8376 = vld [vmem:[%s8372 + $0xc] sm:$0xf]
        %v8377 = vld [vmem:[%s8372 + $0x10] sm:$0xf]
        %v8378 = vld [vmem:[%s8372 + $0x14] sm:$0xf]
        %v8379 = vld [vmem:[%s8372 + $0x18] sm:$0xf]
        %v8380 = vld [vmem:[%s8372 + $0x1c] sm:$0xf]
        %v8381 = vld [vmem:[%s8372 + $0x20] sm:$0xf]
        %v8382 = vld [vmem:[%s8372 + $0x24] sm:$0xf]
        %v8383 = vld [vmem:[%s8372 + $0x28] sm:$0xf]
        %v8384 = vld [vmem:[%s8372 + $0x2c] sm:$0xf]
        %v8385 = vld [vmem:[%s8372 + $0x30] sm:$0xf]
        %v8386 = vld [vmem:[%s8372 + $0x34] sm:$0xf]
        %v8387 = vld [vmem:[%s8372 + $0x38] sm:$0xf]
        %v8388 = vld [vmem:[%s8372 + $0x3c] sm:$0xf]
        %v8405 = vunpack.c.l.b16 %v8373
        %v8406 = vunpack.c.l.b16 %v8374
        %v8407 = vunpack.c.l.b16 %v8375
        %v8408 = vunpack.c.l.b16 %v8376
        %v8409 = vunpack.c.l.b16 %v8377
        %v8410 = vunpack.c.l.b16 %v8378
        %v8411 = vunpack.c.l.b16 %v8379
        %v8412 = vunpack.c.l.b16 %v8380
        %v8413 = vunpack.c.l.b16 %v8381
        %v8414 = vunpack.c.l.b16 %v8382
        %v8415 = vunpack.c.l.b16 %v8383
        %v8416 = vunpack.c.l.b16 %v8384
        %v8417 = vunpack.c.l.b16 %v8385
        %v8418 = vunpack.c.l.b16 %v8386
        %v8419 = vunpack.c.l.b16 %v8387
        %v8420 = vunpack.c.l.b16 %v8388
        %v8421 = vpack.c.b16 %v8406, %v8405
        %v8422 = vpack.c.b16 %v8408, %v8407
        %v8423 = vpack.c.b16 %v8410, %v8409
        %v8424 = vpack.c.b16 %v8412, %v8411
        %v8425 = vpack.c.b16 %v8414, %v8413
        %v8426 = vpack.c.b16 %v8416, %v8415
        %v8427 = vpack.c.b16 %v8418, %v8417
        %v8428 = vpack.c.b16 %v8420, %v8419
        %8437 = vmatprep.subr.bf16.mxu0 0
        %8438 = vmatpush1.bf16.msra.mxu0 %v8421
        %8439 = vmatprep.subr.bf16.mxu0 0
        %8440 = vmatpush1.bf16.msra.mxu0 %v8422
        %8441 = vmatprep.subr.bf16.mxu0 0
        %8442 = vmatpush1.bf16.msra.mxu0 %v8423
        %8443 = vmatprep.subr.bf16.mxu0 0
        %8444 = vmatpush1.bf16.msra.mxu0 %v8424
        %8445 = vmatprep.subr.bf16.mxu0 0
        %8446 = vmatpush1.bf16.msra.mxu0 %v8425
        %8447 = vmatprep.subr.bf16.mxu0 0
        %8448 = vmatpush1.bf16.msra.mxu0 %v8426
        %8449 = vmatprep.subr.bf16.mxu0 0
        %8450 = vmatpush1.bf16.msra.mxu0 %v8427
        %8451 = vmatprep.subr.bf16.mxu0 0
        %8452 = vmatpush1.bf16.msra.mxu0 %v8428
        %8453 = vmatprep.subr.bf16.mxu0 0
        %8454 = vmatpush1.bf16.msra.mxu0 0
        %8455 = vmatprep.subr.bf16.mxu0 0
        %8456 = vmatpush1.bf16.msra.mxu0 0
        %8457 = vmatprep.subr.bf16.mxu0 0
        %8458 = vmatpush1.bf16.msra.mxu0 0
        %8459 = vmatprep.subr.bf16.mxu0 0
        %8460 = vmatpush1.bf16.msra.mxu0 0
        %8461 = vmatprep.subr.bf16.mxu0 0
        %8462 = vmatpush1.bf16.msra.mxu0 0
        %8463 = vmatprep.subr.bf16.mxu0 0
        %8464 = vmatpush1.bf16.msra.mxu0 0
        %8465 = vmatprep.subr.bf16.mxu0 0
        %8466 = vmatpush1.bf16.msra.mxu0 0
        %8467 = vmatprep.subr.bf16.mxu0 0
        %8468 = vmatpush1.bf16.msra.mxu0 0
        %8469 = vmatprep.mubr.bf16.mxu0 0
        %8470 = vmatmul.mubr.bf16.gmra.mrb[0].mxu0 %v8100
        %v8471 = vpop.f32.mrb[0].mxu0
        %v8472 = vadd.f32 0.0, %v8471
        %v8473 = vpop.f32.mrb[0].mxu0
        %v8474 = vpop.f32.mrb[0].mxu0
        %v8475 = vadd.f32 0.0, %v8474
        %v8476 = vpop.f32.mrb[0].mxu0
        %8477 = vmatprep.mubr.bf16.mxu0 0
        %8478 = vmatmul.mubr.bf16.gmra.mrb[0].mxu0 %v8117
        %v8479 = vpop.f32.mrb[0].mxu0
        %v8480 = vadd.f32 0.0, %v8479
        %v8481 = vpop.f32.mrb[0].mxu0
        %v8482 = vpop.f32.mrb[0].mxu0
        %v8483 = vadd.f32 0.0, %v8482
        %v8484 = vpop.f32.mrb[0].mxu0
        %8485 = vmatprep.mubr.bf16.mxu0 0
        %8486 = vmatmul.mubr.bf16.gmra.mrb[0].mxu0 %v8134
        %v8487 = vpop.f32.mrb[0].mxu0
        %v8488 = vadd.f32 0.0, %v8487
        %v8489 = vpop.f32.mrb[0].mxu0
        %v8490 = vpop.f32.mrb[0].mxu0
        %v8491 = vadd.f32 0.0, %v8490
        %v8492 = vpop.f32.mrb[0].mxu0
        %8493 = vmatprep.mubr.bf16.mxu0 0
        %8494 = vmatmul.mubr.bf16.gmra.mrb[0].mxu0 %v8151
        %v8495 = vpop.f32.mrb[0].mxu0
        %v8496 = vadd.f32 0.0, %v8495
        %v8497 = vpop.f32.mrb[0].mxu0
        %v8498 = vpop.f32.mrb[0].mxu0
        %v8499 = vadd.f32 0.0, %v8498
        %v8500 = vpop.f32.mrb[0].mxu0
        %8501 = vmatprep.mubr.bf16.mxu0 0
        %8502 = vmatmul.mubr.bf16.gmra.mrb[0].mxu0 %v8168
        %v8503 = vpop.f32.mrb[0].mxu0
        %v8504 = vadd.f32 0.0, %v8503
        %v8505 = vpop.f32.mrb[0].mxu0
        %v8506 = vpop.f32.mrb[0].mxu0
        %v8507 = vadd.f32 0.0, %v8506
        %v8508 = vpop.f32.mrb[0].mxu0
        %8509 = vmatprep.mubr.bf16.mxu0 0
        %8510 = vmatmul.mubr.bf16.gmra.mrb[0].mxu0 %v8185
        %v8511 = vpop.f32.mrb[0].mxu0
        %v8512 = vadd.f32 0.0, %v8511
        %v8513 = vpop.f32.mrb[0].mxu0
        %v8514 = vpop.f32.mrb[0].mxu0
        %v8515 = vadd.f32 0.0, %v8514
        %v8516 = vpop.f32.mrb[0].mxu0
        %8517 = vmatprep.mubr.bf16.mxu0 0
        %8518 = vmatmul.mubr.bf16.gmra.mrb[0].mxu0 %v8202
        %v8519 = vpop.f32.mrb[0].mxu0
        %v8520 = vadd.f32 0.0, %v8519
        %v8521 = vpop.f32.mrb[0].mxu0
        %v8522 = vpop.f32.mrb[0].mxu0
        %v8523 = vadd.f32 0.0, %v8522
        %v8524 = vpop.f32.mrb[0].mxu0
        %8525 = vmatprep.mubr.bf16.mxu0 0
        %8526 = vmatmul.mubr.bf16.gmra.mrb[0].mxu0 %v8219
        %v8527 = vpop.f32.mrb[0].mxu0
        %v8528 = vadd.f32 0.0, %v8527
        %v8529 = vpop.f32.mrb[0].mxu0
        %v8530 = vpop.f32.mrb[0].mxu0
        %v8531 = vadd.f32 0.0, %v8530
        %v8532 = vpop.f32.mrb[0].mxu0
        %8533 = vmatprep.mubr.bf16.mxu0 0
        %8534 = vmatmul.mubr.bf16.gmra.mrb[0].mxu0 %v8236
        %v8535 = vpop.f32.mrb[0].mxu0
        %v8536 = vadd.f32 0.0, %v8535
        %v8537 = vpop.f32.mrb[0].mxu0
        %v8538 = vpop.f32.mrb[0].mxu0
        %v8539 = vadd.f32 0.0, %v8538
        %v8540 = vpop.f32.mrb[0].mxu0
        %8541 = vmatprep.mubr.bf16.mxu0 0
        %8542 = vmatmul.mubr.bf16.gmra.mrb[0].mxu0 %v8253
        %v8543 = vpop.f32.mrb[0].mxu0
        %v8544 = vadd.f32 0.0, %v8543
        %v8545 = vpop.f32.mrb[0].mxu0
        %v8546 = vpop.f32.mrb[0].mxu0
        %v8547 = vadd.f32 0.0, %v8546
        %v8548 = vpop.f32.mrb[0].mxu0
        %8549 = vmatprep.mubr.bf16.mxu0 0
        %8550 = vmatmul.mubr.bf16.gmra.mrb[0].mxu0 %v8270
        %v8551 = vpop.f32.mrb[0].mxu0
        %v8552 = vadd.f32 0.0, %v8551
        %v8553 = vpop.f32.mrb[0].mxu0
        %v8554 = vpop.f32.mrb[0].mxu0
        %v8555 = vadd.f32 0.0, %v8554
        %v8556 = vpop.f32.mrb[0].mxu0
        %8557 = vmatprep.mubr.bf16.mxu0 0
        %8558 = vmatmul.mubr.bf16.gmra.mrb[0].mxu0 %v8287
        %v8559 = vpop.f32.mrb[0].mxu0
        %v8560 = vadd.f32 0.0, %v8559
        %v8561 = vpop.f32.mrb[0].mxu0
        %v8562 = vpop.f32.mrb[0].mxu0
        %v8563 = vadd.f32 0.0, %v8562
        %v8564 = vpop.f32.mrb[0].mxu0
        %8565 = vmatprep.mubr.bf16.mxu0 0
        %8566 = vmatmul.mubr.bf16.gmra.mrb[0].mxu0 %v8304
        %v8567 = vpop.f32.mrb[0].mxu0
        %v8568 = vadd.f32 0.0, %v8567
        %v8569 = vpop.f32.mrb[0].mxu0
        %v8570 = vpop.f32.mrb[0].mxu0
        %v8571 = vadd.f32 0.0, %v8570
        %v8572 = vpop.f32.mrb[0].mxu0
        %8573 = vmatprep.mubr.bf16.mxu0 0
        %8574 = vmatmul.mubr.bf16.gmra.mrb[0].mxu0 %v8321
        %v8575 = vpop.f32.mrb[0].mxu0
        %v8576 = vadd.f32 0.0, %v8575
        %v8577 = vpop.f32.mrb[0].mxu0
        %v8578 = vpop.f32.mrb[0].mxu0
        %v8579 = vadd.f32 0.0, %v8578
        %v8580 = vpop.f32.mrb[0].mxu0
        %8581 = vmatprep.mubr.bf16.mxu0 0
        %8582 = vmatmul.mubr.bf16.gmra.mrb[0].mxu0 %v8338
        %v8583 = vpop.f32.mrb[0].mxu0
        %v8584 = vadd.f32 0.0, %v8583
        %v8585 = vpop.f32.mrb[0].mxu0
        %v8586 = vpop.f32.mrb[0].mxu0
        %v8587 = vadd.f32 0.0, %v8586
        %v8588 = vpop.f32.mrb[0].mxu0
        %8589 = vmatprep.mubr.bf16.mxu0 0
        %8590 = vmatmul.mubr.bf16.gmra.mrb[0].mxu0 %v8355
        %v8591 = vpop.f32.mrb[0].mxu0
        %v8592 = vadd.f32 0.0, %v8591
        %v8593 = vpop.f32.mrb[0].mxu0
        %v8594 = vpop.f32.mrb[0].mxu0
        %v8595 = vadd.f32 0.0, %v8594
        %v8596 = vpop.f32.mrb[0].mxu0
        %8597 = vdwg.mxu0
        %v8598 = vadd.f32 %v8036, %v8472
        %v8599 = vadd.f32 %v8037, %v8475
        %v8600 = vadd.f32 %v8038, %v8480
        %v8601 = vadd.f32 %v8039, %v8483
        %v8602 = vadd.f32 %v8040, %v8488
        %v8603 = vadd.f32 %v8041, %v8491
        %v8604 = vadd.f32 %v8042, %v8496
        %v8605 = vadd.f32 %v8043, %v8499
        %v8606 = vadd.f32 %v8044, %v8504
        %v8607 = vadd.f32 %v8045, %v8507
        %v8608 = vadd.f32 %v8046, %v8512
        %v8609 = vadd.f32 %v8047, %v8515
        %v8610 = vadd.f32 %v8048, %v8520
        %v8611 = vadd.f32 %v8049, %v8523
        %v8612 = vadd.f32 %v8050, %v8528
        %v8613 = vadd.f32 %v8051, %v8531
        %v8614 = vadd.f32 %v8052, %v8536
        %v8615 = vadd.f32 %v8053, %v8539
        %v8616 = vadd.f32 %v8054, %v8544
        %v8617 = vadd.f32 %v8055, %v8547
        %v8618 = vadd.f32 %v8056, %v8552
        %v8619 = vadd.f32 %v8057, %v8555
        %v8620 = vadd.f32 %v8058, %v8560
        %v8621 = vadd.f32 %v8059, %v8563
        %v8622 = vadd.f32 %v8060, %v8568
        %v8623 = vadd.f32 %v8061, %v8571
        %v8624 = vadd.f32 %v8062, %v8576
        %v8625 = vadd.f32 %v8063, %v8579
        %v8626 = vadd.f32 %v8064, %v8584
        %v8627 = vadd.f32 %v8065, %v8587
        %v8628 = vadd.f32 %v8066, %v8592
        %v8629 = vadd.f32 %v8067, %v8595
        %s8630 = scalar_lea.vmem [#allocation3], 32
        %v8631 = vld [vmem:[%s8630] sm:$0xf8]
        %v8632 = vld [vmem:[%s8630 + $0x8] sm:$0xf]
        %v8633 = vld [vmem:[%s8630 + $0x10] sm:$0xf8]
        %v8634 = vld [vmem:[%s8630 + $0x18] sm:$0xf]
        %v8635 = vld [vmem:[%s8630 + $0x20] sm:$0xf8]
        %v8636 = vld [vmem:[%s8630 + $0x28] sm:$0xf]
        %v8637 = vld [vmem:[%s8630 + $0x30] sm:$0xf8]
        %v8638 = vld [vmem:[%s8630 + $0x38] sm:$0xf]
        %v8639 = vld [vmem:[%s8630 + $0x40] sm:$0xf8]
        %v8640 = vld [vmem:[%s8630 + $0x48] sm:$0xf]
        %v8641 = vld [vmem:[%s8630 + $0x50] sm:$0xf8]
        %v8642 = vld [vmem:[%s8630 + $0x58] sm:$0xf]
        %v8643 = vld [vmem:[%s8630 + $0x60] sm:$0xf8]
        %v8644 = vld [vmem:[%s8630 + $0x68] sm:$0xf]
        %v8645 = vld [vmem:[%s8630 + $0x70] sm:$0xf8]
        %v8646 = vld [vmem:[%s8630 + $0x78] sm:$0xf]
        %v8647 = vld [vmem:[%s8630 + $0x80] sm:$0xf8]
        %v8648 = vld [vmem:[%s8630 + $0x88] sm:$0xf]
        %v8649 = vld [vmem:[%s8630 + $0x90] sm:$0xf8]
        %v8650 = vld [vmem:[%s8630 + $0x98] sm:$0xf]
        %v8651 = vld [vmem:[%s8630 + $0xa0] sm:$0xf8]
        %v8652 = vld [vmem:[%s8630 + $0xa8] sm:$0xf]
        %v8653 = vld [vmem:[%s8630 + $0xb0] sm:$0xf8]
        %v8654 = vld [vmem:[%s8630 + $0xb8] sm:$0xf]
        %v8655 = vld [vmem:[%s8630 + $0xc0] sm:$0xf8]
        %v8656 = vld [vmem:[%s8630 + $0xc8] sm:$0xf]
        %v8657 = vld [vmem:[%s8630 + $0xd0] sm:$0xf8]
        %v8658 = vld [vmem:[%s8630 + $0xd8] sm:$0xf]
        %v8659 = vld [vmem:[%s8630 + $0xe0] sm:$0xf8]
        %v8660 = vld [vmem:[%s8630 + $0xe8] sm:$0xf]
        %v8661 = vld [vmem:[%s8630 + $0xf0] sm:$0xf8]
        %v8662 = vld [vmem:[%s8630 + $0xf8] sm:$0xf]
        %v8664 = vshrl.u32 %v8631, 16
        %v8666 = vrot.slane %v8664, 3
        %v8667 = vshll.u32 %v8631, 16
        %v8669 = vrot.slane %v8667, 4
        %v8670 = vor.u32 %v8666, %v8669
        %v8672 = vshrl.u32 %v8632, 16
        %v8674 = vrot.slane %v8672, 3
        %v8675 = vshll.u32 %v8632, 16
        %v8677 = vrot.slane %v8675, 4
        %v8678 = vor.u32 %v8674, %v8677
        %v8679 = vsel %vm792, %v8670, %v8678
        %v8681 = vshrl.u32 %v8633, 16
        %v8683 = vrot.slane %v8681, 3
        %v8684 = vshll.u32 %v8633, 16
        %v8686 = vrot.slane %v8684, 4
        %v8687 = vor.u32 %v8683, %v8686
        %v8689 = vshrl.u32 %v8634, 16
        %v8691 = vrot.slane %v8689, 3
        %v8692 = vshll.u32 %v8634, 16
        %v8694 = vrot.slane %v8692, 4
        %v8695 = vor.u32 %v8691, %v8694
        %v8696 = vsel %vm792, %v8687, %v8695
        %v8698 = vshrl.u32 %v8635, 16
        %v8700 = vrot.slane %v8698, 3
        %v8701 = vshll.u32 %v8635, 16
        %v8703 = vrot.slane %v8701, 4
        %v8704 = vor.u32 %v8700, %v8703
        %v8706 = vshrl.u32 %v8636, 16
        %v8708 = vrot.slane %v8706, 3
        %v8709 = vshll.u32 %v8636, 16
        %v8711 = vrot.slane %v8709, 4
        %v8712 = vor.u32 %v8708, %v8711
        %v8713 = vsel %vm792, %v8704, %v8712
        %v8715 = vshrl.u32 %v8637, 16
        %v8717 = vrot.slane %v8715, 3
        %v8718 = vshll.u32 %v8637, 16
        %v8720 = vrot.slane %v8718, 4
        %v8721 = vor.u32 %v8717, %v8720
        %v8723 = vshrl.u32 %v8638, 16
        %v8725 = vrot.slane %v8723, 3
        %v8726 = vshll.u32 %v8638, 16
        %v8728 = vrot.slane %v8726, 4
        %v8729 = vor.u32 %v8725, %v8728
        %v8730 = vsel %vm792, %v8721, %v8729
        %v8732 = vshrl.u32 %v8639, 16
        %v8734 = vrot.slane %v8732, 3
        %v8735 = vshll.u32 %v8639, 16
        %v8737 = vrot.slane %v8735, 4
        %v8738 = vor.u32 %v8734, %v8737
        %v8740 = vshrl.u32 %v8640, 16
        %v8742 = vrot.slane %v8740, 3
        %v8743 = vshll.u32 %v8640, 16
        %v8745 = vrot.slane %v8743, 4
        %v8746 = vor.u32 %v8742, %v8745
        %v8747 = vsel %vm792, %v8738, %v8746
        %v8749 = vshrl.u32 %v8641, 16
        %v8751 = vrot.slane %v8749, 3
        %v8752 = vshll.u32 %v8641, 16
        %v8754 = vrot.slane %v8752, 4
        %v8755 = vor.u32 %v8751, %v8754
        %v8757 = vshrl.u32 %v8642, 16
        %v8759 = vrot.slane %v8757, 3
        %v8760 = vshll.u32 %v8642, 16
        %v8762 = vrot.slane %v8760, 4
        %v8763 = vor.u32 %v8759, %v8762
        %v8764 = vsel %vm792, %v8755, %v8763
        %v8766 = vshrl.u32 %v8643, 16
        %v8768 = vrot.slane %v8766, 3
        %v8769 = vshll.u32 %v8643, 16
        %v8771 = vrot.slane %v8769, 4
        %v8772 = vor.u32 %v8768, %v8771
        %v8774 = vshrl.u32 %v8644, 16
        %v8776 = vrot.slane %v8774, 3
        %v8777 = vshll.u32 %v8644, 16
        %v8779 = vrot.slane %v8777, 4
        %v8780 = vor.u32 %v8776, %v8779
        %v8781 = vsel %vm792, %v8772, %v8780
        %v8783 = vshrl.u32 %v8645, 16
        %v8785 = vrot.slane %v8783, 3
        %v8786 = vshll.u32 %v8645, 16
        %v8788 = vrot.slane %v8786, 4
        %v8789 = vor.u32 %v8785, %v8788
        %v8791 = vshrl.u32 %v8646, 16
        %v8793 = vrot.slane %v8791, 3
        %v8794 = vshll.u32 %v8646, 16
        %v8796 = vrot.slane %v8794, 4
        %v8797 = vor.u32 %v8793, %v8796
        %v8798 = vsel %vm792, %v8789, %v8797
        %v8800 = vshrl.u32 %v8647, 16
        %v8802 = vrot.slane %v8800, 3
        %v8803 = vshll.u32 %v8647, 16
        %v8805 = vrot.slane %v8803, 4
        %v8806 = vor.u32 %v8802, %v8805
        %v8808 = vshrl.u32 %v8648, 16
        %v8810 = vrot.slane %v8808, 3
        %v8811 = vshll.u32 %v8648, 16
        %v8813 = vrot.slane %v8811, 4
        %v8814 = vor.u32 %v8810, %v8813
        %v8815 = vsel %vm792, %v8806, %v8814
        %v8817 = vshrl.u32 %v8649, 16
        %v8819 = vrot.slane %v8817, 3
        %v8820 = vshll.u32 %v8649, 16
        %v8822 = vrot.slane %v8820, 4
        %v8823 = vor.u32 %v8819, %v8822
        %v8825 = vshrl.u32 %v8650, 16
        %v8827 = vrot.slane %v8825, 3
        %v8828 = vshll.u32 %v8650, 16
        %v8830 = vrot.slane %v8828, 4
        %v8831 = vor.u32 %v8827, %v8830
        %v8832 = vsel %vm792, %v8823, %v8831
        %v8834 = vshrl.u32 %v8651, 16
        %v8836 = vrot.slane %v8834, 3
        %v8837 = vshll.u32 %v8651, 16
        %v8839 = vrot.slane %v8837, 4
        %v8840 = vor.u32 %v8836, %v8839
        %v8842 = vshrl.u32 %v8652, 16
        %v8844 = vrot.slane %v8842, 3
        %v8845 = vshll.u32 %v8652, 16
        %v8847 = vrot.slane %v8845, 4
        %v8848 = vor.u32 %v8844, %v8847
        %v8849 = vsel %vm792, %v8840, %v8848
        %v8851 = vshrl.u32 %v8653, 16
        %v8853 = vrot.slane %v8851, 3
        %v8854 = vshll.u32 %v8653, 16
        %v8856 = vrot.slane %v8854, 4
        %v8857 = vor.u32 %v8853, %v8856
        %v8859 = vshrl.u32 %v8654, 16
        %v8861 = vrot.slane %v8859, 3
        %v8862 = vshll.u32 %v8654, 16
        %v8864 = vrot.slane %v8862, 4
        %v8865 = vor.u32 %v8861, %v8864
        %v8866 = vsel %vm792, %v8857, %v8865
        %v8868 = vshrl.u32 %v8655, 16
        %v8870 = vrot.slane %v8868, 3
        %v8871 = vshll.u32 %v8655, 16
        %v8873 = vrot.slane %v8871, 4
        %v8874 = vor.u32 %v8870, %v8873
        %v8876 = vshrl.u32 %v8656, 16
        %v8878 = vrot.slane %v8876, 3
        %v8879 = vshll.u32 %v8656, 16
        %v8881 = vrot.slane %v8879, 4
        %v8882 = vor.u32 %v8878, %v8881
        %v8883 = vsel %vm792, %v8874, %v8882
        %v8885 = vshrl.u32 %v8657, 16
        %v8887 = vrot.slane %v8885, 3
        %v8888 = vshll.u32 %v8657, 16
        %v8890 = vrot.slane %v8888, 4
        %v8891 = vor.u32 %v8887, %v8890
        %v8893 = vshrl.u32 %v8658, 16
        %v8895 = vrot.slane %v8893, 3
        %v8896 = vshll.u32 %v8658, 16
        %v8898 = vrot.slane %v8896, 4
        %v8899 = vor.u32 %v8895, %v8898
        %v8900 = vsel %vm792, %v8891, %v8899
        %v8902 = vshrl.u32 %v8659, 16
        %v8904 = vrot.slane %v8902, 3
        %v8905 = vshll.u32 %v8659, 16
        %v8907 = vrot.slane %v8905, 4
        %v8908 = vor.u32 %v8904, %v8907
        %v8910 = vshrl.u32 %v8660, 16
        %v8912 = vrot.slane %v8910, 3
        %v8913 = vshll.u32 %v8660, 16
        %v8915 = vrot.slane %v8913, 4
        %v8916 = vor.u32 %v8912, %v8915
        %v8917 = vsel %vm792, %v8908, %v8916
        %v8919 = vshrl.u32 %v8661, 16
        %v8921 = vrot.slane %v8919, 3
        %v8922 = vshll.u32 %v8661, 16
        %v8924 = vrot.slane %v8922, 4
        %v8925 = vor.u32 %v8921, %v8924
        %v8927 = vshrl.u32 %v8662, 16
        %v8929 = vrot.slane %v8927, 3
        %v8930 = vshll.u32 %v8662, 16
        %v8932 = vrot.slane %v8930, 4
        %v8933 = vor.u32 %v8929, %v8932
        %v8934 = vsel %vm792, %v8925, %v8933
        %s8951 = scalar_lea.vmem [#allocation10], 384
        %v8952 = vld [vmem:[%s8951] sm:$0xf]
        %v8953 = vld [vmem:[%s8951 + $0x4] sm:$0xf]
        %v8954 = vld [vmem:[%s8951 + $0x8] sm:$0xf]
        %v8955 = vld [vmem:[%s8951 + $0xc] sm:$0xf]
        %v8956 = vld [vmem:[%s8951 + $0x10] sm:$0xf]
        %v8957 = vld [vmem:[%s8951 + $0x14] sm:$0xf]
        %v8958 = vld [vmem:[%s8951 + $0x18] sm:$0xf]
        %v8959 = vld [vmem:[%s8951 + $0x1c] sm:$0xf]
        %v8960 = vld [vmem:[%s8951 + $0x20] sm:$0xf]
        %v8961 = vld [vmem:[%s8951 + $0x24] sm:$0xf]
        %v8962 = vld [vmem:[%s8951 + $0x28] sm:$0xf]
        %v8963 = vld [vmem:[%s8951 + $0x2c] sm:$0xf]
        %v8964 = vld [vmem:[%s8951 + $0x30] sm:$0xf]
        %v8965 = vld [vmem:[%s8951 + $0x34] sm:$0xf]
        %v8966 = vld [vmem:[%s8951 + $0x38] sm:$0xf]
        %v8967 = vld [vmem:[%s8951 + $0x3c] sm:$0xf]
        %v8984 = vunpack.c.l.b16 %v8952
        %v8985 = vunpack.c.l.b16 %v8953
        %v8986 = vunpack.c.l.b16 %v8954
        %v8987 = vunpack.c.l.b16 %v8955
        %v8988 = vunpack.c.l.b16 %v8956
        %v8989 = vunpack.c.l.b16 %v8957
        %v8990 = vunpack.c.l.b16 %v8958
        %v8991 = vunpack.c.l.b16 %v8959
        %v8992 = vunpack.c.l.b16 %v8960
        %v8993 = vunpack.c.l.b16 %v8961
        %v8994 = vunpack.c.l.b16 %v8962
        %v8995 = vunpack.c.l.b16 %v8963
        %v8996 = vunpack.c.l.b16 %v8964
        %v8997 = vunpack.c.l.b16 %v8965
        %v8998 = vunpack.c.l.b16 %v8966
        %v8999 = vunpack.c.l.b16 %v8967
        %v9000 = vpack.c.b16 %v8985, %v8984
        %v9001 = vpack.c.b16 %v8987, %v8986
        %v9002 = vpack.c.b16 %v8989, %v8988
        %v9003 = vpack.c.b16 %v8991, %v8990
        %v9004 = vpack.c.b16 %v8993, %v8992
        %v9005 = vpack.c.b16 %v8995, %v8994
        %v9006 = vpack.c.b16 %v8997, %v8996
        %v9007 = vpack.c.b16 %v8999, %v8998
        %9016 = vmatprep.subr.bf16.mxu0 0
        %9017 = vmatpush1.bf16.msra.mxu0 %v9000
        %9018 = vmatprep.subr.bf16.mxu0 0
        %9019 = vmatpush1.bf16.msra.mxu0 %v9001
        %9020 = vmatprep.subr.bf16.mxu0 0
        %9021 = vmatpush1.bf16.msra.mxu0 %v9002
        %9022 = vmatprep.subr.bf16.mxu0 0
        %9023 = vmatpush1.bf16.msra.mxu0 %v9003
        %9024 = vmatprep.subr.bf16.mxu0 0
        %9025 = vmatpush1.bf16.msra.mxu0 %v9004
        %9026 = vmatprep.subr.bf16.mxu0 0
        %9027 = vmatpush1.bf16.msra.mxu0 %v9005
        %9028 = vmatprep.subr.bf16.mxu0 0
        %9029 = vmatpush1.bf16.msra.mxu0 %v9006
        %9030 = vmatprep.subr.bf16.mxu0 0
        %9031 = vmatpush1.bf16.msra.mxu0 %v9007
        %9032 = vmatprep.subr.bf16.mxu0 0
        %9033 = vmatpush1.bf16.msra.mxu0 0
        %9034 = vmatprep.subr.bf16.mxu0 0
        %9035 = vmatpush1.bf16.msra.mxu0 0
        %9036 = vmatprep.subr.bf16.mxu0 0
        %9037 = vmatpush1.bf16.msra.mxu0 0
        %9038 = vmatprep.subr.bf16.mxu0 0
        %9039 = vmatpush1.bf16.msra.mxu0 0
        %9040 = vmatprep.subr.bf16.mxu0 0
        %9041 = vmatpush1.bf16.msra.mxu0 0
        %9042 = vmatprep.subr.bf16.mxu0 0
        %9043 = vmatpush1.bf16.msra.mxu0 0
        %9044 = vmatprep.subr.bf16.mxu0 0
        %9045 = vmatpush1.bf16.msra.mxu0 0
        %9046 = vmatprep.subr.bf16.mxu0 0
        %9047 = vmatpush1.bf16.msra.mxu0 0
        %9048 = vmatprep.mubr.bf16.mxu0 0
        %9049 = vmatmul.mubr.bf16.gmra.mrb[0].mxu0 %v8679
        %v9050 = vpop.f32.mrb[0].mxu0
        %v9051 = vadd.f32 0.0, %v9050
        %v9052 = vpop.f32.mrb[0].mxu0
        %v9053 = vpop.f32.mrb[0].mxu0
        %v9054 = vadd.f32 0.0, %v9053
        %v9055 = vpop.f32.mrb[0].mxu0
        %9056 = vmatprep.mubr.bf16.mxu0 0
        %9057 = vmatmul.mubr.bf16.gmra.mrb[0].mxu0 %v8696
        %v9058 = vpop.f32.mrb[0].mxu0
        %v9059 = vadd.f32 0.0, %v9058
        %v9060 = vpop.f32.mrb[0].mxu0
        %v9061 = vpop.f32.mrb[0].mxu0
        %v9062 = vadd.f32 0.0, %v9061
        %v9063 = vpop.f32.mrb[0].mxu0
        %9064 = vmatprep.mubr.bf16.mxu0 0
        %9065 = vmatmul.mubr.bf16.gmra.mrb[0].mxu0 %v8713
        %v9066 = vpop.f32.mrb[0].mxu0
        %v9067 = vadd.f32 0.0, %v9066
        %v9068 = vpop.f32.mrb[0].mxu0
        %v9069 = vpop.f32.mrb[0].mxu0
        %v9070 = vadd.f32 0.0, %v9069
        %v9071 = vpop.f32.mrb[0].mxu0
        %9072 = vmatprep.mubr.bf16.mxu0 0
        %9073 = vmatmul.mubr.bf16.gmra.mrb[0].mxu0 %v8730
        %v9074 = vpop.f32.mrb[0].mxu0
        %v9075 = vadd.f32 0.0, %v9074
        %v9076 = vpop.f32.mrb[0].mxu0
        %v9077 = vpop.f32.mrb[0].mxu0
        %v9078 = vadd.f32 0.0, %v9077
        %v9079 = vpop.f32.mrb[0].mxu0
        %9080 = vmatprep.mubr.bf16.mxu0 0
        %9081 = vmatmul.mubr.bf16.gmra.mrb[0].mxu0 %v8747
        %v9082 = vpop.f32.mrb[0].mxu0
        %v9083 = vadd.f32 0.0, %v9082
        %v9084 = vpop.f32.mrb[0].mxu0
        %v9085 = vpop.f32.mrb[0].mxu0
        %v9086 = vadd.f32 0.0, %v9085
        %v9087 = vpop.f32.mrb[0].mxu0
        %9088 = vmatprep.mubr.bf16.mxu0 0
        %9089 = vmatmul.mubr.bf16.gmra.mrb[0].mxu0 %v8764
        %v9090 = vpop.f32.mrb[0].mxu0
        %v9091 = vadd.f32 0.0, %v9090
        %v9092 = vpop.f32.mrb[0].mxu0
        %v9093 = vpop.f32.mrb[0].mxu0
        %v9094 = vadd.f32 0.0, %v9093
        %v9095 = vpop.f32.mrb[0].mxu0
        %9096 = vmatprep.mubr.bf16.mxu0 0
        %9097 = vmatmul.mubr.bf16.gmra.mrb[0].mxu0 %v8781
        %v9098 = vpop.f32.mrb[0].mxu0
        %v9099 = vadd.f32 0.0, %v9098
        %v9100 = vpop.f32.mrb[0].mxu0
        %v9101 = vpop.f32.mrb[0].mxu0
        %v9102 = vadd.f32 0.0, %v9101
        %v9103 = vpop.f32.mrb[0].mxu0
        %9104 = vmatprep.mubr.bf16.mxu0 0
        %9105 = vmatmul.mubr.bf16.gmra.mrb[0].mxu0 %v8798
        %v9106 = vpop.f32.mrb[0].mxu0
        %v9107 = vadd.f32 0.0, %v9106
        %v9108 = vpop.f32.mrb[0].mxu0
        %v9109 = vpop.f32.mrb[0].mxu0
        %v9110 = vadd.f32 0.0, %v9109
        %v9111 = vpop.f32.mrb[0].mxu0
        %9112 = vmatprep.mubr.bf16.mxu0 0
        %9113 = vmatmul.mubr.bf16.gmra.mrb[0].mxu0 %v8815
        %v9114 = vpop.f32.mrb[0].mxu0
        %v9115 = vadd.f32 0.0, %v9114
        %v9116 = vpop.f32.mrb[0].mxu0
        %v9117 = vpop.f32.mrb[0].mxu0
        %v9118 = vadd.f32 0.0, %v9117
        %v9119 = vpop.f32.mrb[0].mxu0
        %9120 = vmatprep.mubr.bf16.mxu0 0
        %9121 = vmatmul.mubr.bf16.gmra.mrb[0].mxu0 %v8832
        %v9122 = vpop.f32.mrb[0].mxu0
        %v9123 = vadd.f32 0.0, %v9122
        %v9124 = vpop.f32.mrb[0].mxu0
        %v9125 = vpop.f32.mrb[0].mxu0
        %v9126 = vadd.f32 0.0, %v9125
        %v9127 = vpop.f32.mrb[0].mxu0
        %9128 = vmatprep.mubr.bf16.mxu0 0
        %9129 = vmatmul.mubr.bf16.gmra.mrb[0].mxu0 %v8849
        %v9130 = vpop.f32.mrb[0].mxu0
        %v9131 = vadd.f32 0.0, %v9130
        %v9132 = vpop.f32.mrb[0].mxu0
        %v9133 = vpop.f32.mrb[0].mxu0
        %v9134 = vadd.f32 0.0, %v9133
        %v9135 = vpop.f32.mrb[0].mxu0
        %9136 = vmatprep.mubr.bf16.mxu0 0
        %9137 = vmatmul.mubr.bf16.gmra.mrb[0].mxu0 %v8866
        %v9138 = vpop.f32.mrb[0].mxu0
        %v9139 = vadd.f32 0.0, %v9138
        %v9140 = vpop.f32.mrb[0].mxu0
        %v9141 = vpop.f32.mrb[0].mxu0
        %v9142 = vadd.f32 0.0, %v9141
        %v9143 = vpop.f32.mrb[0].mxu0
        %9144 = vmatprep.mubr.bf16.mxu0 0
        %9145 = vmatmul.mubr.bf16.gmra.mrb[0].mxu0 %v8883
        %v9146 = vpop.f32.mrb[0].mxu0
        %v9147 = vadd.f32 0.0, %v9146
        %v9148 = vpop.f32.mrb[0].mxu0
        %v9149 = vpop.f32.mrb[0].mxu0
        %v9150 = vadd.f32 0.0, %v9149
        %v9151 = vpop.f32.mrb[0].mxu0
        %9152 = vmatprep.mubr.bf16.mxu0 0
        %9153 = vmatmul.mubr.bf16.gmra.mrb[0].mxu0 %v8900
        %v9154 = vpop.f32.mrb[0].mxu0
        %v9155 = vadd.f32 0.0, %v9154
        %v9156 = vpop.f32.mrb[0].mxu0
        %v9157 = vpop.f32.mrb[0].mxu0
        %v9158 = vadd.f32 0.0, %v9157
        %v9159 = vpop.f32.mrb[0].mxu0
        %9160 = vmatprep.mubr.bf16.mxu0 0
        %9161 = vmatmul.mubr.bf16.gmra.mrb[0].mxu0 %v8917
        %v9162 = vpop.f32.mrb[0].mxu0
        %v9163 = vadd.f32 0.0, %v9162
        %v9164 = vpop.f32.mrb[0].mxu0
        %v9165 = vpop.f32.mrb[0].mxu0
        %v9166 = vadd.f32 0.0, %v9165
        %v9167 = vpop.f32.mrb[0].mxu0
        %9168 = vmatprep.mubr.bf16.mxu0 0
        %9169 = vmatmul.mubr.bf16.gmra.mrb[0].mxu0 %v8934
        %v9170 = vpop.f32.mrb[0].mxu0
        %v9171 = vadd.f32 0.0, %v9170
        %v9172 = vpop.f32.mrb[0].mxu0
        %v9173 = vpop.f32.mrb[0].mxu0
        %v9174 = vadd.f32 0.0, %v9173
        %v9175 = vpop.f32.mrb[0].mxu0
        %9176 = vdwg.mxu0
        %v9177 = vadd.f32 %v8598, %v9051
        %v9178 = vadd.f32 %v8599, %v9054
        %v9179 = vadd.f32 %v8600, %v9059
        %v9180 = vadd.f32 %v8601, %v9062
        %v9181 = vadd.f32 %v8602, %v9067
        %v9182 = vadd.f32 %v8603, %v9070
        %v9183 = vadd.f32 %v8604, %v9075
        %v9184 = vadd.f32 %v8605, %v9078
        %v9185 = vadd.f32 %v8606, %v9083
        %v9186 = vadd.f32 %v8607, %v9086
        %v9187 = vadd.f32 %v8608, %v9091
        %v9188 = vadd.f32 %v8609, %v9094
        %v9189 = vadd.f32 %v8610, %v9099
        %v9190 = vadd.f32 %v8611, %v9102
        %v9191 = vadd.f32 %v8612, %v9107
        %v9192 = vadd.f32 %v8613, %v9110
        %v9193 = vadd.f32 %v8614, %v9115
        %v9194 = vadd.f32 %v8615, %v9118
        %v9195 = vadd.f32 %v8616, %v9123
        %v9196 = vadd.f32 %v8617, %v9126
        %v9197 = vadd.f32 %v8618, %v9131
        %v9198 = vadd.f32 %v8619, %v9134
        %v9199 = vadd.f32 %v8620, %v9139
        %v9200 = vadd.f32 %v8621, %v9142
        %v9201 = vadd.f32 %v8622, %v9147
        %v9202 = vadd.f32 %v8623, %v9150
        %v9203 = vadd.f32 %v8624, %v9155
        %v9204 = vadd.f32 %v8625, %v9158
        %v9205 = vadd.f32 %v8626, %v9163
        %v9206 = vadd.f32 %v8627, %v9166
        %v9207 = vadd.f32 %v8628, %v9171
        %v9208 = vadd.f32 %v8629, %v9174
        %v9209 = vld [vmem:[%s8630] sm:$0xf0]
        %v9210 = vld [vmem:[%s8630 + $0x10] sm:$0xf0]
        %v9211 = vld [vmem:[%s8630 + $0x20] sm:$0xf0]
        %v9212 = vld [vmem:[%s8630 + $0x30] sm:$0xf0]
        %v9213 = vld [vmem:[%s8630 + $0x40] sm:$0xf0]
        %v9214 = vld [vmem:[%s8630 + $0x50] sm:$0xf0]
        %v9215 = vld [vmem:[%s8630 + $0x60] sm:$0xf0]
        %v9216 = vld [vmem:[%s8630 + $0x70] sm:$0xf0]
        %v9217 = vld [vmem:[%s8630 + $0x80] sm:$0xf0]
        %v9218 = vld [vmem:[%s8630 + $0x90] sm:$0xf0]
        %v9219 = vld [vmem:[%s8630 + $0xa0] sm:$0xf0]
        %v9220 = vld [vmem:[%s8630 + $0xb0] sm:$0xf0]
        %v9221 = vld [vmem:[%s8630 + $0xc0] sm:$0xf0]
        %v9222 = vld [vmem:[%s8630 + $0xd0] sm:$0xf0]
        %v9223 = vld [vmem:[%s8630 + $0xe0] sm:$0xf0]
        %v9224 = vld [vmem:[%s8630 + $0xf0] sm:$0xf0]
        %v9257 = vrot.slane %v9209, 4
        %v9258 = vrot.slane %v8632, 4
        %v9259 = vsel %vm1322, %v9257, %v9258
        %v9260 = vrot.slane %v9210, 4
        %v9261 = vrot.slane %v8634, 4
        %v9262 = vsel %vm1322, %v9260, %v9261
        %v9263 = vrot.slane %v9211, 4
        %v9264 = vrot.slane %v8636, 4
        %v9265 = vsel %vm1322, %v9263, %v9264
        %v9266 = vrot.slane %v9212, 4
        %v9267 = vrot.slane %v8638, 4
        %v9268 = vsel %vm1322, %v9266, %v9267
        %v9269 = vrot.slane %v9213, 4
        %v9270 = vrot.slane %v8640, 4
        %v9271 = vsel %vm1322, %v9269, %v9270
        %v9272 = vrot.slane %v9214, 4
        %v9273 = vrot.slane %v8642, 4
        %v9274 = vsel %vm1322, %v9272, %v9273
        %v9275 = vrot.slane %v9215, 4
        %v9276 = vrot.slane %v8644, 4
        %v9277 = vsel %vm1322, %v9275, %v9276
        %v9278 = vrot.slane %v9216, 4
        %v9279 = vrot.slane %v8646, 4
        %v9280 = vsel %vm1322, %v9278, %v9279
        %v9281 = vrot.slane %v9217, 4
        %v9282 = vrot.slane %v8648, 4
        %v9283 = vsel %vm1322, %v9281, %v9282
        %v9284 = vrot.slane %v9218, 4
        %v9285 = vrot.slane %v8650, 4
        %v9286 = vsel %vm1322, %v9284, %v9285
        %v9287 = vrot.slane %v9219, 4
        %v9288 = vrot.slane %v8652, 4
        %v9289 = vsel %vm1322, %v9287, %v9288
        %v9290 = vrot.slane %v9220, 4
        %v9291 = vrot.slane %v8654, 4
        %v9292 = vsel %vm1322, %v9290, %v9291
        %v9293 = vrot.slane %v9221, 4
        %v9294 = vrot.slane %v8656, 4
        %v9295 = vsel %vm1322, %v9293, %v9294
        %v9296 = vrot.slane %v9222, 4
        %v9297 = vrot.slane %v8658, 4
        %v9298 = vsel %vm1322, %v9296, %v9297
        %v9299 = vrot.slane %v9223, 4
        %v9300 = vrot.slane %v8660, 4
        %v9301 = vsel %vm1322, %v9299, %v9300
        %v9302 = vrot.slane %v9224, 4
        %v9303 = vrot.slane %v8662, 4
        %v9304 = vsel %vm1322, %v9302, %v9303
        %s9321 = scalar_lea.vmem [#allocation10], 448
        %v9322 = vld [vmem:[%s9321] sm:$0xf]
        %v9323 = vld [vmem:[%s9321 + $0x4] sm:$0xf]
        %v9324 = vld [vmem:[%s9321 + $0x8] sm:$0xf]
        %v9325 = vld [vmem:[%s9321 + $0xc] sm:$0xf]
        %v9326 = vld [vmem:[%s9321 + $0x10] sm:$0xf]
        %v9327 = vld [vmem:[%s9321 + $0x14] sm:$0xf]
        %v9328 = vld [vmem:[%s9321 + $0x18] sm:$0xf]
        %v9329 = vld [vmem:[%s9321 + $0x1c] sm:$0xf]
        %v9330 = vld [vmem:[%s9321 + $0x20] sm:$0xf]
        %v9331 = vld [vmem:[%s9321 + $0x24] sm:$0xf]
        %v9332 = vld [vmem:[%s9321 + $0x28] sm:$0xf]
        %v9333 = vld [vmem:[%s9321 + $0x2c] sm:$0xf]
        %v9334 = vld [vmem:[%s9321 + $0x30] sm:$0xf]
        %v9335 = vld [vmem:[%s9321 + $0x34] sm:$0xf]
        %v9336 = vld [vmem:[%s9321 + $0x38] sm:$0xf]
        %v9337 = vld [vmem:[%s9321 + $0x3c] sm:$0xf]
        %v9354 = vunpack.c.l.b16 %v9322
        %v9355 = vunpack.c.l.b16 %v9323
        %v9356 = vunpack.c.l.b16 %v9324
        %v9357 = vunpack.c.l.b16 %v9325
        %v9358 = vunpack.c.l.b16 %v9326
        %v9359 = vunpack.c.l.b16 %v9327
        %v9360 = vunpack.c.l.b16 %v9328
        %v9361 = vunpack.c.l.b16 %v9329
        %v9362 = vunpack.c.l.b16 %v9330
        %v9363 = vunpack.c.l.b16 %v9331
        %v9364 = vunpack.c.l.b16 %v9332
        %v9365 = vunpack.c.l.b16 %v9333
        %v9366 = vunpack.c.l.b16 %v9334
        %v9367 = vunpack.c.l.b16 %v9335
        %v9368 = vunpack.c.l.b16 %v9336
        %v9369 = vunpack.c.l.b16 %v9337
        %v9370 = vpack.c.b16 %v9355, %v9354
        %v9371 = vpack.c.b16 %v9357, %v9356
        %v9372 = vpack.c.b16 %v9359, %v9358
        %v9373 = vpack.c.b16 %v9361, %v9360
        %v9374 = vpack.c.b16 %v9363, %v9362
        %v9375 = vpack.c.b16 %v9365, %v9364
        %v9376 = vpack.c.b16 %v9367, %v9366
        %v9377 = vpack.c.b16 %v9369, %v9368
        %9386 = vmatprep.subr.bf16.mxu0 0
        %9387 = vmatpush1.bf16.msra.mxu0 %v9370
        %9388 = vmatprep.subr.bf16.mxu0 0
        %9389 = vmatpush1.bf16.msra.mxu0 %v9371
        %9390 = vmatprep.subr.bf16.mxu0 0
        %9391 = vmatpush1.bf16.msra.mxu0 %v9372
        %9392 = vmatprep.subr.bf16.mxu0 0
        %9393 = vmatpush1.bf16.msra.mxu0 %v9373
        %9394 = vmatprep.subr.bf16.mxu0 0
        %9395 = vmatpush1.bf16.msra.mxu0 %v9374
        %9396 = vmatprep.subr.bf16.mxu0 0
        %9397 = vmatpush1.bf16.msra.mxu0 %v9375
        %9398 = vmatprep.subr.bf16.mxu0 0
        %9399 = vmatpush1.bf16.msra.mxu0 %v9376
        %9400 = vmatprep.subr.bf16.mxu0 0
        %9401 = vmatpush1.bf16.msra.mxu0 %v9377
        %9402 = vmatprep.subr.bf16.mxu0 0
        %9403 = vmatpush1.bf16.msra.mxu0 0
        %9404 = vmatprep.subr.bf16.mxu0 0
        %9405 = vmatpush1.bf16.msra.mxu0 0
        %9406 = vmatprep.subr.bf16.mxu0 0
        %9407 = vmatpush1.bf16.msra.mxu0 0
        %9408 = vmatprep.subr.bf16.mxu0 0
        %9409 = vmatpush1.bf16.msra.mxu0 0
        %9410 = vmatprep.subr.bf16.mxu0 0
        %9411 = vmatpush1.bf16.msra.mxu0 0
        %9412 = vmatprep.subr.bf16.mxu0 0
        %9413 = vmatpush1.bf16.msra.mxu0 0
        %9414 = vmatprep.subr.bf16.mxu0 0
        %9415 = vmatpush1.bf16.msra.mxu0 0
        %9416 = vmatprep.subr.bf16.mxu0 0
        %9417 = vmatpush1.bf16.msra.mxu0 0
        %9418 = vmatprep.mubr.bf16.mxu0 0
        %9419 = vmatmul.mubr.bf16.gmra.mrb[0].mxu0 %v9259
        %v9420 = vpop.f32.mrb[0].mxu0
        %v9421 = vadd.f32 0.0, %v9420
        %v9422 = vpop.f32.mrb[0].mxu0
        %v9423 = vpop.f32.mrb[0].mxu0
        %v9424 = vadd.f32 0.0, %v9423
        %v9425 = vpop.f32.mrb[0].mxu0
        %9426 = vmatprep.mubr.bf16.mxu0 0
        %9427 = vmatmul.mubr.bf16.gmra.mrb[0].mxu0 %v9262
        %v9428 = vpop.f32.mrb[0].mxu0
        %v9429 = vadd.f32 0.0, %v9428
        %v9430 = vpop.f32.mrb[0].mxu0
        %v9431 = vpop.f32.mrb[0].mxu0
        %v9432 = vadd.f32 0.0, %v9431
        %v9433 = vpop.f32.mrb[0].mxu0
        %9434 = vmatprep.mubr.bf16.mxu0 0
        %9435 = vmatmul.mubr.bf16.gmra.mrb[0].mxu0 %v9265
        %v9436 = vpop.f32.mrb[0].mxu0
        %v9437 = vadd.f32 0.0, %v9436
        %v9438 = vpop.f32.mrb[0].mxu0
        %v9439 = vpop.f32.mrb[0].mxu0
        %v9440 = vadd.f32 0.0, %v9439
        %v9441 = vpop.f32.mrb[0].mxu0
        %9442 = vmatprep.mubr.bf16.mxu0 0
        %9443 = vmatmul.mubr.bf16.gmra.mrb[0].mxu0 %v9268
        %v9444 = vpop.f32.mrb[0].mxu0
        %v9445 = vadd.f32 0.0, %v9444
        %v9446 = vpop.f32.mrb[0].mxu0
        %v9447 = vpop.f32.mrb[0].mxu0
        %v9448 = vadd.f32 0.0, %v9447
        %v9449 = vpop.f32.mrb[0].mxu0
        %9450 = vmatprep.mubr.bf16.mxu0 0
        %9451 = vmatmul.mubr.bf16.gmra.mrb[0].mxu0 %v9271
        %v9452 = vpop.f32.mrb[0].mxu0
        %v9453 = vadd.f32 0.0, %v9452
        %v9454 = vpop.f32.mrb[0].mxu0
        %v9455 = vpop.f32.mrb[0].mxu0
        %v9456 = vadd.f32 0.0, %v9455
        %v9457 = vpop.f32.mrb[0].mxu0
        %9458 = vmatprep.mubr.bf16.mxu0 0
        %9459 = vmatmul.mubr.bf16.gmra.mrb[0].mxu0 %v9274
        %v9460 = vpop.f32.mrb[0].mxu0
        %v9461 = vadd.f32 0.0, %v9460
        %v9462 = vpop.f32.mrb[0].mxu0
        %v9463 = vpop.f32.mrb[0].mxu0
        %v9464 = vadd.f32 0.0, %v9463
        %v9465 = vpop.f32.mrb[0].mxu0
        %9466 = vmatprep.mubr.bf16.mxu0 0
        %9467 = vmatmul.mubr.bf16.gmra.mrb[0].mxu0 %v9277
        %v9468 = vpop.f32.mrb[0].mxu0
        %v9469 = vadd.f32 0.0, %v9468
        %v9470 = vpop.f32.mrb[0].mxu0
        %v9471 = vpop.f32.mrb[0].mxu0
        %v9472 = vadd.f32 0.0, %v9471
        %v9473 = vpop.f32.mrb[0].mxu0
        %9474 = vmatprep.mubr.bf16.mxu0 0
        %9475 = vmatmul.mubr.bf16.gmra.mrb[0].mxu0 %v9280
        %v9476 = vpop.f32.mrb[0].mxu0
        %v9477 = vadd.f32 0.0, %v9476
        %v9478 = vpop.f32.mrb[0].mxu0
        %v9479 = vpop.f32.mrb[0].mxu0
        %v9480 = vadd.f32 0.0, %v9479
        %v9481 = vpop.f32.mrb[0].mxu0
        %9482 = vmatprep.mubr.bf16.mxu0 0
        %9483 = vmatmul.mubr.bf16.gmra.mrb[0].mxu0 %v9283
        %v9484 = vpop.f32.mrb[0].mxu0
        %v9485 = vadd.f32 0.0, %v9484
        %v9486 = vpop.f32.mrb[0].mxu0
        %v9487 = vpop.f32.mrb[0].mxu0
        %v9488 = vadd.f32 0.0, %v9487
        %v9489 = vpop.f32.mrb[0].mxu0
        %9490 = vmatprep.mubr.bf16.mxu0 0
        %9491 = vmatmul.mubr.bf16.gmra.mrb[0].mxu0 %v9286
        %v9492 = vpop.f32.mrb[0].mxu0
        %v9493 = vadd.f32 0.0, %v9492
        %v9494 = vpop.f32.mrb[0].mxu0
        %v9495 = vpop.f32.mrb[0].mxu0
        %v9496 = vadd.f32 0.0, %v9495
        %v9497 = vpop.f32.mrb[0].mxu0
        %9498 = vmatprep.mubr.bf16.mxu0 0
        %9499 = vmatmul.mubr.bf16.gmra.mrb[0].mxu0 %v9289
        %v9500 = vpop.f32.mrb[0].mxu0
        %v9501 = vadd.f32 0.0, %v9500
        %v9502 = vpop.f32.mrb[0].mxu0
        %v9503 = vpop.f32.mrb[0].mxu0
        %v9504 = vadd.f32 0.0, %v9503
        %v9505 = vpop.f32.mrb[0].mxu0
        %9506 = vmatprep.mubr.bf16.mxu0 0
        %9507 = vmatmul.mubr.bf16.gmra.mrb[0].mxu0 %v9292
        %v9508 = vpop.f32.mrb[0].mxu0
        %v9509 = vadd.f32 0.0, %v9508
        %v9510 = vpop.f32.mrb[0].mxu0
        %v9511 = vpop.f32.mrb[0].mxu0
        %v9512 = vadd.f32 0.0, %v9511
        %v9513 = vpop.f32.mrb[0].mxu0
        %9514 = vmatprep.mubr.bf16.mxu0 0
        %9515 = vmatmul.mubr.bf16.gmra.mrb[0].mxu0 %v9295
        %v9516 = vpop.f32.mrb[0].mxu0
        %v9517 = vadd.f32 0.0, %v9516
        %v9518 = vpop.f32.mrb[0].mxu0
        %v9519 = vpop.f32.mrb[0].mxu0
        %v9520 = vadd.f32 0.0, %v9519
        %v9521 = vpop.f32.mrb[0].mxu0
        %9522 = vmatprep.mubr.bf16.mxu0 0
        %9523 = vmatmul.mubr.bf16.gmra.mrb[0].mxu0 %v9298
        %v9524 = vpop.f32.mrb[0].mxu0
        %v9525 = vadd.f32 0.0, %v9524
        %v9526 = vpop.f32.mrb[0].mxu0
        %v9527 = vpop.f32.mrb[0].mxu0
        %v9528 = vadd.f32 0.0, %v9527
        %v9529 = vpop.f32.mrb[0].mxu0
        %9530 = vmatprep.mubr.bf16.mxu0 0
        %9531 = vmatmul.mubr.bf16.gmra.mrb[0].mxu0 %v9301
        %v9532 = vpop.f32.mrb[0].mxu0
        %v9533 = vadd.f32 0.0, %v9532
        %v9534 = vpop.f32.mrb[0].mxu0
        %v9535 = vpop.f32.mrb[0].mxu0
        %v9536 = vadd.f32 0.0, %v9535
        %v9537 = vpop.f32.mrb[0].mxu0
        %9538 = vmatprep.mubr.bf16.mxu0 0
        %9539 = vmatmul.mubr.bf16.gmra.mrb[0].mxu0 %v9304
        %v9540 = vpop.f32.mrb[0].mxu0
        %v9541 = vadd.f32 0.0, %v9540
        %v9542 = vpop.f32.mrb[0].mxu0
        %v9543 = vpop.f32.mrb[0].mxu0
        %v9544 = vadd.f32 0.0, %v9543
        %v9545 = vpop.f32.mrb[0].mxu0
        %9546 = vdwg.mxu0
        %v9547 = vadd.f32 %v9177, %v9421
        %v9548 = vadd.f32 %v9178, %v9424
        %v9549 = vadd.f32 %v9179, %v9429
        %v9550 = vadd.f32 %v9180, %v9432
        %v9551 = vadd.f32 %v9181, %v9437
        %v9552 = vadd.f32 %v9182, %v9440
        %v9553 = vadd.f32 %v9183, %v9445
        %v9554 = vadd.f32 %v9184, %v9448
        %v9555 = vadd.f32 %v9185, %v9453
        %v9556 = vadd.f32 %v9186, %v9456
        %v9557 = vadd.f32 %v9187, %v9461
        %v9558 = vadd.f32 %v9188, %v9464
        %v9559 = vadd.f32 %v9189, %v9469
        %v9560 = vadd.f32 %v9190, %v9472
        %v9561 = vadd.f32 %v9191, %v9477
        %v9562 = vadd.f32 %v9192, %v9480
        %v9563 = vadd.f32 %v9193, %v9485
        %v9564 = vadd.f32 %v9194, %v9488
        %v9565 = vadd.f32 %v9195, %v9493
        %v9566 = vadd.f32 %v9196, %v9496
        %v9567 = vadd.f32 %v9197, %v9501
        %v9568 = vadd.f32 %v9198, %v9504
        %v9569 = vadd.f32 %v9199, %v9509
        %v9570 = vadd.f32 %v9200, %v9512
        %v9571 = vadd.f32 %v9201, %v9517
        %v9572 = vadd.f32 %v9202, %v9520
        %v9573 = vadd.f32 %v9203, %v9525
        %v9574 = vadd.f32 %v9204, %v9528
        %v9575 = vadd.f32 %v9205, %v9533
        %v9576 = vadd.f32 %v9206, %v9536
        %v9577 = vadd.f32 %v9207, %v9541
        %v9578 = vadd.f32 %v9208, %v9544
        %v9579 = vld [vmem:[%s8630 + $0x8] sm:$0x1f]
        %v9580 = vld [vmem:[%s8630 + $0x18] sm:$0x1f]
        %v9581 = vld [vmem:[%s8630 + $0x28] sm:$0x1f]
        %v9582 = vld [vmem:[%s8630 + $0x38] sm:$0x1f]
        %v9583 = vld [vmem:[%s8630 + $0x48] sm:$0x1f]
        %v9584 = vld [vmem:[%s8630 + $0x58] sm:$0x1f]
        %v9585 = vld [vmem:[%s8630 + $0x68] sm:$0x1f]
        %v9586 = vld [vmem:[%s8630 + $0x78] sm:$0x1f]
        %v9587 = vld [vmem:[%s8630 + $0x88] sm:$0x1f]
        %v9588 = vld [vmem:[%s8630 + $0x98] sm:$0x1f]
        %v9589 = vld [vmem:[%s8630 + $0xa8] sm:$0x1f]
        %v9590 = vld [vmem:[%s8630 + $0xb8] sm:$0x1f]
        %v9591 = vld [vmem:[%s8630 + $0xc8] sm:$0x1f]
        %v9592 = vld [vmem:[%s8630 + $0xd8] sm:$0x1f]
        %v9593 = vld [vmem:[%s8630 + $0xe8] sm:$0x1f]
        %v9594 = vld [vmem:[%s8630 + $0xf8] sm:$0x1f]
        %v9596 = vshrl.u32 %v9209, 16
        %v9598 = vrot.slane %v9596, 4
        %v9599 = vshll.u32 %v9209, 16
        %v9601 = vrot.slane %v9599, 5
        %v9602 = vor.u32 %v9598, %v9601
        %v9604 = vshrl.u32 %v9579, 16
        %v9606 = vrot.slane %v9604, 4
        %v9607 = vshll.u32 %v9579, 16
        %v9609 = vrot.slane %v9607, 5
        %v9610 = vor.u32 %v9606, %v9609
        %v9611 = vsel %vm1838, %v9602, %v9610
        %v9613 = vshrl.u32 %v9210, 16
        %v9615 = vrot.slane %v9613, 4
        %v9616 = vshll.u32 %v9210, 16
        %v9618 = vrot.slane %v9616, 5
        %v9619 = vor.u32 %v9615, %v9618
        %v9621 = vshrl.u32 %v9580, 16
        %v9623 = vrot.slane %v9621, 4
        %v9624 = vshll.u32 %v9580, 16
        %v9626 = vrot.slane %v9624, 5
        %v9627 = vor.u32 %v9623, %v9626
        %v9628 = vsel %vm1838, %v9619, %v9627
        %v9630 = vshrl.u32 %v9211, 16
        %v9632 = vrot.slane %v9630, 4
        %v9633 = vshll.u32 %v9211, 16
        %v9635 = vrot.slane %v9633, 5
        %v9636 = vor.u32 %v9632, %v9635
        %v9638 = vshrl.u32 %v9581, 16
        %v9640 = vrot.slane %v9638, 4
        %v9641 = vshll.u32 %v9581, 16
        %v9643 = vrot.slane %v9641, 5
        %v9644 = vor.u32 %v9640, %v9643
        %v9645 = vsel %vm1838, %v9636, %v9644
        %v9647 = vshrl.u32 %v9212, 16
        %v9649 = vrot.slane %v9647, 4
        %v9650 = vshll.u32 %v9212, 16
        %v9652 = vrot.slane %v9650, 5
        %v9653 = vor.u32 %v9649, %v9652
        %v9655 = vshrl.u32 %v9582, 16
        %v9657 = vrot.slane %v9655, 4
        %v9658 = vshll.u32 %v9582, 16
        %v9660 = vrot.slane %v9658, 5
        %v9661 = vor.u32 %v9657, %v9660
        %v9662 = vsel %vm1838, %v9653, %v9661
        %v9664 = vshrl.u32 %v9213, 16
        %v9666 = vrot.slane %v9664, 4
        %v9667 = vshll.u32 %v9213, 16
        %v9669 = vrot.slane %v9667, 5
        %v9670 = vor.u32 %v9666, %v9669
        %v9672 = vshrl.u32 %v9583, 16
        %v9674 = vrot.slane %v9672, 4
        %v9675 = vshll.u32 %v9583, 16
        %v9677 = vrot.slane %v9675, 5
        %v9678 = vor.u32 %v9674, %v9677
        %v9679 = vsel %vm1838, %v9670, %v9678
        %v9681 = vshrl.u32 %v9214, 16
        %v9683 = vrot.slane %v9681, 4
        %v9684 = vshll.u32 %v9214, 16
        %v9686 = vrot.slane %v9684, 5
        %v9687 = vor.u32 %v9683, %v9686
        %v9689 = vshrl.u32 %v9584, 16
        %v9691 = vrot.slane %v9689, 4
        %v9692 = vshll.u32 %v9584, 16
        %v9694 = vrot.slane %v9692, 5
        %v9695 = vor.u32 %v9691, %v9694
        %v9696 = vsel %vm1838, %v9687, %v9695
        %v9698 = vshrl.u32 %v9215, 16
        %v9700 = vrot.slane %v9698, 4
        %v9701 = vshll.u32 %v9215, 16
        %v9703 = vrot.slane %v9701, 5
        %v9704 = vor.u32 %v9700, %v9703
        %v9706 = vshrl.u32 %v9585, 16
        %v9708 = vrot.slane %v9706, 4
        %v9709 = vshll.u32 %v9585, 16
        %v9711 = vrot.slane %v9709, 5
        %v9712 = vor.u32 %v9708, %v9711
        %v9713 = vsel %vm1838, %v9704, %v9712
        %v9715 = vshrl.u32 %v9216, 16
        %v9717 = vrot.slane %v9715, 4
        %v9718 = vshll.u32 %v9216, 16
        %v9720 = vrot.slane %v9718, 5
        %v9721 = vor.u32 %v9717, %v9720
        %v9723 = vshrl.u32 %v9586, 16
        %v9725 = vrot.slane %v9723, 4
        %v9726 = vshll.u32 %v9586, 16
        %v9728 = vrot.slane %v9726, 5
        %v9729 = vor.u32 %v9725, %v9728
        %v9730 = vsel %vm1838, %v9721, %v9729
        %v9732 = vshrl.u32 %v9217, 16
        %v9734 = vrot.slane %v9732, 4
        %v9735 = vshll.u32 %v9217, 16
        %v9737 = vrot.slane %v9735, 5
        %v9738 = vor.u32 %v9734, %v9737
        %v9740 = vshrl.u32 %v9587, 16
        %v9742 = vrot.slane %v9740, 4
        %v9743 = vshll.u32 %v9587, 16
        %v9745 = vrot.slane %v9743, 5
        %v9746 = vor.u32 %v9742, %v9745
        %v9747 = vsel %vm1838, %v9738, %v9746
        %v9749 = vshrl.u32 %v9218, 16
        %v9751 = vrot.slane %v9749, 4
        %v9752 = vshll.u32 %v9218, 16
        %v9754 = vrot.slane %v9752, 5
        %v9755 = vor.u32 %v9751, %v9754
        %v9757 = vshrl.u32 %v9588, 16
        %v9759 = vrot.slane %v9757, 4
        %v9760 = vshll.u32 %v9588, 16
        %v9762 = vrot.slane %v9760, 5
        %v9763 = vor.u32 %v9759, %v9762
        %v9764 = vsel %vm1838, %v9755, %v9763
        %v9766 = vshrl.u32 %v9219, 16
        %v9768 = vrot.slane %v9766, 4
        %v9769 = vshll.u32 %v9219, 16
        %v9771 = vrot.slane %v9769, 5
        %v9772 = vor.u32 %v9768, %v9771
        %v9774 = vshrl.u32 %v9589, 16
        %v9776 = vrot.slane %v9774, 4
        %v9777 = vshll.u32 %v9589, 16
        %v9779 = vrot.slane %v9777, 5
        %v9780 = vor.u32 %v9776, %v9779
        %v9781 = vsel %vm1838, %v9772, %v9780
        %v9783 = vshrl.u32 %v9220, 16
        %v9785 = vrot.slane %v9783, 4
        %v9786 = vshll.u32 %v9220, 16
        %v9788 = vrot.slane %v9786, 5
        %v9789 = vor.u32 %v9785, %v9788
        %v9791 = vshrl.u32 %v9590, 16
        %v9793 = vrot.slane %v9791, 4
        %v9794 = vshll.u32 %v9590, 16
        %v9796 = vrot.slane %v9794, 5
        %v9797 = vor.u32 %v9793, %v9796
        %v9798 = vsel %vm1838, %v9789, %v9797
        %v9800 = vshrl.u32 %v9221, 16
        %v9802 = vrot.slane %v9800, 4
        %v9803 = vshll.u32 %v9221, 16
        %v9805 = vrot.slane %v9803, 5
        %v9806 = vor.u32 %v9802, %v9805
        %v9808 = vshrl.u32 %v9591, 16
        %v9810 = vrot.slane %v9808, 4
        %v9811 = vshll.u32 %v9591, 16
        %v9813 = vrot.slane %v9811, 5
        %v9814 = vor.u32 %v9810, %v9813
        %v9815 = vsel %vm1838, %v9806, %v9814
        %v9817 = vshrl.u32 %v9222, 16
        %v9819 = vrot.slane %v9817, 4
        %v9820 = vshll.u32 %v9222, 16
        %v9822 = vrot.slane %v9820, 5
        %v9823 = vor.u32 %v9819, %v9822
        %v9825 = vshrl.u32 %v9592, 16
        %v9827 = vrot.slane %v9825, 4
        %v9828 = vshll.u32 %v9592, 16
        %v9830 = vrot.slane %v9828, 5
        %v9831 = vor.u32 %v9827, %v9830
        %v9832 = vsel %vm1838, %v9823, %v9831
        %v9834 = vshrl.u32 %v9223, 16
        %v9836 = vrot.slane %v9834, 4
        %v9837 = vshll.u32 %v9223, 16
        %v9839 = vrot.slane %v9837, 5
        %v9840 = vor.u32 %v9836, %v9839
        %v9842 = vshrl.u32 %v9593, 16
        %v9844 = vrot.slane %v9842, 4
        %v9845 = vshll.u32 %v9593, 16
        %v9847 = vrot.slane %v9845, 5
        %v9848 = vor.u32 %v9844, %v9847
        %v9849 = vsel %vm1838, %v9840, %v9848
        %v9851 = vshrl.u32 %v9224, 16
        %v9853 = vrot.slane %v9851, 4
        %v9854 = vshll.u32 %v9224, 16
        %v9856 = vrot.slane %v9854, 5
        %v9857 = vor.u32 %v9853, %v9856
        %v9859 = vshrl.u32 %v9594, 16
        %v9861 = vrot.slane %v9859, 4
        %v9862 = vshll.u32 %v9594, 16
        %v9864 = vrot.slane %v9862, 5
        %v9865 = vor.u32 %v9861, %v9864
        %v9866 = vsel %vm1838, %v9857, %v9865
        %s9883 = scalar_lea.vmem [#allocation10], 512
        %v9884 = vld [vmem:[%s9883] sm:$0xf]
        %v9885 = vld [vmem:[%s9883 + $0x4] sm:$0xf]
        %v9886 = vld [vmem:[%s9883 + $0x8] sm:$0xf]
        %v9887 = vld [vmem:[%s9883 + $0xc] sm:$0xf]
        %v9888 = vld [vmem:[%s9883 + $0x10] sm:$0xf]
        %v9889 = vld [vmem:[%s9883 + $0x14] sm:$0xf]
        %v9890 = vld [vmem:[%s9883 + $0x18] sm:$0xf]
        %v9891 = vld [vmem:[%s9883 + $0x1c] sm:$0xf]
        %v9892 = vld [vmem:[%s9883 + $0x20] sm:$0xf]
        %v9893 = vld [vmem:[%s9883 + $0x24] sm:$0xf]
        %v9894 = vld [vmem:[%s9883 + $0x28] sm:$0xf]
        %v9895 = vld [vmem:[%s9883 + $0x2c] sm:$0xf]
        %v9896 = vld [vmem:[%s9883 + $0x30] sm:$0xf]
        %v9897 = vld [vmem:[%s9883 + $0x34] sm:$0xf]
        %v9898 = vld [vmem:[%s9883 + $0x38] sm:$0xf]
        %v9899 = vld [vmem:[%s9883 + $0x3c] sm:$0xf]
        %v9916 = vunpack.c.l.b16 %v9884
        %v9917 = vunpack.c.l.b16 %v9885
        %v9918 = vunpack.c.l.b16 %v9886
        %v9919 = vunpack.c.l.b16 %v9887
        %v9920 = vunpack.c.l.b16 %v9888
        %v9921 = vunpack.c.l.b16 %v9889
        %v9922 = vunpack.c.l.b16 %v9890
        %v9923 = vunpack.c.l.b16 %v9891
        %v9924 = vunpack.c.l.b16 %v9892
        %v9925 = vunpack.c.l.b16 %v9893
        %v9926 = vunpack.c.l.b16 %v9894
        %v9927 = vunpack.c.l.b16 %v9895
        %v9928 = vunpack.c.l.b16 %v9896
        %v9929 = vunpack.c.l.b16 %v9897
        %v9930 = vunpack.c.l.b16 %v9898
        %v9931 = vunpack.c.l.b16 %v9899
        %v9932 = vpack.c.b16 %v9917, %v9916
        %v9933 = vpack.c.b16 %v9919, %v9918
        %v9934 = vpack.c.b16 %v9921, %v9920
        %v9935 = vpack.c.b16 %v9923, %v9922
        %v9936 = vpack.c.b16 %v9925, %v9924
        %v9937 = vpack.c.b16 %v9927, %v9926
        %v9938 = vpack.c.b16 %v9929, %v9928
        %v9939 = vpack.c.b16 %v9931, %v9930
        %9948 = vmatprep.subr.bf16.mxu0 0
        %9949 = vmatpush1.bf16.msra.mxu0 %v9932
        %9950 = vmatprep.subr.bf16.mxu0 0
        %9951 = vmatpush1.bf16.msra.mxu0 %v9933
        %9952 = vmatprep.subr.bf16.mxu0 0
        %9953 = vmatpush1.bf16.msra.mxu0 %v9934
        %9954 = vmatprep.subr.bf16.mxu0 0
        %9955 = vmatpush1.bf16.msra.mxu0 %v9935
        %9956 = vmatprep.subr.bf16.mxu0 0
        %9957 = vmatpush1.bf16.msra.mxu0 %v9936
        %9958 = vmatprep.subr.bf16.mxu0 0
        %9959 = vmatpush1.bf16.msra.mxu0 %v9937
        %9960 = vmatprep.subr.bf16.mxu0 0
        %9961 = vmatpush1.bf16.msra.mxu0 %v9938
        %9962 = vmatprep.subr.bf16.mxu0 0
        %9963 = vmatpush1.bf16.msra.mxu0 %v9939
        %9964 = vmatprep.subr.bf16.mxu0 0
        %9965 = vmatpush1.bf16.msra.mxu0 0
        %9966 = vmatprep.subr.bf16.mxu0 0
        %9967 = vmatpush1.bf16.msra.mxu0 0
        %9968 = vmatprep.subr.bf16.mxu0 0
        %9969 = vmatpush1.bf16.msra.mxu0 0
        %9970 = vmatprep.subr.bf16.mxu0 0
        %9971 = vmatpush1.bf16.msra.mxu0 0
        %9972 = vmatprep.subr.bf16.mxu0 0
        %9973 = vmatpush1.bf16.msra.mxu0 0
        %9974 = vmatprep.subr.bf16.mxu0 0
        %9975 = vmatpush1.bf16.msra.mxu0 0
        %9976 = vmatprep.subr.bf16.mxu0 0
        %9977 = vmatpush1.bf16.msra.mxu0 0
        %9978 = vmatprep.subr.bf16.mxu0 0
        %9979 = vmatpush1.bf16.msra.mxu0 0
        %9980 = vmatprep.mubr.bf16.mxu0 0
        %9981 = vmatmul.mubr.bf16.gmra.mrb[0].mxu0 %v9611
        %v9982 = vpop.f32.mrb[0].mxu0
        %v9983 = vadd.f32 0.0, %v9982
        %v9984 = vpop.f32.mrb[0].mxu0
        %v9985 = vpop.f32.mrb[0].mxu0
        %v9986 = vadd.f32 0.0, %v9985
        %v9987 = vpop.f32.mrb[0].mxu0
        %9988 = vmatprep.mubr.bf16.mxu0 0
        %9989 = vmatmul.mubr.bf16.gmra.mrb[0].mxu0 %v9628
        %v9990 = vpop.f32.mrb[0].mxu0
        %v9991 = vadd.f32 0.0, %v9990
        %v9992 = vpop.f32.mrb[0].mxu0
        %v9993 = vpop.f32.mrb[0].mxu0
        %v9994 = vadd.f32 0.0, %v9993
        %v9995 = vpop.f32.mrb[0].mxu0
        %9996 = vmatprep.mubr.bf16.mxu0 0
        %9997 = vmatmul.mubr.bf16.gmra.mrb[0].mxu0 %v9645
        %v9998 = vpop.f32.mrb[0].mxu0
        %v9999 = vadd.f32 0.0, %v9998
        %v10000 = vpop.f32.mrb[0].mxu0
        %v10001 = vpop.f32.mrb[0].mxu0
        %v10002 = vadd.f32 0.0, %v10001
        %v10003 = vpop.f32.mrb[0].mxu0
        %10004 = vmatprep.mubr.bf16.mxu0 0
        %10005 = vmatmul.mubr.bf16.gmra.mrb[0].mxu0 %v9662
        %v10006 = vpop.f32.mrb[0].mxu0
        %v10007 = vadd.f32 0.0, %v10006
        %v10008 = vpop.f32.mrb[0].mxu0
        %v10009 = vpop.f32.mrb[0].mxu0
        %v10010 = vadd.f32 0.0, %v10009
        %v10011 = vpop.f32.mrb[0].mxu0
        %10012 = vmatprep.mubr.bf16.mxu0 0
        %10013 = vmatmul.mubr.bf16.gmra.mrb[0].mxu0 %v9679
        %v10014 = vpop.f32.mrb[0].mxu0
        %v10015 = vadd.f32 0.0, %v10014
        %v10016 = vpop.f32.mrb[0].mxu0
        %v10017 = vpop.f32.mrb[0].mxu0
        %v10018 = vadd.f32 0.0, %v10017
        %v10019 = vpop.f32.mrb[0].mxu0
        %10020 = vmatprep.mubr.bf16.mxu0 0
        %10021 = vmatmul.mubr.bf16.gmra.mrb[0].mxu0 %v9696
        %v10022 = vpop.f32.mrb[0].mxu0
        %v10023 = vadd.f32 0.0, %v10022
        %v10024 = vpop.f32.mrb[0].mxu0
        %v10025 = vpop.f32.mrb[0].mxu0
        %v10026 = vadd.f32 0.0, %v10025
        %v10027 = vpop.f32.mrb[0].mxu0
        %10028 = vmatprep.mubr.bf16.mxu0 0
        %10029 = vmatmul.mubr.bf16.gmra.mrb[0].mxu0 %v9713
        %v10030 = vpop.f32.mrb[0].mxu0
        %v10031 = vadd.f32 0.0, %v10030
        %v10032 = vpop.f32.mrb[0].mxu0
        %v10033 = vpop.f32.mrb[0].mxu0
        %v10034 = vadd.f32 0.0, %v10033
        %v10035 = vpop.f32.mrb[0].mxu0
        %10036 = vmatprep.mubr.bf16.mxu0 0
        %10037 = vmatmul.mubr.bf16.gmra.mrb[0].mxu0 %v9730
        %v10038 = vpop.f32.mrb[0].mxu0
        %v10039 = vadd.f32 0.0, %v10038
        %v10040 = vpop.f32.mrb[0].mxu0
        %v10041 = vpop.f32.mrb[0].mxu0
        %v10042 = vadd.f32 0.0, %v10041
        %v10043 = vpop.f32.mrb[0].mxu0
        %10044 = vmatprep.mubr.bf16.mxu0 0
        %10045 = vmatmul.mubr.bf16.gmra.mrb[0].mxu0 %v9747
        %v10046 = vpop.f32.mrb[0].mxu0
        %v10047 = vadd.f32 0.0, %v10046
        %v10048 = vpop.f32.mrb[0].mxu0
        %v10049 = vpop.f32.mrb[0].mxu0
        %v10050 = vadd.f32 0.0, %v10049
        %v10051 = vpop.f32.mrb[0].mxu0
        %10052 = vmatprep.mubr.bf16.mxu0 0
        %10053 = vmatmul.mubr.bf16.gmra.mrb[0].mxu0 %v9764
        %v10054 = vpop.f32.mrb[0].mxu0
        %v10055 = vadd.f32 0.0, %v10054
        %v10056 = vpop.f32.mrb[0].mxu0
        %v10057 = vpop.f32.mrb[0].mxu0
        %v10058 = vadd.f32 0.0, %v10057
        %v10059 = vpop.f32.mrb[0].mxu0
        %10060 = vmatprep.mubr.bf16.mxu0 0
        %10061 = vmatmul.mubr.bf16.gmra.mrb[0].mxu0 %v9781
        %v10062 = vpop.f32.mrb[0].mxu0
        %v10063 = vadd.f32 0.0, %v10062
        %v10064 = vpop.f32.mrb[0].mxu0
        %v10065 = vpop.f32.mrb[0].mxu0
        %v10066 = vadd.f32 0.0, %v10065
        %v10067 = vpop.f32.mrb[0].mxu0
        %10068 = vmatprep.mubr.bf16.mxu0 0
        %10069 = vmatmul.mubr.bf16.gmra.mrb[0].mxu0 %v9798
        %v10070 = vpop.f32.mrb[0].mxu0
        %v10071 = vadd.f32 0.0, %v10070
        %v10072 = vpop.f32.mrb[0].mxu0
        %v10073 = vpop.f32.mrb[0].mxu0
        %v10074 = vadd.f32 0.0, %v10073
        %v10075 = vpop.f32.mrb[0].mxu0
        %10076 = vmatprep.mubr.bf16.mxu0 0
        %10077 = vmatmul.mubr.bf16.gmra.mrb[0].mxu0 %v9815
        %v10078 = vpop.f32.mrb[0].mxu0
        %v10079 = vadd.f32 0.0, %v10078
        %v10080 = vpop.f32.mrb[0].mxu0
        %v10081 = vpop.f32.mrb[0].mxu0
        %v10082 = vadd.f32 0.0, %v10081
        %v10083 = vpop.f32.mrb[0].mxu0
        %10084 = vmatprep.mubr.bf16.mxu0 0
        %10085 = vmatmul.mubr.bf16.gmra.mrb[0].mxu0 %v9832
        %v10086 = vpop.f32.mrb[0].mxu0
        %v10087 = vadd.f32 0.0, %v10086
        %v10088 = vpop.f32.mrb[0].mxu0
        %v10089 = vpop.f32.mrb[0].mxu0
        %v10090 = vadd.f32 0.0, %v10089
        %v10091 = vpop.f32.mrb[0].mxu0
        %10092 = vmatprep.mubr.bf16.mxu0 0
        %10093 = vmatmul.mubr.bf16.gmra.mrb[0].mxu0 %v9849
        %v10094 = vpop.f32.mrb[0].mxu0
        %v10095 = vadd.f32 0.0, %v10094
        %v10096 = vpop.f32.mrb[0].mxu0
        %v10097 = vpop.f32.mrb[0].mxu0
        %v10098 = vadd.f32 0.0, %v10097
        %v10099 = vpop.f32.mrb[0].mxu0
        %10100 = vmatprep.mubr.bf16.mxu0 0
        %10101 = vmatmul.mubr.bf16.gmra.mrb[0].mxu0 %v9866
        %v10102 = vpop.f32.mrb[0].mxu0
        %v10103 = vadd.f32 0.0, %v10102
        %v10104 = vpop.f32.mrb[0].mxu0
        %v10105 = vpop.f32.mrb[0].mxu0
        %v10106 = vadd.f32 0.0, %v10105
        %v10107 = vpop.f32.mrb[0].mxu0
        %10108 = vdwg.mxu0
        %v10109 = vadd.f32 %v9547, %v9983
        %v10110 = vadd.f32 %v9548, %v9986
        %v10111 = vadd.f32 %v9549, %v9991
        %v10112 = vadd.f32 %v9550, %v9994
        %v10113 = vadd.f32 %v9551, %v9999
        %v10114 = vadd.f32 %v9552, %v10002
        %v10115 = vadd.f32 %v9553, %v10007
        %v10116 = vadd.f32 %v9554, %v10010
        %v10117 = vadd.f32 %v9555, %v10015
        %v10118 = vadd.f32 %v9556, %v10018
        %v10119 = vadd.f32 %v9557, %v10023
        %v10120 = vadd.f32 %v9558, %v10026
        %v10121 = vadd.f32 %v9559, %v10031
        %v10122 = vadd.f32 %v9560, %v10034
        %v10123 = vadd.f32 %v9561, %v10039
        %v10124 = vadd.f32 %v9562, %v10042
        %v10125 = vadd.f32 %v9563, %v10047
        %v10126 = vadd.f32 %v9564, %v10050
        %v10127 = vadd.f32 %v9565, %v10055
        %v10128 = vadd.f32 %v9566, %v10058
        %v10129 = vadd.f32 %v9567, %v10063
        %v10130 = vadd.f32 %v9568, %v10066
        %v10131 = vadd.f32 %v9569, %v10071
        %v10132 = vadd.f32 %v9570, %v10074
        %v10133 = vadd.f32 %v9571, %v10079
        %v10134 = vadd.f32 %v9572, %v10082
        %v10135 = vadd.f32 %v9573, %v10087
        %v10136 = vadd.f32 %v9574, %v10090
        %v10137 = vadd.f32 %v9575, %v10095
        %v10138 = vadd.f32 %v9576, %v10098
        %v10139 = vadd.f32 %v9577, %v10103
        %v10140 = vadd.f32 %v9578, %v10106
        %v10141 = vld [vmem:[%s6] sm:$0x1]
        %v10143 = vlaneseq
        %v10144 = vshrl.u32 %v10143, 7
        %v10145 = vsub.s32 0, %v10144
        %v10146 = vrot.slane %v10141, %v10145
        %v10148 = vadd.f32 %v10109, %v10146
        %v10149 = vadd.f32 %v10110, %v10146
        %v10150 = vadd.f32 %v10111, %v10146
        %v10151 = vadd.f32 %v10112, %v10146
        %v10152 = vadd.f32 %v10113, %v10146
        %v10153 = vadd.f32 %v10114, %v10146
        %v10154 = vadd.f32 %v10115, %v10146
        %v10155 = vadd.f32 %v10116, %v10146
        %v10156 = vadd.f32 %v10117, %v10146
        %v10157 = vadd.f32 %v10118, %v10146
        %v10158 = vadd.f32 %v10119, %v10146
        %v10159 = vadd.f32 %v10120, %v10146
        %v10160 = vadd.f32 %v10121, %v10146
        %v10161 = vadd.f32 %v10122, %v10146
        %v10162 = vadd.f32 %v10123, %v10146
        %v10163 = vadd.f32 %v10124, %v10146
        %v10164 = vadd.f32 %v10125, %v10146
        %v10165 = vadd.f32 %v10126, %v10146
        %v10166 = vadd.f32 %v10127, %v10146
        %v10167 = vadd.f32 %v10128, %v10146
        %v10168 = vadd.f32 %v10129, %v10146
        %v10169 = vadd.f32 %v10130, %v10146
        %v10170 = vadd.f32 %v10131, %v10146
        %v10171 = vadd.f32 %v10132, %v10146
        %v10172 = vadd.f32 %v10133, %v10146
        %v10173 = vadd.f32 %v10134, %v10146
        %v10174 = vadd.f32 %v10135, %v10146
        %v10175 = vadd.f32 %v10136, %v10146
        %v10176 = vadd.f32 %v10137, %v10146
        %v10177 = vadd.f32 %v10138, %v10146
        %v10178 = vadd.f32 %v10139, %v10146
        %v10179 = vadd.f32 %v10140, %v10146
        %v10180 = vunpack.c.l.bf16 %v342
        %v10181 = vunpack.c.l.bf16 %v343
        %v10182 = vunpack.c.l.bf16 %v344
        %v10183 = vunpack.c.l.bf16 %v345
        %v10184 = vunpack.c.l.bf16 %v346
        %v10185 = vunpack.c.l.bf16 %v347
        %v10186 = vunpack.c.l.bf16 %v348
        %v10187 = vunpack.c.l.bf16 %v349
        %v10188 = vunpack.c.l.bf16 %v350
        %v10189 = vunpack.c.l.bf16 %v351
        %v10190 = vunpack.c.l.bf16 %v352
        %v10191 = vunpack.c.l.bf16 %v353
        %v10192 = vunpack.c.l.bf16 %v354
        %v10193 = vunpack.c.l.bf16 %v355
        %v10194 = vunpack.c.l.bf16 %v356
        %v10195 = vunpack.c.l.bf16 %v357
        %v10196 = vunpack.c.l.bf16 %v358
        %v10197 = vunpack.c.l.bf16 %v359
        %v10198 = vunpack.c.l.bf16 %v360
        %v10199 = vunpack.c.l.bf16 %v361
        %v10200 = vunpack.c.l.bf16 %v362
        %v10201 = vunpack.c.l.bf16 %v363
        %v10202 = vunpack.c.l.bf16 %v364
        %v10203 = vunpack.c.l.bf16 %v365
        %v10204 = vunpack.c.l.bf16 %v366
        %v10205 = vunpack.c.l.bf16 %v367
        %v10206 = vunpack.c.l.bf16 %v368
        %v10207 = vunpack.c.l.bf16 %v369
        %v10208 = vunpack.c.l.bf16 %v370
        %v10209 = vunpack.c.l.bf16 %v371
        %v10210 = vunpack.c.l.bf16 %v372
        %v10211 = vunpack.c.l.bf16 %v373
        %v10212 = vadd.f32 %v10148, %v10180
        %v10213 = vadd.f32 %v10149, %v10181
        %v10214 = vadd.f32 %v10150, %v10182
        %v10215 = vadd.f32 %v10151, %v10183
        %v10216 = vadd.f32 %v10152, %v10184
        %v10217 = vadd.f32 %v10153, %v10185
        %v10218 = vadd.f32 %v10154, %v10186
        %v10219 = vadd.f32 %v10155, %v10187
        %v10220 = vadd.f32 %v10156, %v10188
        %v10221 = vadd.f32 %v10157, %v10189
        %v10222 = vadd.f32 %v10158, %v10190
        %v10223 = vadd.f32 %v10159, %v10191
        %v10224 = vadd.f32 %v10160, %v10192
        %v10225 = vadd.f32 %v10161, %v10193
        %v10226 = vadd.f32 %v10162, %v10194
        %v10227 = vadd.f32 %v10163, %v10195
        %v10228 = vadd.f32 %v10164, %v10196
        %v10229 = vadd.f32 %v10165, %v10197
        %v10230 = vadd.f32 %v10166, %v10198
        %v10231 = vadd.f32 %v10167, %v10199
        %v10232 = vadd.f32 %v10168, %v10200
        %v10233 = vadd.f32 %v10169, %v10201
        %v10234 = vadd.f32 %v10170, %v10202
        %v10235 = vadd.f32 %v10171, %v10203
        %v10236 = vadd.f32 %v10172, %v10204
        %v10237 = vadd.f32 %v10173, %v10205
        %v10238 = vadd.f32 %v10174, %v10206
        %v10239 = vadd.f32 %v10175, %v10207
        %v10240 = vadd.f32 %v10176, %v10208
        %v10241 = vadd.f32 %v10177, %v10209
        %v10242 = vadd.f32 %v10178, %v10210
        %v10243 = vadd.f32 %v10179, %v10211
        %v10244 = vmax.f32 %v10212, 0.0
        %v10245 = vmax.f32 %v10213, 0.0
        %v10246 = vmax.f32 %v10214, 0.0
        %v10247 = vmax.f32 %v10215, 0.0
        %v10248 = vmax.f32 %v10216, 0.0
        %v10249 = vmax.f32 %v10217, 0.0
        %v10250 = vmax.f32 %v10218, 0.0
        %v10251 = vmax.f32 %v10219, 0.0
        %v10252 = vmax.f32 %v10220, 0.0
        %v10253 = vmax.f32 %v10221, 0.0
        %v10254 = vmax.f32 %v10222, 0.0
        %v10255 = vmax.f32 %v10223, 0.0
        %v10256 = vmax.f32 %v10224, 0.0
        %v10257 = vmax.f32 %v10225, 0.0
        %v10258 = vmax.f32 %v10226, 0.0
        %v10259 = vmax.f32 %v10227, 0.0
        %v10260 = vmax.f32 %v10228, 0.0
        %v10261 = vmax.f32 %v10229, 0.0
        %v10262 = vmax.f32 %v10230, 0.0
        %v10263 = vmax.f32 %v10231, 0.0
        %v10264 = vmax.f32 %v10232, 0.0
        %v10265 = vmax.f32 %v10233, 0.0
        %v10266 = vmax.f32 %v10234, 0.0
        %v10267 = vmax.f32 %v10235, 0.0
        %v10268 = vmax.f32 %v10236, 0.0
        %v10269 = vmax.f32 %v10237, 0.0
        %v10270 = vmax.f32 %v10238, 0.0
        %v10271 = vmax.f32 %v10239, 0.0
        %v10272 = vmax.f32 %v10240, 0.0
        %v10273 = vmax.f32 %v10241, 0.0
        %v10274 = vmax.f32 %v10242, 0.0
        %v10275 = vmax.f32 %v10243, 0.0
        %v10276 = vpack.c.bf16 %v10245, %v10244
        %v10277 = vpack.c.bf16 %v10247, %v10246
        %v10278 = vpack.c.bf16 %v10249, %v10248
        %v10279 = vpack.c.bf16 %v10251, %v10250
        %v10280 = vpack.c.bf16 %v10253, %v10252
        %v10281 = vpack.c.bf16 %v10255, %v10254
        %v10282 = vpack.c.bf16 %v10257, %v10256
        %v10283 = vpack.c.bf16 %v10259, %v10258
        %v10284 = vpack.c.bf16 %v10261, %v10260
        %v10285 = vpack.c.bf16 %v10263, %v10262
        %v10286 = vpack.c.bf16 %v10265, %v10264
        %v10287 = vpack.c.bf16 %v10267, %v10266
        %v10288 = vpack.c.bf16 %v10269, %v10268
        %v10289 = vpack.c.bf16 %v10271, %v10270
        %v10290 = vpack.c.bf16 %v10273, %v10272
        %v10291 = vpack.c.bf16 %v10275, %v10274
        %v10308 = vunpack.c.l.b16 %v10276
        %v10309 = vunpack.c.h.b16 %v10276
        %v10310 = vunpack.c.l.b16 %v10277
        %v10311 = vunpack.c.h.b16 %v10277
        %v10312 = vunpack.c.l.b16 %v10278
        %v10313 = vunpack.c.h.b16 %v10278
        %v10314 = vunpack.c.l.b16 %v10279
        %v10315 = vunpack.c.h.b16 %v10279
        %v10316 = vunpack.c.l.b16 %v10280
        %v10317 = vunpack.c.h.b16 %v10280
        %v10318 = vunpack.c.l.b16 %v10281
        %v10319 = vunpack.c.h.b16 %v10281
        %v10320 = vunpack.c.l.b16 %v10282
        %v10321 = vunpack.c.h.b16 %v10282
        %v10322 = vunpack.c.l.b16 %v10283
        %v10323 = vunpack.c.h.b16 %v10283
        %v10324 = vunpack.c.l.b16 %v10284
        %v10325 = vunpack.c.h.b16 %v10284
        %v10326 = vunpack.c.l.b16 %v10285
        %v10327 = vunpack.c.h.b16 %v10285
        %v10328 = vunpack.c.l.b16 %v10286
        %v10329 = vunpack.c.h.b16 %v10286
        %v10330 = vunpack.c.l.b16 %v10287
        %v10331 = vunpack.c.h.b16 %v10287
        %v10332 = vunpack.c.l.b16 %v10288
        %v10333 = vunpack.c.h.b16 %v10288
        %v10334 = vunpack.c.l.b16 %v10289
        %v10335 = vunpack.c.h.b16 %v10289
        %v10336 = vunpack.c.l.b16 %v10290
        %v10337 = vunpack.c.h.b16 %v10290
        %v10338 = vunpack.c.l.b16 %v10291
        %v10339 = vunpack.c.h.b16 %v10291
        %v10340 = vpack.c.b16 %v10308, %v10308
        %v10341 = vpack.c.b16 %v10309, %v10309
        %v10342 = vpack.c.b16 %v10310, %v10310
        %v10343 = vpack.c.b16 %v10311, %v10311
        %v10344 = vpack.c.b16 %v10312, %v10312
        %v10345 = vpack.c.b16 %v10313, %v10313
        %v10346 = vpack.c.b16 %v10314, %v10314
        %v10347 = vpack.c.b16 %v10315, %v10315
        %v10348 = vpack.c.b16 %v10316, %v10316
        %v10349 = vpack.c.b16 %v10317, %v10317
        %v10350 = vpack.c.b16 %v10318, %v10318
        %v10351 = vpack.c.b16 %v10319, %v10319
        %v10352 = vpack.c.b16 %v10320, %v10320
        %v10353 = vpack.c.b16 %v10321, %v10321
        %v10354 = vpack.c.b16 %v10322, %v10322
        %v10355 = vpack.c.b16 %v10323, %v10323
        %v10356 = vpack.c.b16 %v10324, %v10324
        %v10357 = vpack.c.b16 %v10325, %v10325
        %v10358 = vpack.c.b16 %v10326, %v10326
        %v10359 = vpack.c.b16 %v10327, %v10327
        %v10360 = vpack.c.b16 %v10328, %v10328
        %v10361 = vpack.c.b16 %v10329, %v10329
        %v10362 = vpack.c.b16 %v10330, %v10330
        %v10363 = vpack.c.b16 %v10331, %v10331
        %v10364 = vpack.c.b16 %v10332, %v10332
        %v10365 = vpack.c.b16 %v10333, %v10333
        %v10366 = vpack.c.b16 %v10334, %v10334
        %v10367 = vpack.c.b16 %v10335, %v10335
        %v10368 = vpack.c.b16 %v10336, %v10336
        %v10369 = vpack.c.b16 %v10337, %v10337
        %v10370 = vpack.c.b16 %v10338, %v10338
        %v10371 = vpack.c.b16 %v10339, %v10339
        %10404 = vst [vmem:[%s340] sm:$0xf] %v10340
        %10405 = vst [vmem:[%s340 + $0x4] sm:$0xf] %v10341
        %10406 = vst [vmem:[%s340 + $0x8] sm:$0xf] %v10342
        %10407 = vst [vmem:[%s340 + $0xc] sm:$0xf] %v10343
        %10408 = vst [vmem:[%s340 + $0x10] sm:$0xf] %v10344
        %10409 = vst [vmem:[%s340 + $0x14] sm:$0xf] %v10345
        %10410 = vst [vmem:[%s340 + $0x18] sm:$0xf] %v10346
        %10411 = vst [vmem:[%s340 + $0x1c] sm:$0xf] %v10347
        %10412 = vst [vmem:[%s340 + $0x20] sm:$0xf] %v10348
        %10413 = vst [vmem:[%s340 + $0x24] sm:$0xf] %v10349
        %10414 = vst [vmem:[%s340 + $0x28] sm:$0xf] %v10350
        %10415 = vst [vmem:[%s340 + $0x2c] sm:$0xf] %v10351
        %10416 = vst [vmem:[%s340 + $0x30] sm:$0xf] %v10352
        %10417 = vst [vmem:[%s340 + $0x34] sm:$0xf] %v10353
        %10418 = vst [vmem:[%s340 + $0x38] sm:$0xf] %v10354
        %10419 = vst [vmem:[%s340 + $0x3c] sm:$0xf] %v10355
        %10420 = vst [vmem:[%s340 + $0x40] sm:$0xf] %v10356
        %10421 = vst [vmem:[%s340 + $0x44] sm:$0xf] %v10357
        %10422 = vst [vmem:[%s340 + $0x48] sm:$0xf] %v10358
        %10423 = vst [vmem:[%s340 + $0x4c] sm:$0xf] %v10359
        %10424 = vst [vmem:[%s340 + $0x50] sm:$0xf] %v10360
        %10425 = vst [vmem:[%s340 + $0x54] sm:$0xf] %v10361
        %10426 = vst [vmem:[%s340 + $0x58] sm:$0xf] %v10362
        %10427 = vst [vmem:[%s340 + $0x5c] sm:$0xf] %v10363
        %10428 = vst [vmem:[%s340 + $0x60] sm:$0xf] %v10364
        %10429 = vst [vmem:[%s340 + $0x64] sm:$0xf] %v10365
        %10430 = vst [vmem:[%s340 + $0x68] sm:$0xf] %v10366
        %10431 = vst [vmem:[%s340 + $0x6c] sm:$0xf] %v10367
        %10432 = vst [vmem:[%s340 + $0x70] sm:$0xf] %v10368
        %10433 = vst [vmem:[%s340 + $0x74] sm:$0xf] %v10369
        %10434 = vst [vmem:[%s340 + $0x78] sm:$0xf] %v10370
        %10435 = vst [vmem:[%s340 + $0x7c] sm:$0xf] %v10371
        %s10436 = sand.u32 %s186, 1
        %s10437 = scalar_lea.sflag [#allocation6], %s10436
        %s10438 = sand.u32 %s186, 1
        %s10439 = smul.addr %s10438, 128
        %s10440 = scalar_lea.vmem [#allocation12], %s10439
        // Predicated region
        $region65: #{tpu_custom_call.1} parent=47 // pred_check
          %p10441 = pneg %p196
        $region66: #{tpu_custom_call.1} parent=47 // pred_check_branch
          %10443 = sbr.rel (%p10441) target = $region68
        $region67: #{tpu_custom_call.1} parent=47 // pred_region
          %s10445 = ssub.s32 2048, 2048
          %10446 = vsyncadd %s10437, %s10445
          %s10447 = smul.addr %s26, 32
          %s10448 = smul.addr %s10447, 64
          %s10449 = scalar_lea.hbm %s7, %s10448
          %s10450 = sshll.u32 %s10440, 4
          %s10451 = int_to_ptr.vmem [resolvable:$true] %s10450
          %10456 = dma.vmem_to_hbm [thread:$0]  %s10451, 2048, %s10449, %s10437, 64, 64, 4
        $region68: #{tpu_custom_call.1} parent=47 // pred_fallthru
          _
      $region48: #{tpu_custom_call.1} parent=5 // pred_fallthru
        _
      %p10457 = scmp.le.s32.totalorder 2, %s21
      // Predicated region
      $region69: #{tpu_custom_call.1} parent=5 // pred_check
        %p10458 = pneg %p10457
      $region70: #{tpu_custom_call.1} parent=5 // pred_check_branch
        %10460 = sbr.rel (%p10458) target = $region72
      $region71: #{tpu_custom_call.1} parent=5 // pred_region
        %s10461 = ssub.s32 %s21, 2
        // Predicated region
        $region73: #{tpu_custom_call.1} parent=71 // pred_check
          %p10462 = pneg %p202
        $region74: #{tpu_custom_call.1} parent=71 // pred_check_branch
          %10464 = sbr.rel (%p10462) target = $region76
        $region75: #{tpu_custom_call.1} parent=71 // pred_region
          %s10465 = sand.u32 %s187, 1
          %s10466 = scalar_lea.sflag [#allocation6], %s10465
          %s10467 = sand.u32 %s187, 1
          %s10468 = smul.addr %s10467, 128
          %s10469 = scalar_lea.vmem [#allocation12], %s10468
          %10470 = dma.done %s10466, 2048
        $region76: #{tpu_custom_call.1} parent=71 // pred_fallthru
          _
      $region72: #{tpu_custom_call.1} parent=5 // pred_fallthru
        _
    $region6: #{tpu_custom_call.1} parent=1 // loop_footer
      %s25 = sadd.s32 1, %s21
    $region7: #{tpu_custom_call.1} parent=1 // loop_footer_branch
      %20 = sbr.rel target = $region3
    $region8: #{tpu_custom_call.1} parent=1 // loop_exit
      _
    %10471 = vsyncpa [#allocation5], 1
    %s10472 = scalar_lea.sflag [#allocation5], 1
    %10473 = vsyncpa %s10472, 1
    %10474 = vsyncpa [#allocation8], 1
    %10475 = vsyncpa [#allocation11], 1
    %10476 = vsyncpa [#allocation6], 1
    %s10477 = scalar_lea.sflag [#allocation6], 1
    %10478 = vsyncpa %s10477, 1

</llo_original>
